<compile_context>
chip_gen: v6e
topology: v6e:2x2x1
jax: 0.10.0
libtpu: 0.0.40
codegen_flags: <defaults>
</compile_context>

<pallas_src>
import jax
import jax.numpy as jnp
from jax.experimental import pallas as pl
from jax.experimental.pallas import tpu as pltpu

FEATS = 256
SUB = 512                 # lane sub-chunk within a batch tile (tile is a multiple of SUB)
NEG_SLOPE = 0.01          # torch.nn.functional.leaky_relu default


def _leaky_relu(x):
    return jnp.where(x > 0, x, NEG_SLOPE * x)


def _round_up(a, m):
    return ((a + m - 1) // m) * m


def mlp1_kernel(x_ref,
                w1_ref, b1_ref,
                w2_ref, b2_ref,
                w3_ref, b3_ref,
                w4_ref, b4_ref,
                w5_ref, b5_ref,
                o_ref):
    # Hoist loop-invariant reads once (JAX does not CSE repeated broadcasts/reads).
    w1 = w1_ref[...]   # (256, 1)   f32  : layer-1 weight column (K=1 layer -> VPU)
    b1 = b1_ref[...]   # (256, 1)   f32
    w2 = w2_ref[...]   # (256, 256) bf16 : pre-cast in the wrapper (MXU operand)
    b2 = b2_ref[...]   # (256, 1)   f32
    w3 = w3_ref[...]
    b3 = b3_ref[...]
    w4 = w4_ref[...]
    b4 = b4_ref[...]
    w5 = w5_ref[...]   # (256, 1)   f32  : layer-5 weight column (M=1 layer -> VPU/XLU)
    b5 = b5_ref[...]   # (1, 1)     f32

    tile = x_ref.shape[1]
    n_chunks = tile // SUB

    # Statically unrolled sub-chunk loop: the VPU epilogue (bias + leaky_relu + bf16 cast)
    # of one chunk overlaps the MXU matmuls of the neighbouring chunk.
    for c in range(n_chunks):
        lo, hi = c * SUB, (c + 1) * SUB
        x = x_ref[:, lo:hi]                                        # (1, SUB) f32

        # Layer 1 (in=1): broadcast outer product on the VPU, fused bias+act+bf16 cast.
        h = _leaky_relu(w1 * x + b1).astype(jnp.bfloat16)           # (256, SUB) bf16

        # Layers 2-3: MXU matmul (bf16 operands, f32 accumulation), bf16 inter-layer store.
        h = _leaky_relu(
            jnp.dot(w2, h, preferred_element_type=jnp.float32) + b2
        ).astype(jnp.bfloat16)
        h = _leaky_relu(
            jnp.dot(w3, h, preferred_element_type=jnp.float32) + b3
        ).astype(jnp.bfloat16)

        # Layer 4: keep the activation in f32 (layer 5 consumes it on the VPU).
        h = _leaky_relu(jnp.dot(w4, h, preferred_element_type=jnp.float32) + b4)

        # Layer 5 (out=1): VPU multiply + sublane reduction; keeps the MXU free.
        out = jnp.sum(w5 * h, axis=0, keepdims=True) + b5           # (1, SUB) f32
        o_ref[:, lo:hi] = out.astype(o_ref.dtype)


def _is_v7x():
    try:
        return "v7" in jax.devices()[0].device_kind.lower()
    except Exception:
        return False


def _choose_tiling(B, tb, even_grid):
    """Pick (tile, grid, padded_B). tile is a multiple of SUB; grid is even on v7x."""
    Bp = _round_up(B, 128)
    tile = min(_round_up(tb, SUB), _round_up(Bp, SUB))
    grid = pl.cdiv(Bp, tile)
    if even_grid and grid == 1 and tile > SUB:
        # Split so both v7x TensorCores get work.
        tile = _round_up(pl.cdiv(Bp, 2), SUB)
        grid = pl.cdiv(Bp, tile)
    if even_grid and grid > 1:
        # Even grid -> balanced split across the two v7x TensorCores.
        grid = _round_up(grid, 2)
        tile = _round_up(pl.cdiv(Bp, grid), SUB)
        grid = _round_up(pl.cdiv(Bp, tile), 2)
    return tile, grid, grid * tile


def mlp1_forward(x, params, *, tb=None, vmem_limit_bytes=None):
    """x: (B, 1) float32. params: PyTorch-layout weights (out, in), biases (out, 1)."""
    B = x.shape[0]
    assert x.shape == (B, 1)

    v7x = _is_v7x()
    if tb is None:
        tb = 4096 if v7x else 8192                     # amortize step overhead; cap on v7x
    if vmem_limit_bytes is None:
        vmem_limit_bytes = (56 if v7x else 96) * 1024 * 1024

    tile, grid, Bp = _choose_tiling(B, tb, even_grid=v7x)

    # Lane-dense input: (B, 1) -> (1, Bp) with zero padding on the batch axis.
    x_t = x.reshape(1, B)
    if Bp != B:
        x_t = jnp.pad(x_t, ((0, 0), (0, Bp - B)))

    # Layer-1/5 weights stay f32 (VPU path); layers 2-4 pre-cast once to bf16 for the MXU.
    w1 = params["w1"].astype(jnp.float32)                          # (256, 1)
    w2 = params["w2"].astype(jnp.bfloat16)                         # (256, 256)
    w3 = params["w3"].astype(jnp.bfloat16)
    w4 = params["w4"].astype(jnp.bfloat16)
    w5 = params["w5"].reshape(FEATS, 1).astype(jnp.float32)        # (1,256) -> (256,1)
    b1 = params["b1"].astype(jnp.float32)
    b2 = params["b2"].astype(jnp.float32)
    b3 = params["b3"].astype(jnp.float32)
    b4 = params["b4"].astype(jnp.float32)
    b5 = params["b5"].reshape(1, 1).astype(jnp.float32)

    # Loop-invariant blocks (constant index_map) for weights/biases.
    full = lambda a: pl.BlockSpec(a.shape, lambda i: (0, 0))

    out_t = pl.pallas_call(
        mlp1_kernel,
        out_shape=jax.ShapeDtypeStruct((1, Bp), x.dtype),
        grid_spec=pltpu.PrefetchScalarGridSpec(
            num_scalar_prefetch=0,
            grid=(grid,),
            in_specs=[
                pl.BlockSpec((1, tile), lambda i: (0, i)),         # lane-dense batch tile
                full(w1), full(b1),
                full(w2), full(b2),
                full(w3), full(b3),
                full(w4), full(b4),
                full(w5), full(b5),
            ],
            out_specs=pl.BlockSpec((1, tile), lambda i: (0, i)),   # lane-dense output tile
        ),
        compiler_params=pltpu.CompilerParams(
            dimension_semantics=("parallel",),
            vmem_limit_bytes=vmem_limit_bytes,
        ),
    )(x_t, w1, b1, w2, b2, w3, b3, w4, b4, w5, b5)

    return out_t[:, :B].reshape(B, 1)


def init_params(key):
    """Deterministic init mimicking torch.nn.Linear (uniform +/- 1/sqrt(fan_in)).
    Weights stored PyTorch-style (out, in); biases as (out, 1)."""
    dims = [(1, 256), (256, 256), (256, 256), (256, 256), (256, 1)]
    params = {}
    for n, (fan_in, fan_out) in enumerate(dims, start=1):
        key, kw, kb = jax.random.split(key, 3)
        bound = 1.0 / jnp.sqrt(jnp.float32(fan_in))
        params[f"w{n}"] = jax.random.uniform(
            kw, (fan_out, fan_in), jnp.float32, -bound, bound)
        params[f"b{n}"] = jax.random.uniform(
            kb, (fan_out, 1), jnp.float32, -bound, bound)
    return params


def mlp1_reference(x, p, matmul_dtype=jnp.float32):
    """PyTorch-semantics reference in (batch, features) layout.
    matmul_dtype=bfloat16 emulates the kernel's MXU precision for layers 2-4;
    layers 1 and 5 run in f32 on the VPU in the kernel, so keep them f32 here."""
    def lin_mxu(h, w, b):
        return jnp.dot(h.astype(matmul_dtype), w.T.astype(matmul_dtype),
                       preferred_element_type=jnp.float32) + b.reshape(1, -1)

    h = _leaky_relu(x @ p["w1"].T + p["b1"].reshape(1, -1))
    h = _leaky_relu(lin_mxu(h, p["w2"], p["b2"]))
    h = _leaky_relu(lin_mxu(h, p["w3"], p["b3"]))
    h = _leaky_relu(lin_mxu(h, p["w4"], p["b4"]))
    return h @ p["w5"].T + p["b5"].reshape(1, -1)


if __name__ == "__main__":
    key = jax.random.PRNGKey(0)
    kp, kx = jax.random.split(key)

    params = init_params(kp)

    B = 1000  # exercises padding + a multi-chunk tile (and a 2-step grid on v7x)
    x = jax.random.normal(kx, (B, 1), jnp.float32)

    out = jax.block_until_ready(mlp1_forward(x, params))
    assert out.shape == (B, 1)
    assert bool(jnp.all(jnp.isfinite(out)))

    # Precision-matched reference (bf16 MXU operands for layers 2-4, f32 accumulation,
    # f32 VPU math for layers 1 and 5).
    ref_bf16 = mlp1_reference(x, params, matmul_dtype=jnp.bfloat16)
    assert jnp.allclose(out, ref_bf16, atol=1e-2, rtol=1e-2), "mismatch vs bf16-matched reference"

    # Loose sanity check against the full-f32 reference.
    ref_f32 = mlp1_reference(x, params, matmul_dtype=jnp.float32)
    assert jnp.allclose(out, ref_f32, atol=5e-2, rtol=5e-2), "mismatch vs f32 reference"

    print("KERNEL_OK")
</pallas_src>

<mosaic_0001>
module attributes {stable_mosaic.version = 11 : i64} {
  func.func @mlp1_kernel(%arg0: i32, %arg1: memref<1x1024xf32, #tpu.memory_space<vmem>>, %arg2: memref<256x1xf32, #tpu.memory_space<vmem>>, %arg3: memref<256x1xf32, #tpu.memory_space<vmem>>, %arg4: memref<256x256xbf16, #tpu.memory_space<vmem>>, %arg5: memref<256x1xf32, #tpu.memory_space<vmem>>, %arg6: memref<256x256xbf16, #tpu.memory_space<vmem>>, %arg7: memref<256x1xf32, #tpu.memory_space<vmem>>, %arg8: memref<256x256xbf16, #tpu.memory_space<vmem>>, %arg9: memref<256x1xf32, #tpu.memory_space<vmem>>, %arg10: memref<256x1xf32, #tpu.memory_space<vmem>>, %arg11: memref<1x1xf32, #tpu.memory_space<vmem>>, %arg12: memref<1x1024xf32, #tpu.memory_space<vmem>>) attributes {dimension_semantics = [#tpu.dimension_semantics<parallel>], iteration_bounds = array<i64: 1>, scalar_prefetch = 0 : i64, scratch_operands = 0 : i64, tpu.core_type = #tpu.core_type<tc>, window_params = [{transform_indices = @transform_0, window_bounds = array<i64: 1, 1024>}, {pipeline_mode = #tpu.pipeline_mode<synchronous>, transform_indices = @transform_1, window_bounds = array<i64: 256, 1>}, {pipeline_mode = #tpu.pipeline_mode<synchronous>, transform_indices = @transform_2, window_bounds = array<i64: 256, 1>}, {pipeline_mode = #tpu.pipeline_mode<synchronous>, transform_indices = @transform_3, window_bounds = array<i64: 256, 256>}, {pipeline_mode = #tpu.pipeline_mode<synchronous>, transform_indices = @transform_4, window_bounds = array<i64: 256, 1>}, {pipeline_mode = #tpu.pipeline_mode<synchronous>, transform_indices = @transform_5, window_bounds = array<i64: 256, 256>}, {pipeline_mode = #tpu.pipeline_mode<synchronous>, transform_indices = @transform_6, window_bounds = array<i64: 256, 1>}, {pipeline_mode = #tpu.pipeline_mode<synchronous>, transform_indices = @transform_7, window_bounds = array<i64: 256, 256>}, {pipeline_mode = #tpu.pipeline_mode<synchronous>, transform_indices = @transform_8, window_bounds = array<i64: 256, 1>}, {pipeline_mode = #tpu.pipeline_mode<synchronous>, transform_indices = @transform_9, window_bounds = array<i64: 256, 1>}, {pipeline_mode = #tpu.pipeline_mode<synchronous>, transform_indices = @transform_10, window_bounds = array<i64: 1, 1>}, {transform_indices = @transform_11, window_bounds = array<i64: 1, 1024>}]} {
    %c0 = arith.constant 0 : index
    %c0_0 = arith.constant 0 : index
    %0 = vector.load %arg2[%c0, %c0_0] : memref<256x1xf32, #tpu.memory_space<vmem>>, vector<256x1xf32>
    %c0_1 = arith.constant 0 : index
    %c0_2 = arith.constant 0 : index
    %1 = vector.load %arg3[%c0_1, %c0_2] : memref<256x1xf32, #tpu.memory_space<vmem>>, vector<256x1xf32>
    %c0_3 = arith.constant 0 : index
    %c0_4 = arith.constant 0 : index
    %2 = vector.load %arg4[%c0_3, %c0_4] : memref<256x256xbf16, #tpu.memory_space<vmem>>, vector<256x256xbf16>
    %c0_5 = arith.constant 0 : index
    %c0_6 = arith.constant 0 : index
    %3 = vector.load %arg5[%c0_5, %c0_6] : memref<256x1xf32, #tpu.memory_space<vmem>>, vector<256x1xf32>
    %c0_7 = arith.constant 0 : index
    %c0_8 = arith.constant 0 : index
    %4 = vector.load %arg6[%c0_7, %c0_8] : memref<256x256xbf16, #tpu.memory_space<vmem>>, vector<256x256xbf16>
    %c0_9 = arith.constant 0 : index
    %c0_10 = arith.constant 0 : index
    %5 = vector.load %arg7[%c0_9, %c0_10] : memref<256x1xf32, #tpu.memory_space<vmem>>, vector<256x1xf32>
    %c0_11 = arith.constant 0 : index
    %c0_12 = arith.constant 0 : index
    %6 = vector.load %arg8[%c0_11, %c0_12] : memref<256x256xbf16, #tpu.memory_space<vmem>>, vector<256x256xbf16>
    %c0_13 = arith.constant 0 : index
    %c0_14 = arith.constant 0 : index
    %7 = vector.load %arg9[%c0_13, %c0_14] : memref<256x1xf32, #tpu.memory_space<vmem>>, vector<256x1xf32>
    %c0_15 = arith.constant 0 : index
    %c0_16 = arith.constant 0 : index
    %8 = vector.load %arg10[%c0_15, %c0_16] : memref<256x1xf32, #tpu.memory_space<vmem>>, vector<256x1xf32>
    %c0_17 = arith.constant 0 : index
    %c0_18 = arith.constant 0 : index
    %9 = vector.load %arg11[%c0_17, %c0_18] : memref<1x1xf32, #tpu.memory_space<vmem>>, vector<1x1xf32>
    %c0_19 = arith.constant 0 : index
    %c0_20 = arith.constant 0 : index
    %10 = vector.load %arg1[%c0_19, %c0_20] : memref<1x1024xf32, #tpu.memory_space<vmem>>, vector<1x512xf32>
    %11 = vector.broadcast %0 : vector<256x1xf32> to vector<256x512xf32>
    %12 = vector.broadcast %10 : vector<1x512xf32> to vector<256x512xf32>
    %13 = arith.mulf %11, %12 : vector<256x512xf32>
    %14 = vector.broadcast %1 : vector<256x1xf32> to vector<256x512xf32>
    %15 = arith.addf %13, %14 : vector<256x512xf32>
    %cst = arith.constant 0.000000e+00 : f32
    %16 = vector.broadcast %cst : f32 to vector<256x512xf32>
    %17 = arith.cmpf ogt, %15, %16 : vector<256x512xf32>
    %cst_21 = arith.constant 0.00999999977 : f32
    %18 = vector.broadcast %cst_21 : f32 to vector<256x512xf32>
    %19 = arith.mulf %18, %15 : vector<256x512xf32>
    %20 = arith.select %17, %15, %19 : vector<256x512xi1>, vector<256x512xf32>
    %21 = arith.truncf %20 : vector<256x512xf32> to vector<256x512xbf16>
    %cst_22 = arith.constant dense<0.000000e+00> : vector<256x512xf32>
    %22 = tpu.matmul %2, %21, %cst_22 {dimension_numbers = #tpu.dot_dimension_numbers<[1], [0], [0], [1], [0, 0, 1, 1], [], []>} : vector<256x256xbf16>, vector<256x512xbf16>, vector<256x512xf32> -> vector<256x512xf32>
    %23 = vector.broadcast %3 : vector<256x1xf32> to vector<256x512xf32>
    %24 = arith.addf %22, %23 : vector<256x512xf32>
    %cst_23 = arith.constant 0.000000e+00 : f32
    %25 = vector.broadcast %cst_23 : f32 to vector<256x512xf32>
    %26 = arith.cmpf ogt, %24, %25 : vector<256x512xf32>
    %cst_24 = arith.constant 0.00999999977 : f32
    %27 = vector.broadcast %cst_24 : f32 to vector<256x512xf32>
    %28 = arith.mulf %27, %24 : vector<256x512xf32>
    %29 = arith.select %26, %24, %28 : vector<256x512xi1>, vector<256x512xf32>
    %30 = arith.truncf %29 : vector<256x512xf32> to vector<256x512xbf16>
    %cst_25 = arith.constant dense<0.000000e+00> : vector<256x512xf32>
    %31 = tpu.matmul %4, %30, %cst_25 {dimension_numbers = #tpu.dot_dimension_numbers<[1], [0], [0], [1], [0, 0, 1, 1], [], []>} : vector<256x256xbf16>, vector<256x512xbf16>, vector<256x512xf32> -> vector<256x512xf32>
    %32 = vector.broadcast %5 : vector<256x1xf32> to vector<256x512xf32>
    %33 = arith.addf %31, %32 : vector<256x512xf32>
    %cst_26 = arith.constant 0.000000e+00 : f32
    %34 = vector.broadcast %cst_26 : f32 to vector<256x512xf32>
    %35 = arith.cmpf ogt, %33, %34 : vector<256x512xf32>
    %cst_27 = arith.constant 0.00999999977 : f32
    %36 = vector.broadcast %cst_27 : f32 to vector<256x512xf32>
    %37 = arith.mulf %36, %33 : vector<256x512xf32>
    %38 = arith.select %35, %33, %37 : vector<256x512xi1>, vector<256x512xf32>
    %39 = arith.truncf %38 : vector<256x512xf32> to vector<256x512xbf16>
    %cst_28 = arith.constant dense<0.000000e+00> : vector<256x512xf32>
    %40 = tpu.matmul %6, %39, %cst_28 {dimension_numbers = #tpu.dot_dimension_numbers<[1], [0], [0], [1], [0, 0, 1, 1], [], []>} : vector<256x256xbf16>, vector<256x512xbf16>, vector<256x512xf32> -> vector<256x512xf32>
    %41 = vector.broadcast %7 : vector<256x1xf32> to vector<256x512xf32>
    %42 = arith.addf %40, %41 : vector<256x512xf32>
    %cst_29 = arith.constant 0.000000e+00 : f32
    %43 = vector.broadcast %cst_29 : f32 to vector<256x512xf32>
    %44 = arith.cmpf ogt, %42, %43 : vector<256x512xf32>
    %cst_30 = arith.constant 0.00999999977 : f32
    %45 = vector.broadcast %cst_30 : f32 to vector<256x512xf32>
    %46 = arith.mulf %45, %42 : vector<256x512xf32>
    %47 = arith.select %44, %42, %46 : vector<256x512xi1>, vector<256x512xf32>
    %48 = vector.broadcast %8 : vector<256x1xf32> to vector<256x512xf32>
    %49 = arith.mulf %48, %47 : vector<256x512xf32>
    %cst_31 = arith.constant dense<0.000000e+00> : vector<512xf32>
    %50 = vector.multi_reduction <add>, %49, %cst_31 [0] : vector<256x512xf32> to vector<512xf32>
    %51 = vector.shape_cast %50 : vector<512xf32> to vector<1x512xf32>
    %52 = vector.broadcast %9 : vector<1x1xf32> to vector<1x512xf32>
    %53 = arith.addf %51, %52 : vector<1x512xf32>
    %c0_32 = arith.constant 0 : index
    %c0_33 = arith.constant 0 : index
    %54 = vector.load %arg12[%c0_32, %c0_33] : memref<1x1024xf32, #tpu.memory_space<vmem>>, vector<1x512xf32>
    tpu.vector_store %arg12[%c0_32, %c0_33], %53 {strides = array<i32>} : memref<1x1024xf32, #tpu.memory_space<vmem>>, vector<1x512xf32>,
    %c0_34 = arith.constant 0 : index
    %c512 = arith.constant 512 : index
    %55 = vector.load %arg1[%c0_34, %c512] : memref<1x1024xf32, #tpu.memory_space<vmem>>, vector<1x512xf32>
    %56 = vector.broadcast %0 : vector<256x1xf32> to vector<256x512xf32>
    %57 = vector.broadcast %55 : vector<1x512xf32> to vector<256x512xf32>
    %58 = arith.mulf %56, %57 : vector<256x512xf32>
    %59 = vector.broadcast %1 : vector<256x1xf32> to vector<256x512xf32>
    %60 = arith.addf %58, %59 : vector<256x512xf32>
    %cst_35 = arith.constant 0.000000e+00 : f32
    %61 = vector.broadcast %cst_35 : f32 to vector<256x512xf32>
    %62 = arith.cmpf ogt, %60, %61 : vector<256x512xf32>
    %cst_36 = arith.constant 0.00999999977 : f32
    %63 = vector.broadcast %cst_36 : f32 to vector<256x512xf32>
    %64 = arith.mulf %63, %60 : vector<256x512xf32>
    %65 = arith.select %62, %60, %64 : vector<256x512xi1>, vector<256x512xf32>
    %66 = arith.truncf %65 : vector<256x512xf32> to vector<256x512xbf16>
    %cst_37 = arith.constant dense<0.000000e+00> : vector<256x512xf32>
    %67 = tpu.matmul %2, %66, %cst_37 {dimension_numbers = #tpu.dot_dimension_numbers<[1], [0], [0], [1], [0, 0, 1, 1], [], []>} : vector<256x256xbf16>, vector<256x512xbf16>, vector<256x512xf32> -> vector<256x512xf32>
    %68 = vector.broadcast %3 : vector<256x1xf32> to vector<256x512xf32>
    %69 = arith.addf %67, %68 : vector<256x512xf32>
    %cst_38 = arith.constant 0.000000e+00 : f32
    %70 = vector.broadcast %cst_38 : f32 to vector<256x512xf32>
    %71 = arith.cmpf ogt, %69, %70 : vector<256x512xf32>
    %cst_39 = arith.constant 0.00999999977 : f32
    %72 = vector.broadcast %cst_39 : f32 to vector<256x512xf32>
    %73 = arith.mulf %72, %69 : vector<256x512xf32>
    %74 = arith.select %71, %69, %73 : vector<256x512xi1>, vector<256x512xf32>
    %75 = arith.truncf %74 : vector<256x512xf32> to vector<256x512xbf16>
    %cst_40 = arith.constant dense<0.000000e+00> : vector<256x512xf32>
    %76 = tpu.matmul %4, %75, %cst_40 {dimension_numbers = #tpu.dot_dimension_numbers<[1], [0], [0], [1], [0, 0, 1, 1], [], []>} : vector<256x256xbf16>, vector<256x512xbf16>, vector<256x512xf32> -> vector<256x512xf32>
    %77 = vector.broadcast %5 : vector<256x1xf32> to vector<256x512xf32>
    %78 = arith.addf %76, %77 : vector<256x512xf32>
    %cst_41 = arith.constant 0.000000e+00 : f32
    %79 = vector.broadcast %cst_41 : f32 to vector<256x512xf32>
    %80 = arith.cmpf ogt, %78, %79 : vector<256x512xf32>
    %cst_42 = arith.constant 0.00999999977 : f32
    %81 = vector.broadcast %cst_42 : f32 to vector<256x512xf32>
    %82 = arith.mulf %81, %78 : vector<256x512xf32>
    %83 = arith.select %80, %78, %82 : vector<256x512xi1>, vector<256x512xf32>
    %84 = arith.truncf %83 : vector<256x512xf32> to vector<256x512xbf16>
    %cst_43 = arith.constant dense<0.000000e+00> : vector<256x512xf32>
    %85 = tpu.matmul %6, %84, %cst_43 {dimension_numbers = #tpu.dot_dimension_numbers<[1], [0], [0], [1], [0, 0, 1, 1], [], []>} : vector<256x256xbf16>, vector<256x512xbf16>, vector<256x512xf32> -> vector<256x512xf32>
    %86 = vector.broadcast %7 : vector<256x1xf32> to vector<256x512xf32>
    %87 = arith.addf %85, %86 : vector<256x512xf32>
    %cst_44 = arith.constant 0.000000e+00 : f32
    %88 = vector.broadcast %cst_44 : f32 to vector<256x512xf32>
    %89 = arith.cmpf ogt, %87, %88 : vector<256x512xf32>
    %cst_45 = arith.constant 0.00999999977 : f32
    %90 = vector.broadcast %cst_45 : f32 to vector<256x512xf32>
    %91 = arith.mulf %90, %87 : vector<256x512xf32>
    %92 = arith.select %89, %87, %91 : vector<256x512xi1>, vector<256x512xf32>
    %93 = vector.broadcast %8 : vector<256x1xf32> to vector<256x512xf32>
    %94 = arith.mulf %93, %92 : vector<256x512xf32>
    %cst_46 = arith.constant dense<0.000000e+00> : vector<512xf32>
    %95 = vector.multi_reduction <add>, %94, %cst_46 [0] : vector<256x512xf32> to vector<512xf32>
    %96 = vector.shape_cast %95 : vector<512xf32> to vector<1x512xf32>
    %97 = vector.broadcast %9 : vector<1x1xf32> to vector<1x512xf32>
    %98 = arith.addf %96, %97 : vector<1x512xf32>
    %c0_47 = arith.constant 0 : index
    %c512_48 = arith.constant 512 : index
    %99 = vector.load %arg12[%c0_47, %c512_48] : memref<1x1024xf32, #tpu.memory_space<vmem>>, vector<1x512xf32>
    tpu.vector_store %arg12[%c0_47, %c512_48], %98 {strides = array<i32>} : memref<1x1024xf32, #tpu.memory_space<vmem>>, vector<1x512xf32>,
    return
  }
  func.func @transform_0(%arg0: i32) -> (i32, i32) {
    %c0_i32 = arith.constant 0 : i32
    %c0_i32_0 = arith.constant 0 : i32
    return %c0_i32, %arg0 : i32, i32
  }
  func.func @transform_1(%arg0: i32) -> (i32, i32) {
    %c0_i32 = arith.constant 0 : i32
    %c0_i32_0 = arith.constant 0 : i32
    %c0_i32_1 = arith.constant 0 : i32
    return %c0_i32, %c0_i32_0 : i32, i32
  }
  func.func @transform_2(%arg0: i32) -> (i32, i32) {
    %c0_i32 = arith.constant 0 : i32
    %c0_i32_0 = arith.constant 0 : i32
    %c0_i32_1 = arith.constant 0 : i32
    return %c0_i32, %c0_i32_0 : i32, i32
  }
  func.func @transform_3(%arg0: i32) -> (i32, i32) {
    %c0_i32 = arith.constant 0 : i32
    %c0_i32_0 = arith.constant 0 : i32
    %c0_i32_1 = arith.constant 0 : i32
    return %c0_i32, %c0_i32_0 : i32, i32
  }
  func.func @transform_4(%arg0: i32) -> (i32, i32) {
    %c0_i32 = arith.constant 0 : i32
    %c0_i32_0 = arith.constant 0 : i32
    %c0_i32_1 = arith.constant 0 : i32
    return %c0_i32, %c0_i32_0 : i32, i32
  }
  func.func @transform_5(%arg0: i32) -> (i32, i32) {
    %c0_i32 = arith.constant 0 : i32
    %c0_i32_0 = arith.constant 0 : i32
    %c0_i32_1 = arith.constant 0 : i32
    return %c0_i32, %c0_i32_0 : i32, i32
  }
  func.func @transform_6(%arg0: i32) -> (i32, i32) {
    %c0_i32 = arith.constant 0 : i32
    %c0_i32_0 = arith.constant 0 : i32
    %c0_i32_1 = arith.constant 0 : i32
    return %c0_i32, %c0_i32_0 : i32, i32
  }
  func.func @transform_7(%arg0: i32) -> (i32, i32) {
    %c0_i32 = arith.constant 0 : i32
    %c0_i32_0 = arith.constant 0 : i32
    %c0_i32_1 = arith.constant 0 : i32
    return %c0_i32, %c0_i32_0 : i32, i32
  }
  func.func @transform_8(%arg0: i32) -> (i32, i32) {
    %c0_i32 = arith.constant 0 : i32
    %c0_i32_0 = arith.constant 0 : i32
    %c0_i32_1 = arith.constant 0 : i32
    return %c0_i32, %c0_i32_0 : i32, i32
  }
  func.func @transform_9(%arg0: i32) -> (i32, i32) {
    %c0_i32 = arith.constant 0 : i32
    %c0_i32_0 = arith.constant 0 : i32
    %c0_i32_1 = arith.constant 0 : i32
    return %c0_i32, %c0_i32_0 : i32, i32
  }
  func.func @transform_10(%arg0: i32) -> (i32, i32) {
    %c0_i32 = arith.constant 0 : i32
    %c0_i32_0 = arith.constant 0 : i32
    %c0_i32_1 = arith.constant 0 : i32
    return %c0_i32, %c0_i32_0 : i32, i32
  }
  func.func @transform_11(%arg0: i32) -> (i32, i32) {
    %c0_i32 = arith.constant 0 : i32
    %c0_i32_0 = arith.constant 0 : i32
    return %c0_i32, %arg0 : i32, i32
  }
}

</mosaic_0001>

<llo_original>
// kernel: tpu_custom_call.1
$region0: #{tpu_custom_call.1}
  #allocation0 [shape = 'u32[]', space=smem, size = 0x4, offset = 0x4, fixed_abs, tag = 'smem constant byte address 0x4 - core index']
  #allocation1 [shape = 'u32[144,128]{1,0:T(1,128)}', space=vmem, size = 0x12000, scoped, tag = 'internal scratch']
  #allocation2 [shape = 'f32[1,1]{1,0:T(1,128)S(1)}', space=vmem, size = 0x200, scoped, tag = 'scoped memory for tpu_custom_call.1']
  %s0 = inlined_call_operand.vmem [shape: f32[1,1024], index: 0, kind: input, shape index: {}]
  %s1 = inlined_call_operand.vmem [shape: f32[256,1], index: 1, kind: input, shape index: {}]
  %s2 = inlined_call_operand.vmem [shape: f32[256,1], index: 2, kind: input, shape index: {}]
  %s3 = inlined_call_operand.vmem [shape: bf16[256,256], index: 3, kind: input, shape index: {}]
  %s4 = inlined_call_operand.vmem [shape: f32[256,1], index: 4, kind: input, shape index: {}]
  %s5 = inlined_call_operand.vmem [shape: bf16[256,256], index: 5, kind: input, shape index: {}]
  %s6 = inlined_call_operand.vmem [shape: f32[256,1], index: 6, kind: input, shape index: {}]
  %s7 = inlined_call_operand.vmem [shape: bf16[256,256], index: 7, kind: input, shape index: {}]
  %s8 = inlined_call_operand.vmem [shape: f32[256,1], index: 8, kind: input, shape index: {}]
  %s9 = inlined_call_operand.vmem [shape: f32[256,1], index: 9, kind: input, shape index: {}]
  %s10 = inlined_call_operand.<no memory space> [shape: f32[1,1], index: 10, kind: input, shape index: {}]
  %s11 = inlined_call_operand.hbm [shape: f32[1,1024], index: 11, kind: output, shape index: {}]
  %s12 = sld [smem:[#allocation0]]
  $region54: #{tpu_custom_call.1} parent=0
    _
  %s14 = ssub.s32 1, %s12
  %s15 = scalar_select 0, %s14, %s12
  %v16 = vstv %s10
  %17 = vst [vmem:[#allocation2] sm:$0x1] %v16
  $region1: #{tpu_custom_call.1} parent=0
    #allocation3 [shape = 'u8[4096]{0}', space=vmem, size = 0x1000, scoped, tag = 'output window, operand 0, single buffered']
    #allocation4 [shape = 's32[1]{0}', space=sflag, size = 0x4, scoped, tag = 'scoped memory for tpu_custom_call.1']
    %18 = vsyncpa [#allocation4], 0
    // Predicated region
    $region2: #{tpu_custom_call.1} parent=1 // pred_check
      _
    $region3: #{tpu_custom_call.1} parent=1 // pred_check_branch
      %20 = sbr.rel (0) target = $region5
    $region4: #{tpu_custom_call.1} parent=1 // pred_region
      _
    $region5: #{tpu_custom_call.1} parent=1 // pred_fallthru
      _
    // Predicated region
    $region6: #{tpu_custom_call.1} parent=1 // pred_check
      _
    $region7: #{tpu_custom_call.1} parent=1 // pred_check_branch
      %22 = sbr.rel (0) target = $region9
    $region8: #{tpu_custom_call.1} parent=1 // pred_region
      _
    $region9: #{tpu_custom_call.1} parent=1 // pred_fallthru
      _
    // Predicated region
    $region10: #{tpu_custom_call.1} parent=1 // pred_check
      _
    $region11: #{tpu_custom_call.1} parent=1 // pred_check_branch
      %24 = sbr.rel (0) target = $region13
    $region12: #{tpu_custom_call.1} parent=1 // pred_region
      _
    $region13: #{tpu_custom_call.1} parent=1 // pred_fallthru
      _
    // Predicated region
    $region14: #{tpu_custom_call.1} parent=1 // pred_check
      _
    $region15: #{tpu_custom_call.1} parent=1 // pred_check_branch
      %26 = sbr.rel (0) target = $region17
    $region16: #{tpu_custom_call.1} parent=1 // pred_region
      _
    $region17: #{tpu_custom_call.1} parent=1 // pred_fallthru
      _
    // Predicated region
    $region18: #{tpu_custom_call.1} parent=1 // pred_check
      _
    $region19: #{tpu_custom_call.1} parent=1 // pred_check_branch
      %28 = sbr.rel (0) target = $region21
    $region20: #{tpu_custom_call.1} parent=1 // pred_region
      _
    $region21: #{tpu_custom_call.1} parent=1 // pred_fallthru
      _
    // Predicated region
    $region22: #{tpu_custom_call.1} parent=1 // pred_check
      _
    $region23: #{tpu_custom_call.1} parent=1 // pred_check_branch
      %30 = sbr.rel (0) target = $region25
    $region24: #{tpu_custom_call.1} parent=1 // pred_region
      _
    $region25: #{tpu_custom_call.1} parent=1 // pred_fallthru
      _
    // Predicated region
    $region26: #{tpu_custom_call.1} parent=1 // pred_check
      _
    $region27: #{tpu_custom_call.1} parent=1 // pred_check_branch
      %32 = sbr.rel (0) target = $region29
    $region28: #{tpu_custom_call.1} parent=1 // pred_region
      _
    $region29: #{tpu_custom_call.1} parent=1 // pred_fallthru
      _
    // Predicated region
    $region30: #{tpu_custom_call.1} parent=1 // pred_check
      _
    $region31: #{tpu_custom_call.1} parent=1 // pred_check_branch
      %34 = sbr.rel (0) target = $region33
    $region32: #{tpu_custom_call.1} parent=1 // pred_region
      _
    $region33: #{tpu_custom_call.1} parent=1 // pred_fallthru
      _
    // Predicated region
    $region34: #{tpu_custom_call.1} parent=1 // pred_check
      _
    $region35: #{tpu_custom_call.1} parent=1 // pred_check_branch
      %36 = sbr.rel (0) target = $region37
    $region36: #{tpu_custom_call.1} parent=1 // pred_region
      _
    $region37: #{tpu_custom_call.1} parent=1 // pred_fallthru
      _
    // Predicated region
    $region38: #{tpu_custom_call.1} parent=1 // pred_check
      _
    $region39: #{tpu_custom_call.1} parent=1 // pred_check_branch
      %38 = sbr.rel (0) target = $region41
    $region40: #{tpu_custom_call.1} parent=1 // pred_region
      _
    $region41: #{tpu_custom_call.1} parent=1 // pred_fallthru
      _
    // Predicated region
    $region42: #{tpu_custom_call.1} parent=1 // pred_check
      _
    $region43: #{tpu_custom_call.1} parent=1 // pred_check_branch
      %40 = sbr.rel (0) target = $region45
    $region44: #{tpu_custom_call.1} parent=1 // pred_region
      _
    $region45: #{tpu_custom_call.1} parent=1 // pred_fallthru
      _
    %v41 = vld [vmem:[%s1] sm:$0xff]
    %v42 = vld [vmem:[%s1 + $0x8] sm:$0xff]
    %v43 = vld [vmem:[%s1 + $0x10] sm:$0xff]
    %v44 = vld [vmem:[%s1 + $0x18] sm:$0xff]
    %v45 = vld [vmem:[%s1 + $0x20] sm:$0xff]
    %v46 = vld [vmem:[%s1 + $0x28] sm:$0xff]
    %v47 = vld [vmem:[%s1 + $0x30] sm:$0xff]
    %v48 = vld [vmem:[%s1 + $0x38] sm:$0xff]
    %v49 = vld [vmem:[%s1 + $0x40] sm:$0xff]
    %v50 = vld [vmem:[%s1 + $0x48] sm:$0xff]
    %v51 = vld [vmem:[%s1 + $0x50] sm:$0xff]
    %v52 = vld [vmem:[%s1 + $0x58] sm:$0xff]
    %v53 = vld [vmem:[%s1 + $0x60] sm:$0xff]
    %v54 = vld [vmem:[%s1 + $0x68] sm:$0xff]
    %v55 = vld [vmem:[%s1 + $0x70] sm:$0xff]
    %v56 = vld [vmem:[%s1 + $0x78] sm:$0xff]
    %v57 = vld [vmem:[%s1 + $0x80] sm:$0xff]
    %v58 = vld [vmem:[%s1 + $0x88] sm:$0xff]
    %v59 = vld [vmem:[%s1 + $0x90] sm:$0xff]
    %v60 = vld [vmem:[%s1 + $0x98] sm:$0xff]
    %v61 = vld [vmem:[%s1 + $0xa0] sm:$0xff]
    %v62 = vld [vmem:[%s1 + $0xa8] sm:$0xff]
    %v63 = vld [vmem:[%s1 + $0xb0] sm:$0xff]
    %v64 = vld [vmem:[%s1 + $0xb8] sm:$0xff]
    %v65 = vld [vmem:[%s1 + $0xc0] sm:$0xff]
    %v66 = vld [vmem:[%s1 + $0xc8] sm:$0xff]
    %v67 = vld [vmem:[%s1 + $0xd0] sm:$0xff]
    %v68 = vld [vmem:[%s1 + $0xd8] sm:$0xff]
    %v69 = vld [vmem:[%s1 + $0xe0] sm:$0xff]
    %v70 = vld [vmem:[%s1 + $0xe8] sm:$0xff]
    %v71 = vld [vmem:[%s1 + $0xf0] sm:$0xff]
    %v72 = vld [vmem:[%s1 + $0xf8] sm:$0xff]
    %v73 = vld [vmem:[%s2] sm:$0xff]
    %v74 = vld [vmem:[%s2 + $0x8] sm:$0xff]
    %v75 = vld [vmem:[%s2 + $0x10] sm:$0xff]
    %v76 = vld [vmem:[%s2 + $0x18] sm:$0xff]
    %v77 = vld [vmem:[%s2 + $0x20] sm:$0xff]
    %v78 = vld [vmem:[%s2 + $0x28] sm:$0xff]
    %v79 = vld [vmem:[%s2 + $0x30] sm:$0xff]
    %v80 = vld [vmem:[%s2 + $0x38] sm:$0xff]
    %v81 = vld [vmem:[%s2 + $0x40] sm:$0xff]
    %v82 = vld [vmem:[%s2 + $0x48] sm:$0xff]
    %v83 = vld [vmem:[%s2 + $0x50] sm:$0xff]
    %v84 = vld [vmem:[%s2 + $0x58] sm:$0xff]
    %v85 = vld [vmem:[%s2 + $0x60] sm:$0xff]
    %v86 = vld [vmem:[%s2 + $0x68] sm:$0xff]
    %v87 = vld [vmem:[%s2 + $0x70] sm:$0xff]
    %v88 = vld [vmem:[%s2 + $0x78] sm:$0xff]
    %v89 = vld [vmem:[%s2 + $0x80] sm:$0xff]
    %v90 = vld [vmem:[%s2 + $0x88] sm:$0xff]
    %v91 = vld [vmem:[%s2 + $0x90] sm:$0xff]
    %v92 = vld [vmem:[%s2 + $0x98] sm:$0xff]
    %v93 = vld [vmem:[%s2 + $0xa0] sm:$0xff]
    %v94 = vld [vmem:[%s2 + $0xa8] sm:$0xff]
    %v95 = vld [vmem:[%s2 + $0xb0] sm:$0xff]
    %v96 = vld [vmem:[%s2 + $0xb8] sm:$0xff]
    %v97 = vld [vmem:[%s2 + $0xc0] sm:$0xff]
    %v98 = vld [vmem:[%s2 + $0xc8] sm:$0xff]
    %v99 = vld [vmem:[%s2 + $0xd0] sm:$0xff]
    %v100 = vld [vmem:[%s2 + $0xd8] sm:$0xff]
    %v101 = vld [vmem:[%s2 + $0xe0] sm:$0xff]
    %v102 = vld [vmem:[%s2 + $0xe8] sm:$0xff]
    %v103 = vld [vmem:[%s2 + $0xf0] sm:$0xff]
    %v104 = vld [vmem:[%s2 + $0xf8] sm:$0xff]
    %v105 = vld [vmem:[%s3] sm:$0xff]
    %v106 = vld [vmem:[%s3 + $0x8] sm:$0xff]
    %v107 = vld [vmem:[%s3 + $0x10] sm:$0xff]
    %v108 = vld [vmem:[%s3 + $0x18] sm:$0xff]
    %v109 = vld [vmem:[%s3 + $0x20] sm:$0xff]
    %v110 = vld [vmem:[%s3 + $0x28] sm:$0xff]
    %v111 = vld [vmem:[%s3 + $0x30] sm:$0xff]
    %v112 = vld [vmem:[%s3 + $0x38] sm:$0xff]
    %v113 = vld [vmem:[%s3 + $0x40] sm:$0xff]
    %v114 = vld [vmem:[%s3 + $0x48] sm:$0xff]
    %v115 = vld [vmem:[%s3 + $0x50] sm:$0xff]
    %v116 = vld [vmem:[%s3 + $0x58] sm:$0xff]
    %v117 = vld [vmem:[%s3 + $0x60] sm:$0xff]
    %v118 = vld [vmem:[%s3 + $0x68] sm:$0xff]
    %v119 = vld [vmem:[%s3 + $0x70] sm:$0xff]
    %v120 = vld [vmem:[%s3 + $0x78] sm:$0xff]
    %v121 = vld [vmem:[%s3 + $0x80] sm:$0xff]
    %v122 = vld [vmem:[%s3 + $0x88] sm:$0xff]
    %v123 = vld [vmem:[%s3 + $0x90] sm:$0xff]
    %v124 = vld [vmem:[%s3 + $0x98] sm:$0xff]
    %v125 = vld [vmem:[%s3 + $0xa0] sm:$0xff]
    %v126 = vld [vmem:[%s3 + $0xa8] sm:$0xff]
    %v127 = vld [vmem:[%s3 + $0xb0] sm:$0xff]
    %v128 = vld [vmem:[%s3 + $0xb8] sm:$0xff]
    %v129 = vld [vmem:[%s3 + $0xc0] sm:$0xff]
    %v130 = vld [vmem:[%s3 + $0xc8] sm:$0xff]
    %v131 = vld [vmem:[%s3 + $0xd0] sm:$0xff]
    %v132 = vld [vmem:[%s3 + $0xd8] sm:$0xff]
    %v133 = vld [vmem:[%s3 + $0xe0] sm:$0xff]
    %v134 = vld [vmem:[%s3 + $0xe8] sm:$0xff]
    %v135 = vld [vmem:[%s3 + $0xf0] sm:$0xff]
    %v136 = vld [vmem:[%s3 + $0xf8] sm:$0xff]
    %v137 = vld [vmem:[%s4] sm:$0xff]
    %v138 = vld [vmem:[%s4 + $0x8] sm:$0xff]
    %v139 = vld [vmem:[%s4 + $0x10] sm:$0xff]
    %v140 = vld [vmem:[%s4 + $0x18] sm:$0xff]
    %v141 = vld [vmem:[%s4 + $0x20] sm:$0xff]
    %v142 = vld [vmem:[%s4 + $0x28] sm:$0xff]
    %v143 = vld [vmem:[%s4 + $0x30] sm:$0xff]
    %v144 = vld [vmem:[%s4 + $0x38] sm:$0xff]
    %v145 = vld [vmem:[%s4 + $0x40] sm:$0xff]
    %v146 = vld [vmem:[%s4 + $0x48] sm:$0xff]
    %v147 = vld [vmem:[%s4 + $0x50] sm:$0xff]
    %v148 = vld [vmem:[%s4 + $0x58] sm:$0xff]
    %v149 = vld [vmem:[%s4 + $0x60] sm:$0xff]
    %v150 = vld [vmem:[%s4 + $0x68] sm:$0xff]
    %v151 = vld [vmem:[%s4 + $0x70] sm:$0xff]
    %v152 = vld [vmem:[%s4 + $0x78] sm:$0xff]
    %v153 = vld [vmem:[%s4 + $0x80] sm:$0xff]
    %v154 = vld [vmem:[%s4 + $0x88] sm:$0xff]
    %v155 = vld [vmem:[%s4 + $0x90] sm:$0xff]
    %v156 = vld [vmem:[%s4 + $0x98] sm:$0xff]
    %v157 = vld [vmem:[%s4 + $0xa0] sm:$0xff]
    %v158 = vld [vmem:[%s4 + $0xa8] sm:$0xff]
    %v159 = vld [vmem:[%s4 + $0xb0] sm:$0xff]
    %v160 = vld [vmem:[%s4 + $0xb8] sm:$0xff]
    %v161 = vld [vmem:[%s4 + $0xc0] sm:$0xff]
    %v162 = vld [vmem:[%s4 + $0xc8] sm:$0xff]
    %v163 = vld [vmem:[%s4 + $0xd0] sm:$0xff]
    %v164 = vld [vmem:[%s4 + $0xd8] sm:$0xff]
    %v165 = vld [vmem:[%s4 + $0xe0] sm:$0xff]
    %v166 = vld [vmem:[%s4 + $0xe8] sm:$0xff]
    %v167 = vld [vmem:[%s4 + $0xf0] sm:$0xff]
    %v168 = vld [vmem:[%s4 + $0xf8] sm:$0xff]
    %v169 = vld [vmem:[%s5] sm:$0xff]
    %v170 = vld [vmem:[%s5 + $0x8] sm:$0xff]
    %v171 = vld [vmem:[%s5 + $0x10] sm:$0xff]
    %v172 = vld [vmem:[%s5 + $0x18] sm:$0xff]
    %v173 = vld [vmem:[%s5 + $0x20] sm:$0xff]
    %v174 = vld [vmem:[%s5 + $0x28] sm:$0xff]
    %v175 = vld [vmem:[%s5 + $0x30] sm:$0xff]
    %v176 = vld [vmem:[%s5 + $0x38] sm:$0xff]
    %v177 = vld [vmem:[%s5 + $0x40] sm:$0xff]
    %v178 = vld [vmem:[%s5 + $0x48] sm:$0xff]
    %v179 = vld [vmem:[%s5 + $0x50] sm:$0xff]
    %v180 = vld [vmem:[%s5 + $0x58] sm:$0xff]
    %v181 = vld [vmem:[%s5 + $0x60] sm:$0xff]
    %v182 = vld [vmem:[%s5 + $0x68] sm:$0xff]
    %v183 = vld [vmem:[%s5 + $0x70] sm:$0xff]
    %v184 = vld [vmem:[%s5 + $0x78] sm:$0xff]
    %v185 = vld [vmem:[%s5 + $0x80] sm:$0xff]
    %v186 = vld [vmem:[%s5 + $0x88] sm:$0xff]
    %v187 = vld [vmem:[%s5 + $0x90] sm:$0xff]
    %v188 = vld [vmem:[%s5 + $0x98] sm:$0xff]
    %v189 = vld [vmem:[%s5 + $0xa0] sm:$0xff]
    %v190 = vld [vmem:[%s5 + $0xa8] sm:$0xff]
    %v191 = vld [vmem:[%s5 + $0xb0] sm:$0xff]
    %v192 = vld [vmem:[%s5 + $0xb8] sm:$0xff]
    %v193 = vld [vmem:[%s5 + $0xc0] sm:$0xff]
    %v194 = vld [vmem:[%s5 + $0xc8] sm:$0xff]
    %v195 = vld [vmem:[%s5 + $0xd0] sm:$0xff]
    %v196 = vld [vmem:[%s5 + $0xd8] sm:$0xff]
    %v197 = vld [vmem:[%s5 + $0xe0] sm:$0xff]
    %v198 = vld [vmem:[%s5 + $0xe8] sm:$0xff]
    %v199 = vld [vmem:[%s5 + $0xf0] sm:$0xff]
    %v200 = vld [vmem:[%s5 + $0xf8] sm:$0xff]
    %v201 = vld [vmem:[%s6] sm:$0xff]
    %v202 = vld [vmem:[%s6 + $0x8] sm:$0xff]
    %v203 = vld [vmem:[%s6 + $0x10] sm:$0xff]
    %v204 = vld [vmem:[%s6 + $0x18] sm:$0xff]
    %v205 = vld [vmem:[%s6 + $0x20] sm:$0xff]
    %v206 = vld [vmem:[%s6 + $0x28] sm:$0xff]
    %v207 = vld [vmem:[%s6 + $0x30] sm:$0xff]
    %v208 = vld [vmem:[%s6 + $0x38] sm:$0xff]
    %v209 = vld [vmem:[%s6 + $0x40] sm:$0xff]
    %v210 = vld [vmem:[%s6 + $0x48] sm:$0xff]
    %v211 = vld [vmem:[%s6 + $0x50] sm:$0xff]
    %v212 = vld [vmem:[%s6 + $0x58] sm:$0xff]
    %v213 = vld [vmem:[%s6 + $0x60] sm:$0xff]
    %v214 = vld [vmem:[%s6 + $0x68] sm:$0xff]
    %v215 = vld [vmem:[%s6 + $0x70] sm:$0xff]
    %v216 = vld [vmem:[%s6 + $0x78] sm:$0xff]
    %v217 = vld [vmem:[%s6 + $0x80] sm:$0xff]
    %v218 = vld [vmem:[%s6 + $0x88] sm:$0xff]
    %v219 = vld [vmem:[%s6 + $0x90] sm:$0xff]
    %v220 = vld [vmem:[%s6 + $0x98] sm:$0xff]
    %v221 = vld [vmem:[%s6 + $0xa0] sm:$0xff]
    %v222 = vld [vmem:[%s6 + $0xa8] sm:$0xff]
    %v223 = vld [vmem:[%s6 + $0xb0] sm:$0xff]
    %v224 = vld [vmem:[%s6 + $0xb8] sm:$0xff]
    %v225 = vld [vmem:[%s6 + $0xc0] sm:$0xff]
    %v226 = vld [vmem:[%s6 + $0xc8] sm:$0xff]
    %v227 = vld [vmem:[%s6 + $0xd0] sm:$0xff]
    %v228 = vld [vmem:[%s6 + $0xd8] sm:$0xff]
    %v229 = vld [vmem:[%s6 + $0xe0] sm:$0xff]
    %v230 = vld [vmem:[%s6 + $0xe8] sm:$0xff]
    %v231 = vld [vmem:[%s6 + $0xf0] sm:$0xff]
    %v232 = vld [vmem:[%s6 + $0xf8] sm:$0xff]
    %v233 = vld [vmem:[%s7] sm:$0xff]
    %v234 = vld [vmem:[%s7 + $0x8] sm:$0xff]
    %v235 = vld [vmem:[%s7 + $0x10] sm:$0xff]
    %v236 = vld [vmem:[%s7 + $0x18] sm:$0xff]
    %v237 = vld [vmem:[%s7 + $0x20] sm:$0xff]
    %v238 = vld [vmem:[%s7 + $0x28] sm:$0xff]
    %v239 = vld [vmem:[%s7 + $0x30] sm:$0xff]
    %v240 = vld [vmem:[%s7 + $0x38] sm:$0xff]
    %v241 = vld [vmem:[%s7 + $0x40] sm:$0xff]
    %v242 = vld [vmem:[%s7 + $0x48] sm:$0xff]
    %v243 = vld [vmem:[%s7 + $0x50] sm:$0xff]
    %v244 = vld [vmem:[%s7 + $0x58] sm:$0xff]
    %v245 = vld [vmem:[%s7 + $0x60] sm:$0xff]
    %v246 = vld [vmem:[%s7 + $0x68] sm:$0xff]
    %v247 = vld [vmem:[%s7 + $0x70] sm:$0xff]
    %v248 = vld [vmem:[%s7 + $0x78] sm:$0xff]
    %v249 = vld [vmem:[%s7 + $0x80] sm:$0xff]
    %v250 = vld [vmem:[%s7 + $0x88] sm:$0xff]
    %v251 = vld [vmem:[%s7 + $0x90] sm:$0xff]
    %v252 = vld [vmem:[%s7 + $0x98] sm:$0xff]
    %v253 = vld [vmem:[%s7 + $0xa0] sm:$0xff]
    %v254 = vld [vmem:[%s7 + $0xa8] sm:$0xff]
    %v255 = vld [vmem:[%s7 + $0xb0] sm:$0xff]
    %v256 = vld [vmem:[%s7 + $0xb8] sm:$0xff]
    %v257 = vld [vmem:[%s7 + $0xc0] sm:$0xff]
    %v258 = vld [vmem:[%s7 + $0xc8] sm:$0xff]
    %v259 = vld [vmem:[%s7 + $0xd0] sm:$0xff]
    %v260 = vld [vmem:[%s7 + $0xd8] sm:$0xff]
    %v261 = vld [vmem:[%s7 + $0xe0] sm:$0xff]
    %v262 = vld [vmem:[%s7 + $0xe8] sm:$0xff]
    %v263 = vld [vmem:[%s7 + $0xf0] sm:$0xff]
    %v264 = vld [vmem:[%s7 + $0xf8] sm:$0xff]
    %v265 = vld [vmem:[%s8] sm:$0xff]
    %v266 = vld [vmem:[%s8 + $0x8] sm:$0xff]
    %v267 = vld [vmem:[%s8 + $0x10] sm:$0xff]
    %v268 = vld [vmem:[%s8 + $0x18] sm:$0xff]
    %v269 = vld [vmem:[%s8 + $0x20] sm:$0xff]
    %v270 = vld [vmem:[%s8 + $0x28] sm:$0xff]
    %v271 = vld [vmem:[%s8 + $0x30] sm:$0xff]
    %v272 = vld [vmem:[%s8 + $0x38] sm:$0xff]
    %v273 = vld [vmem:[%s8 + $0x40] sm:$0xff]
    %v274 = vld [vmem:[%s8 + $0x48] sm:$0xff]
    %v275 = vld [vmem:[%s8 + $0x50] sm:$0xff]
    %v276 = vld [vmem:[%s8 + $0x58] sm:$0xff]
    %v277 = vld [vmem:[%s8 + $0x60] sm:$0xff]
    %v278 = vld [vmem:[%s8 + $0x68] sm:$0xff]
    %v279 = vld [vmem:[%s8 + $0x70] sm:$0xff]
    %v280 = vld [vmem:[%s8 + $0x78] sm:$0xff]
    %v281 = vld [vmem:[%s8 + $0x80] sm:$0xff]
    %v282 = vld [vmem:[%s8 + $0x88] sm:$0xff]
    %v283 = vld [vmem:[%s8 + $0x90] sm:$0xff]
    %v284 = vld [vmem:[%s8 + $0x98] sm:$0xff]
    %v285 = vld [vmem:[%s8 + $0xa0] sm:$0xff]
    %v286 = vld [vmem:[%s8 + $0xa8] sm:$0xff]
    %v287 = vld [vmem:[%s8 + $0xb0] sm:$0xff]
    %v288 = vld [vmem:[%s8 + $0xb8] sm:$0xff]
    %v289 = vld [vmem:[%s8 + $0xc0] sm:$0xff]
    %v290 = vld [vmem:[%s8 + $0xc8] sm:$0xff]
    %v291 = vld [vmem:[%s8 + $0xd0] sm:$0xff]
    %v292 = vld [vmem:[%s8 + $0xd8] sm:$0xff]
    %v293 = vld [vmem:[%s8 + $0xe0] sm:$0xff]
    %v294 = vld [vmem:[%s8 + $0xe8] sm:$0xff]
    %v295 = vld [vmem:[%s8 + $0xf0] sm:$0xff]
    %v296 = vld [vmem:[%s8 + $0xf8] sm:$0xff]
    %v297 = vld [vmem:[%s9] sm:$0xff]
    %v298 = vld [vmem:[%s9 + $0x8] sm:$0xff]
    %v299 = vld [vmem:[%s9 + $0x10] sm:$0xff]
    %v300 = vld [vmem:[%s9 + $0x18] sm:$0xff]
    %v301 = vld [vmem:[%s9 + $0x20] sm:$0xff]
    %v302 = vld [vmem:[%s9 + $0x28] sm:$0xff]
    %v303 = vld [vmem:[%s9 + $0x30] sm:$0xff]
    %v304 = vld [vmem:[%s9 + $0x38] sm:$0xff]
    %v305 = vld [vmem:[%s9 + $0x40] sm:$0xff]
    %v306 = vld [vmem:[%s9 + $0x48] sm:$0xff]
    %v307 = vld [vmem:[%s9 + $0x50] sm:$0xff]
    %v308 = vld [vmem:[%s9 + $0x58] sm:$0xff]
    %v309 = vld [vmem:[%s9 + $0x60] sm:$0xff]
    %v310 = vld [vmem:[%s9 + $0x68] sm:$0xff]
    %v311 = vld [vmem:[%s9 + $0x70] sm:$0xff]
    %v312 = vld [vmem:[%s9 + $0x78] sm:$0xff]
    %v313 = vld [vmem:[%s9 + $0x80] sm:$0xff]
    %v314 = vld [vmem:[%s9 + $0x88] sm:$0xff]
    %v315 = vld [vmem:[%s9 + $0x90] sm:$0xff]
    %v316 = vld [vmem:[%s9 + $0x98] sm:$0xff]
    %v317 = vld [vmem:[%s9 + $0xa0] sm:$0xff]
    %v318 = vld [vmem:[%s9 + $0xa8] sm:$0xff]
    %v319 = vld [vmem:[%s9 + $0xb0] sm:$0xff]
    %v320 = vld [vmem:[%s9 + $0xb8] sm:$0xff]
    %v321 = vld [vmem:[%s9 + $0xc0] sm:$0xff]
    %v322 = vld [vmem:[%s9 + $0xc8] sm:$0xff]
    %v323 = vld [vmem:[%s9 + $0xd0] sm:$0xff]
    %v324 = vld [vmem:[%s9 + $0xd8] sm:$0xff]
    %v325 = vld [vmem:[%s9 + $0xe0] sm:$0xff]
    %v326 = vld [vmem:[%s9 + $0xe8] sm:$0xff]
    %v327 = vld [vmem:[%s9 + $0xf0] sm:$0xff]
    %v328 = vld [vmem:[%s9 + $0xf8] sm:$0xff]
    %v329 = vld [vmem:[#allocation2] sm:$0x1]
    %v330 = vld [vmem:[%s0] sm:$0xf]
    %332 = vset.pattern.permute.xlu0 0
    %333 = vperm.xlu0 %332, %v41
    %v334 = vpop.permute.xlu0 %333
    %337 = vset.pattern.permute.xlu0 0
    %338 = vperm.xlu0 %337, %v42
    %v339 = vpop.permute.xlu0 %338
    %342 = vset.pattern.permute.xlu0 0
    %343 = vperm.xlu0 %342, %v43
    %v344 = vpop.permute.xlu0 %343
    %347 = vset.pattern.permute.xlu0 0
    %348 = vperm.xlu0 %347, %v44
    %v349 = vpop.permute.xlu0 %348
    %352 = vset.pattern.permute.xlu0 0
    %353 = vperm.xlu0 %352, %v45
    %v354 = vpop.permute.xlu0 %353
    %357 = vset.pattern.permute.xlu0 0
    %358 = vperm.xlu0 %357, %v46
    %v359 = vpop.permute.xlu0 %358
    %362 = vset.pattern.permute.xlu0 0
    %363 = vperm.xlu0 %362, %v47
    %v364 = vpop.permute.xlu0 %363
    %367 = vset.pattern.permute.xlu0 0
    %368 = vperm.xlu0 %367, %v48
    %v369 = vpop.permute.xlu0 %368
    %372 = vset.pattern.permute.xlu0 0
    %373 = vperm.xlu0 %372, %v49
    %v374 = vpop.permute.xlu0 %373
    %377 = vset.pattern.permute.xlu0 0
    %378 = vperm.xlu0 %377, %v50
    %v379 = vpop.permute.xlu0 %378
    %382 = vset.pattern.permute.xlu0 0
    %383 = vperm.xlu0 %382, %v51
    %v384 = vpop.permute.xlu0 %383
    %387 = vset.pattern.permute.xlu0 0
    %388 = vperm.xlu0 %387, %v52
    %v389 = vpop.permute.xlu0 %388
    %392 = vset.pattern.permute.xlu0 0
    %393 = vperm.xlu0 %392, %v53
    %v394 = vpop.permute.xlu0 %393
    %397 = vset.pattern.permute.xlu0 0
    %398 = vperm.xlu0 %397, %v54
    %v399 = vpop.permute.xlu0 %398
    %402 = vset.pattern.permute.xlu0 0
    %403 = vperm.xlu0 %402, %v55
    %v404 = vpop.permute.xlu0 %403
    %407 = vset.pattern.permute.xlu0 0
    %408 = vperm.xlu0 %407, %v56
    %v409 = vpop.permute.xlu0 %408
    %412 = vset.pattern.permute.xlu0 0
    %413 = vperm.xlu0 %412, %v57
    %v414 = vpop.permute.xlu0 %413
    %417 = vset.pattern.permute.xlu0 0
    %418 = vperm.xlu0 %417, %v58
    %v419 = vpop.permute.xlu0 %418
    %422 = vset.pattern.permute.xlu0 0
    %423 = vperm.xlu0 %422, %v59
    %v424 = vpop.permute.xlu0 %423
    %427 = vset.pattern.permute.xlu0 0
    %428 = vperm.xlu0 %427, %v60
    %v429 = vpop.permute.xlu0 %428
    %432 = vset.pattern.permute.xlu0 0
    %433 = vperm.xlu0 %432, %v61
    %v434 = vpop.permute.xlu0 %433
    %437 = vset.pattern.permute.xlu0 0
    %438 = vperm.xlu0 %437, %v62
    %v439 = vpop.permute.xlu0 %438
    %442 = vset.pattern.permute.xlu0 0
    %443 = vperm.xlu0 %442, %v63
    %v444 = vpop.permute.xlu0 %443
    %447 = vset.pattern.permute.xlu0 0
    %448 = vperm.xlu0 %447, %v64
    %v449 = vpop.permute.xlu0 %448
    %452 = vset.pattern.permute.xlu0 0
    %453 = vperm.xlu0 %452, %v65
    %v454 = vpop.permute.xlu0 %453
    %457 = vset.pattern.permute.xlu0 0
    %458 = vperm.xlu0 %457, %v66
    %v459 = vpop.permute.xlu0 %458
    %462 = vset.pattern.permute.xlu0 0
    %463 = vperm.xlu0 %462, %v67
    %v464 = vpop.permute.xlu0 %463
    %467 = vset.pattern.permute.xlu0 0
    %468 = vperm.xlu0 %467, %v68
    %v469 = vpop.permute.xlu0 %468
    %472 = vset.pattern.permute.xlu0 0
    %473 = vperm.xlu0 %472, %v69
    %v474 = vpop.permute.xlu0 %473
    %477 = vset.pattern.permute.xlu0 0
    %478 = vperm.xlu0 %477, %v70
    %v479 = vpop.permute.xlu0 %478
    %482 = vset.pattern.permute.xlu0 0
    %483 = vperm.xlu0 %482, %v71
    %v484 = vpop.permute.xlu0 %483
    %487 = vset.pattern.permute.xlu0 0
    %488 = vperm.xlu0 %487, %v72
    %v489 = vpop.permute.xlu0 %488
    %v492 = vlaneseq
    %v493 = vshrl.u32 %v492, 7
    %v494 = vsub.s32 0, %v493
    %v495 = vrot.slane %v330, %v494
    %v496 = vlaneseq
    %v497 = vshrl.u32 %v496, 7
    %v498 = vsub.s32 1, %v497
    %v499 = vrot.slane %v330, %v498
    %v500 = vlaneseq
    %v501 = vshrl.u32 %v500, 7
    %v502 = vsub.s32 2, %v501
    %v503 = vrot.slane %v330, %v502
    %v504 = vlaneseq
    %v505 = vshrl.u32 %v504, 7
    %v506 = vsub.s32 3, %v505
    %v507 = vrot.slane %v330, %v506
    %v512 = vmul.f32 %v334, %v495
    %v513 = vmul.f32 %v334, %v499
    %v514 = vmul.f32 %v334, %v503
    %v515 = vmul.f32 %v334, %v507
    %v516 = vmul.f32 %v339, %v495
    %v517 = vmul.f32 %v339, %v499
    %v518 = vmul.f32 %v339, %v503
    %v519 = vmul.f32 %v339, %v507
    %v520 = vmul.f32 %v344, %v495
    %v521 = vmul.f32 %v344, %v499
    %v522 = vmul.f32 %v344, %v503
    %v523 = vmul.f32 %v344, %v507
    %v524 = vmul.f32 %v349, %v495
    %v525 = vmul.f32 %v349, %v499
    %v526 = vmul.f32 %v349, %v503
    %v527 = vmul.f32 %v349, %v507
    %v528 = vmul.f32 %v354, %v495
    %v529 = vmul.f32 %v354, %v499
    %v530 = vmul.f32 %v354, %v503
    %v531 = vmul.f32 %v354, %v507
    %v532 = vmul.f32 %v359, %v495
    %v533 = vmul.f32 %v359, %v499
    %v534 = vmul.f32 %v359, %v503
    %v535 = vmul.f32 %v359, %v507
    %v536 = vmul.f32 %v364, %v495
    %v537 = vmul.f32 %v364, %v499
    %v538 = vmul.f32 %v364, %v503
    %v539 = vmul.f32 %v364, %v507
    %v540 = vmul.f32 %v369, %v495
    %v541 = vmul.f32 %v369, %v499
    %v542 = vmul.f32 %v369, %v503
    %v543 = vmul.f32 %v369, %v507
    %v544 = vmul.f32 %v374, %v495
    %v545 = vmul.f32 %v374, %v499
    %v546 = vmul.f32 %v374, %v503
    %v547 = vmul.f32 %v374, %v507
    %v548 = vmul.f32 %v379, %v495
    %v549 = vmul.f32 %v379, %v499
    %v550 = vmul.f32 %v379, %v503
    %v551 = vmul.f32 %v379, %v507
    %v552 = vmul.f32 %v384, %v495
    %v553 = vmul.f32 %v384, %v499
    %v554 = vmul.f32 %v384, %v503
    %v555 = vmul.f32 %v384, %v507
    %v556 = vmul.f32 %v389, %v495
    %v557 = vmul.f32 %v389, %v499
    %v558 = vmul.f32 %v389, %v503
    %v559 = vmul.f32 %v389, %v507
    %v560 = vmul.f32 %v394, %v495
    %v561 = vmul.f32 %v394, %v499
    %v562 = vmul.f32 %v394, %v503
    %v563 = vmul.f32 %v394, %v507
    %v564 = vmul.f32 %v399, %v495
    %v565 = vmul.f32 %v399, %v499
    %v566 = vmul.f32 %v399, %v503
    %v567 = vmul.f32 %v399, %v507
    %v568 = vmul.f32 %v404, %v495
    %v569 = vmul.f32 %v404, %v499
    %v570 = vmul.f32 %v404, %v503
    %v571 = vmul.f32 %v404, %v507
    %v572 = vmul.f32 %v409, %v495
    %v573 = vmul.f32 %v409, %v499
    %v574 = vmul.f32 %v409, %v503
    %v575 = vmul.f32 %v409, %v507
    %v576 = vmul.f32 %v414, %v495
    %v577 = vmul.f32 %v414, %v499
    %v578 = vmul.f32 %v414, %v503
    %v579 = vmul.f32 %v414, %v507
    %v580 = vmul.f32 %v419, %v495
    %v581 = vmul.f32 %v419, %v499
    %v582 = vmul.f32 %v419, %v503
    %v583 = vmul.f32 %v419, %v507
    %v584 = vmul.f32 %v424, %v495
    %v585 = vmul.f32 %v424, %v499
    %v586 = vmul.f32 %v424, %v503
    %v587 = vmul.f32 %v424, %v507
    %v588 = vmul.f32 %v429, %v495
    %v589 = vmul.f32 %v429, %v499
    %v590 = vmul.f32 %v429, %v503
    %v591 = vmul.f32 %v429, %v507
    %v592 = vmul.f32 %v434, %v495
    %v593 = vmul.f32 %v434, %v499
    %v594 = vmul.f32 %v434, %v503
    %v595 = vmul.f32 %v434, %v507
    %v596 = vmul.f32 %v439, %v495
    %v597 = vmul.f32 %v439, %v499
    %v598 = vmul.f32 %v439, %v503
    %v599 = vmul.f32 %v439, %v507
    %v600 = vmul.f32 %v444, %v495
    %v601 = vmul.f32 %v444, %v499
    %v602 = vmul.f32 %v444, %v503
    %v603 = vmul.f32 %v444, %v507
    %v604 = vmul.f32 %v449, %v495
    %v605 = vmul.f32 %v449, %v499
    %v606 = vmul.f32 %v449, %v503
    %v607 = vmul.f32 %v449, %v507
    %v608 = vmul.f32 %v454, %v495
    %v609 = vmul.f32 %v454, %v499
    %v610 = vmul.f32 %v454, %v503
    %v611 = vmul.f32 %v454, %v507
    %v612 = vmul.f32 %v459, %v495
    %v613 = vmul.f32 %v459, %v499
    %v614 = vmul.f32 %v459, %v503
    %v615 = vmul.f32 %v459, %v507
    %v616 = vmul.f32 %v464, %v495
    %v617 = vmul.f32 %v464, %v499
    %v618 = vmul.f32 %v464, %v503
    %v619 = vmul.f32 %v464, %v507
    %v620 = vmul.f32 %v469, %v495
    %v621 = vmul.f32 %v469, %v499
    %v622 = vmul.f32 %v469, %v503
    %v623 = vmul.f32 %v469, %v507
    %v624 = vmul.f32 %v474, %v495
    %v625 = vmul.f32 %v474, %v499
    %v626 = vmul.f32 %v474, %v503
    %v627 = vmul.f32 %v474, %v507
    %v628 = vmul.f32 %v479, %v495
    %v629 = vmul.f32 %v479, %v499
    %v630 = vmul.f32 %v479, %v503
    %v631 = vmul.f32 %v479, %v507
    %v632 = vmul.f32 %v484, %v495
    %v633 = vmul.f32 %v484, %v499
    %v634 = vmul.f32 %v484, %v503
    %v635 = vmul.f32 %v484, %v507
    %v636 = vmul.f32 %v489, %v495
    %v637 = vmul.f32 %v489, %v499
    %v638 = vmul.f32 %v489, %v503
    %v639 = vmul.f32 %v489, %v507
    %641 = vset.pattern.permute.xlu0 0
    %642 = vperm.xlu0 %641, %v73
    %v643 = vpop.permute.xlu0 %642
    %646 = vset.pattern.permute.xlu0 0
    %647 = vperm.xlu0 %646, %v74
    %v648 = vpop.permute.xlu0 %647
    %651 = vset.pattern.permute.xlu0 0
    %652 = vperm.xlu0 %651, %v75
    %v653 = vpop.permute.xlu0 %652
    %656 = vset.pattern.permute.xlu0 0
    %657 = vperm.xlu0 %656, %v76
    %v658 = vpop.permute.xlu0 %657
    %661 = vset.pattern.permute.xlu0 0
    %662 = vperm.xlu0 %661, %v77
    %v663 = vpop.permute.xlu0 %662
    %666 = vset.pattern.permute.xlu0 0
    %667 = vperm.xlu0 %666, %v78
    %v668 = vpop.permute.xlu0 %667
    %671 = vset.pattern.permute.xlu0 0
    %672 = vperm.xlu0 %671, %v79
    %v673 = vpop.permute.xlu0 %672
    %676 = vset.pattern.permute.xlu0 0
    %677 = vperm.xlu0 %676, %v80
    %v678 = vpop.permute.xlu0 %677
    %681 = vset.pattern.permute.xlu0 0
    %682 = vperm.xlu0 %681, %v81
    %v683 = vpop.permute.xlu0 %682
    %686 = vset.pattern.permute.xlu0 0
    %687 = vperm.xlu0 %686, %v82
    %v688 = vpop.permute.xlu0 %687
    %691 = vset.pattern.permute.xlu0 0
    %692 = vperm.xlu0 %691, %v83
    %v693 = vpop.permute.xlu0 %692
    %696 = vset.pattern.permute.xlu0 0
    %697 = vperm.xlu0 %696, %v84
    %v698 = vpop.permute.xlu0 %697
    %701 = vset.pattern.permute.xlu0 0
    %702 = vperm.xlu0 %701, %v85
    %v703 = vpop.permute.xlu0 %702
    %706 = vset.pattern.permute.xlu0 0
    %707 = vperm.xlu0 %706, %v86
    %v708 = vpop.permute.xlu0 %707
    %711 = vset.pattern.permute.xlu0 0
    %712 = vperm.xlu0 %711, %v87
    %v713 = vpop.permute.xlu0 %712
    %716 = vset.pattern.permute.xlu0 0
    %717 = vperm.xlu0 %716, %v88
    %v718 = vpop.permute.xlu0 %717
    %721 = vset.pattern.permute.xlu0 0
    %722 = vperm.xlu0 %721, %v89
    %v723 = vpop.permute.xlu0 %722
    %726 = vset.pattern.permute.xlu0 0
    %727 = vperm.xlu0 %726, %v90
    %v728 = vpop.permute.xlu0 %727
    %731 = vset.pattern.permute.xlu0 0
    %732 = vperm.xlu0 %731, %v91
    %v733 = vpop.permute.xlu0 %732
    %736 = vset.pattern.permute.xlu0 0
    %737 = vperm.xlu0 %736, %v92
    %v738 = vpop.permute.xlu0 %737
    %741 = vset.pattern.permute.xlu0 0
    %742 = vperm.xlu0 %741, %v93
    %v743 = vpop.permute.xlu0 %742
    %746 = vset.pattern.permute.xlu0 0
    %747 = vperm.xlu0 %746, %v94
    %v748 = vpop.permute.xlu0 %747
    %751 = vset.pattern.permute.xlu0 0
    %752 = vperm.xlu0 %751, %v95
    %v753 = vpop.permute.xlu0 %752
    %756 = vset.pattern.permute.xlu0 0
    %757 = vperm.xlu0 %756, %v96
    %v758 = vpop.permute.xlu0 %757
    %761 = vset.pattern.permute.xlu0 0
    %762 = vperm.xlu0 %761, %v97
    %v763 = vpop.permute.xlu0 %762
    %766 = vset.pattern.permute.xlu0 0
    %767 = vperm.xlu0 %766, %v98
    %v768 = vpop.permute.xlu0 %767
    %771 = vset.pattern.permute.xlu0 0
    %772 = vperm.xlu0 %771, %v99
    %v773 = vpop.permute.xlu0 %772
    %776 = vset.pattern.permute.xlu0 0
    %777 = vperm.xlu0 %776, %v100
    %v778 = vpop.permute.xlu0 %777
    %781 = vset.pattern.permute.xlu0 0
    %782 = vperm.xlu0 %781, %v101
    %v783 = vpop.permute.xlu0 %782
    %786 = vset.pattern.permute.xlu0 0
    %787 = vperm.xlu0 %786, %v102
    %v788 = vpop.permute.xlu0 %787
    %791 = vset.pattern.permute.xlu0 0
    %792 = vperm.xlu0 %791, %v103
    %v793 = vpop.permute.xlu0 %792
    %796 = vset.pattern.permute.xlu0 0
    %797 = vperm.xlu0 %796, %v104
    %v798 = vpop.permute.xlu0 %797
    %v800 = vadd.f32 %v512, %v643
    %v801 = vadd.f32 %v513, %v643
    %v802 = vadd.f32 %v514, %v643
    %v803 = vadd.f32 %v515, %v643
    %v804 = vadd.f32 %v516, %v648
    %v805 = vadd.f32 %v517, %v648
    %v806 = vadd.f32 %v518, %v648
    %v807 = vadd.f32 %v519, %v648
    %v808 = vadd.f32 %v520, %v653
    %v809 = vadd.f32 %v521, %v653
    %v810 = vadd.f32 %v522, %v653
    %v811 = vadd.f32 %v523, %v653
    %v812 = vadd.f32 %v524, %v658
    %v813 = vadd.f32 %v525, %v658
    %v814 = vadd.f32 %v526, %v658
    %v815 = vadd.f32 %v527, %v658
    %v816 = vadd.f32 %v528, %v663
    %v817 = vadd.f32 %v529, %v663
    %v818 = vadd.f32 %v530, %v663
    %v819 = vadd.f32 %v531, %v663
    %v820 = vadd.f32 %v532, %v668
    %v821 = vadd.f32 %v533, %v668
    %v822 = vadd.f32 %v534, %v668
    %v823 = vadd.f32 %v535, %v668
    %v824 = vadd.f32 %v536, %v673
    %v825 = vadd.f32 %v537, %v673
    %v826 = vadd.f32 %v538, %v673
    %v827 = vadd.f32 %v539, %v673
    %v828 = vadd.f32 %v540, %v678
    %v829 = vadd.f32 %v541, %v678
    %v830 = vadd.f32 %v542, %v678
    %v831 = vadd.f32 %v543, %v678
    %v832 = vadd.f32 %v544, %v683
    %v833 = vadd.f32 %v545, %v683
    %v834 = vadd.f32 %v546, %v683
    %v835 = vadd.f32 %v547, %v683
    %v836 = vadd.f32 %v548, %v688
    %v837 = vadd.f32 %v549, %v688
    %v838 = vadd.f32 %v550, %v688
    %v839 = vadd.f32 %v551, %v688
    %v840 = vadd.f32 %v552, %v693
    %v841 = vadd.f32 %v553, %v693
    %v842 = vadd.f32 %v554, %v693
    %v843 = vadd.f32 %v555, %v693
    %v844 = vadd.f32 %v556, %v698
    %v845 = vadd.f32 %v557, %v698
    %v846 = vadd.f32 %v558, %v698
    %v847 = vadd.f32 %v559, %v698
    %v848 = vadd.f32 %v560, %v703
    %v849 = vadd.f32 %v561, %v703
    %v850 = vadd.f32 %v562, %v703
    %v851 = vadd.f32 %v563, %v703
    %v852 = vadd.f32 %v564, %v708
    %v853 = vadd.f32 %v565, %v708
    %v854 = vadd.f32 %v566, %v708
    %v855 = vadd.f32 %v567, %v708
    %v856 = vadd.f32 %v568, %v713
    %v857 = vadd.f32 %v569, %v713
    %v858 = vadd.f32 %v570, %v713
    %v859 = vadd.f32 %v571, %v713
    %v860 = vadd.f32 %v572, %v718
    %v861 = vadd.f32 %v573, %v718
    %v862 = vadd.f32 %v574, %v718
    %v863 = vadd.f32 %v575, %v718
    %v864 = vadd.f32 %v576, %v723
    %v865 = vadd.f32 %v577, %v723
    %v866 = vadd.f32 %v578, %v723
    %v867 = vadd.f32 %v579, %v723
    %v868 = vadd.f32 %v580, %v728
    %v869 = vadd.f32 %v581, %v728
    %v870 = vadd.f32 %v582, %v728
    %v871 = vadd.f32 %v583, %v728
    %v872 = vadd.f32 %v584, %v733
    %v873 = vadd.f32 %v585, %v733
    %v874 = vadd.f32 %v586, %v733
    %v875 = vadd.f32 %v587, %v733
    %v876 = vadd.f32 %v588, %v738
    %v877 = vadd.f32 %v589, %v738
    %v878 = vadd.f32 %v590, %v738
    %v879 = vadd.f32 %v591, %v738
    %v880 = vadd.f32 %v592, %v743
    %v881 = vadd.f32 %v593, %v743
    %v882 = vadd.f32 %v594, %v743
    %v883 = vadd.f32 %v595, %v743
    %v884 = vadd.f32 %v596, %v748
    %v885 = vadd.f32 %v597, %v748
    %v886 = vadd.f32 %v598, %v748
    %v887 = vadd.f32 %v599, %v748
    %v888 = vadd.f32 %v600, %v753
    %v889 = vadd.f32 %v601, %v753
    %v890 = vadd.f32 %v602, %v753
    %v891 = vadd.f32 %v603, %v753
    %v892 = vadd.f32 %v604, %v758
    %v893 = vadd.f32 %v605, %v758
    %v894 = vadd.f32 %v606, %v758
    %v895 = vadd.f32 %v607, %v758
    %v896 = vadd.f32 %v608, %v763
    %v897 = vadd.f32 %v609, %v763
    %v898 = vadd.f32 %v610, %v763
    %v899 = vadd.f32 %v611, %v763
    %v900 = vadd.f32 %v612, %v768
    %v901 = vadd.f32 %v613, %v768
    %v902 = vadd.f32 %v614, %v768
    %v903 = vadd.f32 %v615, %v768
    %v904 = vadd.f32 %v616, %v773
    %v905 = vadd.f32 %v617, %v773
    %v906 = vadd.f32 %v618, %v773
    %v907 = vadd.f32 %v619, %v773
    %v908 = vadd.f32 %v620, %v778
    %v909 = vadd.f32 %v621, %v778
    %v910 = vadd.f32 %v622, %v778
    %v911 = vadd.f32 %v623, %v778
    %v912 = vadd.f32 %v624, %v783
    %v913 = vadd.f32 %v625, %v783
    %v914 = vadd.f32 %v626, %v783
    %v915 = vadd.f32 %v627, %v783
    %v916 = vadd.f32 %v628, %v788
    %v917 = vadd.f32 %v629, %v788
    %v918 = vadd.f32 %v630, %v788
    %v919 = vadd.f32 %v631, %v788
    %v920 = vadd.f32 %v632, %v793
    %v921 = vadd.f32 %v633, %v793
    %v922 = vadd.f32 %v634, %v793
    %v923 = vadd.f32 %v635, %v793
    %v924 = vadd.f32 %v636, %v798
    %v925 = vadd.f32 %v637, %v798
    %v926 = vadd.f32 %v638, %v798
    %v927 = vadd.f32 %v639, %v798
    %vm928 = vcmp.gt.f32.partialorder %v800, 0.0
    %vm929 = vcmp.gt.f32.partialorder %v801, 0.0
    %vm930 = vcmp.gt.f32.partialorder %v802, 0.0
    %vm931 = vcmp.gt.f32.partialorder %v803, 0.0
    %vm932 = vcmp.gt.f32.partialorder %v804, 0.0
    %vm933 = vcmp.gt.f32.partialorder %v805, 0.0
    %vm934 = vcmp.gt.f32.partialorder %v806, 0.0
    %vm935 = vcmp.gt.f32.partialorder %v807, 0.0
    %vm936 = vcmp.gt.f32.partialorder %v808, 0.0
    %vm937 = vcmp.gt.f32.partialorder %v809, 0.0
    %vm938 = vcmp.gt.f32.partialorder %v810, 0.0
    %vm939 = vcmp.gt.f32.partialorder %v811, 0.0
    %vm940 = vcmp.gt.f32.partialorder %v812, 0.0
    %vm941 = vcmp.gt.f32.partialorder %v813, 0.0
    %vm942 = vcmp.gt.f32.partialorder %v814, 0.0
    %vm943 = vcmp.gt.f32.partialorder %v815, 0.0
    %vm944 = vcmp.gt.f32.partialorder %v816, 0.0
    %vm945 = vcmp.gt.f32.partialorder %v817, 0.0
    %vm946 = vcmp.gt.f32.partialorder %v818, 0.0
    %vm947 = vcmp.gt.f32.partialorder %v819, 0.0
    %vm948 = vcmp.gt.f32.partialorder %v820, 0.0
    %vm949 = vcmp.gt.f32.partialorder %v821, 0.0
    %vm950 = vcmp.gt.f32.partialorder %v822, 0.0
    %vm951 = vcmp.gt.f32.partialorder %v823, 0.0
    %vm952 = vcmp.gt.f32.partialorder %v824, 0.0
    %vm953 = vcmp.gt.f32.partialorder %v825, 0.0
    %vm954 = vcmp.gt.f32.partialorder %v826, 0.0
    %vm955 = vcmp.gt.f32.partialorder %v827, 0.0
    %vm956 = vcmp.gt.f32.partialorder %v828, 0.0
    %vm957 = vcmp.gt.f32.partialorder %v829, 0.0
    %vm958 = vcmp.gt.f32.partialorder %v830, 0.0
    %vm959 = vcmp.gt.f32.partialorder %v831, 0.0
    %vm960 = vcmp.gt.f32.partialorder %v832, 0.0
    %vm961 = vcmp.gt.f32.partialorder %v833, 0.0
    %vm962 = vcmp.gt.f32.partialorder %v834, 0.0
    %vm963 = vcmp.gt.f32.partialorder %v835, 0.0
    %vm964 = vcmp.gt.f32.partialorder %v836, 0.0
    %vm965 = vcmp.gt.f32.partialorder %v837, 0.0
    %vm966 = vcmp.gt.f32.partialorder %v838, 0.0
    %vm967 = vcmp.gt.f32.partialorder %v839, 0.0
    %vm968 = vcmp.gt.f32.partialorder %v840, 0.0
    %vm969 = vcmp.gt.f32.partialorder %v841, 0.0
    %vm970 = vcmp.gt.f32.partialorder %v842, 0.0
    %vm971 = vcmp.gt.f32.partialorder %v843, 0.0
    %vm972 = vcmp.gt.f32.partialorder %v844, 0.0
    %vm973 = vcmp.gt.f32.partialorder %v845, 0.0
    %vm974 = vcmp.gt.f32.partialorder %v846, 0.0
    %vm975 = vcmp.gt.f32.partialorder %v847, 0.0
    %vm976 = vcmp.gt.f32.partialorder %v848, 0.0
    %vm977 = vcmp.gt.f32.partialorder %v849, 0.0
    %vm978 = vcmp.gt.f32.partialorder %v850, 0.0
    %vm979 = vcmp.gt.f32.partialorder %v851, 0.0
    %vm980 = vcmp.gt.f32.partialorder %v852, 0.0
    %vm981 = vcmp.gt.f32.partialorder %v853, 0.0
    %vm982 = vcmp.gt.f32.partialorder %v854, 0.0
    %vm983 = vcmp.gt.f32.partialorder %v855, 0.0
    %vm984 = vcmp.gt.f32.partialorder %v856, 0.0
    %vm985 = vcmp.gt.f32.partialorder %v857, 0.0
    %vm986 = vcmp.gt.f32.partialorder %v858, 0.0
    %vm987 = vcmp.gt.f32.partialorder %v859, 0.0
    %vm988 = vcmp.gt.f32.partialorder %v860, 0.0
    %vm989 = vcmp.gt.f32.partialorder %v861, 0.0
    %vm990 = vcmp.gt.f32.partialorder %v862, 0.0
    %vm991 = vcmp.gt.f32.partialorder %v863, 0.0
    %vm992 = vcmp.gt.f32.partialorder %v864, 0.0
    %vm993 = vcmp.gt.f32.partialorder %v865, 0.0
    %vm994 = vcmp.gt.f32.partialorder %v866, 0.0
    %vm995 = vcmp.gt.f32.partialorder %v867, 0.0
    %vm996 = vcmp.gt.f32.partialorder %v868, 0.0
    %vm997 = vcmp.gt.f32.partialorder %v869, 0.0
    %vm998 = vcmp.gt.f32.partialorder %v870, 0.0
    %vm999 = vcmp.gt.f32.partialorder %v871, 0.0
    %vm1000 = vcmp.gt.f32.partialorder %v872, 0.0
    %vm1001 = vcmp.gt.f32.partialorder %v873, 0.0
    %vm1002 = vcmp.gt.f32.partialorder %v874, 0.0
    %vm1003 = vcmp.gt.f32.partialorder %v875, 0.0
    %vm1004 = vcmp.gt.f32.partialorder %v876, 0.0
    %vm1005 = vcmp.gt.f32.partialorder %v877, 0.0
    %vm1006 = vcmp.gt.f32.partialorder %v878, 0.0
    %vm1007 = vcmp.gt.f32.partialorder %v879, 0.0
    %vm1008 = vcmp.gt.f32.partialorder %v880, 0.0
    %vm1009 = vcmp.gt.f32.partialorder %v881, 0.0
    %vm1010 = vcmp.gt.f32.partialorder %v882, 0.0
    %vm1011 = vcmp.gt.f32.partialorder %v883, 0.0
    %vm1012 = vcmp.gt.f32.partialorder %v884, 0.0
    %vm1013 = vcmp.gt.f32.partialorder %v885, 0.0
    %vm1014 = vcmp.gt.f32.partialorder %v886, 0.0
    %vm1015 = vcmp.gt.f32.partialorder %v887, 0.0
    %vm1016 = vcmp.gt.f32.partialorder %v888, 0.0
    %vm1017 = vcmp.gt.f32.partialorder %v889, 0.0
    %vm1018 = vcmp.gt.f32.partialorder %v890, 0.0
    %vm1019 = vcmp.gt.f32.partialorder %v891, 0.0
    %vm1020 = vcmp.gt.f32.partialorder %v892, 0.0
    %vm1021 = vcmp.gt.f32.partialorder %v893, 0.0
    %vm1022 = vcmp.gt.f32.partialorder %v894, 0.0
    %vm1023 = vcmp.gt.f32.partialorder %v895, 0.0
    %vm1024 = vcmp.gt.f32.partialorder %v896, 0.0
    %vm1025 = vcmp.gt.f32.partialorder %v897, 0.0
    %vm1026 = vcmp.gt.f32.partialorder %v898, 0.0
    %vm1027 = vcmp.gt.f32.partialorder %v899, 0.0
    %vm1028 = vcmp.gt.f32.partialorder %v900, 0.0
    %vm1029 = vcmp.gt.f32.partialorder %v901, 0.0
    %vm1030 = vcmp.gt.f32.partialorder %v902, 0.0
    %vm1031 = vcmp.gt.f32.partialorder %v903, 0.0
    %vm1032 = vcmp.gt.f32.partialorder %v904, 0.0
    %vm1033 = vcmp.gt.f32.partialorder %v905, 0.0
    %vm1034 = vcmp.gt.f32.partialorder %v906, 0.0
    %vm1035 = vcmp.gt.f32.partialorder %v907, 0.0
    %vm1036 = vcmp.gt.f32.partialorder %v908, 0.0
    %vm1037 = vcmp.gt.f32.partialorder %v909, 0.0
    %vm1038 = vcmp.gt.f32.partialorder %v910, 0.0
    %vm1039 = vcmp.gt.f32.partialorder %v911, 0.0
    %vm1040 = vcmp.gt.f32.partialorder %v912, 0.0
    %vm1041 = vcmp.gt.f32.partialorder %v913, 0.0
    %vm1042 = vcmp.gt.f32.partialorder %v914, 0.0
    %vm1043 = vcmp.gt.f32.partialorder %v915, 0.0
    %vm1044 = vcmp.gt.f32.partialorder %v916, 0.0
    %vm1045 = vcmp.gt.f32.partialorder %v917, 0.0
    %vm1046 = vcmp.gt.f32.partialorder %v918, 0.0
    %vm1047 = vcmp.gt.f32.partialorder %v919, 0.0
    %vm1048 = vcmp.gt.f32.partialorder %v920, 0.0
    %vm1049 = vcmp.gt.f32.partialorder %v921, 0.0
    %vm1050 = vcmp.gt.f32.partialorder %v922, 0.0
    %vm1051 = vcmp.gt.f32.partialorder %v923, 0.0
    %vm1052 = vcmp.gt.f32.partialorder %v924, 0.0
    %vm1053 = vcmp.gt.f32.partialorder %v925, 0.0
    %vm1054 = vcmp.gt.f32.partialorder %v926, 0.0
    %vm1055 = vcmp.gt.f32.partialorder %v927, 0.0
    %v1056 = vmul.f32 %v800, 0.01
    %v1057 = vmul.f32 %v801, 0.01
    %v1058 = vmul.f32 %v802, 0.01
    %v1059 = vmul.f32 %v803, 0.01
    %v1060 = vmul.f32 %v804, 0.01
    %v1061 = vmul.f32 %v805, 0.01
    %v1062 = vmul.f32 %v806, 0.01
    %v1063 = vmul.f32 %v807, 0.01
    %v1064 = vmul.f32 %v808, 0.01
    %v1065 = vmul.f32 %v809, 0.01
    %v1066 = vmul.f32 %v810, 0.01
    %v1067 = vmul.f32 %v811, 0.01
    %v1068 = vmul.f32 %v812, 0.01
    %v1069 = vmul.f32 %v813, 0.01
    %v1070 = vmul.f32 %v814, 0.01
    %v1071 = vmul.f32 %v815, 0.01
    %v1072 = vmul.f32 %v816, 0.01
    %v1073 = vmul.f32 %v817, 0.01
    %v1074 = vmul.f32 %v818, 0.01
    %v1075 = vmul.f32 %v819, 0.01
    %v1076 = vmul.f32 %v820, 0.01
    %v1077 = vmul.f32 %v821, 0.01
    %v1078 = vmul.f32 %v822, 0.01
    %v1079 = vmul.f32 %v823, 0.01
    %v1080 = vmul.f32 %v824, 0.01
    %v1081 = vmul.f32 %v825, 0.01
    %v1082 = vmul.f32 %v826, 0.01
    %v1083 = vmul.f32 %v827, 0.01
    %v1084 = vmul.f32 %v828, 0.01
    %v1085 = vmul.f32 %v829, 0.01
    %v1086 = vmul.f32 %v830, 0.01
    %v1087 = vmul.f32 %v831, 0.01
    %v1088 = vmul.f32 %v832, 0.01
    %v1089 = vmul.f32 %v833, 0.01
    %v1090 = vmul.f32 %v834, 0.01
    %v1091 = vmul.f32 %v835, 0.01
    %v1092 = vmul.f32 %v836, 0.01
    %v1093 = vmul.f32 %v837, 0.01
    %v1094 = vmul.f32 %v838, 0.01
    %v1095 = vmul.f32 %v839, 0.01
    %v1096 = vmul.f32 %v840, 0.01
    %v1097 = vmul.f32 %v841, 0.01
    %v1098 = vmul.f32 %v842, 0.01
    %v1099 = vmul.f32 %v843, 0.01
    %v1100 = vmul.f32 %v844, 0.01
    %v1101 = vmul.f32 %v845, 0.01
    %v1102 = vmul.f32 %v846, 0.01
    %v1103 = vmul.f32 %v847, 0.01
    %v1104 = vmul.f32 %v848, 0.01
    %v1105 = vmul.f32 %v849, 0.01
    %v1106 = vmul.f32 %v850, 0.01
    %v1107 = vmul.f32 %v851, 0.01
    %v1108 = vmul.f32 %v852, 0.01
    %v1109 = vmul.f32 %v853, 0.01
    %v1110 = vmul.f32 %v854, 0.01
    %v1111 = vmul.f32 %v855, 0.01
    %v1112 = vmul.f32 %v856, 0.01
    %v1113 = vmul.f32 %v857, 0.01
    %v1114 = vmul.f32 %v858, 0.01
    %v1115 = vmul.f32 %v859, 0.01
    %v1116 = vmul.f32 %v860, 0.01
    %v1117 = vmul.f32 %v861, 0.01
    %v1118 = vmul.f32 %v862, 0.01
    %v1119 = vmul.f32 %v863, 0.01
    %v1120 = vmul.f32 %v864, 0.01
    %v1121 = vmul.f32 %v865, 0.01
    %v1122 = vmul.f32 %v866, 0.01
    %v1123 = vmul.f32 %v867, 0.01
    %v1124 = vmul.f32 %v868, 0.01
    %v1125 = vmul.f32 %v869, 0.01
    %v1126 = vmul.f32 %v870, 0.01
    %v1127 = vmul.f32 %v871, 0.01
    %v1128 = vmul.f32 %v872, 0.01
    %v1129 = vmul.f32 %v873, 0.01
    %v1130 = vmul.f32 %v874, 0.01
    %v1131 = vmul.f32 %v875, 0.01
    %v1132 = vmul.f32 %v876, 0.01
    %v1133 = vmul.f32 %v877, 0.01
    %v1134 = vmul.f32 %v878, 0.01
    %v1135 = vmul.f32 %v879, 0.01
    %v1136 = vmul.f32 %v880, 0.01
    %v1137 = vmul.f32 %v881, 0.01
    %v1138 = vmul.f32 %v882, 0.01
    %v1139 = vmul.f32 %v883, 0.01
    %v1140 = vmul.f32 %v884, 0.01
    %v1141 = vmul.f32 %v885, 0.01
    %v1142 = vmul.f32 %v886, 0.01
    %v1143 = vmul.f32 %v887, 0.01
    %v1144 = vmul.f32 %v888, 0.01
    %v1145 = vmul.f32 %v889, 0.01
    %v1146 = vmul.f32 %v890, 0.01
    %v1147 = vmul.f32 %v891, 0.01
    %v1148 = vmul.f32 %v892, 0.01
    %v1149 = vmul.f32 %v893, 0.01
    %v1150 = vmul.f32 %v894, 0.01
    %v1151 = vmul.f32 %v895, 0.01
    %v1152 = vmul.f32 %v896, 0.01
    %v1153 = vmul.f32 %v897, 0.01
    %v1154 = vmul.f32 %v898, 0.01
    %v1155 = vmul.f32 %v899, 0.01
    %v1156 = vmul.f32 %v900, 0.01
    %v1157 = vmul.f32 %v901, 0.01
    %v1158 = vmul.f32 %v902, 0.01
    %v1159 = vmul.f32 %v903, 0.01
    %v1160 = vmul.f32 %v904, 0.01
    %v1161 = vmul.f32 %v905, 0.01
    %v1162 = vmul.f32 %v906, 0.01
    %v1163 = vmul.f32 %v907, 0.01
    %v1164 = vmul.f32 %v908, 0.01
    %v1165 = vmul.f32 %v909, 0.01
    %v1166 = vmul.f32 %v910, 0.01
    %v1167 = vmul.f32 %v911, 0.01
    %v1168 = vmul.f32 %v912, 0.01
    %v1169 = vmul.f32 %v913, 0.01
    %v1170 = vmul.f32 %v914, 0.01
    %v1171 = vmul.f32 %v915, 0.01
    %v1172 = vmul.f32 %v916, 0.01
    %v1173 = vmul.f32 %v917, 0.01
    %v1174 = vmul.f32 %v918, 0.01
    %v1175 = vmul.f32 %v919, 0.01
    %v1176 = vmul.f32 %v920, 0.01
    %v1177 = vmul.f32 %v921, 0.01
    %v1178 = vmul.f32 %v922, 0.01
    %v1179 = vmul.f32 %v923, 0.01
    %v1180 = vmul.f32 %v924, 0.01
    %v1181 = vmul.f32 %v925, 0.01
    %v1182 = vmul.f32 %v926, 0.01
    %v1183 = vmul.f32 %v927, 0.01
    %v1184 = vsel %vm928, %v800, %v1056
    %v1185 = vsel %vm929, %v801, %v1057
    %v1186 = vsel %vm930, %v802, %v1058
    %v1187 = vsel %vm931, %v803, %v1059
    %v1188 = vsel %vm932, %v804, %v1060
    %v1189 = vsel %vm933, %v805, %v1061
    %v1190 = vsel %vm934, %v806, %v1062
    %v1191 = vsel %vm935, %v807, %v1063
    %v1192 = vsel %vm936, %v808, %v1064
    %v1193 = vsel %vm937, %v809, %v1065
    %v1194 = vsel %vm938, %v810, %v1066
    %v1195 = vsel %vm939, %v811, %v1067
    %v1196 = vsel %vm940, %v812, %v1068
    %v1197 = vsel %vm941, %v813, %v1069
    %v1198 = vsel %vm942, %v814, %v1070
    %v1199 = vsel %vm943, %v815, %v1071
    %v1200 = vsel %vm944, %v816, %v1072
    %v1201 = vsel %vm945, %v817, %v1073
    %v1202 = vsel %vm946, %v818, %v1074
    %v1203 = vsel %vm947, %v819, %v1075
    %v1204 = vsel %vm948, %v820, %v1076
    %v1205 = vsel %vm949, %v821, %v1077
    %v1206 = vsel %vm950, %v822, %v1078
    %v1207 = vsel %vm951, %v823, %v1079
    %v1208 = vsel %vm952, %v824, %v1080
    %v1209 = vsel %vm953, %v825, %v1081
    %v1210 = vsel %vm954, %v826, %v1082
    %v1211 = vsel %vm955, %v827, %v1083
    %v1212 = vsel %vm956, %v828, %v1084
    %v1213 = vsel %vm957, %v829, %v1085
    %v1214 = vsel %vm958, %v830, %v1086
    %v1215 = vsel %vm959, %v831, %v1087
    %v1216 = vsel %vm960, %v832, %v1088
    %v1217 = vsel %vm961, %v833, %v1089
    %v1218 = vsel %vm962, %v834, %v1090
    %v1219 = vsel %vm963, %v835, %v1091
    %v1220 = vsel %vm964, %v836, %v1092
    %v1221 = vsel %vm965, %v837, %v1093
    %v1222 = vsel %vm966, %v838, %v1094
    %v1223 = vsel %vm967, %v839, %v1095
    %v1224 = vsel %vm968, %v840, %v1096
    %v1225 = vsel %vm969, %v841, %v1097
    %v1226 = vsel %vm970, %v842, %v1098
    %v1227 = vsel %vm971, %v843, %v1099
    %v1228 = vsel %vm972, %v844, %v1100
    %v1229 = vsel %vm973, %v845, %v1101
    %v1230 = vsel %vm974, %v846, %v1102
    %v1231 = vsel %vm975, %v847, %v1103
    %v1232 = vsel %vm976, %v848, %v1104
    %v1233 = vsel %vm977, %v849, %v1105
    %v1234 = vsel %vm978, %v850, %v1106
    %v1235 = vsel %vm979, %v851, %v1107
    %v1236 = vsel %vm980, %v852, %v1108
    %v1237 = vsel %vm981, %v853, %v1109
    %v1238 = vsel %vm982, %v854, %v1110
    %v1239 = vsel %vm983, %v855, %v1111
    %v1240 = vsel %vm984, %v856, %v1112
    %v1241 = vsel %vm985, %v857, %v1113
    %v1242 = vsel %vm986, %v858, %v1114
    %v1243 = vsel %vm987, %v859, %v1115
    %v1244 = vsel %vm988, %v860, %v1116
    %v1245 = vsel %vm989, %v861, %v1117
    %v1246 = vsel %vm990, %v862, %v1118
    %v1247 = vsel %vm991, %v863, %v1119
    %v1248 = vsel %vm992, %v864, %v1120
    %v1249 = vsel %vm993, %v865, %v1121
    %v1250 = vsel %vm994, %v866, %v1122
    %v1251 = vsel %vm995, %v867, %v1123
    %v1252 = vsel %vm996, %v868, %v1124
    %v1253 = vsel %vm997, %v869, %v1125
    %v1254 = vsel %vm998, %v870, %v1126
    %v1255 = vsel %vm999, %v871, %v1127
    %v1256 = vsel %vm1000, %v872, %v1128
    %v1257 = vsel %vm1001, %v873, %v1129
    %v1258 = vsel %vm1002, %v874, %v1130
    %v1259 = vsel %vm1003, %v875, %v1131
    %v1260 = vsel %vm1004, %v876, %v1132
    %v1261 = vsel %vm1005, %v877, %v1133
    %v1262 = vsel %vm1006, %v878, %v1134
    %v1263 = vsel %vm1007, %v879, %v1135
    %v1264 = vsel %vm1008, %v880, %v1136
    %v1265 = vsel %vm1009, %v881, %v1137
    %v1266 = vsel %vm1010, %v882, %v1138
    %v1267 = vsel %vm1011, %v883, %v1139
    %v1268 = vsel %vm1012, %v884, %v1140
    %v1269 = vsel %vm1013, %v885, %v1141
    %v1270 = vsel %vm1014, %v886, %v1142
    %v1271 = vsel %vm1015, %v887, %v1143
    %v1272 = vsel %vm1016, %v888, %v1144
    %v1273 = vsel %vm1017, %v889, %v1145
    %v1274 = vsel %vm1018, %v890, %v1146
    %v1275 = vsel %vm1019, %v891, %v1147
    %v1276 = vsel %vm1020, %v892, %v1148
    %v1277 = vsel %vm1021, %v893, %v1149
    %v1278 = vsel %vm1022, %v894, %v1150
    %v1279 = vsel %vm1023, %v895, %v1151
    %v1280 = vsel %vm1024, %v896, %v1152
    %v1281 = vsel %vm1025, %v897, %v1153
    %v1282 = vsel %vm1026, %v898, %v1154
    %v1283 = vsel %vm1027, %v899, %v1155
    %v1284 = vsel %vm1028, %v900, %v1156
    %v1285 = vsel %vm1029, %v901, %v1157
    %v1286 = vsel %vm1030, %v902, %v1158
    %v1287 = vsel %vm1031, %v903, %v1159
    %v1288 = vsel %vm1032, %v904, %v1160
    %v1289 = vsel %vm1033, %v905, %v1161
    %v1290 = vsel %vm1034, %v906, %v1162
    %v1291 = vsel %vm1035, %v907, %v1163
    %v1292 = vsel %vm1036, %v908, %v1164
    %v1293 = vsel %vm1037, %v909, %v1165
    %v1294 = vsel %vm1038, %v910, %v1166
    %v1295 = vsel %vm1039, %v911, %v1167
    %v1296 = vsel %vm1040, %v912, %v1168
    %v1297 = vsel %vm1041, %v913, %v1169
    %v1298 = vsel %vm1042, %v914, %v1170
    %v1299 = vsel %vm1043, %v915, %v1171
    %v1300 = vsel %vm1044, %v916, %v1172
    %v1301 = vsel %vm1045, %v917, %v1173
    %v1302 = vsel %vm1046, %v918, %v1174
    %v1303 = vsel %vm1047, %v919, %v1175
    %v1304 = vsel %vm1048, %v920, %v1176
    %v1305 = vsel %vm1049, %v921, %v1177
    %v1306 = vsel %vm1050, %v922, %v1178
    %v1307 = vsel %vm1051, %v923, %v1179
    %v1308 = vsel %vm1052, %v924, %v1180
    %v1309 = vsel %vm1053, %v925, %v1181
    %v1310 = vsel %vm1054, %v926, %v1182
    %v1311 = vsel %vm1055, %v927, %v1183
    %v1312 = vpack.c.bf16 %v1188, %v1184
    %v1313 = vpack.c.bf16 %v1189, %v1185
    %v1314 = vpack.c.bf16 %v1190, %v1186
    %v1315 = vpack.c.bf16 %v1191, %v1187
    %v1316 = vpack.c.bf16 %v1196, %v1192
    %v1317 = vpack.c.bf16 %v1197, %v1193
    %v1318 = vpack.c.bf16 %v1198, %v1194
    %v1319 = vpack.c.bf16 %v1199, %v1195
    %v1320 = vpack.c.bf16 %v1204, %v1200
    %v1321 = vpack.c.bf16 %v1205, %v1201
    %v1322 = vpack.c.bf16 %v1206, %v1202
    %v1323 = vpack.c.bf16 %v1207, %v1203
    %v1324 = vpack.c.bf16 %v1212, %v1208
    %v1325 = vpack.c.bf16 %v1213, %v1209
    %v1326 = vpack.c.bf16 %v1214, %v1210
    %v1327 = vpack.c.bf16 %v1215, %v1211
    %v1328 = vpack.c.bf16 %v1220, %v1216
    %v1329 = vpack.c.bf16 %v1221, %v1217
    %v1330 = vpack.c.bf16 %v1222, %v1218
    %v1331 = vpack.c.bf16 %v1223, %v1219
    %v1332 = vpack.c.bf16 %v1228, %v1224
    %v1333 = vpack.c.bf16 %v1229, %v1225
    %v1334 = vpack.c.bf16 %v1230, %v1226
    %v1335 = vpack.c.bf16 %v1231, %v1227
    %v1336 = vpack.c.bf16 %v1236, %v1232
    %v1337 = vpack.c.bf16 %v1237, %v1233
    %v1338 = vpack.c.bf16 %v1238, %v1234
    %v1339 = vpack.c.bf16 %v1239, %v1235
    %v1340 = vpack.c.bf16 %v1244, %v1240
    %v1341 = vpack.c.bf16 %v1245, %v1241
    %v1342 = vpack.c.bf16 %v1246, %v1242
    %v1343 = vpack.c.bf16 %v1247, %v1243
    %v1344 = vpack.c.bf16 %v1252, %v1248
    %v1345 = vpack.c.bf16 %v1253, %v1249
    %v1346 = vpack.c.bf16 %v1254, %v1250
    %v1347 = vpack.c.bf16 %v1255, %v1251
    %v1348 = vpack.c.bf16 %v1260, %v1256
    %v1349 = vpack.c.bf16 %v1261, %v1257
    %v1350 = vpack.c.bf16 %v1262, %v1258
    %v1351 = vpack.c.bf16 %v1263, %v1259
    %v1352 = vpack.c.bf16 %v1268, %v1264
    %v1353 = vpack.c.bf16 %v1269, %v1265
    %v1354 = vpack.c.bf16 %v1270, %v1266
    %v1355 = vpack.c.bf16 %v1271, %v1267
    %v1356 = vpack.c.bf16 %v1276, %v1272
    %v1357 = vpack.c.bf16 %v1277, %v1273
    %v1358 = vpack.c.bf16 %v1278, %v1274
    %v1359 = vpack.c.bf16 %v1279, %v1275
    %v1360 = vpack.c.bf16 %v1284, %v1280
    %v1361 = vpack.c.bf16 %v1285, %v1281
    %v1362 = vpack.c.bf16 %v1286, %v1282
    %v1363 = vpack.c.bf16 %v1287, %v1283
    %v1364 = vpack.c.bf16 %v1292, %v1288
    %v1365 = vpack.c.bf16 %v1293, %v1289
    %v1366 = vpack.c.bf16 %v1294, %v1290
    %v1367 = vpack.c.bf16 %v1295, %v1291
    %v1368 = vpack.c.bf16 %v1300, %v1296
    %v1369 = vpack.c.bf16 %v1301, %v1297
    %v1370 = vpack.c.bf16 %v1302, %v1298
    %v1371 = vpack.c.bf16 %v1303, %v1299
    %v1372 = vpack.c.bf16 %v1308, %v1304
    %v1373 = vpack.c.bf16 %v1309, %v1305
    %v1374 = vpack.c.bf16 %v1310, %v1306
    %v1375 = vpack.c.bf16 %v1311, %v1307
    %1377 = vset.pattern.permute.xlu0 0
    %1378 = vperm.xlu0 %1377, %v137
    %v1379 = vpop.permute.xlu0 %1378
    %1382 = vset.pattern.permute.xlu0 0
    %1383 = vperm.xlu0 %1382, %v138
    %v1384 = vpop.permute.xlu0 %1383
    %1387 = vset.pattern.permute.xlu0 0
    %1388 = vperm.xlu0 %1387, %v139
    %v1389 = vpop.permute.xlu0 %1388
    %1392 = vset.pattern.permute.xlu0 0
    %1393 = vperm.xlu0 %1392, %v140
    %v1394 = vpop.permute.xlu0 %1393
    %1397 = vset.pattern.permute.xlu0 0
    %1398 = vperm.xlu0 %1397, %v141
    %v1399 = vpop.permute.xlu0 %1398
    %1402 = vset.pattern.permute.xlu0 0
    %1403 = vperm.xlu0 %1402, %v142
    %v1404 = vpop.permute.xlu0 %1403
    %1407 = vset.pattern.permute.xlu0 0
    %1408 = vperm.xlu0 %1407, %v143
    %v1409 = vpop.permute.xlu0 %1408
    %1412 = vset.pattern.permute.xlu0 0
    %1413 = vperm.xlu0 %1412, %v144
    %v1414 = vpop.permute.xlu0 %1413
    %1417 = vset.pattern.permute.xlu0 0
    %1418 = vperm.xlu0 %1417, %v145
    %v1419 = vpop.permute.xlu0 %1418
    %1422 = vset.pattern.permute.xlu0 0
    %1423 = vperm.xlu0 %1422, %v146
    %v1424 = vpop.permute.xlu0 %1423
    %1427 = vset.pattern.permute.xlu0 0
    %1428 = vperm.xlu0 %1427, %v147
    %v1429 = vpop.permute.xlu0 %1428
    %1432 = vset.pattern.permute.xlu0 0
    %1433 = vperm.xlu0 %1432, %v148
    %v1434 = vpop.permute.xlu0 %1433
    %1437 = vset.pattern.permute.xlu0 0
    %1438 = vperm.xlu0 %1437, %v149
    %v1439 = vpop.permute.xlu0 %1438
    %1442 = vset.pattern.permute.xlu0 0
    %1443 = vperm.xlu0 %1442, %v150
    %v1444 = vpop.permute.xlu0 %1443
    %1447 = vset.pattern.permute.xlu0 0
    %1448 = vperm.xlu0 %1447, %v151
    %v1449 = vpop.permute.xlu0 %1448
    %1452 = vset.pattern.permute.xlu0 0
    %1453 = vperm.xlu0 %1452, %v152
    %v1454 = vpop.permute.xlu0 %1453
    %1457 = vset.pattern.permute.xlu0 0
    %1458 = vperm.xlu0 %1457, %v153
    %v1459 = vpop.permute.xlu0 %1458
    %1462 = vset.pattern.permute.xlu0 0
    %1463 = vperm.xlu0 %1462, %v154
    %v1464 = vpop.permute.xlu0 %1463
    %1467 = vset.pattern.permute.xlu0 0
    %1468 = vperm.xlu0 %1467, %v155
    %v1469 = vpop.permute.xlu0 %1468
    %1472 = vset.pattern.permute.xlu0 0
    %1473 = vperm.xlu0 %1472, %v156
    %v1474 = vpop.permute.xlu0 %1473
    %1477 = vset.pattern.permute.xlu0 0
    %1478 = vperm.xlu0 %1477, %v157
    %v1479 = vpop.permute.xlu0 %1478
    %1482 = vset.pattern.permute.xlu0 0
    %1483 = vperm.xlu0 %1482, %v158
    %v1484 = vpop.permute.xlu0 %1483
    %1487 = vset.pattern.permute.xlu0 0
    %1488 = vperm.xlu0 %1487, %v159
    %v1489 = vpop.permute.xlu0 %1488
    %1492 = vset.pattern.permute.xlu0 0
    %1493 = vperm.xlu0 %1492, %v160
    %v1494 = vpop.permute.xlu0 %1493
    %1497 = vset.pattern.permute.xlu0 0
    %1498 = vperm.xlu0 %1497, %v161
    %v1499 = vpop.permute.xlu0 %1498
    %1502 = vset.pattern.permute.xlu0 0
    %1503 = vperm.xlu0 %1502, %v162
    %v1504 = vpop.permute.xlu0 %1503
    %1507 = vset.pattern.permute.xlu0 0
    %1508 = vperm.xlu0 %1507, %v163
    %v1509 = vpop.permute.xlu0 %1508
    %1512 = vset.pattern.permute.xlu0 0
    %1513 = vperm.xlu0 %1512, %v164
    %v1514 = vpop.permute.xlu0 %1513
    %1517 = vset.pattern.permute.xlu0 0
    %1518 = vperm.xlu0 %1517, %v165
    %v1519 = vpop.permute.xlu0 %1518
    %1522 = vset.pattern.permute.xlu0 0
    %1523 = vperm.xlu0 %1522, %v166
    %v1524 = vpop.permute.xlu0 %1523
    %1527 = vset.pattern.permute.xlu0 0
    %1528 = vperm.xlu0 %1527, %v167
    %v1529 = vpop.permute.xlu0 %1528
    %1532 = vset.pattern.permute.xlu0 0
    %1533 = vperm.xlu0 %1532, %v168
    %v1534 = vpop.permute.xlu0 %1533
    %v1568 = vunpack.c.l.b16 %v105
    %v1569 = vunpack.c.h.b16 %v105
    %v1570 = vunpack.c.l.b16 %v106
    %v1571 = vunpack.c.h.b16 %v106
    %v1572 = vunpack.c.l.b16 %v107
    %v1573 = vunpack.c.h.b16 %v107
    %v1574 = vunpack.c.l.b16 %v108
    %v1575 = vunpack.c.h.b16 %v108
    %v1576 = vunpack.c.l.b16 %v109
    %v1577 = vunpack.c.h.b16 %v109
    %v1578 = vunpack.c.l.b16 %v110
    %v1579 = vunpack.c.h.b16 %v110
    %v1580 = vunpack.c.l.b16 %v111
    %v1581 = vunpack.c.h.b16 %v111
    %v1582 = vunpack.c.l.b16 %v112
    %v1583 = vunpack.c.h.b16 %v112
    %v1584 = vunpack.c.l.b16 %v113
    %v1585 = vunpack.c.h.b16 %v113
    %v1586 = vunpack.c.l.b16 %v114
    %v1587 = vunpack.c.h.b16 %v114
    %v1588 = vunpack.c.l.b16 %v115
    %v1589 = vunpack.c.h.b16 %v115
    %v1590 = vunpack.c.l.b16 %v116
    %v1591 = vunpack.c.h.b16 %v116
    %v1592 = vunpack.c.l.b16 %v117
    %v1593 = vunpack.c.h.b16 %v117
    %v1594 = vunpack.c.l.b16 %v118
    %v1595 = vunpack.c.h.b16 %v118
    %v1596 = vunpack.c.l.b16 %v119
    %v1597 = vunpack.c.h.b16 %v119
    %v1598 = vunpack.c.l.b16 %v120
    %v1599 = vunpack.c.h.b16 %v120
    %v1600 = vunpack.c.l.b16 %v121
    %v1601 = vunpack.c.h.b16 %v121
    %v1602 = vunpack.c.l.b16 %v122
    %v1603 = vunpack.c.h.b16 %v122
    %v1604 = vunpack.c.l.b16 %v123
    %v1605 = vunpack.c.h.b16 %v123
    %v1606 = vunpack.c.l.b16 %v124
    %v1607 = vunpack.c.h.b16 %v124
    %v1608 = vunpack.c.l.b16 %v125
    %v1609 = vunpack.c.h.b16 %v125
    %v1610 = vunpack.c.l.b16 %v126
    %v1611 = vunpack.c.h.b16 %v126
    %v1612 = vunpack.c.l.b16 %v127
    %v1613 = vunpack.c.h.b16 %v127
    %v1614 = vunpack.c.l.b16 %v128
    %v1615 = vunpack.c.h.b16 %v128
    %v1616 = vunpack.c.l.b16 %v129
    %v1617 = vunpack.c.h.b16 %v129
    %v1618 = vunpack.c.l.b16 %v130
    %v1619 = vunpack.c.h.b16 %v130
    %v1620 = vunpack.c.l.b16 %v131
    %v1621 = vunpack.c.h.b16 %v131
    %v1622 = vunpack.c.l.b16 %v132
    %v1623 = vunpack.c.h.b16 %v132
    %v1624 = vunpack.c.l.b16 %v133
    %v1625 = vunpack.c.h.b16 %v133
    %v1626 = vunpack.c.l.b16 %v134
    %v1627 = vunpack.c.h.b16 %v134
    %v1628 = vunpack.c.l.b16 %v135
    %v1629 = vunpack.c.h.b16 %v135
    %v1630 = vunpack.c.l.b16 %v136
    %v1631 = vunpack.c.h.b16 %v136
    %v1632 = vpack.c.b16 %v1570, %v1568
    %v1633 = vpack.c.b16 %v1571, %v1569
    %v1634 = vpack.c.b16 %v1574, %v1572
    %v1635 = vpack.c.b16 %v1575, %v1573
    %v1636 = vpack.c.b16 %v1578, %v1576
    %v1637 = vpack.c.b16 %v1579, %v1577
    %v1638 = vpack.c.b16 %v1582, %v1580
    %v1639 = vpack.c.b16 %v1583, %v1581
    %v1640 = vpack.c.b16 %v1586, %v1584
    %v1641 = vpack.c.b16 %v1587, %v1585
    %v1642 = vpack.c.b16 %v1590, %v1588
    %v1643 = vpack.c.b16 %v1591, %v1589
    %v1644 = vpack.c.b16 %v1594, %v1592
    %v1645 = vpack.c.b16 %v1595, %v1593
    %v1646 = vpack.c.b16 %v1598, %v1596
    %v1647 = vpack.c.b16 %v1599, %v1597
    %v1648 = vpack.c.b16 %v1602, %v1600
    %v1649 = vpack.c.b16 %v1603, %v1601
    %v1650 = vpack.c.b16 %v1606, %v1604
    %v1651 = vpack.c.b16 %v1607, %v1605
    %v1652 = vpack.c.b16 %v1610, %v1608
    %v1653 = vpack.c.b16 %v1611, %v1609
    %v1654 = vpack.c.b16 %v1614, %v1612
    %v1655 = vpack.c.b16 %v1615, %v1613
    %v1656 = vpack.c.b16 %v1618, %v1616
    %v1657 = vpack.c.b16 %v1619, %v1617
    %v1658 = vpack.c.b16 %v1622, %v1620
    %v1659 = vpack.c.b16 %v1623, %v1621
    %v1660 = vpack.c.b16 %v1626, %v1624
    %v1661 = vpack.c.b16 %v1627, %v1625
    %v1662 = vpack.c.b16 %v1630, %v1628
    %v1663 = vpack.c.b16 %v1631, %v1629
    %1696 = vmatprep.subr.bf16.mxu0 %v1341
    %1697 = vmatpush1.bf16.msra.mxu0 %v1340
    %1698 = vmatprep.subr.bf16.mxu0 %v1337
    %1699 = vmatpush1.bf16.msra.mxu0 %v1336
    %1700 = vmatprep.subr.bf16.mxu0 %v1333
    %1701 = vmatpush1.bf16.msra.mxu0 %v1332
    %1702 = vmatprep.subr.bf16.mxu0 %v1329
    %1703 = vmatpush1.bf16.msra.mxu0 %v1328
    %1704 = vmatprep.subr.bf16.mxu0 %v1325
    %1705 = vmatpush1.bf16.msra.mxu0 %v1324
    %1706 = vmatprep.subr.bf16.mxu0 %v1321
    %1707 = vmatpush1.bf16.msra.mxu0 %v1320
    %1708 = vmatprep.subr.bf16.mxu0 %v1317
    %1709 = vmatpush1.bf16.msra.mxu0 %v1316
    %1710 = vmatprep.subr.bf16.mxu0 %v1313
    %1711 = vmatpush1.bf16.msra.mxu0 %v1312
    %1712 = vmatprep.subr.bf16.mxu0 %v1373
    %1713 = vmatpush2.bf16.msra.mxu0 %v1372
    %1714 = vmatprep.subr.bf16.mxu0 %v1369
    %1715 = vmatpush2.bf16.msra.mxu0 %v1368
    %1716 = vmatprep.subr.bf16.mxu0 %v1365
    %1717 = vmatpush2.bf16.msra.mxu0 %v1364
    %1718 = vmatprep.subr.bf16.mxu0 %v1361
    %1719 = vmatpush2.bf16.msra.mxu0 %v1360
    %1720 = vmatprep.subr.bf16.mxu0 %v1357
    %1721 = vmatpush2.bf16.msra.mxu0 %v1356
    %1722 = vmatprep.subr.bf16.mxu0 %v1353
    %1723 = vmatpush2.bf16.msra.mxu0 %v1352
    %1724 = vmatprep.subr.bf16.mxu0 %v1349
    %1725 = vmatpush2.bf16.msra.mxu0 %v1348
    %1726 = vmatprep.subr.bf16.mxu0 %v1345
    %1727 = vmatpush2.bf16.msra.mxu0 %v1344
    %1728 = vmatprep.mubr.bf16.mxu0 %v1633
    %1729 = vmatmul.mubr.bf16.gmra.mxu0 %v1632
    %v1730 = vpop.f32.mrf.mxu0
    %v1731 = vadd.f32 %v1379, %v1730
    %v1732 = vpop.f32.mrf.mxu0
    %v1733 = vadd.f32 %v1379, %v1732
    %v1734 = vpop.f32.mrf.mxu0
    %v1735 = vadd.f32 %v1384, %v1734
    %v1736 = vpop.f32.mrf.mxu0
    %v1737 = vadd.f32 %v1384, %v1736
    %1738 = vmatprep.mubr.bf16.mxu0 %v1635
    %1739 = vmatmul.mubr.bf16.gmra.mxu0 %v1634
    %v1740 = vpop.f32.mrf.mxu0
    %v1741 = vadd.f32 %v1389, %v1740
    %v1742 = vpop.f32.mrf.mxu0
    %v1743 = vadd.f32 %v1389, %v1742
    %v1744 = vpop.f32.mrf.mxu0
    %v1745 = vadd.f32 %v1394, %v1744
    %v1746 = vpop.f32.mrf.mxu0
    %v1747 = vadd.f32 %v1394, %v1746
    %1748 = vmatprep.mubr.bf16.mxu0 %v1637
    %1749 = vmatmul.mubr.bf16.gmra.mxu0 %v1636
    %v1750 = vpop.f32.mrf.mxu0
    %v1751 = vadd.f32 %v1399, %v1750
    %v1752 = vpop.f32.mrf.mxu0
    %v1753 = vadd.f32 %v1399, %v1752
    %v1754 = vpop.f32.mrf.mxu0
    %v1755 = vadd.f32 %v1404, %v1754
    %v1756 = vpop.f32.mrf.mxu0
    %v1757 = vadd.f32 %v1404, %v1756
    %1758 = vmatprep.mubr.bf16.mxu0 %v1639
    %1759 = vmatmul.mubr.bf16.gmra.mxu0 %v1638
    %v1760 = vpop.f32.mrf.mxu0
    %v1761 = vadd.f32 %v1409, %v1760
    %v1762 = vpop.f32.mrf.mxu0
    %v1763 = vadd.f32 %v1409, %v1762
    %v1764 = vpop.f32.mrf.mxu0
    %v1765 = vadd.f32 %v1414, %v1764
    %v1766 = vpop.f32.mrf.mxu0
    %v1767 = vadd.f32 %v1414, %v1766
    %1768 = vmatprep.mubr.bf16.mxu0 %v1641
    %1769 = vmatmul.mubr.bf16.gmra.mxu0 %v1640
    %v1770 = vpop.f32.mrf.mxu0
    %v1771 = vadd.f32 %v1419, %v1770
    %v1772 = vpop.f32.mrf.mxu0
    %v1773 = vadd.f32 %v1419, %v1772
    %v1774 = vpop.f32.mrf.mxu0
    %v1775 = vadd.f32 %v1424, %v1774
    %v1776 = vpop.f32.mrf.mxu0
    %v1777 = vadd.f32 %v1424, %v1776
    %1778 = vmatprep.mubr.bf16.mxu0 %v1643
    %1779 = vmatmul.mubr.bf16.gmra.mxu0 %v1642
    %v1780 = vpop.f32.mrf.mxu0
    %v1781 = vadd.f32 %v1429, %v1780
    %v1782 = vpop.f32.mrf.mxu0
    %v1783 = vadd.f32 %v1429, %v1782
    %v1784 = vpop.f32.mrf.mxu0
    %v1785 = vadd.f32 %v1434, %v1784
    %v1786 = vpop.f32.mrf.mxu0
    %v1787 = vadd.f32 %v1434, %v1786
    %1788 = vmatprep.mubr.bf16.mxu0 %v1645
    %1789 = vmatmul.mubr.bf16.gmra.mxu0 %v1644
    %v1790 = vpop.f32.mrf.mxu0
    %v1791 = vadd.f32 %v1439, %v1790
    %v1792 = vpop.f32.mrf.mxu0
    %v1793 = vadd.f32 %v1439, %v1792
    %v1794 = vpop.f32.mrf.mxu0
    %v1795 = vadd.f32 %v1444, %v1794
    %v1796 = vpop.f32.mrf.mxu0
    %v1797 = vadd.f32 %v1444, %v1796
    %1798 = vmatprep.mubr.bf16.mxu0 %v1647
    %1799 = vmatmul.mubr.bf16.gmra.mxu0 %v1646
    %v1800 = vpop.f32.mrf.mxu0
    %v1801 = vadd.f32 %v1449, %v1800
    %v1802 = vpop.f32.mrf.mxu0
    %v1803 = vadd.f32 %v1449, %v1802
    %v1804 = vpop.f32.mrf.mxu0
    %v1805 = vadd.f32 %v1454, %v1804
    %v1806 = vpop.f32.mrf.mxu0
    %v1807 = vadd.f32 %v1454, %v1806
    %1808 = vmatprep.mubr.bf16.mxu0 %v1649
    %1809 = vmatmul.mubr.bf16.gmra.mxu0 %v1648
    %v1810 = vpop.f32.mrf.mxu0
    %v1811 = vadd.f32 %v1459, %v1810
    %v1812 = vpop.f32.mrf.mxu0
    %v1813 = vadd.f32 %v1459, %v1812
    %v1814 = vpop.f32.mrf.mxu0
    %v1815 = vadd.f32 %v1464, %v1814
    %v1816 = vpop.f32.mrf.mxu0
    %v1817 = vadd.f32 %v1464, %v1816
    %1818 = vmatprep.mubr.bf16.mxu0 %v1651
    %1819 = vmatmul.mubr.bf16.gmra.mxu0 %v1650
    %v1820 = vpop.f32.mrf.mxu0
    %v1821 = vadd.f32 %v1469, %v1820
    %v1822 = vpop.f32.mrf.mxu0
    %v1823 = vadd.f32 %v1469, %v1822
    %v1824 = vpop.f32.mrf.mxu0
    %v1825 = vadd.f32 %v1474, %v1824
    %v1826 = vpop.f32.mrf.mxu0
    %v1827 = vadd.f32 %v1474, %v1826
    %1828 = vmatprep.mubr.bf16.mxu0 %v1653
    %1829 = vmatmul.mubr.bf16.gmra.mxu0 %v1652
    %v1830 = vpop.f32.mrf.mxu0
    %v1831 = vadd.f32 %v1479, %v1830
    %v1832 = vpop.f32.mrf.mxu0
    %v1833 = vadd.f32 %v1479, %v1832
    %v1834 = vpop.f32.mrf.mxu0
    %v1835 = vadd.f32 %v1484, %v1834
    %v1836 = vpop.f32.mrf.mxu0
    %v1837 = vadd.f32 %v1484, %v1836
    %1838 = vmatprep.mubr.bf16.mxu0 %v1655
    %1839 = vmatmul.mubr.bf16.gmra.mxu0 %v1654
    %v1840 = vpop.f32.mrf.mxu0
    %v1841 = vadd.f32 %v1489, %v1840
    %v1842 = vpop.f32.mrf.mxu0
    %v1843 = vadd.f32 %v1489, %v1842
    %v1844 = vpop.f32.mrf.mxu0
    %v1845 = vadd.f32 %v1494, %v1844
    %v1846 = vpop.f32.mrf.mxu0
    %v1847 = vadd.f32 %v1494, %v1846
    %1848 = vmatprep.mubr.bf16.mxu0 %v1657
    %1849 = vmatmul.mubr.bf16.gmra.mxu0 %v1656
    %v1850 = vpop.f32.mrf.mxu0
    %v1851 = vadd.f32 %v1499, %v1850
    %v1852 = vpop.f32.mrf.mxu0
    %v1853 = vadd.f32 %v1499, %v1852
    %v1854 = vpop.f32.mrf.mxu0
    %v1855 = vadd.f32 %v1504, %v1854
    %v1856 = vpop.f32.mrf.mxu0
    %v1857 = vadd.f32 %v1504, %v1856
    %1858 = vmatprep.mubr.bf16.mxu0 %v1659
    %1859 = vmatmul.mubr.bf16.gmra.mxu0 %v1658
    %v1860 = vpop.f32.mrf.mxu0
    %v1861 = vadd.f32 %v1509, %v1860
    %v1862 = vpop.f32.mrf.mxu0
    %v1863 = vadd.f32 %v1509, %v1862
    %v1864 = vpop.f32.mrf.mxu0
    %v1865 = vadd.f32 %v1514, %v1864
    %v1866 = vpop.f32.mrf.mxu0
    %v1867 = vadd.f32 %v1514, %v1866
    %1868 = vmatprep.mubr.bf16.mxu0 %v1661
    %1869 = vmatmul.mubr.bf16.gmra.mxu0 %v1660
    %v1870 = vpop.f32.mrf.mxu0
    %v1871 = vadd.f32 %v1519, %v1870
    %v1872 = vpop.f32.mrf.mxu0
    %v1873 = vadd.f32 %v1519, %v1872
    %v1874 = vpop.f32.mrf.mxu0
    %v1875 = vadd.f32 %v1524, %v1874
    %v1876 = vpop.f32.mrf.mxu0
    %v1877 = vadd.f32 %v1524, %v1876
    %1878 = vmatprep.mubr.bf16.mxu0 %v1663
    %1879 = vmatmul.mubr.bf16.gmra.mxu0 %v1662
    %v1880 = vpop.f32.mrf.mxu0
    %v1881 = vadd.f32 %v1529, %v1880
    %v1882 = vpop.f32.mrf.mxu0
    %v1883 = vadd.f32 %v1529, %v1882
    %v1884 = vpop.f32.mrf.mxu0
    %v1885 = vadd.f32 %v1534, %v1884
    %v1886 = vpop.f32.mrf.mxu0
    %v1887 = vadd.f32 %v1534, %v1886
    %1888 = vdwg.mxu0
    %1889 = vmatprep.subr.bf16.mxu0 %v1343
    %1890 = vmatpush1.bf16.msra.mxu0 %v1342
    %1891 = vmatprep.subr.bf16.mxu0 %v1339
    %1892 = vmatpush1.bf16.msra.mxu0 %v1338
    %1893 = vmatprep.subr.bf16.mxu0 %v1335
    %1894 = vmatpush1.bf16.msra.mxu0 %v1334
    %1895 = vmatprep.subr.bf16.mxu0 %v1331
    %1896 = vmatpush1.bf16.msra.mxu0 %v1330
    %1897 = vmatprep.subr.bf16.mxu0 %v1327
    %1898 = vmatpush1.bf16.msra.mxu0 %v1326
    %1899 = vmatprep.subr.bf16.mxu0 %v1323
    %1900 = vmatpush1.bf16.msra.mxu0 %v1322
    %1901 = vmatprep.subr.bf16.mxu0 %v1319
    %1902 = vmatpush1.bf16.msra.mxu0 %v1318
    %1903 = vmatprep.subr.bf16.mxu0 %v1315
    %1904 = vmatpush1.bf16.msra.mxu0 %v1314
    %1905 = vmatprep.subr.bf16.mxu0 %v1375
    %1906 = vmatpush2.bf16.msra.mxu0 %v1374
    %1907 = vmatprep.subr.bf16.mxu0 %v1371
    %1908 = vmatpush2.bf16.msra.mxu0 %v1370
    %1909 = vmatprep.subr.bf16.mxu0 %v1367
    %1910 = vmatpush2.bf16.msra.mxu0 %v1366
    %1911 = vmatprep.subr.bf16.mxu0 %v1363
    %1912 = vmatpush2.bf16.msra.mxu0 %v1362
    %1913 = vmatprep.subr.bf16.mxu0 %v1359
    %1914 = vmatpush2.bf16.msra.mxu0 %v1358
    %1915 = vmatprep.subr.bf16.mxu0 %v1355
    %1916 = vmatpush2.bf16.msra.mxu0 %v1354
    %1917 = vmatprep.subr.bf16.mxu0 %v1351
    %1918 = vmatpush2.bf16.msra.mxu0 %v1350
    %1919 = vmatprep.subr.bf16.mxu0 %v1347
    %1920 = vmatpush2.bf16.msra.mxu0 %v1346
    %1921 = vmatprep.mubr.bf16.mxu0 %v1633
    %1922 = vmatmul.mubr.bf16.gmra.mxu0 %v1632
    %v1923 = vpop.f32.mrf.mxu0
    %v1924 = vadd.f32 %v1379, %v1923
    %v1925 = vpop.f32.mrf.mxu0
    %v1926 = vadd.f32 %v1379, %v1925
    %v1927 = vpop.f32.mrf.mxu0
    %v1928 = vadd.f32 %v1384, %v1927
    %v1929 = vpop.f32.mrf.mxu0
    %v1930 = vadd.f32 %v1384, %v1929
    %1931 = vmatprep.mubr.bf16.mxu0 %v1635
    %1932 = vmatmul.mubr.bf16.gmra.mxu0 %v1634
    %v1933 = vpop.f32.mrf.mxu0
    %v1934 = vadd.f32 %v1389, %v1933
    %v1935 = vpop.f32.mrf.mxu0
    %v1936 = vadd.f32 %v1389, %v1935
    %v1937 = vpop.f32.mrf.mxu0
    %v1938 = vadd.f32 %v1394, %v1937
    %v1939 = vpop.f32.mrf.mxu0
    %v1940 = vadd.f32 %v1394, %v1939
    %1941 = vmatprep.mubr.bf16.mxu0 %v1637
    %1942 = vmatmul.mubr.bf16.gmra.mxu0 %v1636
    %v1943 = vpop.f32.mrf.mxu0
    %v1944 = vadd.f32 %v1399, %v1943
    %v1945 = vpop.f32.mrf.mxu0
    %v1946 = vadd.f32 %v1399, %v1945
    %v1947 = vpop.f32.mrf.mxu0
    %v1948 = vadd.f32 %v1404, %v1947
    %v1949 = vpop.f32.mrf.mxu0
    %v1950 = vadd.f32 %v1404, %v1949
    %1951 = vmatprep.mubr.bf16.mxu0 %v1639
    %1952 = vmatmul.mubr.bf16.gmra.mxu0 %v1638
    %v1953 = vpop.f32.mrf.mxu0
    %v1954 = vadd.f32 %v1409, %v1953
    %v1955 = vpop.f32.mrf.mxu0
    %v1956 = vadd.f32 %v1409, %v1955
    %v1957 = vpop.f32.mrf.mxu0
    %v1958 = vadd.f32 %v1414, %v1957
    %v1959 = vpop.f32.mrf.mxu0
    %v1960 = vadd.f32 %v1414, %v1959
    %1961 = vmatprep.mubr.bf16.mxu0 %v1641
    %1962 = vmatmul.mubr.bf16.gmra.mxu0 %v1640
    %v1963 = vpop.f32.mrf.mxu0
    %v1964 = vadd.f32 %v1419, %v1963
    %v1965 = vpop.f32.mrf.mxu0
    %v1966 = vadd.f32 %v1419, %v1965
    %v1967 = vpop.f32.mrf.mxu0
    %v1968 = vadd.f32 %v1424, %v1967
    %v1969 = vpop.f32.mrf.mxu0
    %v1970 = vadd.f32 %v1424, %v1969
    %1971 = vmatprep.mubr.bf16.mxu0 %v1643
    %1972 = vmatmul.mubr.bf16.gmra.mxu0 %v1642
    %v1973 = vpop.f32.mrf.mxu0
    %v1974 = vadd.f32 %v1429, %v1973
    %v1975 = vpop.f32.mrf.mxu0
    %v1976 = vadd.f32 %v1429, %v1975
    %v1977 = vpop.f32.mrf.mxu0
    %v1978 = vadd.f32 %v1434, %v1977
    %v1979 = vpop.f32.mrf.mxu0
    %v1980 = vadd.f32 %v1434, %v1979
    %1981 = vmatprep.mubr.bf16.mxu0 %v1645
    %1982 = vmatmul.mubr.bf16.gmra.mxu0 %v1644
    %v1983 = vpop.f32.mrf.mxu0
    %v1984 = vadd.f32 %v1439, %v1983
    %v1985 = vpop.f32.mrf.mxu0
    %v1986 = vadd.f32 %v1439, %v1985
    %v1987 = vpop.f32.mrf.mxu0
    %v1988 = vadd.f32 %v1444, %v1987
    %v1989 = vpop.f32.mrf.mxu0
    %v1990 = vadd.f32 %v1444, %v1989
    %1991 = vmatprep.mubr.bf16.mxu0 %v1647
    %1992 = vmatmul.mubr.bf16.gmra.mxu0 %v1646
    %v1993 = vpop.f32.mrf.mxu0
    %v1994 = vadd.f32 %v1449, %v1993
    %v1995 = vpop.f32.mrf.mxu0
    %v1996 = vadd.f32 %v1449, %v1995
    %v1997 = vpop.f32.mrf.mxu0
    %v1998 = vadd.f32 %v1454, %v1997
    %v1999 = vpop.f32.mrf.mxu0
    %v2000 = vadd.f32 %v1454, %v1999
    %2001 = vmatprep.mubr.bf16.mxu0 %v1649
    %2002 = vmatmul.mubr.bf16.gmra.mxu0 %v1648
    %v2003 = vpop.f32.mrf.mxu0
    %v2004 = vadd.f32 %v1459, %v2003
    %v2005 = vpop.f32.mrf.mxu0
    %v2006 = vadd.f32 %v1459, %v2005
    %v2007 = vpop.f32.mrf.mxu0
    %v2008 = vadd.f32 %v1464, %v2007
    %v2009 = vpop.f32.mrf.mxu0
    %v2010 = vadd.f32 %v1464, %v2009
    %2011 = vmatprep.mubr.bf16.mxu0 %v1651
    %2012 = vmatmul.mubr.bf16.gmra.mxu0 %v1650
    %v2013 = vpop.f32.mrf.mxu0
    %v2014 = vadd.f32 %v1469, %v2013
    %v2015 = vpop.f32.mrf.mxu0
    %v2016 = vadd.f32 %v1469, %v2015
    %v2017 = vpop.f32.mrf.mxu0
    %v2018 = vadd.f32 %v1474, %v2017
    %v2019 = vpop.f32.mrf.mxu0
    %v2020 = vadd.f32 %v1474, %v2019
    %2021 = vmatprep.mubr.bf16.mxu0 %v1653
    %2022 = vmatmul.mubr.bf16.gmra.mxu0 %v1652
    %v2023 = vpop.f32.mrf.mxu0
    %v2024 = vadd.f32 %v1479, %v2023
    %v2025 = vpop.f32.mrf.mxu0
    %v2026 = vadd.f32 %v1479, %v2025
    %v2027 = vpop.f32.mrf.mxu0
    %v2028 = vadd.f32 %v1484, %v2027
    %v2029 = vpop.f32.mrf.mxu0
    %v2030 = vadd.f32 %v1484, %v2029
    %2031 = vmatprep.mubr.bf16.mxu0 %v1655
    %2032 = vmatmul.mubr.bf16.gmra.mxu0 %v1654
    %v2033 = vpop.f32.mrf.mxu0
    %v2034 = vadd.f32 %v1489, %v2033
    %v2035 = vpop.f32.mrf.mxu0
    %v2036 = vadd.f32 %v1489, %v2035
    %v2037 = vpop.f32.mrf.mxu0
    %v2038 = vadd.f32 %v1494, %v2037
    %v2039 = vpop.f32.mrf.mxu0
    %v2040 = vadd.f32 %v1494, %v2039
    %2041 = vmatprep.mubr.bf16.mxu0 %v1657
    %2042 = vmatmul.mubr.bf16.gmra.mxu0 %v1656
    %v2043 = vpop.f32.mrf.mxu0
    %v2044 = vadd.f32 %v1499, %v2043
    %v2045 = vpop.f32.mrf.mxu0
    %v2046 = vadd.f32 %v1499, %v2045
    %v2047 = vpop.f32.mrf.mxu0
    %v2048 = vadd.f32 %v1504, %v2047
    %v2049 = vpop.f32.mrf.mxu0
    %v2050 = vadd.f32 %v1504, %v2049
    %2051 = vmatprep.mubr.bf16.mxu0 %v1659
    %2052 = vmatmul.mubr.bf16.gmra.mxu0 %v1658
    %v2053 = vpop.f32.mrf.mxu0
    %v2054 = vadd.f32 %v1509, %v2053
    %v2055 = vpop.f32.mrf.mxu0
    %v2056 = vadd.f32 %v1509, %v2055
    %v2057 = vpop.f32.mrf.mxu0
    %v2058 = vadd.f32 %v1514, %v2057
    %v2059 = vpop.f32.mrf.mxu0
    %v2060 = vadd.f32 %v1514, %v2059
    %2061 = vmatprep.mubr.bf16.mxu0 %v1661
    %2062 = vmatmul.mubr.bf16.gmra.mxu0 %v1660
    %v2063 = vpop.f32.mrf.mxu0
    %v2064 = vadd.f32 %v1519, %v2063
    %v2065 = vpop.f32.mrf.mxu0
    %v2066 = vadd.f32 %v1519, %v2065
    %v2067 = vpop.f32.mrf.mxu0
    %v2068 = vadd.f32 %v1524, %v2067
    %v2069 = vpop.f32.mrf.mxu0
    %v2070 = vadd.f32 %v1524, %v2069
    %2071 = vmatprep.mubr.bf16.mxu0 %v1663
    %2072 = vmatmul.mubr.bf16.gmra.mxu0 %v1662
    %v2073 = vpop.f32.mrf.mxu0
    %v2074 = vadd.f32 %v1529, %v2073
    %v2075 = vpop.f32.mrf.mxu0
    %v2076 = vadd.f32 %v1529, %v2075
    %v2077 = vpop.f32.mrf.mxu0
    %v2078 = vadd.f32 %v1534, %v2077
    %v2079 = vpop.f32.mrf.mxu0
    %v2080 = vadd.f32 %v1534, %v2079
    %2081 = vdwg.mxu0
    %vm2082 = vcmp.gt.f32.partialorder %v1731, 0.0
    %vm2083 = vcmp.gt.f32.partialorder %v1733, 0.0
    %vm2084 = vcmp.gt.f32.partialorder %v1924, 0.0
    %vm2085 = vcmp.gt.f32.partialorder %v1926, 0.0
    %vm2086 = vcmp.gt.f32.partialorder %v1735, 0.0
    %vm2087 = vcmp.gt.f32.partialorder %v1737, 0.0
    %vm2088 = vcmp.gt.f32.partialorder %v1928, 0.0
    %vm2089 = vcmp.gt.f32.partialorder %v1930, 0.0
    %vm2090 = vcmp.gt.f32.partialorder %v1741, 0.0
    %vm2091 = vcmp.gt.f32.partialorder %v1743, 0.0
    %vm2092 = vcmp.gt.f32.partialorder %v1934, 0.0
    %vm2093 = vcmp.gt.f32.partialorder %v1936, 0.0
    %vm2094 = vcmp.gt.f32.partialorder %v1745, 0.0
    %vm2095 = vcmp.gt.f32.partialorder %v1747, 0.0
    %vm2096 = vcmp.gt.f32.partialorder %v1938, 0.0
    %vm2097 = vcmp.gt.f32.partialorder %v1940, 0.0
    %vm2098 = vcmp.gt.f32.partialorder %v1751, 0.0
    %vm2099 = vcmp.gt.f32.partialorder %v1753, 0.0
    %vm2100 = vcmp.gt.f32.partialorder %v1944, 0.0
    %vm2101 = vcmp.gt.f32.partialorder %v1946, 0.0
    %vm2102 = vcmp.gt.f32.partialorder %v1755, 0.0
    %vm2103 = vcmp.gt.f32.partialorder %v1757, 0.0
    %vm2104 = vcmp.gt.f32.partialorder %v1948, 0.0
    %vm2105 = vcmp.gt.f32.partialorder %v1950, 0.0
    %vm2106 = vcmp.gt.f32.partialorder %v1761, 0.0
    %vm2107 = vcmp.gt.f32.partialorder %v1763, 0.0
    %vm2108 = vcmp.gt.f32.partialorder %v1954, 0.0
    %vm2109 = vcmp.gt.f32.partialorder %v1956, 0.0
    %vm2110 = vcmp.gt.f32.partialorder %v1765, 0.0
    %vm2111 = vcmp.gt.f32.partialorder %v1767, 0.0
    %vm2112 = vcmp.gt.f32.partialorder %v1958, 0.0
    %vm2113 = vcmp.gt.f32.partialorder %v1960, 0.0
    %vm2114 = vcmp.gt.f32.partialorder %v1771, 0.0
    %vm2115 = vcmp.gt.f32.partialorder %v1773, 0.0
    %vm2116 = vcmp.gt.f32.partialorder %v1964, 0.0
    %vm2117 = vcmp.gt.f32.partialorder %v1966, 0.0
    %vm2118 = vcmp.gt.f32.partialorder %v1775, 0.0
    %vm2119 = vcmp.gt.f32.partialorder %v1777, 0.0
    %vm2120 = vcmp.gt.f32.partialorder %v1968, 0.0
    %vm2121 = vcmp.gt.f32.partialorder %v1970, 0.0
    %vm2122 = vcmp.gt.f32.partialorder %v1781, 0.0
    %vm2123 = vcmp.gt.f32.partialorder %v1783, 0.0
    %vm2124 = vcmp.gt.f32.partialorder %v1974, 0.0
    %vm2125 = vcmp.gt.f32.partialorder %v1976, 0.0
    %vm2126 = vcmp.gt.f32.partialorder %v1785, 0.0
    %vm2127 = vcmp.gt.f32.partialorder %v1787, 0.0
    %vm2128 = vcmp.gt.f32.partialorder %v1978, 0.0
    %vm2129 = vcmp.gt.f32.partialorder %v1980, 0.0
    %vm2130 = vcmp.gt.f32.partialorder %v1791, 0.0
    %vm2131 = vcmp.gt.f32.partialorder %v1793, 0.0
    %vm2132 = vcmp.gt.f32.partialorder %v1984, 0.0
    %vm2133 = vcmp.gt.f32.partialorder %v1986, 0.0
    %vm2134 = vcmp.gt.f32.partialorder %v1795, 0.0
    %vm2135 = vcmp.gt.f32.partialorder %v1797, 0.0
    %vm2136 = vcmp.gt.f32.partialorder %v1988, 0.0
    %vm2137 = vcmp.gt.f32.partialorder %v1990, 0.0
    %vm2138 = vcmp.gt.f32.partialorder %v1801, 0.0
    %vm2139 = vcmp.gt.f32.partialorder %v1803, 0.0
    %vm2140 = vcmp.gt.f32.partialorder %v1994, 0.0
    %vm2141 = vcmp.gt.f32.partialorder %v1996, 0.0
    %vm2142 = vcmp.gt.f32.partialorder %v1805, 0.0
    %vm2143 = vcmp.gt.f32.partialorder %v1807, 0.0
    %vm2144 = vcmp.gt.f32.partialorder %v1998, 0.0
    %vm2145 = vcmp.gt.f32.partialorder %v2000, 0.0
    %vm2146 = vcmp.gt.f32.partialorder %v1811, 0.0
    %vm2147 = vcmp.gt.f32.partialorder %v1813, 0.0
    %vm2148 = vcmp.gt.f32.partialorder %v2004, 0.0
    %vm2149 = vcmp.gt.f32.partialorder %v2006, 0.0
    %vm2150 = vcmp.gt.f32.partialorder %v1815, 0.0
    %vm2151 = vcmp.gt.f32.partialorder %v1817, 0.0
    %vm2152 = vcmp.gt.f32.partialorder %v2008, 0.0
    %vm2153 = vcmp.gt.f32.partialorder %v2010, 0.0
    %vm2154 = vcmp.gt.f32.partialorder %v1821, 0.0
    %vm2155 = vcmp.gt.f32.partialorder %v1823, 0.0
    %vm2156 = vcmp.gt.f32.partialorder %v2014, 0.0
    %vm2157 = vcmp.gt.f32.partialorder %v2016, 0.0
    %vm2158 = vcmp.gt.f32.partialorder %v1825, 0.0
    %vm2159 = vcmp.gt.f32.partialorder %v1827, 0.0
    %vm2160 = vcmp.gt.f32.partialorder %v2018, 0.0
    %vm2161 = vcmp.gt.f32.partialorder %v2020, 0.0
    %vm2162 = vcmp.gt.f32.partialorder %v1831, 0.0
    %vm2163 = vcmp.gt.f32.partialorder %v1833, 0.0
    %vm2164 = vcmp.gt.f32.partialorder %v2024, 0.0
    %vm2165 = vcmp.gt.f32.partialorder %v2026, 0.0
    %vm2166 = vcmp.gt.f32.partialorder %v1835, 0.0
    %vm2167 = vcmp.gt.f32.partialorder %v1837, 0.0
    %vm2168 = vcmp.gt.f32.partialorder %v2028, 0.0
    %vm2169 = vcmp.gt.f32.partialorder %v2030, 0.0
    %vm2170 = vcmp.gt.f32.partialorder %v1841, 0.0
    %vm2171 = vcmp.gt.f32.partialorder %v1843, 0.0
    %vm2172 = vcmp.gt.f32.partialorder %v2034, 0.0
    %vm2173 = vcmp.gt.f32.partialorder %v2036, 0.0
    %vm2174 = vcmp.gt.f32.partialorder %v1845, 0.0
    %vm2175 = vcmp.gt.f32.partialorder %v1847, 0.0
    %vm2176 = vcmp.gt.f32.partialorder %v2038, 0.0
    %vm2177 = vcmp.gt.f32.partialorder %v2040, 0.0
    %vm2178 = vcmp.gt.f32.partialorder %v1851, 0.0
    %vm2179 = vcmp.gt.f32.partialorder %v1853, 0.0
    %vm2180 = vcmp.gt.f32.partialorder %v2044, 0.0
    %vm2181 = vcmp.gt.f32.partialorder %v2046, 0.0
    %vm2182 = vcmp.gt.f32.partialorder %v1855, 0.0
    %vm2183 = vcmp.gt.f32.partialorder %v1857, 0.0
    %vm2184 = vcmp.gt.f32.partialorder %v2048, 0.0
    %vm2185 = vcmp.gt.f32.partialorder %v2050, 0.0
    %vm2186 = vcmp.gt.f32.partialorder %v1861, 0.0
    %vm2187 = vcmp.gt.f32.partialorder %v1863, 0.0
    %vm2188 = vcmp.gt.f32.partialorder %v2054, 0.0
    %vm2189 = vcmp.gt.f32.partialorder %v2056, 0.0
    %vm2190 = vcmp.gt.f32.partialorder %v1865, 0.0
    %vm2191 = vcmp.gt.f32.partialorder %v1867, 0.0
    %vm2192 = vcmp.gt.f32.partialorder %v2058, 0.0
    %vm2193 = vcmp.gt.f32.partialorder %v2060, 0.0
    %vm2194 = vcmp.gt.f32.partialorder %v1871, 0.0
    %vm2195 = vcmp.gt.f32.partialorder %v1873, 0.0
    %vm2196 = vcmp.gt.f32.partialorder %v2064, 0.0
    %vm2197 = vcmp.gt.f32.partialorder %v2066, 0.0
    %vm2198 = vcmp.gt.f32.partialorder %v1875, 0.0
    %vm2199 = vcmp.gt.f32.partialorder %v1877, 0.0
    %vm2200 = vcmp.gt.f32.partialorder %v2068, 0.0
    %vm2201 = vcmp.gt.f32.partialorder %v2070, 0.0
    %vm2202 = vcmp.gt.f32.partialorder %v1881, 0.0
    %vm2203 = vcmp.gt.f32.partialorder %v1883, 0.0
    %vm2204 = vcmp.gt.f32.partialorder %v2074, 0.0
    %vm2205 = vcmp.gt.f32.partialorder %v2076, 0.0
    %vm2206 = vcmp.gt.f32.partialorder %v1885, 0.0
    %vm2207 = vcmp.gt.f32.partialorder %v1887, 0.0
    %vm2208 = vcmp.gt.f32.partialorder %v2078, 0.0
    %vm2209 = vcmp.gt.f32.partialorder %v2080, 0.0
    %v2210 = vmul.f32 %v1731, 0.01
    %v2211 = vmul.f32 %v1733, 0.01
    %v2212 = vmul.f32 %v1924, 0.01
    %v2213 = vmul.f32 %v1926, 0.01
    %v2214 = vmul.f32 %v1735, 0.01
    %v2215 = vmul.f32 %v1737, 0.01
    %v2216 = vmul.f32 %v1928, 0.01
    %v2217 = vmul.f32 %v1930, 0.01
    %v2218 = vmul.f32 %v1741, 0.01
    %v2219 = vmul.f32 %v1743, 0.01
    %v2220 = vmul.f32 %v1934, 0.01
    %v2221 = vmul.f32 %v1936, 0.01
    %v2222 = vmul.f32 %v1745, 0.01
    %v2223 = vmul.f32 %v1747, 0.01
    %v2224 = vmul.f32 %v1938, 0.01
    %v2225 = vmul.f32 %v1940, 0.01
    %v2226 = vmul.f32 %v1751, 0.01
    %v2227 = vmul.f32 %v1753, 0.01
    %v2228 = vmul.f32 %v1944, 0.01
    %v2229 = vmul.f32 %v1946, 0.01
    %v2230 = vmul.f32 %v1755, 0.01
    %v2231 = vmul.f32 %v1757, 0.01
    %v2232 = vmul.f32 %v1948, 0.01
    %v2233 = vmul.f32 %v1950, 0.01
    %v2234 = vmul.f32 %v1761, 0.01
    %v2235 = vmul.f32 %v1763, 0.01
    %v2236 = vmul.f32 %v1954, 0.01
    %v2237 = vmul.f32 %v1956, 0.01
    %v2238 = vmul.f32 %v1765, 0.01
    %v2239 = vmul.f32 %v1767, 0.01
    %v2240 = vmul.f32 %v1958, 0.01
    %v2241 = vmul.f32 %v1960, 0.01
    %v2242 = vmul.f32 %v1771, 0.01
    %v2243 = vmul.f32 %v1773, 0.01
    %v2244 = vmul.f32 %v1964, 0.01
    %v2245 = vmul.f32 %v1966, 0.01
    %v2246 = vmul.f32 %v1775, 0.01
    %v2247 = vmul.f32 %v1777, 0.01
    %v2248 = vmul.f32 %v1968, 0.01
    %v2249 = vmul.f32 %v1970, 0.01
    %v2250 = vmul.f32 %v1781, 0.01
    %v2251 = vmul.f32 %v1783, 0.01
    %v2252 = vmul.f32 %v1974, 0.01
    %v2253 = vmul.f32 %v1976, 0.01
    %v2254 = vmul.f32 %v1785, 0.01
    %v2255 = vmul.f32 %v1787, 0.01
    %v2256 = vmul.f32 %v1978, 0.01
    %v2257 = vmul.f32 %v1980, 0.01
    %v2258 = vmul.f32 %v1791, 0.01
    %v2259 = vmul.f32 %v1793, 0.01
    %v2260 = vmul.f32 %v1984, 0.01
    %v2261 = vmul.f32 %v1986, 0.01
    %v2262 = vmul.f32 %v1795, 0.01
    %v2263 = vmul.f32 %v1797, 0.01
    %v2264 = vmul.f32 %v1988, 0.01
    %v2265 = vmul.f32 %v1990, 0.01
    %v2266 = vmul.f32 %v1801, 0.01
    %v2267 = vmul.f32 %v1803, 0.01
    %v2268 = vmul.f32 %v1994, 0.01
    %v2269 = vmul.f32 %v1996, 0.01
    %v2270 = vmul.f32 %v1805, 0.01
    %v2271 = vmul.f32 %v1807, 0.01
    %v2272 = vmul.f32 %v1998, 0.01
    %v2273 = vmul.f32 %v2000, 0.01
    %v2274 = vmul.f32 %v1811, 0.01
    %v2275 = vmul.f32 %v1813, 0.01
    %v2276 = vmul.f32 %v2004, 0.01
    %v2277 = vmul.f32 %v2006, 0.01
    %v2278 = vmul.f32 %v1815, 0.01
    %v2279 = vmul.f32 %v1817, 0.01
    %v2280 = vmul.f32 %v2008, 0.01
    %v2281 = vmul.f32 %v2010, 0.01
    %v2282 = vmul.f32 %v1821, 0.01
    %v2283 = vmul.f32 %v1823, 0.01
    %v2284 = vmul.f32 %v2014, 0.01
    %v2285 = vmul.f32 %v2016, 0.01
    %v2286 = vmul.f32 %v1825, 0.01
    %v2287 = vmul.f32 %v1827, 0.01
    %v2288 = vmul.f32 %v2018, 0.01
    %v2289 = vmul.f32 %v2020, 0.01
    %v2290 = vmul.f32 %v1831, 0.01
    %v2291 = vmul.f32 %v1833, 0.01
    %v2292 = vmul.f32 %v2024, 0.01
    %v2293 = vmul.f32 %v2026, 0.01
    %v2294 = vmul.f32 %v1835, 0.01
    %v2295 = vmul.f32 %v1837, 0.01
    %v2296 = vmul.f32 %v2028, 0.01
    %v2297 = vmul.f32 %v2030, 0.01
    %v2298 = vmul.f32 %v1841, 0.01
    %v2299 = vmul.f32 %v1843, 0.01
    %v2300 = vmul.f32 %v2034, 0.01
    %v2301 = vmul.f32 %v2036, 0.01
    %v2302 = vmul.f32 %v1845, 0.01
    %v2303 = vmul.f32 %v1847, 0.01
    %v2304 = vmul.f32 %v2038, 0.01
    %v2305 = vmul.f32 %v2040, 0.01
    %v2306 = vmul.f32 %v1851, 0.01
    %v2307 = vmul.f32 %v1853, 0.01
    %v2308 = vmul.f32 %v2044, 0.01
    %v2309 = vmul.f32 %v2046, 0.01
    %v2310 = vmul.f32 %v1855, 0.01
    %v2311 = vmul.f32 %v1857, 0.01
    %v2312 = vmul.f32 %v2048, 0.01
    %v2313 = vmul.f32 %v2050, 0.01
    %v2314 = vmul.f32 %v1861, 0.01
    %v2315 = vmul.f32 %v1863, 0.01
    %v2316 = vmul.f32 %v2054, 0.01
    %v2317 = vmul.f32 %v2056, 0.01
    %v2318 = vmul.f32 %v1865, 0.01
    %v2319 = vmul.f32 %v1867, 0.01
    %v2320 = vmul.f32 %v2058, 0.01
    %v2321 = vmul.f32 %v2060, 0.01
    %v2322 = vmul.f32 %v1871, 0.01
    %v2323 = vmul.f32 %v1873, 0.01
    %v2324 = vmul.f32 %v2064, 0.01
    %v2325 = vmul.f32 %v2066, 0.01
    %v2326 = vmul.f32 %v1875, 0.01
    %v2327 = vmul.f32 %v1877, 0.01
    %v2328 = vmul.f32 %v2068, 0.01
    %v2329 = vmul.f32 %v2070, 0.01
    %v2330 = vmul.f32 %v1881, 0.01
    %v2331 = vmul.f32 %v1883, 0.01
    %v2332 = vmul.f32 %v2074, 0.01
    %v2333 = vmul.f32 %v2076, 0.01
    %v2334 = vmul.f32 %v1885, 0.01
    %v2335 = vmul.f32 %v1887, 0.01
    %v2336 = vmul.f32 %v2078, 0.01
    %v2337 = vmul.f32 %v2080, 0.01
    %v2338 = vsel %vm2082, %v1731, %v2210
    %v2339 = vsel %vm2083, %v1733, %v2211
    %v2340 = vsel %vm2084, %v1924, %v2212
    %v2341 = vsel %vm2085, %v1926, %v2213
    %v2342 = vsel %vm2086, %v1735, %v2214
    %v2343 = vsel %vm2087, %v1737, %v2215
    %v2344 = vsel %vm2088, %v1928, %v2216
    %v2345 = vsel %vm2089, %v1930, %v2217
    %v2346 = vsel %vm2090, %v1741, %v2218
    %v2347 = vsel %vm2091, %v1743, %v2219
    %v2348 = vsel %vm2092, %v1934, %v2220
    %v2349 = vsel %vm2093, %v1936, %v2221
    %v2350 = vsel %vm2094, %v1745, %v2222
    %v2351 = vsel %vm2095, %v1747, %v2223
    %v2352 = vsel %vm2096, %v1938, %v2224
    %v2353 = vsel %vm2097, %v1940, %v2225
    %v2354 = vsel %vm2098, %v1751, %v2226
    %v2355 = vsel %vm2099, %v1753, %v2227
    %v2356 = vsel %vm2100, %v1944, %v2228
    %v2357 = vsel %vm2101, %v1946, %v2229
    %v2358 = vsel %vm2102, %v1755, %v2230
    %v2359 = vsel %vm2103, %v1757, %v2231
    %v2360 = vsel %vm2104, %v1948, %v2232
    %v2361 = vsel %vm2105, %v1950, %v2233
    %v2362 = vsel %vm2106, %v1761, %v2234
    %v2363 = vsel %vm2107, %v1763, %v2235
    %v2364 = vsel %vm2108, %v1954, %v2236
    %v2365 = vsel %vm2109, %v1956, %v2237
    %v2366 = vsel %vm2110, %v1765, %v2238
    %v2367 = vsel %vm2111, %v1767, %v2239
    %v2368 = vsel %vm2112, %v1958, %v2240
    %v2369 = vsel %vm2113, %v1960, %v2241
    %v2370 = vsel %vm2114, %v1771, %v2242
    %v2371 = vsel %vm2115, %v1773, %v2243
    %v2372 = vsel %vm2116, %v1964, %v2244
    %v2373 = vsel %vm2117, %v1966, %v2245
    %v2374 = vsel %vm2118, %v1775, %v2246
    %v2375 = vsel %vm2119, %v1777, %v2247
    %v2376 = vsel %vm2120, %v1968, %v2248
    %v2377 = vsel %vm2121, %v1970, %v2249
    %v2378 = vsel %vm2122, %v1781, %v2250
    %v2379 = vsel %vm2123, %v1783, %v2251
    %v2380 = vsel %vm2124, %v1974, %v2252
    %v2381 = vsel %vm2125, %v1976, %v2253
    %v2382 = vsel %vm2126, %v1785, %v2254
    %v2383 = vsel %vm2127, %v1787, %v2255
    %v2384 = vsel %vm2128, %v1978, %v2256
    %v2385 = vsel %vm2129, %v1980, %v2257
    %v2386 = vsel %vm2130, %v1791, %v2258
    %v2387 = vsel %vm2131, %v1793, %v2259
    %v2388 = vsel %vm2132, %v1984, %v2260
    %v2389 = vsel %vm2133, %v1986, %v2261
    %v2390 = vsel %vm2134, %v1795, %v2262
    %v2391 = vsel %vm2135, %v1797, %v2263
    %v2392 = vsel %vm2136, %v1988, %v2264
    %v2393 = vsel %vm2137, %v1990, %v2265
    %v2394 = vsel %vm2138, %v1801, %v2266
    %v2395 = vsel %vm2139, %v1803, %v2267
    %v2396 = vsel %vm2140, %v1994, %v2268
    %v2397 = vsel %vm2141, %v1996, %v2269
    %v2398 = vsel %vm2142, %v1805, %v2270
    %v2399 = vsel %vm2143, %v1807, %v2271
    %v2400 = vsel %vm2144, %v1998, %v2272
    %v2401 = vsel %vm2145, %v2000, %v2273
    %v2402 = vsel %vm2146, %v1811, %v2274
    %v2403 = vsel %vm2147, %v1813, %v2275
    %v2404 = vsel %vm2148, %v2004, %v2276
    %v2405 = vsel %vm2149, %v2006, %v2277
    %v2406 = vsel %vm2150, %v1815, %v2278
    %v2407 = vsel %vm2151, %v1817, %v2279
    %v2408 = vsel %vm2152, %v2008, %v2280
    %v2409 = vsel %vm2153, %v2010, %v2281
    %v2410 = vsel %vm2154, %v1821, %v2282
    %v2411 = vsel %vm2155, %v1823, %v2283
    %v2412 = vsel %vm2156, %v2014, %v2284
    %v2413 = vsel %vm2157, %v2016, %v2285
    %v2414 = vsel %vm2158, %v1825, %v2286
    %v2415 = vsel %vm2159, %v1827, %v2287
    %v2416 = vsel %vm2160, %v2018, %v2288
    %v2417 = vsel %vm2161, %v2020, %v2289
    %v2418 = vsel %vm2162, %v1831, %v2290
    %v2419 = vsel %vm2163, %v1833, %v2291
    %v2420 = vsel %vm2164, %v2024, %v2292
    %v2421 = vsel %vm2165, %v2026, %v2293
    %v2422 = vsel %vm2166, %v1835, %v2294
    %v2423 = vsel %vm2167, %v1837, %v2295
    %v2424 = vsel %vm2168, %v2028, %v2296
    %v2425 = vsel %vm2169, %v2030, %v2297
    %v2426 = vsel %vm2170, %v1841, %v2298
    %v2427 = vsel %vm2171, %v1843, %v2299
    %v2428 = vsel %vm2172, %v2034, %v2300
    %v2429 = vsel %vm2173, %v2036, %v2301
    %v2430 = vsel %vm2174, %v1845, %v2302
    %v2431 = vsel %vm2175, %v1847, %v2303
    %v2432 = vsel %vm2176, %v2038, %v2304
    %v2433 = vsel %vm2177, %v2040, %v2305
    %v2434 = vsel %vm2178, %v1851, %v2306
    %v2435 = vsel %vm2179, %v1853, %v2307
    %v2436 = vsel %vm2180, %v2044, %v2308
    %v2437 = vsel %vm2181, %v2046, %v2309
    %v2438 = vsel %vm2182, %v1855, %v2310
    %v2439 = vsel %vm2183, %v1857, %v2311
    %v2440 = vsel %vm2184, %v2048, %v2312
    %v2441 = vsel %vm2185, %v2050, %v2313
    %v2442 = vsel %vm2186, %v1861, %v2314
    %v2443 = vsel %vm2187, %v1863, %v2315
    %v2444 = vsel %vm2188, %v2054, %v2316
    %v2445 = vsel %vm2189, %v2056, %v2317
    %v2446 = vsel %vm2190, %v1865, %v2318
    %v2447 = vsel %vm2191, %v1867, %v2319
    %v2448 = vsel %vm2192, %v2058, %v2320
    %v2449 = vsel %vm2193, %v2060, %v2321
    %v2450 = vsel %vm2194, %v1871, %v2322
    %v2451 = vsel %vm2195, %v1873, %v2323
    %v2452 = vsel %vm2196, %v2064, %v2324
    %v2453 = vsel %vm2197, %v2066, %v2325
    %v2454 = vsel %vm2198, %v1875, %v2326
    %v2455 = vsel %vm2199, %v1877, %v2327
    %v2456 = vsel %vm2200, %v2068, %v2328
    %v2457 = vsel %vm2201, %v2070, %v2329
    %v2458 = vsel %vm2202, %v1881, %v2330
    %v2459 = vsel %vm2203, %v1883, %v2331
    %v2460 = vsel %vm2204, %v2074, %v2332
    %v2461 = vsel %vm2205, %v2076, %v2333
    %v2462 = vsel %vm2206, %v1885, %v2334
    %v2463 = vsel %vm2207, %v1887, %v2335
    %v2464 = vsel %vm2208, %v2078, %v2336
    %v2465 = vsel %vm2209, %v2080, %v2337
    %v2466 = vpack.c.bf16 %v2342, %v2338
    %v2467 = vpack.c.bf16 %v2343, %v2339
    %v2468 = vpack.c.bf16 %v2344, %v2340
    %v2469 = vpack.c.bf16 %v2345, %v2341
    %v2470 = vpack.c.bf16 %v2350, %v2346
    %v2471 = vpack.c.bf16 %v2351, %v2347
    %v2472 = vpack.c.bf16 %v2352, %v2348
    %v2473 = vpack.c.bf16 %v2353, %v2349
    %v2474 = vpack.c.bf16 %v2358, %v2354
    %v2475 = vpack.c.bf16 %v2359, %v2355
    %v2476 = vpack.c.bf16 %v2360, %v2356
    %v2477 = vpack.c.bf16 %v2361, %v2357
    %v2478 = vpack.c.bf16 %v2366, %v2362
    %v2479 = vpack.c.bf16 %v2367, %v2363
    %v2480 = vpack.c.bf16 %v2368, %v2364
    %v2481 = vpack.c.bf16 %v2369, %v2365
    %v2482 = vpack.c.bf16 %v2374, %v2370
    %v2483 = vpack.c.bf16 %v2375, %v2371
    %v2484 = vpack.c.bf16 %v2376, %v2372
    %v2485 = vpack.c.bf16 %v2377, %v2373
    %v2486 = vpack.c.bf16 %v2382, %v2378
    %v2487 = vpack.c.bf16 %v2383, %v2379
    %v2488 = vpack.c.bf16 %v2384, %v2380
    %v2489 = vpack.c.bf16 %v2385, %v2381
    %v2490 = vpack.c.bf16 %v2390, %v2386
    %v2491 = vpack.c.bf16 %v2391, %v2387
    %v2492 = vpack.c.bf16 %v2392, %v2388
    %v2493 = vpack.c.bf16 %v2393, %v2389
    %v2494 = vpack.c.bf16 %v2398, %v2394
    %v2495 = vpack.c.bf16 %v2399, %v2395
    %v2496 = vpack.c.bf16 %v2400, %v2396
    %v2497 = vpack.c.bf16 %v2401, %v2397
    %v2498 = vpack.c.bf16 %v2406, %v2402
    %v2499 = vpack.c.bf16 %v2407, %v2403
    %v2500 = vpack.c.bf16 %v2408, %v2404
    %v2501 = vpack.c.bf16 %v2409, %v2405
    %v2502 = vpack.c.bf16 %v2414, %v2410
    %v2503 = vpack.c.bf16 %v2415, %v2411
    %v2504 = vpack.c.bf16 %v2416, %v2412
    %v2505 = vpack.c.bf16 %v2417, %v2413
    %v2506 = vpack.c.bf16 %v2422, %v2418
    %v2507 = vpack.c.bf16 %v2423, %v2419
    %v2508 = vpack.c.bf16 %v2424, %v2420
    %v2509 = vpack.c.bf16 %v2425, %v2421
    %v2510 = vpack.c.bf16 %v2430, %v2426
    %v2511 = vpack.c.bf16 %v2431, %v2427
    %v2512 = vpack.c.bf16 %v2432, %v2428
    %v2513 = vpack.c.bf16 %v2433, %v2429
    %v2514 = vpack.c.bf16 %v2438, %v2434
    %v2515 = vpack.c.bf16 %v2439, %v2435
    %v2516 = vpack.c.bf16 %v2440, %v2436
    %v2517 = vpack.c.bf16 %v2441, %v2437
    %v2518 = vpack.c.bf16 %v2446, %v2442
    %v2519 = vpack.c.bf16 %v2447, %v2443
    %v2520 = vpack.c.bf16 %v2448, %v2444
    %v2521 = vpack.c.bf16 %v2449, %v2445
    %v2522 = vpack.c.bf16 %v2454, %v2450
    %v2523 = vpack.c.bf16 %v2455, %v2451
    %v2524 = vpack.c.bf16 %v2456, %v2452
    %v2525 = vpack.c.bf16 %v2457, %v2453
    %v2526 = vpack.c.bf16 %v2462, %v2458
    %v2527 = vpack.c.bf16 %v2463, %v2459
    %v2528 = vpack.c.bf16 %v2464, %v2460
    %v2529 = vpack.c.bf16 %v2465, %v2461
    %2531 = vset.pattern.permute.xlu0 0
    %2532 = vperm.xlu0 %2531, %v201
    %v2533 = vpop.permute.xlu0 %2532
    %2536 = vset.pattern.permute.xlu0 0
    %2537 = vperm.xlu0 %2536, %v202
    %v2538 = vpop.permute.xlu0 %2537
    %2541 = vset.pattern.permute.xlu0 0
    %2542 = vperm.xlu0 %2541, %v203
    %v2543 = vpop.permute.xlu0 %2542
    %2546 = vset.pattern.permute.xlu0 0
    %2547 = vperm.xlu0 %2546, %v204
    %v2548 = vpop.permute.xlu0 %2547
    %2551 = vset.pattern.permute.xlu0 0
    %2552 = vperm.xlu0 %2551, %v205
    %v2553 = vpop.permute.xlu0 %2552
    %2556 = vset.pattern.permute.xlu0 0
    %2557 = vperm.xlu0 %2556, %v206
    %v2558 = vpop.permute.xlu0 %2557
    %2561 = vset.pattern.permute.xlu0 0
    %2562 = vperm.xlu0 %2561, %v207
    %v2563 = vpop.permute.xlu0 %2562
    %2566 = vset.pattern.permute.xlu0 0
    %2567 = vperm.xlu0 %2566, %v208
    %v2568 = vpop.permute.xlu0 %2567
    %2571 = vset.pattern.permute.xlu0 0
    %2572 = vperm.xlu0 %2571, %v209
    %v2573 = vpop.permute.xlu0 %2572
    %2576 = vset.pattern.permute.xlu0 0
    %2577 = vperm.xlu0 %2576, %v210
    %v2578 = vpop.permute.xlu0 %2577
    %2581 = vset.pattern.permute.xlu0 0
    %2582 = vperm.xlu0 %2581, %v211
    %v2583 = vpop.permute.xlu0 %2582
    %2586 = vset.pattern.permute.xlu0 0
    %2587 = vperm.xlu0 %2586, %v212
    %v2588 = vpop.permute.xlu0 %2587
    %2591 = vset.pattern.permute.xlu0 0
    %2592 = vperm.xlu0 %2591, %v213
    %v2593 = vpop.permute.xlu0 %2592
    %2596 = vset.pattern.permute.xlu0 0
    %2597 = vperm.xlu0 %2596, %v214
    %v2598 = vpop.permute.xlu0 %2597
    %2601 = vset.pattern.permute.xlu0 0
    %2602 = vperm.xlu0 %2601, %v215
    %v2603 = vpop.permute.xlu0 %2602
    %2606 = vset.pattern.permute.xlu0 0
    %2607 = vperm.xlu0 %2606, %v216
    %v2608 = vpop.permute.xlu0 %2607
    %2611 = vset.pattern.permute.xlu0 0
    %2612 = vperm.xlu0 %2611, %v217
    %v2613 = vpop.permute.xlu0 %2612
    %2616 = vset.pattern.permute.xlu0 0
    %2617 = vperm.xlu0 %2616, %v218
    %v2618 = vpop.permute.xlu0 %2617
    %2621 = vset.pattern.permute.xlu0 0
    %2622 = vperm.xlu0 %2621, %v219
    %v2623 = vpop.permute.xlu0 %2622
    %2626 = vset.pattern.permute.xlu0 0
    %2627 = vperm.xlu0 %2626, %v220
    %v2628 = vpop.permute.xlu0 %2627
    %2631 = vset.pattern.permute.xlu0 0
    %2632 = vperm.xlu0 %2631, %v221
    %v2633 = vpop.permute.xlu0 %2632
    %2636 = vset.pattern.permute.xlu0 0
    %2637 = vperm.xlu0 %2636, %v222
    %v2638 = vpop.permute.xlu0 %2637
    %2641 = vset.pattern.permute.xlu0 0
    %2642 = vperm.xlu0 %2641, %v223
    %v2643 = vpop.permute.xlu0 %2642
    %2646 = vset.pattern.permute.xlu0 0
    %2647 = vperm.xlu0 %2646, %v224
    %v2648 = vpop.permute.xlu0 %2647
    %2651 = vset.pattern.permute.xlu0 0
    %2652 = vperm.xlu0 %2651, %v225
    %v2653 = vpop.permute.xlu0 %2652
    %2656 = vset.pattern.permute.xlu0 0
    %2657 = vperm.xlu0 %2656, %v226
    %v2658 = vpop.permute.xlu0 %2657
    %2661 = vset.pattern.permute.xlu0 0
    %2662 = vperm.xlu0 %2661, %v227
    %v2663 = vpop.permute.xlu0 %2662
    %2666 = vset.pattern.permute.xlu0 0
    %2667 = vperm.xlu0 %2666, %v228
    %v2668 = vpop.permute.xlu0 %2667
    %2671 = vset.pattern.permute.xlu0 0
    %2672 = vperm.xlu0 %2671, %v229
    %v2673 = vpop.permute.xlu0 %2672
    %2676 = vset.pattern.permute.xlu0 0
    %2677 = vperm.xlu0 %2676, %v230
    %v2678 = vpop.permute.xlu0 %2677
    %2681 = vset.pattern.permute.xlu0 0
    %2682 = vperm.xlu0 %2681, %v231
    %v2683 = vpop.permute.xlu0 %2682
    %2686 = vset.pattern.permute.xlu0 0
    %2687 = vperm.xlu0 %2686, %v232
    %v2688 = vpop.permute.xlu0 %2687
    %v2722 = vunpack.c.l.b16 %v169
    %v2723 = vunpack.c.h.b16 %v169
    %v2724 = vunpack.c.l.b16 %v170
    %v2725 = vunpack.c.h.b16 %v170
    %v2726 = vunpack.c.l.b16 %v171
    %v2727 = vunpack.c.h.b16 %v171
    %v2728 = vunpack.c.l.b16 %v172
    %v2729 = vunpack.c.h.b16 %v172
    %v2730 = vunpack.c.l.b16 %v173
    %v2731 = vunpack.c.h.b16 %v173
    %v2732 = vunpack.c.l.b16 %v174
    %v2733 = vunpack.c.h.b16 %v174
    %v2734 = vunpack.c.l.b16 %v175
    %v2735 = vunpack.c.h.b16 %v175
    %v2736 = vunpack.c.l.b16 %v176
    %v2737 = vunpack.c.h.b16 %v176
    %v2738 = vunpack.c.l.b16 %v177
    %v2739 = vunpack.c.h.b16 %v177
    %v2740 = vunpack.c.l.b16 %v178
    %v2741 = vunpack.c.h.b16 %v178
    %v2742 = vunpack.c.l.b16 %v179
    %v2743 = vunpack.c.h.b16 %v179
    %v2744 = vunpack.c.l.b16 %v180
    %v2745 = vunpack.c.h.b16 %v180
    %v2746 = vunpack.c.l.b16 %v181
    %v2747 = vunpack.c.h.b16 %v181
    %v2748 = vunpack.c.l.b16 %v182
    %v2749 = vunpack.c.h.b16 %v182
    %v2750 = vunpack.c.l.b16 %v183
    %v2751 = vunpack.c.h.b16 %v183
    %v2752 = vunpack.c.l.b16 %v184
    %v2753 = vunpack.c.h.b16 %v184
    %v2754 = vunpack.c.l.b16 %v185
    %v2755 = vunpack.c.h.b16 %v185
    %v2756 = vunpack.c.l.b16 %v186
    %v2757 = vunpack.c.h.b16 %v186
    %v2758 = vunpack.c.l.b16 %v187
    %v2759 = vunpack.c.h.b16 %v187
    %v2760 = vunpack.c.l.b16 %v188
    %v2761 = vunpack.c.h.b16 %v188
    %v2762 = vunpack.c.l.b16 %v189
    %v2763 = vunpack.c.h.b16 %v189
    %v2764 = vunpack.c.l.b16 %v190
    %v2765 = vunpack.c.h.b16 %v190
    %v2766 = vunpack.c.l.b16 %v191
    %v2767 = vunpack.c.h.b16 %v191
    %v2768 = vunpack.c.l.b16 %v192
    %v2769 = vunpack.c.h.b16 %v192
    %v2770 = vunpack.c.l.b16 %v193
    %v2771 = vunpack.c.h.b16 %v193
    %v2772 = vunpack.c.l.b16 %v194
    %v2773 = vunpack.c.h.b16 %v194
    %v2774 = vunpack.c.l.b16 %v195
    %v2775 = vunpack.c.h.b16 %v195
    %v2776 = vunpack.c.l.b16 %v196
    %v2777 = vunpack.c.h.b16 %v196
    %v2778 = vunpack.c.l.b16 %v197
    %v2779 = vunpack.c.h.b16 %v197
    %v2780 = vunpack.c.l.b16 %v198
    %v2781 = vunpack.c.h.b16 %v198
    %v2782 = vunpack.c.l.b16 %v199
    %v2783 = vunpack.c.h.b16 %v199
    %v2784 = vunpack.c.l.b16 %v200
    %v2785 = vunpack.c.h.b16 %v200
    %v2786 = vpack.c.b16 %v2724, %v2722
    %v2787 = vpack.c.b16 %v2725, %v2723
    %v2788 = vpack.c.b16 %v2728, %v2726
    %v2789 = vpack.c.b16 %v2729, %v2727
    %v2790 = vpack.c.b16 %v2732, %v2730
    %v2791 = vpack.c.b16 %v2733, %v2731
    %v2792 = vpack.c.b16 %v2736, %v2734
    %v2793 = vpack.c.b16 %v2737, %v2735
    %v2794 = vpack.c.b16 %v2740, %v2738
    %v2795 = vpack.c.b16 %v2741, %v2739
    %v2796 = vpack.c.b16 %v2744, %v2742
    %v2797 = vpack.c.b16 %v2745, %v2743
    %v2798 = vpack.c.b16 %v2748, %v2746
    %v2799 = vpack.c.b16 %v2749, %v2747
    %v2800 = vpack.c.b16 %v2752, %v2750
    %v2801 = vpack.c.b16 %v2753, %v2751
    %v2802 = vpack.c.b16 %v2756, %v2754
    %v2803 = vpack.c.b16 %v2757, %v2755
    %v2804 = vpack.c.b16 %v2760, %v2758
    %v2805 = vpack.c.b16 %v2761, %v2759
    %v2806 = vpack.c.b16 %v2764, %v2762
    %v2807 = vpack.c.b16 %v2765, %v2763
    %v2808 = vpack.c.b16 %v2768, %v2766
    %v2809 = vpack.c.b16 %v2769, %v2767
    %v2810 = vpack.c.b16 %v2772, %v2770
    %v2811 = vpack.c.b16 %v2773, %v2771
    %v2812 = vpack.c.b16 %v2776, %v2774
    %v2813 = vpack.c.b16 %v2777, %v2775
    %v2814 = vpack.c.b16 %v2780, %v2778
    %v2815 = vpack.c.b16 %v2781, %v2779
    %v2816 = vpack.c.b16 %v2784, %v2782
    %v2817 = vpack.c.b16 %v2785, %v2783
    %2850 = vmatprep.subr.bf16.mxu0 %v2495
    %2851 = vmatpush1.bf16.msra.mxu0 %v2494
    %2852 = vmatprep.subr.bf16.mxu0 %v2491
    %2853 = vmatpush1.bf16.msra.mxu0 %v2490
    %2854 = vmatprep.subr.bf16.mxu0 %v2487
    %2855 = vmatpush1.bf16.msra.mxu0 %v2486
    %2856 = vmatprep.subr.bf16.mxu0 %v2483
    %2857 = vmatpush1.bf16.msra.mxu0 %v2482
    %2858 = vmatprep.subr.bf16.mxu0 %v2479
    %2859 = vmatpush1.bf16.msra.mxu0 %v2478
    %2860 = vmatprep.subr.bf16.mxu0 %v2475
    %2861 = vmatpush1.bf16.msra.mxu0 %v2474
    %2862 = vmatprep.subr.bf16.mxu0 %v2471
    %2863 = vmatpush1.bf16.msra.mxu0 %v2470
    %2864 = vmatprep.subr.bf16.mxu0 %v2467
    %2865 = vmatpush1.bf16.msra.mxu0 %v2466
    %2866 = vmatprep.subr.bf16.mxu0 %v2527
    %2867 = vmatpush2.bf16.msra.mxu0 %v2526
    %2868 = vmatprep.subr.bf16.mxu0 %v2523
    %2869 = vmatpush2.bf16.msra.mxu0 %v2522
    %2870 = vmatprep.subr.bf16.mxu0 %v2519
    %2871 = vmatpush2.bf16.msra.mxu0 %v2518
    %2872 = vmatprep.subr.bf16.mxu0 %v2515
    %2873 = vmatpush2.bf16.msra.mxu0 %v2514
    %2874 = vmatprep.subr.bf16.mxu0 %v2511
    %2875 = vmatpush2.bf16.msra.mxu0 %v2510
    %2876 = vmatprep.subr.bf16.mxu0 %v2507
    %2877 = vmatpush2.bf16.msra.mxu0 %v2506
    %2878 = vmatprep.subr.bf16.mxu0 %v2503
    %2879 = vmatpush2.bf16.msra.mxu0 %v2502
    %2880 = vmatprep.subr.bf16.mxu0 %v2499
    %2881 = vmatpush2.bf16.msra.mxu0 %v2498
    %2882 = vmatprep.mubr.bf16.mxu0 %v2787
    %2883 = vmatmul.mubr.bf16.gmra.mxu0 %v2786
    %v2884 = vpop.f32.mrf.mxu0
    %v2885 = vadd.f32 %v2533, %v2884
    %v2886 = vpop.f32.mrf.mxu0
    %v2887 = vadd.f32 %v2533, %v2886
    %v2888 = vpop.f32.mrf.mxu0
    %v2889 = vadd.f32 %v2538, %v2888
    %v2890 = vpop.f32.mrf.mxu0
    %v2891 = vadd.f32 %v2538, %v2890
    %2892 = vmatprep.mubr.bf16.mxu0 %v2789
    %2893 = vmatmul.mubr.bf16.gmra.mxu0 %v2788
    %v2894 = vpop.f32.mrf.mxu0
    %v2895 = vadd.f32 %v2543, %v2894
    %v2896 = vpop.f32.mrf.mxu0
    %v2897 = vadd.f32 %v2543, %v2896
    %v2898 = vpop.f32.mrf.mxu0
    %v2899 = vadd.f32 %v2548, %v2898
    %v2900 = vpop.f32.mrf.mxu0
    %v2901 = vadd.f32 %v2548, %v2900
    %2902 = vmatprep.mubr.bf16.mxu0 %v2791
    %2903 = vmatmul.mubr.bf16.gmra.mxu0 %v2790
    %v2904 = vpop.f32.mrf.mxu0
    %v2905 = vadd.f32 %v2553, %v2904
    %v2906 = vpop.f32.mrf.mxu0
    %v2907 = vadd.f32 %v2553, %v2906
    %v2908 = vpop.f32.mrf.mxu0
    %v2909 = vadd.f32 %v2558, %v2908
    %v2910 = vpop.f32.mrf.mxu0
    %v2911 = vadd.f32 %v2558, %v2910
    %2912 = vmatprep.mubr.bf16.mxu0 %v2793
    %2913 = vmatmul.mubr.bf16.gmra.mxu0 %v2792
    %v2914 = vpop.f32.mrf.mxu0
    %v2915 = vadd.f32 %v2563, %v2914
    %v2916 = vpop.f32.mrf.mxu0
    %v2917 = vadd.f32 %v2563, %v2916
    %v2918 = vpop.f32.mrf.mxu0
    %v2919 = vadd.f32 %v2568, %v2918
    %v2920 = vpop.f32.mrf.mxu0
    %v2921 = vadd.f32 %v2568, %v2920
    %2922 = vmatprep.mubr.bf16.mxu0 %v2795
    %2923 = vmatmul.mubr.bf16.gmra.mxu0 %v2794
    %v2924 = vpop.f32.mrf.mxu0
    %v2925 = vadd.f32 %v2573, %v2924
    %v2926 = vpop.f32.mrf.mxu0
    %v2927 = vadd.f32 %v2573, %v2926
    %v2928 = vpop.f32.mrf.mxu0
    %v2929 = vadd.f32 %v2578, %v2928
    %v2930 = vpop.f32.mrf.mxu0
    %v2931 = vadd.f32 %v2578, %v2930
    %2932 = vmatprep.mubr.bf16.mxu0 %v2797
    %2933 = vmatmul.mubr.bf16.gmra.mxu0 %v2796
    %v2934 = vpop.f32.mrf.mxu0
    %v2935 = vadd.f32 %v2583, %v2934
    %v2936 = vpop.f32.mrf.mxu0
    %v2937 = vadd.f32 %v2583, %v2936
    %v2938 = vpop.f32.mrf.mxu0
    %v2939 = vadd.f32 %v2588, %v2938
    %v2940 = vpop.f32.mrf.mxu0
    %v2941 = vadd.f32 %v2588, %v2940
    %2942 = vmatprep.mubr.bf16.mxu0 %v2799
    %2943 = vmatmul.mubr.bf16.gmra.mxu0 %v2798
    %v2944 = vpop.f32.mrf.mxu0
    %v2945 = vadd.f32 %v2593, %v2944
    %v2946 = vpop.f32.mrf.mxu0
    %v2947 = vadd.f32 %v2593, %v2946
    %v2948 = vpop.f32.mrf.mxu0
    %v2949 = vadd.f32 %v2598, %v2948
    %v2950 = vpop.f32.mrf.mxu0
    %v2951 = vadd.f32 %v2598, %v2950
    %2952 = vmatprep.mubr.bf16.mxu0 %v2801
    %2953 = vmatmul.mubr.bf16.gmra.mxu0 %v2800
    %v2954 = vpop.f32.mrf.mxu0
    %v2955 = vadd.f32 %v2603, %v2954
    %v2956 = vpop.f32.mrf.mxu0
    %v2957 = vadd.f32 %v2603, %v2956
    %v2958 = vpop.f32.mrf.mxu0
    %v2959 = vadd.f32 %v2608, %v2958
    %v2960 = vpop.f32.mrf.mxu0
    %v2961 = vadd.f32 %v2608, %v2960
    %2962 = vmatprep.mubr.bf16.mxu0 %v2803
    %2963 = vmatmul.mubr.bf16.gmra.mxu0 %v2802
    %v2964 = vpop.f32.mrf.mxu0
    %v2965 = vadd.f32 %v2613, %v2964
    %v2966 = vpop.f32.mrf.mxu0
    %v2967 = vadd.f32 %v2613, %v2966
    %v2968 = vpop.f32.mrf.mxu0
    %v2969 = vadd.f32 %v2618, %v2968
    %v2970 = vpop.f32.mrf.mxu0
    %v2971 = vadd.f32 %v2618, %v2970
    %2972 = vmatprep.mubr.bf16.mxu0 %v2805
    %2973 = vmatmul.mubr.bf16.gmra.mxu0 %v2804
    %v2974 = vpop.f32.mrf.mxu0
    %v2975 = vadd.f32 %v2623, %v2974
    %v2976 = vpop.f32.mrf.mxu0
    %v2977 = vadd.f32 %v2623, %v2976
    %v2978 = vpop.f32.mrf.mxu0
    %v2979 = vadd.f32 %v2628, %v2978
    %v2980 = vpop.f32.mrf.mxu0
    %v2981 = vadd.f32 %v2628, %v2980
    %2982 = vmatprep.mubr.bf16.mxu0 %v2807
    %2983 = vmatmul.mubr.bf16.gmra.mxu0 %v2806
    %v2984 = vpop.f32.mrf.mxu0
    %v2985 = vadd.f32 %v2633, %v2984
    %v2986 = vpop.f32.mrf.mxu0
    %v2987 = vadd.f32 %v2633, %v2986
    %v2988 = vpop.f32.mrf.mxu0
    %v2989 = vadd.f32 %v2638, %v2988
    %v2990 = vpop.f32.mrf.mxu0
    %v2991 = vadd.f32 %v2638, %v2990
    %2992 = vmatprep.mubr.bf16.mxu0 %v2809
    %2993 = vmatmul.mubr.bf16.gmra.mxu0 %v2808
    %v2994 = vpop.f32.mrf.mxu0
    %v2995 = vadd.f32 %v2643, %v2994
    %v2996 = vpop.f32.mrf.mxu0
    %v2997 = vadd.f32 %v2643, %v2996
    %v2998 = vpop.f32.mrf.mxu0
    %v2999 = vadd.f32 %v2648, %v2998
    %v3000 = vpop.f32.mrf.mxu0
    %v3001 = vadd.f32 %v2648, %v3000
    %3002 = vmatprep.mubr.bf16.mxu0 %v2811
    %3003 = vmatmul.mubr.bf16.gmra.mxu0 %v2810
    %v3004 = vpop.f32.mrf.mxu0
    %v3005 = vadd.f32 %v2653, %v3004
    %v3006 = vpop.f32.mrf.mxu0
    %v3007 = vadd.f32 %v2653, %v3006
    %v3008 = vpop.f32.mrf.mxu0
    %v3009 = vadd.f32 %v2658, %v3008
    %v3010 = vpop.f32.mrf.mxu0
    %v3011 = vadd.f32 %v2658, %v3010
    %3012 = vmatprep.mubr.bf16.mxu0 %v2813
    %3013 = vmatmul.mubr.bf16.gmra.mxu0 %v2812
    %v3014 = vpop.f32.mrf.mxu0
    %v3015 = vadd.f32 %v2663, %v3014
    %v3016 = vpop.f32.mrf.mxu0
    %v3017 = vadd.f32 %v2663, %v3016
    %v3018 = vpop.f32.mrf.mxu0
    %v3019 = vadd.f32 %v2668, %v3018
    %v3020 = vpop.f32.mrf.mxu0
    %v3021 = vadd.f32 %v2668, %v3020
    %3022 = vmatprep.mubr.bf16.mxu0 %v2815
    %3023 = vmatmul.mubr.bf16.gmra.mxu0 %v2814
    %v3024 = vpop.f32.mrf.mxu0
    %v3025 = vadd.f32 %v2673, %v3024
    %v3026 = vpop.f32.mrf.mxu0
    %v3027 = vadd.f32 %v2673, %v3026
    %v3028 = vpop.f32.mrf.mxu0
    %v3029 = vadd.f32 %v2678, %v3028
    %v3030 = vpop.f32.mrf.mxu0
    %v3031 = vadd.f32 %v2678, %v3030
    %3032 = vmatprep.mubr.bf16.mxu0 %v2817
    %3033 = vmatmul.mubr.bf16.gmra.mxu0 %v2816
    %v3034 = vpop.f32.mrf.mxu0
    %v3035 = vadd.f32 %v2683, %v3034
    %v3036 = vpop.f32.mrf.mxu0
    %v3037 = vadd.f32 %v2683, %v3036
    %v3038 = vpop.f32.mrf.mxu0
    %v3039 = vadd.f32 %v2688, %v3038
    %v3040 = vpop.f32.mrf.mxu0
    %v3041 = vadd.f32 %v2688, %v3040
    %3042 = vdwg.mxu0
    %3043 = vmatprep.subr.bf16.mxu0 %v2497
    %3044 = vmatpush1.bf16.msra.mxu0 %v2496
    %3045 = vmatprep.subr.bf16.mxu0 %v2493
    %3046 = vmatpush1.bf16.msra.mxu0 %v2492
    %3047 = vmatprep.subr.bf16.mxu0 %v2489
    %3048 = vmatpush1.bf16.msra.mxu0 %v2488
    %3049 = vmatprep.subr.bf16.mxu0 %v2485
    %3050 = vmatpush1.bf16.msra.mxu0 %v2484
    %3051 = vmatprep.subr.bf16.mxu0 %v2481
    %3052 = vmatpush1.bf16.msra.mxu0 %v2480
    %3053 = vmatprep.subr.bf16.mxu0 %v2477
    %3054 = vmatpush1.bf16.msra.mxu0 %v2476
    %3055 = vmatprep.subr.bf16.mxu0 %v2473
    %3056 = vmatpush1.bf16.msra.mxu0 %v2472
    %3057 = vmatprep.subr.bf16.mxu0 %v2469
    %3058 = vmatpush1.bf16.msra.mxu0 %v2468
    %3059 = vmatprep.subr.bf16.mxu0 %v2529
    %3060 = vmatpush2.bf16.msra.mxu0 %v2528
    %3061 = vmatprep.subr.bf16.mxu0 %v2525
    %3062 = vmatpush2.bf16.msra.mxu0 %v2524
    %3063 = vmatprep.subr.bf16.mxu0 %v2521
    %3064 = vmatpush2.bf16.msra.mxu0 %v2520
    %3065 = vmatprep.subr.bf16.mxu0 %v2517
    %3066 = vmatpush2.bf16.msra.mxu0 %v2516
    %3067 = vmatprep.subr.bf16.mxu0 %v2513
    %3068 = vmatpush2.bf16.msra.mxu0 %v2512
    %3069 = vmatprep.subr.bf16.mxu0 %v2509
    %3070 = vmatpush2.bf16.msra.mxu0 %v2508
    %3071 = vmatprep.subr.bf16.mxu0 %v2505
    %3072 = vmatpush2.bf16.msra.mxu0 %v2504
    %3073 = vmatprep.subr.bf16.mxu0 %v2501
    %3074 = vmatpush2.bf16.msra.mxu0 %v2500
    %3075 = vmatprep.mubr.bf16.mxu0 %v2787
    %3076 = vmatmul.mubr.bf16.gmra.mxu0 %v2786
    %v3077 = vpop.f32.mrf.mxu0
    %v3078 = vadd.f32 %v2533, %v3077
    %v3079 = vpop.f32.mrf.mxu0
    %v3080 = vadd.f32 %v2533, %v3079
    %v3081 = vpop.f32.mrf.mxu0
    %v3082 = vadd.f32 %v2538, %v3081
    %v3083 = vpop.f32.mrf.mxu0
    %v3084 = vadd.f32 %v2538, %v3083
    %3085 = vmatprep.mubr.bf16.mxu0 %v2789
    %3086 = vmatmul.mubr.bf16.gmra.mxu0 %v2788
    %v3087 = vpop.f32.mrf.mxu0
    %v3088 = vadd.f32 %v2543, %v3087
    %v3089 = vpop.f32.mrf.mxu0
    %v3090 = vadd.f32 %v2543, %v3089
    %v3091 = vpop.f32.mrf.mxu0
    %v3092 = vadd.f32 %v2548, %v3091
    %v3093 = vpop.f32.mrf.mxu0
    %v3094 = vadd.f32 %v2548, %v3093
    %3095 = vmatprep.mubr.bf16.mxu0 %v2791
    %3096 = vmatmul.mubr.bf16.gmra.mxu0 %v2790
    %v3097 = vpop.f32.mrf.mxu0
    %v3098 = vadd.f32 %v2553, %v3097
    %v3099 = vpop.f32.mrf.mxu0
    %v3100 = vadd.f32 %v2553, %v3099
    %v3101 = vpop.f32.mrf.mxu0
    %v3102 = vadd.f32 %v2558, %v3101
    %v3103 = vpop.f32.mrf.mxu0
    %v3104 = vadd.f32 %v2558, %v3103
    %3105 = vmatprep.mubr.bf16.mxu0 %v2793
    %3106 = vmatmul.mubr.bf16.gmra.mxu0 %v2792
    %v3107 = vpop.f32.mrf.mxu0
    %v3108 = vadd.f32 %v2563, %v3107
    %v3109 = vpop.f32.mrf.mxu0
    %v3110 = vadd.f32 %v2563, %v3109
    %v3111 = vpop.f32.mrf.mxu0
    %v3112 = vadd.f32 %v2568, %v3111
    %v3113 = vpop.f32.mrf.mxu0
    %v3114 = vadd.f32 %v2568, %v3113
    %3115 = vmatprep.mubr.bf16.mxu0 %v2795
    %3116 = vmatmul.mubr.bf16.gmra.mxu0 %v2794
    %v3117 = vpop.f32.mrf.mxu0
    %v3118 = vadd.f32 %v2573, %v3117
    %v3119 = vpop.f32.mrf.mxu0
    %v3120 = vadd.f32 %v2573, %v3119
    %v3121 = vpop.f32.mrf.mxu0
    %v3122 = vadd.f32 %v2578, %v3121
    %v3123 = vpop.f32.mrf.mxu0
    %v3124 = vadd.f32 %v2578, %v3123
    %3125 = vmatprep.mubr.bf16.mxu0 %v2797
    %3126 = vmatmul.mubr.bf16.gmra.mxu0 %v2796
    %v3127 = vpop.f32.mrf.mxu0
    %v3128 = vadd.f32 %v2583, %v3127
    %v3129 = vpop.f32.mrf.mxu0
    %v3130 = vadd.f32 %v2583, %v3129
    %v3131 = vpop.f32.mrf.mxu0
    %v3132 = vadd.f32 %v2588, %v3131
    %v3133 = vpop.f32.mrf.mxu0
    %v3134 = vadd.f32 %v2588, %v3133
    %3135 = vmatprep.mubr.bf16.mxu0 %v2799
    %3136 = vmatmul.mubr.bf16.gmra.mxu0 %v2798
    %v3137 = vpop.f32.mrf.mxu0
    %v3138 = vadd.f32 %v2593, %v3137
    %v3139 = vpop.f32.mrf.mxu0
    %v3140 = vadd.f32 %v2593, %v3139
    %v3141 = vpop.f32.mrf.mxu0
    %v3142 = vadd.f32 %v2598, %v3141
    %v3143 = vpop.f32.mrf.mxu0
    %v3144 = vadd.f32 %v2598, %v3143
    %3145 = vmatprep.mubr.bf16.mxu0 %v2801
    %3146 = vmatmul.mubr.bf16.gmra.mxu0 %v2800
    %v3147 = vpop.f32.mrf.mxu0
    %v3148 = vadd.f32 %v2603, %v3147
    %v3149 = vpop.f32.mrf.mxu0
    %v3150 = vadd.f32 %v2603, %v3149
    %v3151 = vpop.f32.mrf.mxu0
    %v3152 = vadd.f32 %v2608, %v3151
    %v3153 = vpop.f32.mrf.mxu0
    %v3154 = vadd.f32 %v2608, %v3153
    %3155 = vmatprep.mubr.bf16.mxu0 %v2803
    %3156 = vmatmul.mubr.bf16.gmra.mxu0 %v2802
    %v3157 = vpop.f32.mrf.mxu0
    %v3158 = vadd.f32 %v2613, %v3157
    %v3159 = vpop.f32.mrf.mxu0
    %v3160 = vadd.f32 %v2613, %v3159
    %v3161 = vpop.f32.mrf.mxu0
    %v3162 = vadd.f32 %v2618, %v3161
    %v3163 = vpop.f32.mrf.mxu0
    %v3164 = vadd.f32 %v2618, %v3163
    %3165 = vmatprep.mubr.bf16.mxu0 %v2805
    %3166 = vmatmul.mubr.bf16.gmra.mxu0 %v2804
    %v3167 = vpop.f32.mrf.mxu0
    %v3168 = vadd.f32 %v2623, %v3167
    %v3169 = vpop.f32.mrf.mxu0
    %v3170 = vadd.f32 %v2623, %v3169
    %v3171 = vpop.f32.mrf.mxu0
    %v3172 = vadd.f32 %v2628, %v3171
    %v3173 = vpop.f32.mrf.mxu0
    %v3174 = vadd.f32 %v2628, %v3173
    %3175 = vmatprep.mubr.bf16.mxu0 %v2807
    %3176 = vmatmul.mubr.bf16.gmra.mxu0 %v2806
    %v3177 = vpop.f32.mrf.mxu0
    %v3178 = vadd.f32 %v2633, %v3177
    %v3179 = vpop.f32.mrf.mxu0
    %v3180 = vadd.f32 %v2633, %v3179
    %v3181 = vpop.f32.mrf.mxu0
    %v3182 = vadd.f32 %v2638, %v3181
    %v3183 = vpop.f32.mrf.mxu0
    %v3184 = vadd.f32 %v2638, %v3183
    %3185 = vmatprep.mubr.bf16.mxu0 %v2809
    %3186 = vmatmul.mubr.bf16.gmra.mxu0 %v2808
    %v3187 = vpop.f32.mrf.mxu0
    %v3188 = vadd.f32 %v2643, %v3187
    %v3189 = vpop.f32.mrf.mxu0
    %v3190 = vadd.f32 %v2643, %v3189
    %v3191 = vpop.f32.mrf.mxu0
    %v3192 = vadd.f32 %v2648, %v3191
    %v3193 = vpop.f32.mrf.mxu0
    %v3194 = vadd.f32 %v2648, %v3193
    %3195 = vmatprep.mubr.bf16.mxu0 %v2811
    %3196 = vmatmul.mubr.bf16.gmra.mxu0 %v2810
    %v3197 = vpop.f32.mrf.mxu0
    %v3198 = vadd.f32 %v2653, %v3197
    %v3199 = vpop.f32.mrf.mxu0
    %v3200 = vadd.f32 %v2653, %v3199
    %v3201 = vpop.f32.mrf.mxu0
    %v3202 = vadd.f32 %v2658, %v3201
    %v3203 = vpop.f32.mrf.mxu0
    %v3204 = vadd.f32 %v2658, %v3203
    %3205 = vmatprep.mubr.bf16.mxu0 %v2813
    %3206 = vmatmul.mubr.bf16.gmra.mxu0 %v2812
    %v3207 = vpop.f32.mrf.mxu0
    %v3208 = vadd.f32 %v2663, %v3207
    %v3209 = vpop.f32.mrf.mxu0
    %v3210 = vadd.f32 %v2663, %v3209
    %v3211 = vpop.f32.mrf.mxu0
    %v3212 = vadd.f32 %v2668, %v3211
    %v3213 = vpop.f32.mrf.mxu0
    %v3214 = vadd.f32 %v2668, %v3213
    %3215 = vmatprep.mubr.bf16.mxu0 %v2815
    %3216 = vmatmul.mubr.bf16.gmra.mxu0 %v2814
    %v3217 = vpop.f32.mrf.mxu0
    %v3218 = vadd.f32 %v2673, %v3217
    %v3219 = vpop.f32.mrf.mxu0
    %v3220 = vadd.f32 %v2673, %v3219
    %v3221 = vpop.f32.mrf.mxu0
    %v3222 = vadd.f32 %v2678, %v3221
    %v3223 = vpop.f32.mrf.mxu0
    %v3224 = vadd.f32 %v2678, %v3223
    %3225 = vmatprep.mubr.bf16.mxu0 %v2817
    %3226 = vmatmul.mubr.bf16.gmra.mxu0 %v2816
    %v3227 = vpop.f32.mrf.mxu0
    %v3228 = vadd.f32 %v2683, %v3227
    %v3229 = vpop.f32.mrf.mxu0
    %v3230 = vadd.f32 %v2683, %v3229
    %v3231 = vpop.f32.mrf.mxu0
    %v3232 = vadd.f32 %v2688, %v3231
    %v3233 = vpop.f32.mrf.mxu0
    %v3234 = vadd.f32 %v2688, %v3233
    %3235 = vdwg.mxu0
    %vm3236 = vcmp.gt.f32.partialorder %v2885, 0.0
    %vm3237 = vcmp.gt.f32.partialorder %v2887, 0.0
    %vm3238 = vcmp.gt.f32.partialorder %v3078, 0.0
    %vm3239 = vcmp.gt.f32.partialorder %v3080, 0.0
    %vm3240 = vcmp.gt.f32.partialorder %v2889, 0.0
    %vm3241 = vcmp.gt.f32.partialorder %v2891, 0.0
    %vm3242 = vcmp.gt.f32.partialorder %v3082, 0.0
    %vm3243 = vcmp.gt.f32.partialorder %v3084, 0.0
    %vm3244 = vcmp.gt.f32.partialorder %v2895, 0.0
    %vm3245 = vcmp.gt.f32.partialorder %v2897, 0.0
    %vm3246 = vcmp.gt.f32.partialorder %v3088, 0.0
    %vm3247 = vcmp.gt.f32.partialorder %v3090, 0.0
    %vm3248 = vcmp.gt.f32.partialorder %v2899, 0.0
    %vm3249 = vcmp.gt.f32.partialorder %v2901, 0.0
    %vm3250 = vcmp.gt.f32.partialorder %v3092, 0.0
    %vm3251 = vcmp.gt.f32.partialorder %v3094, 0.0
    %vm3252 = vcmp.gt.f32.partialorder %v2905, 0.0
    %vm3253 = vcmp.gt.f32.partialorder %v2907, 0.0
    %vm3254 = vcmp.gt.f32.partialorder %v3098, 0.0
    %vm3255 = vcmp.gt.f32.partialorder %v3100, 0.0
    %vm3256 = vcmp.gt.f32.partialorder %v2909, 0.0
    %vm3257 = vcmp.gt.f32.partialorder %v2911, 0.0
    %vm3258 = vcmp.gt.f32.partialorder %v3102, 0.0
    %vm3259 = vcmp.gt.f32.partialorder %v3104, 0.0
    %vm3260 = vcmp.gt.f32.partialorder %v2915, 0.0
    %vm3261 = vcmp.gt.f32.partialorder %v2917, 0.0
    %vm3262 = vcmp.gt.f32.partialorder %v3108, 0.0
    %vm3263 = vcmp.gt.f32.partialorder %v3110, 0.0
    %vm3264 = vcmp.gt.f32.partialorder %v2919, 0.0
    %vm3265 = vcmp.gt.f32.partialorder %v2921, 0.0
    %vm3266 = vcmp.gt.f32.partialorder %v3112, 0.0
    %vm3267 = vcmp.gt.f32.partialorder %v3114, 0.0
    %vm3268 = vcmp.gt.f32.partialorder %v2925, 0.0
    %vm3269 = vcmp.gt.f32.partialorder %v2927, 0.0
    %vm3270 = vcmp.gt.f32.partialorder %v3118, 0.0
    %vm3271 = vcmp.gt.f32.partialorder %v3120, 0.0
    %vm3272 = vcmp.gt.f32.partialorder %v2929, 0.0
    %vm3273 = vcmp.gt.f32.partialorder %v2931, 0.0
    %vm3274 = vcmp.gt.f32.partialorder %v3122, 0.0
    %vm3275 = vcmp.gt.f32.partialorder %v3124, 0.0
    %vm3276 = vcmp.gt.f32.partialorder %v2935, 0.0
    %vm3277 = vcmp.gt.f32.partialorder %v2937, 0.0
    %vm3278 = vcmp.gt.f32.partialorder %v3128, 0.0
    %vm3279 = vcmp.gt.f32.partialorder %v3130, 0.0
    %vm3280 = vcmp.gt.f32.partialorder %v2939, 0.0
    %vm3281 = vcmp.gt.f32.partialorder %v2941, 0.0
    %vm3282 = vcmp.gt.f32.partialorder %v3132, 0.0
    %vm3283 = vcmp.gt.f32.partialorder %v3134, 0.0
    %vm3284 = vcmp.gt.f32.partialorder %v2945, 0.0
    %vm3285 = vcmp.gt.f32.partialorder %v2947, 0.0
    %vm3286 = vcmp.gt.f32.partialorder %v3138, 0.0
    %vm3287 = vcmp.gt.f32.partialorder %v3140, 0.0
    %vm3288 = vcmp.gt.f32.partialorder %v2949, 0.0
    %vm3289 = vcmp.gt.f32.partialorder %v2951, 0.0
    %vm3290 = vcmp.gt.f32.partialorder %v3142, 0.0
    %vm3291 = vcmp.gt.f32.partialorder %v3144, 0.0
    %vm3292 = vcmp.gt.f32.partialorder %v2955, 0.0
    %vm3293 = vcmp.gt.f32.partialorder %v2957, 0.0
    %vm3294 = vcmp.gt.f32.partialorder %v3148, 0.0
    %vm3295 = vcmp.gt.f32.partialorder %v3150, 0.0
    %vm3296 = vcmp.gt.f32.partialorder %v2959, 0.0
    %vm3297 = vcmp.gt.f32.partialorder %v2961, 0.0
    %vm3298 = vcmp.gt.f32.partialorder %v3152, 0.0
    %vm3299 = vcmp.gt.f32.partialorder %v3154, 0.0
    %vm3300 = vcmp.gt.f32.partialorder %v2965, 0.0
    %vm3301 = vcmp.gt.f32.partialorder %v2967, 0.0
    %vm3302 = vcmp.gt.f32.partialorder %v3158, 0.0
    %vm3303 = vcmp.gt.f32.partialorder %v3160, 0.0
    %vm3304 = vcmp.gt.f32.partialorder %v2969, 0.0
    %vm3305 = vcmp.gt.f32.partialorder %v2971, 0.0
    %vm3306 = vcmp.gt.f32.partialorder %v3162, 0.0
    %vm3307 = vcmp.gt.f32.partialorder %v3164, 0.0
    %vm3308 = vcmp.gt.f32.partialorder %v2975, 0.0
    %vm3309 = vcmp.gt.f32.partialorder %v2977, 0.0
    %vm3310 = vcmp.gt.f32.partialorder %v3168, 0.0
    %vm3311 = vcmp.gt.f32.partialorder %v3170, 0.0
    %vm3312 = vcmp.gt.f32.partialorder %v2979, 0.0
    %vm3313 = vcmp.gt.f32.partialorder %v2981, 0.0
    %vm3314 = vcmp.gt.f32.partialorder %v3172, 0.0
    %vm3315 = vcmp.gt.f32.partialorder %v3174, 0.0
    %vm3316 = vcmp.gt.f32.partialorder %v2985, 0.0
    %vm3317 = vcmp.gt.f32.partialorder %v2987, 0.0
    %vm3318 = vcmp.gt.f32.partialorder %v3178, 0.0
    %vm3319 = vcmp.gt.f32.partialorder %v3180, 0.0
    %vm3320 = vcmp.gt.f32.partialorder %v2989, 0.0
    %vm3321 = vcmp.gt.f32.partialorder %v2991, 0.0
    %vm3322 = vcmp.gt.f32.partialorder %v3182, 0.0
    %vm3323 = vcmp.gt.f32.partialorder %v3184, 0.0
    %vm3324 = vcmp.gt.f32.partialorder %v2995, 0.0
    %vm3325 = vcmp.gt.f32.partialorder %v2997, 0.0
    %vm3326 = vcmp.gt.f32.partialorder %v3188, 0.0
    %vm3327 = vcmp.gt.f32.partialorder %v3190, 0.0
    %vm3328 = vcmp.gt.f32.partialorder %v2999, 0.0
    %vm3329 = vcmp.gt.f32.partialorder %v3001, 0.0
    %vm3330 = vcmp.gt.f32.partialorder %v3192, 0.0
    %vm3331 = vcmp.gt.f32.partialorder %v3194, 0.0
    %vm3332 = vcmp.gt.f32.partialorder %v3005, 0.0
    %vm3333 = vcmp.gt.f32.partialorder %v3007, 0.0
    %vm3334 = vcmp.gt.f32.partialorder %v3198, 0.0
    %vm3335 = vcmp.gt.f32.partialorder %v3200, 0.0
    %vm3336 = vcmp.gt.f32.partialorder %v3009, 0.0
    %vm3337 = vcmp.gt.f32.partialorder %v3011, 0.0
    %vm3338 = vcmp.gt.f32.partialorder %v3202, 0.0
    %vm3339 = vcmp.gt.f32.partialorder %v3204, 0.0
    %vm3340 = vcmp.gt.f32.partialorder %v3015, 0.0
    %vm3341 = vcmp.gt.f32.partialorder %v3017, 0.0
    %vm3342 = vcmp.gt.f32.partialorder %v3208, 0.0
    %vm3343 = vcmp.gt.f32.partialorder %v3210, 0.0
    %vm3344 = vcmp.gt.f32.partialorder %v3019, 0.0
    %vm3345 = vcmp.gt.f32.partialorder %v3021, 0.0
    %vm3346 = vcmp.gt.f32.partialorder %v3212, 0.0
    %vm3347 = vcmp.gt.f32.partialorder %v3214, 0.0
    %vm3348 = vcmp.gt.f32.partialorder %v3025, 0.0
    %vm3349 = vcmp.gt.f32.partialorder %v3027, 0.0
    %vm3350 = vcmp.gt.f32.partialorder %v3218, 0.0
    %vm3351 = vcmp.gt.f32.partialorder %v3220, 0.0
    %vm3352 = vcmp.gt.f32.partialorder %v3029, 0.0
    %vm3353 = vcmp.gt.f32.partialorder %v3031, 0.0
    %vm3354 = vcmp.gt.f32.partialorder %v3222, 0.0
    %vm3355 = vcmp.gt.f32.partialorder %v3224, 0.0
    %vm3356 = vcmp.gt.f32.partialorder %v3035, 0.0
    %vm3357 = vcmp.gt.f32.partialorder %v3037, 0.0
    %vm3358 = vcmp.gt.f32.partialorder %v3228, 0.0
    %vm3359 = vcmp.gt.f32.partialorder %v3230, 0.0
    %vm3360 = vcmp.gt.f32.partialorder %v3039, 0.0
    %vm3361 = vcmp.gt.f32.partialorder %v3041, 0.0
    %vm3362 = vcmp.gt.f32.partialorder %v3232, 0.0
    %vm3363 = vcmp.gt.f32.partialorder %v3234, 0.0
    %v3364 = vmul.f32 %v2885, 0.01
    %v3365 = vmul.f32 %v2887, 0.01
    %v3366 = vmul.f32 %v3078, 0.01
    %v3367 = vmul.f32 %v3080, 0.01
    %v3368 = vmul.f32 %v2889, 0.01
    %v3369 = vmul.f32 %v2891, 0.01
    %v3370 = vmul.f32 %v3082, 0.01
    %v3371 = vmul.f32 %v3084, 0.01
    %v3372 = vmul.f32 %v2895, 0.01
    %v3373 = vmul.f32 %v2897, 0.01
    %v3374 = vmul.f32 %v3088, 0.01
    %v3375 = vmul.f32 %v3090, 0.01
    %v3376 = vmul.f32 %v2899, 0.01
    %v3377 = vmul.f32 %v2901, 0.01
    %v3378 = vmul.f32 %v3092, 0.01
    %v3379 = vmul.f32 %v3094, 0.01
    %v3380 = vmul.f32 %v2905, 0.01
    %v3381 = vmul.f32 %v2907, 0.01
    %v3382 = vmul.f32 %v3098, 0.01
    %v3383 = vmul.f32 %v3100, 0.01
    %v3384 = vmul.f32 %v2909, 0.01
    %v3385 = vmul.f32 %v2911, 0.01
    %v3386 = vmul.f32 %v3102, 0.01
    %v3387 = vmul.f32 %v3104, 0.01
    %v3388 = vmul.f32 %v2915, 0.01
    %v3389 = vmul.f32 %v2917, 0.01
    %v3390 = vmul.f32 %v3108, 0.01
    %v3391 = vmul.f32 %v3110, 0.01
    %v3392 = vmul.f32 %v2919, 0.01
    %v3393 = vmul.f32 %v2921, 0.01
    %v3394 = vmul.f32 %v3112, 0.01
    %v3395 = vmul.f32 %v3114, 0.01
    %v3396 = vmul.f32 %v2925, 0.01
    %v3397 = vmul.f32 %v2927, 0.01
    %v3398 = vmul.f32 %v3118, 0.01
    %v3399 = vmul.f32 %v3120, 0.01
    %v3400 = vmul.f32 %v2929, 0.01
    %v3401 = vmul.f32 %v2931, 0.01
    %v3402 = vmul.f32 %v3122, 0.01
    %v3403 = vmul.f32 %v3124, 0.01
    %v3404 = vmul.f32 %v2935, 0.01
    %v3405 = vmul.f32 %v2937, 0.01
    %v3406 = vmul.f32 %v3128, 0.01
    %v3407 = vmul.f32 %v3130, 0.01
    %v3408 = vmul.f32 %v2939, 0.01
    %v3409 = vmul.f32 %v2941, 0.01
    %v3410 = vmul.f32 %v3132, 0.01
    %v3411 = vmul.f32 %v3134, 0.01
    %v3412 = vmul.f32 %v2945, 0.01
    %v3413 = vmul.f32 %v2947, 0.01
    %v3414 = vmul.f32 %v3138, 0.01
    %v3415 = vmul.f32 %v3140, 0.01
    %v3416 = vmul.f32 %v2949, 0.01
    %v3417 = vmul.f32 %v2951, 0.01
    %v3418 = vmul.f32 %v3142, 0.01
    %v3419 = vmul.f32 %v3144, 0.01
    %v3420 = vmul.f32 %v2955, 0.01
    %v3421 = vmul.f32 %v2957, 0.01
    %v3422 = vmul.f32 %v3148, 0.01
    %v3423 = vmul.f32 %v3150, 0.01
    %v3424 = vmul.f32 %v2959, 0.01
    %v3425 = vmul.f32 %v2961, 0.01
    %v3426 = vmul.f32 %v3152, 0.01
    %v3427 = vmul.f32 %v3154, 0.01
    %v3428 = vmul.f32 %v2965, 0.01
    %v3429 = vmul.f32 %v2967, 0.01
    %v3430 = vmul.f32 %v3158, 0.01
    %v3431 = vmul.f32 %v3160, 0.01
    %v3432 = vmul.f32 %v2969, 0.01
    %v3433 = vmul.f32 %v2971, 0.01
    %v3434 = vmul.f32 %v3162, 0.01
    %v3435 = vmul.f32 %v3164, 0.01
    %v3436 = vmul.f32 %v2975, 0.01
    %v3437 = vmul.f32 %v2977, 0.01
    %v3438 = vmul.f32 %v3168, 0.01
    %v3439 = vmul.f32 %v3170, 0.01
    %v3440 = vmul.f32 %v2979, 0.01
    %v3441 = vmul.f32 %v2981, 0.01
    %v3442 = vmul.f32 %v3172, 0.01
    %v3443 = vmul.f32 %v3174, 0.01
    %v3444 = vmul.f32 %v2985, 0.01
    %v3445 = vmul.f32 %v2987, 0.01
    %v3446 = vmul.f32 %v3178, 0.01
    %v3447 = vmul.f32 %v3180, 0.01
    %v3448 = vmul.f32 %v2989, 0.01
    %v3449 = vmul.f32 %v2991, 0.01
    %v3450 = vmul.f32 %v3182, 0.01
    %v3451 = vmul.f32 %v3184, 0.01
    %v3452 = vmul.f32 %v2995, 0.01
    %v3453 = vmul.f32 %v2997, 0.01
    %v3454 = vmul.f32 %v3188, 0.01
    %v3455 = vmul.f32 %v3190, 0.01
    %v3456 = vmul.f32 %v2999, 0.01
    %v3457 = vmul.f32 %v3001, 0.01
    %v3458 = vmul.f32 %v3192, 0.01
    %v3459 = vmul.f32 %v3194, 0.01
    %v3460 = vmul.f32 %v3005, 0.01
    %v3461 = vmul.f32 %v3007, 0.01
    %v3462 = vmul.f32 %v3198, 0.01
    %v3463 = vmul.f32 %v3200, 0.01
    %v3464 = vmul.f32 %v3009, 0.01
    %v3465 = vmul.f32 %v3011, 0.01
    %v3466 = vmul.f32 %v3202, 0.01
    %v3467 = vmul.f32 %v3204, 0.01
    %v3468 = vmul.f32 %v3015, 0.01
    %v3469 = vmul.f32 %v3017, 0.01
    %v3470 = vmul.f32 %v3208, 0.01
    %v3471 = vmul.f32 %v3210, 0.01
    %v3472 = vmul.f32 %v3019, 0.01
    %v3473 = vmul.f32 %v3021, 0.01
    %v3474 = vmul.f32 %v3212, 0.01
    %v3475 = vmul.f32 %v3214, 0.01
    %v3476 = vmul.f32 %v3025, 0.01
    %v3477 = vmul.f32 %v3027, 0.01
    %v3478 = vmul.f32 %v3218, 0.01
    %v3479 = vmul.f32 %v3220, 0.01
    %v3480 = vmul.f32 %v3029, 0.01
    %v3481 = vmul.f32 %v3031, 0.01
    %v3482 = vmul.f32 %v3222, 0.01
    %v3483 = vmul.f32 %v3224, 0.01
    %v3484 = vmul.f32 %v3035, 0.01
    %v3485 = vmul.f32 %v3037, 0.01
    %v3486 = vmul.f32 %v3228, 0.01
    %v3487 = vmul.f32 %v3230, 0.01
    %v3488 = vmul.f32 %v3039, 0.01
    %v3489 = vmul.f32 %v3041, 0.01
    %v3490 = vmul.f32 %v3232, 0.01
    %v3491 = vmul.f32 %v3234, 0.01
    %v3492 = vsel %vm3236, %v2885, %v3364
    %v3493 = vsel %vm3237, %v2887, %v3365
    %v3494 = vsel %vm3238, %v3078, %v3366
    %v3495 = vsel %vm3239, %v3080, %v3367
    %v3496 = vsel %vm3240, %v2889, %v3368
    %v3497 = vsel %vm3241, %v2891, %v3369
    %v3498 = vsel %vm3242, %v3082, %v3370
    %v3499 = vsel %vm3243, %v3084, %v3371
    %v3500 = vsel %vm3244, %v2895, %v3372
    %v3501 = vsel %vm3245, %v2897, %v3373
    %v3502 = vsel %vm3246, %v3088, %v3374
    %v3503 = vsel %vm3247, %v3090, %v3375
    %v3504 = vsel %vm3248, %v2899, %v3376
    %v3505 = vsel %vm3249, %v2901, %v3377
    %v3506 = vsel %vm3250, %v3092, %v3378
    %v3507 = vsel %vm3251, %v3094, %v3379
    %v3508 = vsel %vm3252, %v2905, %v3380
    %v3509 = vsel %vm3253, %v2907, %v3381
    %v3510 = vsel %vm3254, %v3098, %v3382
    %v3511 = vsel %vm3255, %v3100, %v3383
    %v3512 = vsel %vm3256, %v2909, %v3384
    %v3513 = vsel %vm3257, %v2911, %v3385
    %v3514 = vsel %vm3258, %v3102, %v3386
    %v3515 = vsel %vm3259, %v3104, %v3387
    %v3516 = vsel %vm3260, %v2915, %v3388
    %v3517 = vsel %vm3261, %v2917, %v3389
    %v3518 = vsel %vm3262, %v3108, %v3390
    %v3519 = vsel %vm3263, %v3110, %v3391
    %v3520 = vsel %vm3264, %v2919, %v3392
    %v3521 = vsel %vm3265, %v2921, %v3393
    %v3522 = vsel %vm3266, %v3112, %v3394
    %v3523 = vsel %vm3267, %v3114, %v3395
    %v3524 = vsel %vm3268, %v2925, %v3396
    %v3525 = vsel %vm3269, %v2927, %v3397
    %v3526 = vsel %vm3270, %v3118, %v3398
    %v3527 = vsel %vm3271, %v3120, %v3399
    %v3528 = vsel %vm3272, %v2929, %v3400
    %v3529 = vsel %vm3273, %v2931, %v3401
    %v3530 = vsel %vm3274, %v3122, %v3402
    %v3531 = vsel %vm3275, %v3124, %v3403
    %v3532 = vsel %vm3276, %v2935, %v3404
    %v3533 = vsel %vm3277, %v2937, %v3405
    %v3534 = vsel %vm3278, %v3128, %v3406
    %v3535 = vsel %vm3279, %v3130, %v3407
    %v3536 = vsel %vm3280, %v2939, %v3408
    %v3537 = vsel %vm3281, %v2941, %v3409
    %v3538 = vsel %vm3282, %v3132, %v3410
    %v3539 = vsel %vm3283, %v3134, %v3411
    %v3540 = vsel %vm3284, %v2945, %v3412
    %v3541 = vsel %vm3285, %v2947, %v3413
    %v3542 = vsel %vm3286, %v3138, %v3414
    %v3543 = vsel %vm3287, %v3140, %v3415
    %v3544 = vsel %vm3288, %v2949, %v3416
    %v3545 = vsel %vm3289, %v2951, %v3417
    %v3546 = vsel %vm3290, %v3142, %v3418
    %v3547 = vsel %vm3291, %v3144, %v3419
    %v3548 = vsel %vm3292, %v2955, %v3420
    %v3549 = vsel %vm3293, %v2957, %v3421
    %v3550 = vsel %vm3294, %v3148, %v3422
    %v3551 = vsel %vm3295, %v3150, %v3423
    %v3552 = vsel %vm3296, %v2959, %v3424
    %v3553 = vsel %vm3297, %v2961, %v3425
    %v3554 = vsel %vm3298, %v3152, %v3426
    %v3555 = vsel %vm3299, %v3154, %v3427
    %v3556 = vsel %vm3300, %v2965, %v3428
    %v3557 = vsel %vm3301, %v2967, %v3429
    %v3558 = vsel %vm3302, %v3158, %v3430
    %v3559 = vsel %vm3303, %v3160, %v3431
    %v3560 = vsel %vm3304, %v2969, %v3432
    %v3561 = vsel %vm3305, %v2971, %v3433
    %v3562 = vsel %vm3306, %v3162, %v3434
    %v3563 = vsel %vm3307, %v3164, %v3435
    %v3564 = vsel %vm3308, %v2975, %v3436
    %v3565 = vsel %vm3309, %v2977, %v3437
    %v3566 = vsel %vm3310, %v3168, %v3438
    %v3567 = vsel %vm3311, %v3170, %v3439
    %v3568 = vsel %vm3312, %v2979, %v3440
    %v3569 = vsel %vm3313, %v2981, %v3441
    %v3570 = vsel %vm3314, %v3172, %v3442
    %v3571 = vsel %vm3315, %v3174, %v3443
    %v3572 = vsel %vm3316, %v2985, %v3444
    %v3573 = vsel %vm3317, %v2987, %v3445
    %v3574 = vsel %vm3318, %v3178, %v3446
    %v3575 = vsel %vm3319, %v3180, %v3447
    %v3576 = vsel %vm3320, %v2989, %v3448
    %v3577 = vsel %vm3321, %v2991, %v3449
    %v3578 = vsel %vm3322, %v3182, %v3450
    %v3579 = vsel %vm3323, %v3184, %v3451
    %v3580 = vsel %vm3324, %v2995, %v3452
    %v3581 = vsel %vm3325, %v2997, %v3453
    %v3582 = vsel %vm3326, %v3188, %v3454
    %v3583 = vsel %vm3327, %v3190, %v3455
    %v3584 = vsel %vm3328, %v2999, %v3456
    %v3585 = vsel %vm3329, %v3001, %v3457
    %v3586 = vsel %vm3330, %v3192, %v3458
    %v3587 = vsel %vm3331, %v3194, %v3459
    %v3588 = vsel %vm3332, %v3005, %v3460
    %v3589 = vsel %vm3333, %v3007, %v3461
    %v3590 = vsel %vm3334, %v3198, %v3462
    %v3591 = vsel %vm3335, %v3200, %v3463
    %v3592 = vsel %vm3336, %v3009, %v3464
    %v3593 = vsel %vm3337, %v3011, %v3465
    %v3594 = vsel %vm3338, %v3202, %v3466
    %v3595 = vsel %vm3339, %v3204, %v3467
    %v3596 = vsel %vm3340, %v3015, %v3468
    %v3597 = vsel %vm3341, %v3017, %v3469
    %v3598 = vsel %vm3342, %v3208, %v3470
    %v3599 = vsel %vm3343, %v3210, %v3471
    %v3600 = vsel %vm3344, %v3019, %v3472
    %v3601 = vsel %vm3345, %v3021, %v3473
    %v3602 = vsel %vm3346, %v3212, %v3474
    %v3603 = vsel %vm3347, %v3214, %v3475
    %v3604 = vsel %vm3348, %v3025, %v3476
    %v3605 = vsel %vm3349, %v3027, %v3477
    %v3606 = vsel %vm3350, %v3218, %v3478
    %v3607 = vsel %vm3351, %v3220, %v3479
    %v3608 = vsel %vm3352, %v3029, %v3480
    %v3609 = vsel %vm3353, %v3031, %v3481
    %v3610 = vsel %vm3354, %v3222, %v3482
    %v3611 = vsel %vm3355, %v3224, %v3483
    %v3612 = vsel %vm3356, %v3035, %v3484
    %v3613 = vsel %vm3357, %v3037, %v3485
    %v3614 = vsel %vm3358, %v3228, %v3486
    %v3615 = vsel %vm3359, %v3230, %v3487
    %v3616 = vsel %vm3360, %v3039, %v3488
    %v3617 = vsel %vm3361, %v3041, %v3489
    %v3618 = vsel %vm3362, %v3232, %v3490
    %v3619 = vsel %vm3363, %v3234, %v3491
    %v3620 = vpack.c.bf16 %v3496, %v3492
    %v3621 = vpack.c.bf16 %v3497, %v3493
    %v3622 = vpack.c.bf16 %v3498, %v3494
    %v3623 = vpack.c.bf16 %v3499, %v3495
    %v3624 = vpack.c.bf16 %v3504, %v3500
    %v3625 = vpack.c.bf16 %v3505, %v3501
    %v3626 = vpack.c.bf16 %v3506, %v3502
    %v3627 = vpack.c.bf16 %v3507, %v3503
    %v3628 = vpack.c.bf16 %v3512, %v3508
    %v3629 = vpack.c.bf16 %v3513, %v3509
    %v3630 = vpack.c.bf16 %v3514, %v3510
    %v3631 = vpack.c.bf16 %v3515, %v3511
    %v3632 = vpack.c.bf16 %v3520, %v3516
    %v3633 = vpack.c.bf16 %v3521, %v3517
    %v3634 = vpack.c.bf16 %v3522, %v3518
    %v3635 = vpack.c.bf16 %v3523, %v3519
    %v3636 = vpack.c.bf16 %v3528, %v3524
    %v3637 = vpack.c.bf16 %v3529, %v3525
    %v3638 = vpack.c.bf16 %v3530, %v3526
    %v3639 = vpack.c.bf16 %v3531, %v3527
    %v3640 = vpack.c.bf16 %v3536, %v3532
    %v3641 = vpack.c.bf16 %v3537, %v3533
    %v3642 = vpack.c.bf16 %v3538, %v3534
    %v3643 = vpack.c.bf16 %v3539, %v3535
    %v3644 = vpack.c.bf16 %v3544, %v3540
    %v3645 = vpack.c.bf16 %v3545, %v3541
    %v3646 = vpack.c.bf16 %v3546, %v3542
    %v3647 = vpack.c.bf16 %v3547, %v3543
    %v3648 = vpack.c.bf16 %v3552, %v3548
    %v3649 = vpack.c.bf16 %v3553, %v3549
    %v3650 = vpack.c.bf16 %v3554, %v3550
    %v3651 = vpack.c.bf16 %v3555, %v3551
    %v3652 = vpack.c.bf16 %v3560, %v3556
    %v3653 = vpack.c.bf16 %v3561, %v3557
    %v3654 = vpack.c.bf16 %v3562, %v3558
    %v3655 = vpack.c.bf16 %v3563, %v3559
    %v3656 = vpack.c.bf16 %v3568, %v3564
    %v3657 = vpack.c.bf16 %v3569, %v3565
    %v3658 = vpack.c.bf16 %v3570, %v3566
    %v3659 = vpack.c.bf16 %v3571, %v3567
    %v3660 = vpack.c.bf16 %v3576, %v3572
    %v3661 = vpack.c.bf16 %v3577, %v3573
    %v3662 = vpack.c.bf16 %v3578, %v3574
    %v3663 = vpack.c.bf16 %v3579, %v3575
    %v3664 = vpack.c.bf16 %v3584, %v3580
    %v3665 = vpack.c.bf16 %v3585, %v3581
    %v3666 = vpack.c.bf16 %v3586, %v3582
    %v3667 = vpack.c.bf16 %v3587, %v3583
    %v3668 = vpack.c.bf16 %v3592, %v3588
    %v3669 = vpack.c.bf16 %v3593, %v3589
    %v3670 = vpack.c.bf16 %v3594, %v3590
    %v3671 = vpack.c.bf16 %v3595, %v3591
    %v3672 = vpack.c.bf16 %v3600, %v3596
    %v3673 = vpack.c.bf16 %v3601, %v3597
    %v3674 = vpack.c.bf16 %v3602, %v3598
    %v3675 = vpack.c.bf16 %v3603, %v3599
    %v3676 = vpack.c.bf16 %v3608, %v3604
    %v3677 = vpack.c.bf16 %v3609, %v3605
    %v3678 = vpack.c.bf16 %v3610, %v3606
    %v3679 = vpack.c.bf16 %v3611, %v3607
    %v3680 = vpack.c.bf16 %v3616, %v3612
    %v3681 = vpack.c.bf16 %v3617, %v3613
    %v3682 = vpack.c.bf16 %v3618, %v3614
    %v3683 = vpack.c.bf16 %v3619, %v3615
    %3685 = vset.pattern.permute.xlu0 0
    %3686 = vperm.xlu0 %3685, %v265
    %v3687 = vpop.permute.xlu0 %3686
    %3690 = vset.pattern.permute.xlu0 0
    %3691 = vperm.xlu0 %3690, %v266
    %v3692 = vpop.permute.xlu0 %3691
    %3695 = vset.pattern.permute.xlu0 0
    %3696 = vperm.xlu0 %3695, %v267
    %v3697 = vpop.permute.xlu0 %3696
    %3700 = vset.pattern.permute.xlu0 0
    %3701 = vperm.xlu0 %3700, %v268
    %v3702 = vpop.permute.xlu0 %3701
    %3705 = vset.pattern.permute.xlu0 0
    %3706 = vperm.xlu0 %3705, %v269
    %v3707 = vpop.permute.xlu0 %3706
    %3710 = vset.pattern.permute.xlu0 0
    %3711 = vperm.xlu0 %3710, %v270
    %v3712 = vpop.permute.xlu0 %3711
    %3715 = vset.pattern.permute.xlu0 0
    %3716 = vperm.xlu0 %3715, %v271
    %v3717 = vpop.permute.xlu0 %3716
    %3720 = vset.pattern.permute.xlu0 0
    %3721 = vperm.xlu0 %3720, %v272
    %v3722 = vpop.permute.xlu0 %3721
    %3725 = vset.pattern.permute.xlu0 0
    %3726 = vperm.xlu0 %3725, %v273
    %v3727 = vpop.permute.xlu0 %3726
    %3730 = vset.pattern.permute.xlu0 0
    %3731 = vperm.xlu0 %3730, %v274
    %v3732 = vpop.permute.xlu0 %3731
    %3735 = vset.pattern.permute.xlu0 0
    %3736 = vperm.xlu0 %3735, %v275
    %v3737 = vpop.permute.xlu0 %3736
    %3740 = vset.pattern.permute.xlu0 0
    %3741 = vperm.xlu0 %3740, %v276
    %v3742 = vpop.permute.xlu0 %3741
    %3745 = vset.pattern.permute.xlu0 0
    %3746 = vperm.xlu0 %3745, %v277
    %v3747 = vpop.permute.xlu0 %3746
    %3750 = vset.pattern.permute.xlu0 0
    %3751 = vperm.xlu0 %3750, %v278
    %v3752 = vpop.permute.xlu0 %3751
    %3755 = vset.pattern.permute.xlu0 0
    %3756 = vperm.xlu0 %3755, %v279
    %v3757 = vpop.permute.xlu0 %3756
    %3760 = vset.pattern.permute.xlu0 0
    %3761 = vperm.xlu0 %3760, %v280
    %v3762 = vpop.permute.xlu0 %3761
    %3765 = vset.pattern.permute.xlu0 0
    %3766 = vperm.xlu0 %3765, %v281
    %v3767 = vpop.permute.xlu0 %3766
    %3770 = vset.pattern.permute.xlu0 0
    %3771 = vperm.xlu0 %3770, %v282
    %v3772 = vpop.permute.xlu0 %3771
    %3775 = vset.pattern.permute.xlu0 0
    %3776 = vperm.xlu0 %3775, %v283
    %v3777 = vpop.permute.xlu0 %3776
    %3780 = vset.pattern.permute.xlu0 0
    %3781 = vperm.xlu0 %3780, %v284
    %v3782 = vpop.permute.xlu0 %3781
    %3785 = vset.pattern.permute.xlu0 0
    %3786 = vperm.xlu0 %3785, %v285
    %v3787 = vpop.permute.xlu0 %3786
    %3790 = vset.pattern.permute.xlu0 0
    %3791 = vperm.xlu0 %3790, %v286
    %v3792 = vpop.permute.xlu0 %3791
    %3795 = vset.pattern.permute.xlu0 0
    %3796 = vperm.xlu0 %3795, %v287
    %v3797 = vpop.permute.xlu0 %3796
    %3800 = vset.pattern.permute.xlu0 0
    %3801 = vperm.xlu0 %3800, %v288
    %v3802 = vpop.permute.xlu0 %3801
    %3805 = vset.pattern.permute.xlu0 0
    %3806 = vperm.xlu0 %3805, %v289
    %v3807 = vpop.permute.xlu0 %3806
    %3810 = vset.pattern.permute.xlu0 0
    %3811 = vperm.xlu0 %3810, %v290
    %v3812 = vpop.permute.xlu0 %3811
    %3815 = vset.pattern.permute.xlu0 0
    %3816 = vperm.xlu0 %3815, %v291
    %v3817 = vpop.permute.xlu0 %3816
    %3820 = vset.pattern.permute.xlu0 0
    %3821 = vperm.xlu0 %3820, %v292
    %v3822 = vpop.permute.xlu0 %3821
    %3825 = vset.pattern.permute.xlu0 0
    %3826 = vperm.xlu0 %3825, %v293
    %v3827 = vpop.permute.xlu0 %3826
    %3830 = vset.pattern.permute.xlu0 0
    %3831 = vperm.xlu0 %3830, %v294
    %v3832 = vpop.permute.xlu0 %3831
    %3835 = vset.pattern.permute.xlu0 0
    %3836 = vperm.xlu0 %3835, %v295
    %v3837 = vpop.permute.xlu0 %3836
    %3840 = vset.pattern.permute.xlu0 0
    %3841 = vperm.xlu0 %3840, %v296
    %v3842 = vpop.permute.xlu0 %3841
    %v3876 = vunpack.c.l.b16 %v233
    %v3877 = vunpack.c.h.b16 %v233
    %v3878 = vunpack.c.l.b16 %v234
    %v3879 = vunpack.c.h.b16 %v234
    %v3880 = vunpack.c.l.b16 %v235
    %v3881 = vunpack.c.h.b16 %v235
    %v3882 = vunpack.c.l.b16 %v236
    %v3883 = vunpack.c.h.b16 %v236
    %v3884 = vunpack.c.l.b16 %v237
    %v3885 = vunpack.c.h.b16 %v237
    %v3886 = vunpack.c.l.b16 %v238
    %v3887 = vunpack.c.h.b16 %v238
    %v3888 = vunpack.c.l.b16 %v239
    %v3889 = vunpack.c.h.b16 %v239
    %v3890 = vunpack.c.l.b16 %v240
    %v3891 = vunpack.c.h.b16 %v240
    %v3892 = vunpack.c.l.b16 %v241
    %v3893 = vunpack.c.h.b16 %v241
    %v3894 = vunpack.c.l.b16 %v242
    %v3895 = vunpack.c.h.b16 %v242
    %v3896 = vunpack.c.l.b16 %v243
    %v3897 = vunpack.c.h.b16 %v243
    %v3898 = vunpack.c.l.b16 %v244
    %v3899 = vunpack.c.h.b16 %v244
    %v3900 = vunpack.c.l.b16 %v245
    %v3901 = vunpack.c.h.b16 %v245
    %v3902 = vunpack.c.l.b16 %v246
    %v3903 = vunpack.c.h.b16 %v246
    %v3904 = vunpack.c.l.b16 %v247
    %v3905 = vunpack.c.h.b16 %v247
    %v3906 = vunpack.c.l.b16 %v248
    %v3907 = vunpack.c.h.b16 %v248
    %v3908 = vunpack.c.l.b16 %v249
    %v3909 = vunpack.c.h.b16 %v249
    %v3910 = vunpack.c.l.b16 %v250
    %v3911 = vunpack.c.h.b16 %v250
    %v3912 = vunpack.c.l.b16 %v251
    %v3913 = vunpack.c.h.b16 %v251
    %v3914 = vunpack.c.l.b16 %v252
    %v3915 = vunpack.c.h.b16 %v252
    %v3916 = vunpack.c.l.b16 %v253
    %v3917 = vunpack.c.h.b16 %v253
    %v3918 = vunpack.c.l.b16 %v254
    %v3919 = vunpack.c.h.b16 %v254
    %v3920 = vunpack.c.l.b16 %v255
    %v3921 = vunpack.c.h.b16 %v255
    %v3922 = vunpack.c.l.b16 %v256
    %v3923 = vunpack.c.h.b16 %v256
    %v3924 = vunpack.c.l.b16 %v257
    %v3925 = vunpack.c.h.b16 %v257
    %v3926 = vunpack.c.l.b16 %v258
    %v3927 = vunpack.c.h.b16 %v258
    %v3928 = vunpack.c.l.b16 %v259
    %v3929 = vunpack.c.h.b16 %v259
    %v3930 = vunpack.c.l.b16 %v260
    %v3931 = vunpack.c.h.b16 %v260
    %v3932 = vunpack.c.l.b16 %v261
    %v3933 = vunpack.c.h.b16 %v261
    %v3934 = vunpack.c.l.b16 %v262
    %v3935 = vunpack.c.h.b16 %v262
    %v3936 = vunpack.c.l.b16 %v263
    %v3937 = vunpack.c.h.b16 %v263
    %v3938 = vunpack.c.l.b16 %v264
    %v3939 = vunpack.c.h.b16 %v264
    %v3940 = vpack.c.b16 %v3878, %v3876
    %v3941 = vpack.c.b16 %v3879, %v3877
    %v3942 = vpack.c.b16 %v3882, %v3880
    %v3943 = vpack.c.b16 %v3883, %v3881
    %v3944 = vpack.c.b16 %v3886, %v3884
    %v3945 = vpack.c.b16 %v3887, %v3885
    %v3946 = vpack.c.b16 %v3890, %v3888
    %v3947 = vpack.c.b16 %v3891, %v3889
    %v3948 = vpack.c.b16 %v3894, %v3892
    %v3949 = vpack.c.b16 %v3895, %v3893
    %v3950 = vpack.c.b16 %v3898, %v3896
    %v3951 = vpack.c.b16 %v3899, %v3897
    %v3952 = vpack.c.b16 %v3902, %v3900
    %v3953 = vpack.c.b16 %v3903, %v3901
    %v3954 = vpack.c.b16 %v3906, %v3904
    %v3955 = vpack.c.b16 %v3907, %v3905
    %v3956 = vpack.c.b16 %v3910, %v3908
    %v3957 = vpack.c.b16 %v3911, %v3909
    %v3958 = vpack.c.b16 %v3914, %v3912
    %v3959 = vpack.c.b16 %v3915, %v3913
    %v3960 = vpack.c.b16 %v3918, %v3916
    %v3961 = vpack.c.b16 %v3919, %v3917
    %v3962 = vpack.c.b16 %v3922, %v3920
    %v3963 = vpack.c.b16 %v3923, %v3921
    %v3964 = vpack.c.b16 %v3926, %v3924
    %v3965 = vpack.c.b16 %v3927, %v3925
    %v3966 = vpack.c.b16 %v3930, %v3928
    %v3967 = vpack.c.b16 %v3931, %v3929
    %v3968 = vpack.c.b16 %v3934, %v3932
    %v3969 = vpack.c.b16 %v3935, %v3933
    %v3970 = vpack.c.b16 %v3938, %v3936
    %v3971 = vpack.c.b16 %v3939, %v3937
    %4004 = vmatprep.subr.bf16.mxu0 %v3649
    %4005 = vmatpush1.bf16.msra.mxu0 %v3648
    %4006 = vmatprep.subr.bf16.mxu0 %v3645
    %4007 = vmatpush1.bf16.msra.mxu0 %v3644
    %4008 = vmatprep.subr.bf16.mxu0 %v3641
    %4009 = vmatpush1.bf16.msra.mxu0 %v3640
    %4010 = vmatprep.subr.bf16.mxu0 %v3637
    %4011 = vmatpush1.bf16.msra.mxu0 %v3636
    %4012 = vmatprep.subr.bf16.mxu0 %v3633
    %4013 = vmatpush1.bf16.msra.mxu0 %v3632
    %4014 = vmatprep.subr.bf16.mxu0 %v3629
    %4015 = vmatpush1.bf16.msra.mxu0 %v3628
    %4016 = vmatprep.subr.bf16.mxu0 %v3625
    %4017 = vmatpush1.bf16.msra.mxu0 %v3624
    %4018 = vmatprep.subr.bf16.mxu0 %v3621
    %4019 = vmatpush1.bf16.msra.mxu0 %v3620
    %4020 = vmatprep.subr.bf16.mxu0 %v3681
    %4021 = vmatpush2.bf16.msra.mxu0 %v3680
    %4022 = vmatprep.subr.bf16.mxu0 %v3677
    %4023 = vmatpush2.bf16.msra.mxu0 %v3676
    %4024 = vmatprep.subr.bf16.mxu0 %v3673
    %4025 = vmatpush2.bf16.msra.mxu0 %v3672
    %4026 = vmatprep.subr.bf16.mxu0 %v3669
    %4027 = vmatpush2.bf16.msra.mxu0 %v3668
    %4028 = vmatprep.subr.bf16.mxu0 %v3665
    %4029 = vmatpush2.bf16.msra.mxu0 %v3664
    %4030 = vmatprep.subr.bf16.mxu0 %v3661
    %4031 = vmatpush2.bf16.msra.mxu0 %v3660
    %4032 = vmatprep.subr.bf16.mxu0 %v3657
    %4033 = vmatpush2.bf16.msra.mxu0 %v3656
    %4034 = vmatprep.subr.bf16.mxu0 %v3653
    %4035 = vmatpush2.bf16.msra.mxu0 %v3652
    %4036 = vmatprep.mubr.bf16.mxu0 %v3941
    %4037 = vmatmul.mubr.bf16.gmra.mxu0 %v3940
    %v4038 = vpop.f32.mrf.mxu0
    %v4039 = vadd.f32 %v3687, %v4038
    %v4040 = vpop.f32.mrf.mxu0
    %v4041 = vadd.f32 %v3687, %v4040
    %v4042 = vpop.f32.mrf.mxu0
    %v4043 = vadd.f32 %v3692, %v4042
    %v4044 = vpop.f32.mrf.mxu0
    %v4045 = vadd.f32 %v3692, %v4044
    %4046 = vmatprep.mubr.bf16.mxu0 %v3943
    %4047 = vmatmul.mubr.bf16.gmra.mxu0 %v3942
    %v4048 = vpop.f32.mrf.mxu0
    %v4049 = vadd.f32 %v3697, %v4048
    %v4050 = vpop.f32.mrf.mxu0
    %v4051 = vadd.f32 %v3697, %v4050
    %v4052 = vpop.f32.mrf.mxu0
    %v4053 = vadd.f32 %v3702, %v4052
    %v4054 = vpop.f32.mrf.mxu0
    %v4055 = vadd.f32 %v3702, %v4054
    %4056 = vmatprep.mubr.bf16.mxu0 %v3945
    %4057 = vmatmul.mubr.bf16.gmra.mxu0 %v3944
    %v4058 = vpop.f32.mrf.mxu0
    %v4059 = vadd.f32 %v3707, %v4058
    %v4060 = vpop.f32.mrf.mxu0
    %v4061 = vadd.f32 %v3707, %v4060
    %v4062 = vpop.f32.mrf.mxu0
    %v4063 = vadd.f32 %v3712, %v4062
    %v4064 = vpop.f32.mrf.mxu0
    %v4065 = vadd.f32 %v3712, %v4064
    %4066 = vmatprep.mubr.bf16.mxu0 %v3947
    %4067 = vmatmul.mubr.bf16.gmra.mxu0 %v3946
    %v4068 = vpop.f32.mrf.mxu0
    %v4069 = vadd.f32 %v3717, %v4068
    %v4070 = vpop.f32.mrf.mxu0
    %v4071 = vadd.f32 %v3717, %v4070
    %v4072 = vpop.f32.mrf.mxu0
    %v4073 = vadd.f32 %v3722, %v4072
    %v4074 = vpop.f32.mrf.mxu0
    %v4075 = vadd.f32 %v3722, %v4074
    %4076 = vmatprep.mubr.bf16.mxu0 %v3949
    %4077 = vmatmul.mubr.bf16.gmra.mxu0 %v3948
    %v4078 = vpop.f32.mrf.mxu0
    %v4079 = vadd.f32 %v3727, %v4078
    %v4080 = vpop.f32.mrf.mxu0
    %v4081 = vadd.f32 %v3727, %v4080
    %v4082 = vpop.f32.mrf.mxu0
    %v4083 = vadd.f32 %v3732, %v4082
    %v4084 = vpop.f32.mrf.mxu0
    %v4085 = vadd.f32 %v3732, %v4084
    %4086 = vmatprep.mubr.bf16.mxu0 %v3951
    %4087 = vmatmul.mubr.bf16.gmra.mxu0 %v3950
    %v4088 = vpop.f32.mrf.mxu0
    %v4089 = vadd.f32 %v3737, %v4088
    %v4090 = vpop.f32.mrf.mxu0
    %v4091 = vadd.f32 %v3737, %v4090
    %v4092 = vpop.f32.mrf.mxu0
    %v4093 = vadd.f32 %v3742, %v4092
    %v4094 = vpop.f32.mrf.mxu0
    %v4095 = vadd.f32 %v3742, %v4094
    %4096 = vmatprep.mubr.bf16.mxu0 %v3953
    %4097 = vmatmul.mubr.bf16.gmra.mxu0 %v3952
    %v4098 = vpop.f32.mrf.mxu0
    %v4099 = vadd.f32 %v3747, %v4098
    %v4100 = vpop.f32.mrf.mxu0
    %v4101 = vadd.f32 %v3747, %v4100
    %v4102 = vpop.f32.mrf.mxu0
    %v4103 = vadd.f32 %v3752, %v4102
    %v4104 = vpop.f32.mrf.mxu0
    %v4105 = vadd.f32 %v3752, %v4104
    %4106 = vmatprep.mubr.bf16.mxu0 %v3955
    %4107 = vmatmul.mubr.bf16.gmra.mxu0 %v3954
    %v4108 = vpop.f32.mrf.mxu0
    %v4109 = vadd.f32 %v3757, %v4108
    %v4110 = vpop.f32.mrf.mxu0
    %v4111 = vadd.f32 %v3757, %v4110
    %v4112 = vpop.f32.mrf.mxu0
    %v4113 = vadd.f32 %v3762, %v4112
    %v4114 = vpop.f32.mrf.mxu0
    %v4115 = vadd.f32 %v3762, %v4114
    %4116 = vmatprep.mubr.bf16.mxu0 %v3957
    %4117 = vmatmul.mubr.bf16.gmra.mxu0 %v3956
    %v4118 = vpop.f32.mrf.mxu0
    %v4119 = vadd.f32 %v3767, %v4118
    %v4120 = vpop.f32.mrf.mxu0
    %v4121 = vadd.f32 %v3767, %v4120
    %v4122 = vpop.f32.mrf.mxu0
    %v4123 = vadd.f32 %v3772, %v4122
    %v4124 = vpop.f32.mrf.mxu0
    %v4125 = vadd.f32 %v3772, %v4124
    %4126 = vmatprep.mubr.bf16.mxu0 %v3959
    %4127 = vmatmul.mubr.bf16.gmra.mxu0 %v3958
    %v4128 = vpop.f32.mrf.mxu0
    %v4129 = vadd.f32 %v3777, %v4128
    %v4130 = vpop.f32.mrf.mxu0
    %v4131 = vadd.f32 %v3777, %v4130
    %v4132 = vpop.f32.mrf.mxu0
    %v4133 = vadd.f32 %v3782, %v4132
    %v4134 = vpop.f32.mrf.mxu0
    %v4135 = vadd.f32 %v3782, %v4134
    %4136 = vmatprep.mubr.bf16.mxu0 %v3961
    %4137 = vmatmul.mubr.bf16.gmra.mxu0 %v3960
    %v4138 = vpop.f32.mrf.mxu0
    %v4139 = vadd.f32 %v3787, %v4138
    %v4140 = vpop.f32.mrf.mxu0
    %v4141 = vadd.f32 %v3787, %v4140
    %v4142 = vpop.f32.mrf.mxu0
    %v4143 = vadd.f32 %v3792, %v4142
    %v4144 = vpop.f32.mrf.mxu0
    %v4145 = vadd.f32 %v3792, %v4144
    %4146 = vmatprep.mubr.bf16.mxu0 %v3963
    %4147 = vmatmul.mubr.bf16.gmra.mxu0 %v3962
    %v4148 = vpop.f32.mrf.mxu0
    %v4149 = vadd.f32 %v3797, %v4148
    %v4150 = vpop.f32.mrf.mxu0
    %v4151 = vadd.f32 %v3797, %v4150
    %v4152 = vpop.f32.mrf.mxu0
    %v4153 = vadd.f32 %v3802, %v4152
    %v4154 = vpop.f32.mrf.mxu0
    %v4155 = vadd.f32 %v3802, %v4154
    %4156 = vmatprep.mubr.bf16.mxu0 %v3965
    %4157 = vmatmul.mubr.bf16.gmra.mxu0 %v3964
    %v4158 = vpop.f32.mrf.mxu0
    %v4159 = vadd.f32 %v3807, %v4158
    %v4160 = vpop.f32.mrf.mxu0
    %v4161 = vadd.f32 %v3807, %v4160
    %v4162 = vpop.f32.mrf.mxu0
    %v4163 = vadd.f32 %v3812, %v4162
    %v4164 = vpop.f32.mrf.mxu0
    %v4165 = vadd.f32 %v3812, %v4164
    %4166 = vmatprep.mubr.bf16.mxu0 %v3967
    %4167 = vmatmul.mubr.bf16.gmra.mxu0 %v3966
    %v4168 = vpop.f32.mrf.mxu0
    %v4169 = vadd.f32 %v3817, %v4168
    %v4170 = vpop.f32.mrf.mxu0
    %v4171 = vadd.f32 %v3817, %v4170
    %v4172 = vpop.f32.mrf.mxu0
    %v4173 = vadd.f32 %v3822, %v4172
    %v4174 = vpop.f32.mrf.mxu0
    %v4175 = vadd.f32 %v3822, %v4174
    %4176 = vmatprep.mubr.bf16.mxu0 %v3969
    %4177 = vmatmul.mubr.bf16.gmra.mxu0 %v3968
    %v4178 = vpop.f32.mrf.mxu0
    %v4179 = vadd.f32 %v3827, %v4178
    %v4180 = vpop.f32.mrf.mxu0
    %v4181 = vadd.f32 %v3827, %v4180
    %v4182 = vpop.f32.mrf.mxu0
    %v4183 = vadd.f32 %v3832, %v4182
    %v4184 = vpop.f32.mrf.mxu0
    %v4185 = vadd.f32 %v3832, %v4184
    %4186 = vmatprep.mubr.bf16.mxu0 %v3971
    %4187 = vmatmul.mubr.bf16.gmra.mxu0 %v3970
    %v4188 = vpop.f32.mrf.mxu0
    %v4189 = vadd.f32 %v3837, %v4188
    %v4190 = vpop.f32.mrf.mxu0
    %v4191 = vadd.f32 %v3837, %v4190
    %v4192 = vpop.f32.mrf.mxu0
    %v4193 = vadd.f32 %v3842, %v4192
    %v4194 = vpop.f32.mrf.mxu0
    %v4195 = vadd.f32 %v3842, %v4194
    %4196 = vdwg.mxu0
    %4197 = vmatprep.subr.bf16.mxu0 %v3651
    %4198 = vmatpush1.bf16.msra.mxu0 %v3650
    %4199 = vmatprep.subr.bf16.mxu0 %v3647
    %4200 = vmatpush1.bf16.msra.mxu0 %v3646
    %4201 = vmatprep.subr.bf16.mxu0 %v3643
    %4202 = vmatpush1.bf16.msra.mxu0 %v3642
    %4203 = vmatprep.subr.bf16.mxu0 %v3639
    %4204 = vmatpush1.bf16.msra.mxu0 %v3638
    %4205 = vmatprep.subr.bf16.mxu0 %v3635
    %4206 = vmatpush1.bf16.msra.mxu0 %v3634
    %4207 = vmatprep.subr.bf16.mxu0 %v3631
    %4208 = vmatpush1.bf16.msra.mxu0 %v3630
    %4209 = vmatprep.subr.bf16.mxu0 %v3627
    %4210 = vmatpush1.bf16.msra.mxu0 %v3626
    %4211 = vmatprep.subr.bf16.mxu0 %v3623
    %4212 = vmatpush1.bf16.msra.mxu0 %v3622
    %4213 = vmatprep.subr.bf16.mxu0 %v3683
    %4214 = vmatpush2.bf16.msra.mxu0 %v3682
    %4215 = vmatprep.subr.bf16.mxu0 %v3679
    %4216 = vmatpush2.bf16.msra.mxu0 %v3678
    %4217 = vmatprep.subr.bf16.mxu0 %v3675
    %4218 = vmatpush2.bf16.msra.mxu0 %v3674
    %4219 = vmatprep.subr.bf16.mxu0 %v3671
    %4220 = vmatpush2.bf16.msra.mxu0 %v3670
    %4221 = vmatprep.subr.bf16.mxu0 %v3667
    %4222 = vmatpush2.bf16.msra.mxu0 %v3666
    %4223 = vmatprep.subr.bf16.mxu0 %v3663
    %4224 = vmatpush2.bf16.msra.mxu0 %v3662
    %4225 = vmatprep.subr.bf16.mxu0 %v3659
    %4226 = vmatpush2.bf16.msra.mxu0 %v3658
    %4227 = vmatprep.subr.bf16.mxu0 %v3655
    %4228 = vmatpush2.bf16.msra.mxu0 %v3654
    %4229 = vmatprep.mubr.bf16.mxu0 %v3941
    %4230 = vmatmul.mubr.bf16.gmra.mxu0 %v3940
    %v4231 = vpop.f32.mrf.mxu0
    %v4232 = vadd.f32 %v3687, %v4231
    %v4233 = vpop.f32.mrf.mxu0
    %v4234 = vadd.f32 %v3687, %v4233
    %v4235 = vpop.f32.mrf.mxu0
    %v4236 = vadd.f32 %v3692, %v4235
    %v4237 = vpop.f32.mrf.mxu0
    %v4238 = vadd.f32 %v3692, %v4237
    %4239 = vmatprep.mubr.bf16.mxu0 %v3943
    %4240 = vmatmul.mubr.bf16.gmra.mxu0 %v3942
    %v4241 = vpop.f32.mrf.mxu0
    %v4242 = vadd.f32 %v3697, %v4241
    %v4243 = vpop.f32.mrf.mxu0
    %v4244 = vadd.f32 %v3697, %v4243
    %v4245 = vpop.f32.mrf.mxu0
    %v4246 = vadd.f32 %v3702, %v4245
    %v4247 = vpop.f32.mrf.mxu0
    %v4248 = vadd.f32 %v3702, %v4247
    %4249 = vmatprep.mubr.bf16.mxu0 %v3945
    %4250 = vmatmul.mubr.bf16.gmra.mxu0 %v3944
    %v4251 = vpop.f32.mrf.mxu0
    %v4252 = vadd.f32 %v3707, %v4251
    %v4253 = vpop.f32.mrf.mxu0
    %v4254 = vadd.f32 %v3707, %v4253
    %v4255 = vpop.f32.mrf.mxu0
    %v4256 = vadd.f32 %v3712, %v4255
    %v4257 = vpop.f32.mrf.mxu0
    %v4258 = vadd.f32 %v3712, %v4257
    %4259 = vmatprep.mubr.bf16.mxu0 %v3947
    %4260 = vmatmul.mubr.bf16.gmra.mxu0 %v3946
    %v4261 = vpop.f32.mrf.mxu0
    %v4262 = vadd.f32 %v3717, %v4261
    %v4263 = vpop.f32.mrf.mxu0
    %v4264 = vadd.f32 %v3717, %v4263
    %v4265 = vpop.f32.mrf.mxu0
    %v4266 = vadd.f32 %v3722, %v4265
    %v4267 = vpop.f32.mrf.mxu0
    %v4268 = vadd.f32 %v3722, %v4267
    %4269 = vmatprep.mubr.bf16.mxu0 %v3949
    %4270 = vmatmul.mubr.bf16.gmra.mxu0 %v3948
    %v4271 = vpop.f32.mrf.mxu0
    %v4272 = vadd.f32 %v3727, %v4271
    %v4273 = vpop.f32.mrf.mxu0
    %v4274 = vadd.f32 %v3727, %v4273
    %v4275 = vpop.f32.mrf.mxu0
    %v4276 = vadd.f32 %v3732, %v4275
    %v4277 = vpop.f32.mrf.mxu0
    %v4278 = vadd.f32 %v3732, %v4277
    %4279 = vmatprep.mubr.bf16.mxu0 %v3951
    %4280 = vmatmul.mubr.bf16.gmra.mxu0 %v3950
    %v4281 = vpop.f32.mrf.mxu0
    %v4282 = vadd.f32 %v3737, %v4281
    %v4283 = vpop.f32.mrf.mxu0
    %v4284 = vadd.f32 %v3737, %v4283
    %v4285 = vpop.f32.mrf.mxu0
    %v4286 = vadd.f32 %v3742, %v4285
    %v4287 = vpop.f32.mrf.mxu0
    %v4288 = vadd.f32 %v3742, %v4287
    %4289 = vmatprep.mubr.bf16.mxu0 %v3953
    %4290 = vmatmul.mubr.bf16.gmra.mxu0 %v3952
    %v4291 = vpop.f32.mrf.mxu0
    %v4292 = vadd.f32 %v3747, %v4291
    %v4293 = vpop.f32.mrf.mxu0
    %v4294 = vadd.f32 %v3747, %v4293
    %v4295 = vpop.f32.mrf.mxu0
    %v4296 = vadd.f32 %v3752, %v4295
    %v4297 = vpop.f32.mrf.mxu0
    %v4298 = vadd.f32 %v3752, %v4297
    %4299 = vmatprep.mubr.bf16.mxu0 %v3955
    %4300 = vmatmul.mubr.bf16.gmra.mxu0 %v3954
    %v4301 = vpop.f32.mrf.mxu0
    %v4302 = vadd.f32 %v3757, %v4301
    %v4303 = vpop.f32.mrf.mxu0
    %v4304 = vadd.f32 %v3757, %v4303
    %v4305 = vpop.f32.mrf.mxu0
    %v4306 = vadd.f32 %v3762, %v4305
    %v4307 = vpop.f32.mrf.mxu0
    %v4308 = vadd.f32 %v3762, %v4307
    %4309 = vmatprep.mubr.bf16.mxu0 %v3957
    %4310 = vmatmul.mubr.bf16.gmra.mxu0 %v3956
    %v4311 = vpop.f32.mrf.mxu0
    %v4312 = vadd.f32 %v3767, %v4311
    %v4313 = vpop.f32.mrf.mxu0
    %v4314 = vadd.f32 %v3767, %v4313
    %v4315 = vpop.f32.mrf.mxu0
    %v4316 = vadd.f32 %v3772, %v4315
    %v4317 = vpop.f32.mrf.mxu0
    %v4318 = vadd.f32 %v3772, %v4317
    %4319 = vmatprep.mubr.bf16.mxu0 %v3959
    %4320 = vmatmul.mubr.bf16.gmra.mxu0 %v3958
    %v4321 = vpop.f32.mrf.mxu0
    %v4322 = vadd.f32 %v3777, %v4321
    %v4323 = vpop.f32.mrf.mxu0
    %v4324 = vadd.f32 %v3777, %v4323
    %v4325 = vpop.f32.mrf.mxu0
    %v4326 = vadd.f32 %v3782, %v4325
    %v4327 = vpop.f32.mrf.mxu0
    %v4328 = vadd.f32 %v3782, %v4327
    %4329 = vmatprep.mubr.bf16.mxu0 %v3961
    %4330 = vmatmul.mubr.bf16.gmra.mxu0 %v3960
    %v4331 = vpop.f32.mrf.mxu0
    %v4332 = vadd.f32 %v3787, %v4331
    %v4333 = vpop.f32.mrf.mxu0
    %v4334 = vadd.f32 %v3787, %v4333
    %v4335 = vpop.f32.mrf.mxu0
    %v4336 = vadd.f32 %v3792, %v4335
    %v4337 = vpop.f32.mrf.mxu0
    %v4338 = vadd.f32 %v3792, %v4337
    %4339 = vmatprep.mubr.bf16.mxu0 %v3963
    %4340 = vmatmul.mubr.bf16.gmra.mxu0 %v3962
    %v4341 = vpop.f32.mrf.mxu0
    %v4342 = vadd.f32 %v3797, %v4341
    %v4343 = vpop.f32.mrf.mxu0
    %v4344 = vadd.f32 %v3797, %v4343
    %v4345 = vpop.f32.mrf.mxu0
    %v4346 = vadd.f32 %v3802, %v4345
    %v4347 = vpop.f32.mrf.mxu0
    %v4348 = vadd.f32 %v3802, %v4347
    %4349 = vmatprep.mubr.bf16.mxu0 %v3965
    %4350 = vmatmul.mubr.bf16.gmra.mxu0 %v3964
    %v4351 = vpop.f32.mrf.mxu0
    %v4352 = vadd.f32 %v3807, %v4351
    %v4353 = vpop.f32.mrf.mxu0
    %v4354 = vadd.f32 %v3807, %v4353
    %v4355 = vpop.f32.mrf.mxu0
    %v4356 = vadd.f32 %v3812, %v4355
    %v4357 = vpop.f32.mrf.mxu0
    %v4358 = vadd.f32 %v3812, %v4357
    %4359 = vmatprep.mubr.bf16.mxu0 %v3967
    %4360 = vmatmul.mubr.bf16.gmra.mxu0 %v3966
    %v4361 = vpop.f32.mrf.mxu0
    %v4362 = vadd.f32 %v3817, %v4361
    %v4363 = vpop.f32.mrf.mxu0
    %v4364 = vadd.f32 %v3817, %v4363
    %v4365 = vpop.f32.mrf.mxu0
    %v4366 = vadd.f32 %v3822, %v4365
    %v4367 = vpop.f32.mrf.mxu0
    %v4368 = vadd.f32 %v3822, %v4367
    %4369 = vmatprep.mubr.bf16.mxu0 %v3969
    %4370 = vmatmul.mubr.bf16.gmra.mxu0 %v3968
    %v4371 = vpop.f32.mrf.mxu0
    %v4372 = vadd.f32 %v3827, %v4371
    %v4373 = vpop.f32.mrf.mxu0
    %v4374 = vadd.f32 %v3827, %v4373
    %v4375 = vpop.f32.mrf.mxu0
    %v4376 = vadd.f32 %v3832, %v4375
    %v4377 = vpop.f32.mrf.mxu0
    %v4378 = vadd.f32 %v3832, %v4377
    %4379 = vmatprep.mubr.bf16.mxu0 %v3971
    %4380 = vmatmul.mubr.bf16.gmra.mxu0 %v3970
    %v4381 = vpop.f32.mrf.mxu0
    %v4382 = vadd.f32 %v3837, %v4381
    %v4383 = vpop.f32.mrf.mxu0
    %v4384 = vadd.f32 %v3837, %v4383
    %v4385 = vpop.f32.mrf.mxu0
    %v4386 = vadd.f32 %v3842, %v4385
    %v4387 = vpop.f32.mrf.mxu0
    %v4388 = vadd.f32 %v3842, %v4387
    %4389 = vdwg.mxu0
    %vm4390 = vcmp.gt.f32.partialorder %v4039, 0.0
    %vm4391 = vcmp.gt.f32.partialorder %v4041, 0.0
    %vm4392 = vcmp.gt.f32.partialorder %v4232, 0.0
    %vm4393 = vcmp.gt.f32.partialorder %v4234, 0.0
    %vm4394 = vcmp.gt.f32.partialorder %v4043, 0.0
    %vm4395 = vcmp.gt.f32.partialorder %v4045, 0.0
    %vm4396 = vcmp.gt.f32.partialorder %v4236, 0.0
    %vm4397 = vcmp.gt.f32.partialorder %v4238, 0.0
    %vm4398 = vcmp.gt.f32.partialorder %v4049, 0.0
    %vm4399 = vcmp.gt.f32.partialorder %v4051, 0.0
    %vm4400 = vcmp.gt.f32.partialorder %v4242, 0.0
    %vm4401 = vcmp.gt.f32.partialorder %v4244, 0.0
    %vm4402 = vcmp.gt.f32.partialorder %v4053, 0.0
    %vm4403 = vcmp.gt.f32.partialorder %v4055, 0.0
    %vm4404 = vcmp.gt.f32.partialorder %v4246, 0.0
    %vm4405 = vcmp.gt.f32.partialorder %v4248, 0.0
    %vm4406 = vcmp.gt.f32.partialorder %v4059, 0.0
    %vm4407 = vcmp.gt.f32.partialorder %v4061, 0.0
    %vm4408 = vcmp.gt.f32.partialorder %v4252, 0.0
    %vm4409 = vcmp.gt.f32.partialorder %v4254, 0.0
    %vm4410 = vcmp.gt.f32.partialorder %v4063, 0.0
    %vm4411 = vcmp.gt.f32.partialorder %v4065, 0.0
    %vm4412 = vcmp.gt.f32.partialorder %v4256, 0.0
    %vm4413 = vcmp.gt.f32.partialorder %v4258, 0.0
    %vm4414 = vcmp.gt.f32.partialorder %v4069, 0.0
    %vm4415 = vcmp.gt.f32.partialorder %v4071, 0.0
    %vm4416 = vcmp.gt.f32.partialorder %v4262, 0.0
    %vm4417 = vcmp.gt.f32.partialorder %v4264, 0.0
    %vm4418 = vcmp.gt.f32.partialorder %v4073, 0.0
    %vm4419 = vcmp.gt.f32.partialorder %v4075, 0.0
    %vm4420 = vcmp.gt.f32.partialorder %v4266, 0.0
    %vm4421 = vcmp.gt.f32.partialorder %v4268, 0.0
    %vm4422 = vcmp.gt.f32.partialorder %v4079, 0.0
    %vm4423 = vcmp.gt.f32.partialorder %v4081, 0.0
    %vm4424 = vcmp.gt.f32.partialorder %v4272, 0.0
    %vm4425 = vcmp.gt.f32.partialorder %v4274, 0.0
    %vm4426 = vcmp.gt.f32.partialorder %v4083, 0.0
    %vm4427 = vcmp.gt.f32.partialorder %v4085, 0.0
    %vm4428 = vcmp.gt.f32.partialorder %v4276, 0.0
    %vm4429 = vcmp.gt.f32.partialorder %v4278, 0.0
    %vm4430 = vcmp.gt.f32.partialorder %v4089, 0.0
    %vm4431 = vcmp.gt.f32.partialorder %v4091, 0.0
    %vm4432 = vcmp.gt.f32.partialorder %v4282, 0.0
    %vm4433 = vcmp.gt.f32.partialorder %v4284, 0.0
    %vm4434 = vcmp.gt.f32.partialorder %v4093, 0.0
    %vm4435 = vcmp.gt.f32.partialorder %v4095, 0.0
    %vm4436 = vcmp.gt.f32.partialorder %v4286, 0.0
    %vm4437 = vcmp.gt.f32.partialorder %v4288, 0.0
    %vm4438 = vcmp.gt.f32.partialorder %v4099, 0.0
    %vm4439 = vcmp.gt.f32.partialorder %v4101, 0.0
    %vm4440 = vcmp.gt.f32.partialorder %v4292, 0.0
    %vm4441 = vcmp.gt.f32.partialorder %v4294, 0.0
    %vm4442 = vcmp.gt.f32.partialorder %v4103, 0.0
    %vm4443 = vcmp.gt.f32.partialorder %v4105, 0.0
    %vm4444 = vcmp.gt.f32.partialorder %v4296, 0.0
    %vm4445 = vcmp.gt.f32.partialorder %v4298, 0.0
    %vm4446 = vcmp.gt.f32.partialorder %v4109, 0.0
    %vm4447 = vcmp.gt.f32.partialorder %v4111, 0.0
    %vm4448 = vcmp.gt.f32.partialorder %v4302, 0.0
    %vm4449 = vcmp.gt.f32.partialorder %v4304, 0.0
    %vm4450 = vcmp.gt.f32.partialorder %v4113, 0.0
    %vm4451 = vcmp.gt.f32.partialorder %v4115, 0.0
    %vm4452 = vcmp.gt.f32.partialorder %v4306, 0.0
    %vm4453 = vcmp.gt.f32.partialorder %v4308, 0.0
    %vm4454 = vcmp.gt.f32.partialorder %v4119, 0.0
    %vm4455 = vcmp.gt.f32.partialorder %v4121, 0.0
    %vm4456 = vcmp.gt.f32.partialorder %v4312, 0.0
    %vm4457 = vcmp.gt.f32.partialorder %v4314, 0.0
    %vm4458 = vcmp.gt.f32.partialorder %v4123, 0.0
    %vm4459 = vcmp.gt.f32.partialorder %v4125, 0.0
    %vm4460 = vcmp.gt.f32.partialorder %v4316, 0.0
    %vm4461 = vcmp.gt.f32.partialorder %v4318, 0.0
    %vm4462 = vcmp.gt.f32.partialorder %v4129, 0.0
    %vm4463 = vcmp.gt.f32.partialorder %v4131, 0.0
    %vm4464 = vcmp.gt.f32.partialorder %v4322, 0.0
    %vm4465 = vcmp.gt.f32.partialorder %v4324, 0.0
    %vm4466 = vcmp.gt.f32.partialorder %v4133, 0.0
    %vm4467 = vcmp.gt.f32.partialorder %v4135, 0.0
    %vm4468 = vcmp.gt.f32.partialorder %v4326, 0.0
    %vm4469 = vcmp.gt.f32.partialorder %v4328, 0.0
    %vm4470 = vcmp.gt.f32.partialorder %v4139, 0.0
    %vm4471 = vcmp.gt.f32.partialorder %v4141, 0.0
    %vm4472 = vcmp.gt.f32.partialorder %v4332, 0.0
    %vm4473 = vcmp.gt.f32.partialorder %v4334, 0.0
    %vm4474 = vcmp.gt.f32.partialorder %v4143, 0.0
    %vm4475 = vcmp.gt.f32.partialorder %v4145, 0.0
    %vm4476 = vcmp.gt.f32.partialorder %v4336, 0.0
    %vm4477 = vcmp.gt.f32.partialorder %v4338, 0.0
    %vm4478 = vcmp.gt.f32.partialorder %v4149, 0.0
    %vm4479 = vcmp.gt.f32.partialorder %v4151, 0.0
    %vm4480 = vcmp.gt.f32.partialorder %v4342, 0.0
    %vm4481 = vcmp.gt.f32.partialorder %v4344, 0.0
    %vm4482 = vcmp.gt.f32.partialorder %v4153, 0.0
    %vm4483 = vcmp.gt.f32.partialorder %v4155, 0.0
    %vm4484 = vcmp.gt.f32.partialorder %v4346, 0.0
    %vm4485 = vcmp.gt.f32.partialorder %v4348, 0.0
    %vm4486 = vcmp.gt.f32.partialorder %v4159, 0.0
    %vm4487 = vcmp.gt.f32.partialorder %v4161, 0.0
    %vm4488 = vcmp.gt.f32.partialorder %v4352, 0.0
    %vm4489 = vcmp.gt.f32.partialorder %v4354, 0.0
    %vm4490 = vcmp.gt.f32.partialorder %v4163, 0.0
    %vm4491 = vcmp.gt.f32.partialorder %v4165, 0.0
    %vm4492 = vcmp.gt.f32.partialorder %v4356, 0.0
    %vm4493 = vcmp.gt.f32.partialorder %v4358, 0.0
    %vm4494 = vcmp.gt.f32.partialorder %v4169, 0.0
    %vm4495 = vcmp.gt.f32.partialorder %v4171, 0.0
    %vm4496 = vcmp.gt.f32.partialorder %v4362, 0.0
    %vm4497 = vcmp.gt.f32.partialorder %v4364, 0.0
    %vm4498 = vcmp.gt.f32.partialorder %v4173, 0.0
    %vm4499 = vcmp.gt.f32.partialorder %v4175, 0.0
    %vm4500 = vcmp.gt.f32.partialorder %v4366, 0.0
    %vm4501 = vcmp.gt.f32.partialorder %v4368, 0.0
    %vm4502 = vcmp.gt.f32.partialorder %v4179, 0.0
    %vm4503 = vcmp.gt.f32.partialorder %v4181, 0.0
    %vm4504 = vcmp.gt.f32.partialorder %v4372, 0.0
    %vm4505 = vcmp.gt.f32.partialorder %v4374, 0.0
    %vm4506 = vcmp.gt.f32.partialorder %v4183, 0.0
    %vm4507 = vcmp.gt.f32.partialorder %v4185, 0.0
    %vm4508 = vcmp.gt.f32.partialorder %v4376, 0.0
    %vm4509 = vcmp.gt.f32.partialorder %v4378, 0.0
    %vm4510 = vcmp.gt.f32.partialorder %v4189, 0.0
    %vm4511 = vcmp.gt.f32.partialorder %v4191, 0.0
    %vm4512 = vcmp.gt.f32.partialorder %v4382, 0.0
    %vm4513 = vcmp.gt.f32.partialorder %v4384, 0.0
    %vm4514 = vcmp.gt.f32.partialorder %v4193, 0.0
    %vm4515 = vcmp.gt.f32.partialorder %v4195, 0.0
    %vm4516 = vcmp.gt.f32.partialorder %v4386, 0.0
    %vm4517 = vcmp.gt.f32.partialorder %v4388, 0.0
    %v4518 = vmul.f32 %v4039, 0.01
    %v4519 = vmul.f32 %v4041, 0.01
    %v4520 = vmul.f32 %v4232, 0.01
    %v4521 = vmul.f32 %v4234, 0.01
    %v4522 = vmul.f32 %v4043, 0.01
    %v4523 = vmul.f32 %v4045, 0.01
    %v4524 = vmul.f32 %v4236, 0.01
    %v4525 = vmul.f32 %v4238, 0.01
    %v4526 = vmul.f32 %v4049, 0.01
    %v4527 = vmul.f32 %v4051, 0.01
    %v4528 = vmul.f32 %v4242, 0.01
    %v4529 = vmul.f32 %v4244, 0.01
    %v4530 = vmul.f32 %v4053, 0.01
    %v4531 = vmul.f32 %v4055, 0.01
    %v4532 = vmul.f32 %v4246, 0.01
    %v4533 = vmul.f32 %v4248, 0.01
    %v4534 = vmul.f32 %v4059, 0.01
    %v4535 = vmul.f32 %v4061, 0.01
    %v4536 = vmul.f32 %v4252, 0.01
    %v4537 = vmul.f32 %v4254, 0.01
    %v4538 = vmul.f32 %v4063, 0.01
    %v4539 = vmul.f32 %v4065, 0.01
    %v4540 = vmul.f32 %v4256, 0.01
    %v4541 = vmul.f32 %v4258, 0.01
    %v4542 = vmul.f32 %v4069, 0.01
    %v4543 = vmul.f32 %v4071, 0.01
    %v4544 = vmul.f32 %v4262, 0.01
    %v4545 = vmul.f32 %v4264, 0.01
    %v4546 = vmul.f32 %v4073, 0.01
    %v4547 = vmul.f32 %v4075, 0.01
    %v4548 = vmul.f32 %v4266, 0.01
    %v4549 = vmul.f32 %v4268, 0.01
    %v4550 = vmul.f32 %v4079, 0.01
    %v4551 = vmul.f32 %v4081, 0.01
    %v4552 = vmul.f32 %v4272, 0.01
    %v4553 = vmul.f32 %v4274, 0.01
    %v4554 = vmul.f32 %v4083, 0.01
    %v4555 = vmul.f32 %v4085, 0.01
    %v4556 = vmul.f32 %v4276, 0.01
    %v4557 = vmul.f32 %v4278, 0.01
    %v4558 = vmul.f32 %v4089, 0.01
    %v4559 = vmul.f32 %v4091, 0.01
    %v4560 = vmul.f32 %v4282, 0.01
    %v4561 = vmul.f32 %v4284, 0.01
    %v4562 = vmul.f32 %v4093, 0.01
    %v4563 = vmul.f32 %v4095, 0.01
    %v4564 = vmul.f32 %v4286, 0.01
    %v4565 = vmul.f32 %v4288, 0.01
    %v4566 = vmul.f32 %v4099, 0.01
    %v4567 = vmul.f32 %v4101, 0.01
    %v4568 = vmul.f32 %v4292, 0.01
    %v4569 = vmul.f32 %v4294, 0.01
    %v4570 = vmul.f32 %v4103, 0.01
    %v4571 = vmul.f32 %v4105, 0.01
    %v4572 = vmul.f32 %v4296, 0.01
    %v4573 = vmul.f32 %v4298, 0.01
    %v4574 = vmul.f32 %v4109, 0.01
    %v4575 = vmul.f32 %v4111, 0.01
    %v4576 = vmul.f32 %v4302, 0.01
    %v4577 = vmul.f32 %v4304, 0.01
    %v4578 = vmul.f32 %v4113, 0.01
    %v4579 = vmul.f32 %v4115, 0.01
    %v4580 = vmul.f32 %v4306, 0.01
    %v4581 = vmul.f32 %v4308, 0.01
    %v4582 = vmul.f32 %v4119, 0.01
    %v4583 = vmul.f32 %v4121, 0.01
    %v4584 = vmul.f32 %v4312, 0.01
    %v4585 = vmul.f32 %v4314, 0.01
    %v4586 = vmul.f32 %v4123, 0.01
    %v4587 = vmul.f32 %v4125, 0.01
    %v4588 = vmul.f32 %v4316, 0.01
    %v4589 = vmul.f32 %v4318, 0.01
    %v4590 = vmul.f32 %v4129, 0.01
    %v4591 = vmul.f32 %v4131, 0.01
    %v4592 = vmul.f32 %v4322, 0.01
    %v4593 = vmul.f32 %v4324, 0.01
    %v4594 = vmul.f32 %v4133, 0.01
    %v4595 = vmul.f32 %v4135, 0.01
    %v4596 = vmul.f32 %v4326, 0.01
    %v4597 = vmul.f32 %v4328, 0.01
    %v4598 = vmul.f32 %v4139, 0.01
    %v4599 = vmul.f32 %v4141, 0.01
    %v4600 = vmul.f32 %v4332, 0.01
    %v4601 = vmul.f32 %v4334, 0.01
    %v4602 = vmul.f32 %v4143, 0.01
    %v4603 = vmul.f32 %v4145, 0.01
    %v4604 = vmul.f32 %v4336, 0.01
    %v4605 = vmul.f32 %v4338, 0.01
    %v4606 = vmul.f32 %v4149, 0.01
    %v4607 = vmul.f32 %v4151, 0.01
    %v4608 = vmul.f32 %v4342, 0.01
    %v4609 = vmul.f32 %v4344, 0.01
    %v4610 = vmul.f32 %v4153, 0.01
    %v4611 = vmul.f32 %v4155, 0.01
    %v4612 = vmul.f32 %v4346, 0.01
    %v4613 = vmul.f32 %v4348, 0.01
    %v4614 = vmul.f32 %v4159, 0.01
    %v4615 = vmul.f32 %v4161, 0.01
    %v4616 = vmul.f32 %v4352, 0.01
    %v4617 = vmul.f32 %v4354, 0.01
    %v4618 = vmul.f32 %v4163, 0.01
    %v4619 = vmul.f32 %v4165, 0.01
    %v4620 = vmul.f32 %v4356, 0.01
    %v4621 = vmul.f32 %v4358, 0.01
    %v4622 = vmul.f32 %v4169, 0.01
    %v4623 = vmul.f32 %v4171, 0.01
    %v4624 = vmul.f32 %v4362, 0.01
    %v4625 = vmul.f32 %v4364, 0.01
    %v4626 = vmul.f32 %v4173, 0.01
    %v4627 = vmul.f32 %v4175, 0.01
    %v4628 = vmul.f32 %v4366, 0.01
    %v4629 = vmul.f32 %v4368, 0.01
    %v4630 = vmul.f32 %v4179, 0.01
    %v4631 = vmul.f32 %v4181, 0.01
    %v4632 = vmul.f32 %v4372, 0.01
    %v4633 = vmul.f32 %v4374, 0.01
    %v4634 = vmul.f32 %v4183, 0.01
    %v4635 = vmul.f32 %v4185, 0.01
    %v4636 = vmul.f32 %v4376, 0.01
    %v4637 = vmul.f32 %v4378, 0.01
    %v4638 = vmul.f32 %v4189, 0.01
    %v4639 = vmul.f32 %v4191, 0.01
    %v4640 = vmul.f32 %v4382, 0.01
    %v4641 = vmul.f32 %v4384, 0.01
    %v4642 = vmul.f32 %v4193, 0.01
    %v4643 = vmul.f32 %v4195, 0.01
    %v4644 = vmul.f32 %v4386, 0.01
    %v4645 = vmul.f32 %v4388, 0.01
    %v4646 = vsel %vm4390, %v4039, %v4518
    %v4647 = vsel %vm4391, %v4041, %v4519
    %v4648 = vsel %vm4392, %v4232, %v4520
    %v4649 = vsel %vm4393, %v4234, %v4521
    %v4650 = vsel %vm4394, %v4043, %v4522
    %v4651 = vsel %vm4395, %v4045, %v4523
    %v4652 = vsel %vm4396, %v4236, %v4524
    %v4653 = vsel %vm4397, %v4238, %v4525
    %v4654 = vsel %vm4398, %v4049, %v4526
    %v4655 = vsel %vm4399, %v4051, %v4527
    %v4656 = vsel %vm4400, %v4242, %v4528
    %v4657 = vsel %vm4401, %v4244, %v4529
    %v4658 = vsel %vm4402, %v4053, %v4530
    %v4659 = vsel %vm4403, %v4055, %v4531
    %v4660 = vsel %vm4404, %v4246, %v4532
    %v4661 = vsel %vm4405, %v4248, %v4533
    %v4662 = vsel %vm4406, %v4059, %v4534
    %v4663 = vsel %vm4407, %v4061, %v4535
    %v4664 = vsel %vm4408, %v4252, %v4536
    %v4665 = vsel %vm4409, %v4254, %v4537
    %v4666 = vsel %vm4410, %v4063, %v4538
    %v4667 = vsel %vm4411, %v4065, %v4539
    %v4668 = vsel %vm4412, %v4256, %v4540
    %v4669 = vsel %vm4413, %v4258, %v4541
    %v4670 = vsel %vm4414, %v4069, %v4542
    %v4671 = vsel %vm4415, %v4071, %v4543
    %v4672 = vsel %vm4416, %v4262, %v4544
    %v4673 = vsel %vm4417, %v4264, %v4545
    %v4674 = vsel %vm4418, %v4073, %v4546
    %v4675 = vsel %vm4419, %v4075, %v4547
    %v4676 = vsel %vm4420, %v4266, %v4548
    %v4677 = vsel %vm4421, %v4268, %v4549
    %v4678 = vsel %vm4422, %v4079, %v4550
    %v4679 = vsel %vm4423, %v4081, %v4551
    %v4680 = vsel %vm4424, %v4272, %v4552
    %v4681 = vsel %vm4425, %v4274, %v4553
    %v4682 = vsel %vm4426, %v4083, %v4554
    %v4683 = vsel %vm4427, %v4085, %v4555
    %v4684 = vsel %vm4428, %v4276, %v4556
    %v4685 = vsel %vm4429, %v4278, %v4557
    %v4686 = vsel %vm4430, %v4089, %v4558
    %v4687 = vsel %vm4431, %v4091, %v4559
    %v4688 = vsel %vm4432, %v4282, %v4560
    %v4689 = vsel %vm4433, %v4284, %v4561
    %v4690 = vsel %vm4434, %v4093, %v4562
    %v4691 = vsel %vm4435, %v4095, %v4563
    %v4692 = vsel %vm4436, %v4286, %v4564
    %v4693 = vsel %vm4437, %v4288, %v4565
    %v4694 = vsel %vm4438, %v4099, %v4566
    %v4695 = vsel %vm4439, %v4101, %v4567
    %v4696 = vsel %vm4440, %v4292, %v4568
    %v4697 = vsel %vm4441, %v4294, %v4569
    %v4698 = vsel %vm4442, %v4103, %v4570
    %v4699 = vsel %vm4443, %v4105, %v4571
    %v4700 = vsel %vm4444, %v4296, %v4572
    %v4701 = vsel %vm4445, %v4298, %v4573
    %v4702 = vsel %vm4446, %v4109, %v4574
    %v4703 = vsel %vm4447, %v4111, %v4575
    %v4704 = vsel %vm4448, %v4302, %v4576
    %v4705 = vsel %vm4449, %v4304, %v4577
    %v4706 = vsel %vm4450, %v4113, %v4578
    %v4707 = vsel %vm4451, %v4115, %v4579
    %v4708 = vsel %vm4452, %v4306, %v4580
    %v4709 = vsel %vm4453, %v4308, %v4581
    %v4710 = vsel %vm4454, %v4119, %v4582
    %v4711 = vsel %vm4455, %v4121, %v4583
    %v4712 = vsel %vm4456, %v4312, %v4584
    %v4713 = vsel %vm4457, %v4314, %v4585
    %v4714 = vsel %vm4458, %v4123, %v4586
    %v4715 = vsel %vm4459, %v4125, %v4587
    %v4716 = vsel %vm4460, %v4316, %v4588
    %v4717 = vsel %vm4461, %v4318, %v4589
    %v4718 = vsel %vm4462, %v4129, %v4590
    %v4719 = vsel %vm4463, %v4131, %v4591
    %v4720 = vsel %vm4464, %v4322, %v4592
    %v4721 = vsel %vm4465, %v4324, %v4593
    %v4722 = vsel %vm4466, %v4133, %v4594
    %v4723 = vsel %vm4467, %v4135, %v4595
    %v4724 = vsel %vm4468, %v4326, %v4596
    %v4725 = vsel %vm4469, %v4328, %v4597
    %v4726 = vsel %vm4470, %v4139, %v4598
    %v4727 = vsel %vm4471, %v4141, %v4599
    %v4728 = vsel %vm4472, %v4332, %v4600
    %v4729 = vsel %vm4473, %v4334, %v4601
    %v4730 = vsel %vm4474, %v4143, %v4602
    %v4731 = vsel %vm4475, %v4145, %v4603
    %v4732 = vsel %vm4476, %v4336, %v4604
    %v4733 = vsel %vm4477, %v4338, %v4605
    %v4734 = vsel %vm4478, %v4149, %v4606
    %v4735 = vsel %vm4479, %v4151, %v4607
    %v4736 = vsel %vm4480, %v4342, %v4608
    %v4737 = vsel %vm4481, %v4344, %v4609
    %v4738 = vsel %vm4482, %v4153, %v4610
    %v4739 = vsel %vm4483, %v4155, %v4611
    %v4740 = vsel %vm4484, %v4346, %v4612
    %v4741 = vsel %vm4485, %v4348, %v4613
    %v4742 = vsel %vm4486, %v4159, %v4614
    %v4743 = vsel %vm4487, %v4161, %v4615
    %v4744 = vsel %vm4488, %v4352, %v4616
    %v4745 = vsel %vm4489, %v4354, %v4617
    %v4746 = vsel %vm4490, %v4163, %v4618
    %v4747 = vsel %vm4491, %v4165, %v4619
    %v4748 = vsel %vm4492, %v4356, %v4620
    %v4749 = vsel %vm4493, %v4358, %v4621
    %v4750 = vsel %vm4494, %v4169, %v4622
    %v4751 = vsel %vm4495, %v4171, %v4623
    %v4752 = vsel %vm4496, %v4362, %v4624
    %v4753 = vsel %vm4497, %v4364, %v4625
    %v4754 = vsel %vm4498, %v4173, %v4626
    %v4755 = vsel %vm4499, %v4175, %v4627
    %v4756 = vsel %vm4500, %v4366, %v4628
    %v4757 = vsel %vm4501, %v4368, %v4629
    %v4758 = vsel %vm4502, %v4179, %v4630
    %v4759 = vsel %vm4503, %v4181, %v4631
    %v4760 = vsel %vm4504, %v4372, %v4632
    %v4761 = vsel %vm4505, %v4374, %v4633
    %v4762 = vsel %vm4506, %v4183, %v4634
    %v4763 = vsel %vm4507, %v4185, %v4635
    %v4764 = vsel %vm4508, %v4376, %v4636
    %v4765 = vsel %vm4509, %v4378, %v4637
    %v4766 = vsel %vm4510, %v4189, %v4638
    %v4767 = vsel %vm4511, %v4191, %v4639
    %v4768 = vsel %vm4512, %v4382, %v4640
    %v4769 = vsel %vm4513, %v4384, %v4641
    %v4770 = vsel %vm4514, %v4193, %v4642
    %v4771 = vsel %vm4515, %v4195, %v4643
    %v4772 = vsel %vm4516, %v4386, %v4644
    %v4773 = vsel %vm4517, %v4388, %v4645
    %4775 = vset.pattern.permute.xlu0 0
    %4776 = vperm.xlu0 %4775, %v297
    %v4777 = vpop.permute.xlu0 %4776
    %4780 = vset.pattern.permute.xlu0 0
    %4781 = vperm.xlu0 %4780, %v298
    %v4782 = vpop.permute.xlu0 %4781
    %4785 = vset.pattern.permute.xlu0 0
    %4786 = vperm.xlu0 %4785, %v299
    %v4787 = vpop.permute.xlu0 %4786
    %4790 = vset.pattern.permute.xlu0 0
    %4791 = vperm.xlu0 %4790, %v300
    %v4792 = vpop.permute.xlu0 %4791
    %4795 = vset.pattern.permute.xlu0 0
    %4796 = vperm.xlu0 %4795, %v301
    %v4797 = vpop.permute.xlu0 %4796
    %4800 = vset.pattern.permute.xlu0 0
    %4801 = vperm.xlu0 %4800, %v302
    %v4802 = vpop.permute.xlu0 %4801
    %4805 = vset.pattern.permute.xlu0 0
    %4806 = vperm.xlu0 %4805, %v303
    %v4807 = vpop.permute.xlu0 %4806
    %4810 = vset.pattern.permute.xlu0 0
    %4811 = vperm.xlu0 %4810, %v304
    %v4812 = vpop.permute.xlu0 %4811
    %4815 = vset.pattern.permute.xlu0 0
    %4816 = vperm.xlu0 %4815, %v305
    %v4817 = vpop.permute.xlu0 %4816
    %4820 = vset.pattern.permute.xlu0 0
    %4821 = vperm.xlu0 %4820, %v306
    %v4822 = vpop.permute.xlu0 %4821
    %4825 = vset.pattern.permute.xlu0 0
    %4826 = vperm.xlu0 %4825, %v307
    %v4827 = vpop.permute.xlu0 %4826
    %4830 = vset.pattern.permute.xlu0 0
    %4831 = vperm.xlu0 %4830, %v308
    %v4832 = vpop.permute.xlu0 %4831
    %4835 = vset.pattern.permute.xlu0 0
    %4836 = vperm.xlu0 %4835, %v309
    %v4837 = vpop.permute.xlu0 %4836
    %4840 = vset.pattern.permute.xlu0 0
    %4841 = vperm.xlu0 %4840, %v310
    %v4842 = vpop.permute.xlu0 %4841
    %4845 = vset.pattern.permute.xlu0 0
    %4846 = vperm.xlu0 %4845, %v311
    %v4847 = vpop.permute.xlu0 %4846
    %4850 = vset.pattern.permute.xlu0 0
    %4851 = vperm.xlu0 %4850, %v312
    %v4852 = vpop.permute.xlu0 %4851
    %4855 = vset.pattern.permute.xlu0 0
    %4856 = vperm.xlu0 %4855, %v313
    %v4857 = vpop.permute.xlu0 %4856
    %4860 = vset.pattern.permute.xlu0 0
    %4861 = vperm.xlu0 %4860, %v314
    %v4862 = vpop.permute.xlu0 %4861
    %4865 = vset.pattern.permute.xlu0 0
    %4866 = vperm.xlu0 %4865, %v315
    %v4867 = vpop.permute.xlu0 %4866
    %4870 = vset.pattern.permute.xlu0 0
    %4871 = vperm.xlu0 %4870, %v316
    %v4872 = vpop.permute.xlu0 %4871
    %4875 = vset.pattern.permute.xlu0 0
    %4876 = vperm.xlu0 %4875, %v317
    %v4877 = vpop.permute.xlu0 %4876
    %4880 = vset.pattern.permute.xlu0 0
    %4881 = vperm.xlu0 %4880, %v318
    %v4882 = vpop.permute.xlu0 %4881
    %4885 = vset.pattern.permute.xlu0 0
    %4886 = vperm.xlu0 %4885, %v319
    %v4887 = vpop.permute.xlu0 %4886
    %4890 = vset.pattern.permute.xlu0 0
    %4891 = vperm.xlu0 %4890, %v320
    %v4892 = vpop.permute.xlu0 %4891
    %4895 = vset.pattern.permute.xlu0 0
    %4896 = vperm.xlu0 %4895, %v321
    %v4897 = vpop.permute.xlu0 %4896
    %4900 = vset.pattern.permute.xlu0 0
    %4901 = vperm.xlu0 %4900, %v322
    %v4902 = vpop.permute.xlu0 %4901
    %4905 = vset.pattern.permute.xlu0 0
    %4906 = vperm.xlu0 %4905, %v323
    %v4907 = vpop.permute.xlu0 %4906
    %4910 = vset.pattern.permute.xlu0 0
    %4911 = vperm.xlu0 %4910, %v324
    %v4912 = vpop.permute.xlu0 %4911
    %4915 = vset.pattern.permute.xlu0 0
    %4916 = vperm.xlu0 %4915, %v325
    %v4917 = vpop.permute.xlu0 %4916
    %4920 = vset.pattern.permute.xlu0 0
    %4921 = vperm.xlu0 %4920, %v326
    %v4922 = vpop.permute.xlu0 %4921
    %4925 = vset.pattern.permute.xlu0 0
    %4926 = vperm.xlu0 %4925, %v327
    %v4927 = vpop.permute.xlu0 %4926
    %4930 = vset.pattern.permute.xlu0 0
    %4931 = vperm.xlu0 %4930, %v328
    %v4932 = vpop.permute.xlu0 %4931
    %v4934 = vmul.f32 %v4777, %v4646
    %v4935 = vmul.f32 %v4777, %v4647
    %v4936 = vmul.f32 %v4777, %v4648
    %v4937 = vmul.f32 %v4777, %v4649
    %v4938 = vmul.f32 %v4782, %v4650
    %v4939 = vmul.f32 %v4782, %v4651
    %v4940 = vmul.f32 %v4782, %v4652
    %v4941 = vmul.f32 %v4782, %v4653
    %v4942 = vmul.f32 %v4787, %v4654
    %v4943 = vmul.f32 %v4787, %v4655
    %v4944 = vmul.f32 %v4787, %v4656
    %v4945 = vmul.f32 %v4787, %v4657
    %v4946 = vmul.f32 %v4792, %v4658
    %v4947 = vmul.f32 %v4792, %v4659
    %v4948 = vmul.f32 %v4792, %v4660
    %v4949 = vmul.f32 %v4792, %v4661
    %v4950 = vmul.f32 %v4797, %v4662
    %v4951 = vmul.f32 %v4797, %v4663
    %v4952 = vmul.f32 %v4797, %v4664
    %v4953 = vmul.f32 %v4797, %v4665
    %v4954 = vmul.f32 %v4802, %v4666
    %v4955 = vmul.f32 %v4802, %v4667
    %v4956 = vmul.f32 %v4802, %v4668
    %v4957 = vmul.f32 %v4802, %v4669
    %v4958 = vmul.f32 %v4807, %v4670
    %v4959 = vmul.f32 %v4807, %v4671
    %v4960 = vmul.f32 %v4807, %v4672
    %v4961 = vmul.f32 %v4807, %v4673
    %v4962 = vmul.f32 %v4812, %v4674
    %v4963 = vmul.f32 %v4812, %v4675
    %v4964 = vmul.f32 %v4812, %v4676
    %v4965 = vmul.f32 %v4812, %v4677
    %v4966 = vmul.f32 %v4817, %v4678
    %v4967 = vmul.f32 %v4817, %v4679
    %v4968 = vmul.f32 %v4817, %v4680
    %v4969 = vmul.f32 %v4817, %v4681
    %v4970 = vmul.f32 %v4822, %v4682
    %v4971 = vmul.f32 %v4822, %v4683
    %v4972 = vmul.f32 %v4822, %v4684
    %v4973 = vmul.f32 %v4822, %v4685
    %v4974 = vmul.f32 %v4827, %v4686
    %v4975 = vmul.f32 %v4827, %v4687
    %v4976 = vmul.f32 %v4827, %v4688
    %v4977 = vmul.f32 %v4827, %v4689
    %v4978 = vmul.f32 %v4832, %v4690
    %v4979 = vmul.f32 %v4832, %v4691
    %v4980 = vmul.f32 %v4832, %v4692
    %v4981 = vmul.f32 %v4832, %v4693
    %v4982 = vmul.f32 %v4837, %v4694
    %v4983 = vmul.f32 %v4837, %v4695
    %v4984 = vmul.f32 %v4837, %v4696
    %v4985 = vmul.f32 %v4837, %v4697
    %v4986 = vmul.f32 %v4842, %v4698
    %v4987 = vmul.f32 %v4842, %v4699
    %v4988 = vmul.f32 %v4842, %v4700
    %v4989 = vmul.f32 %v4842, %v4701
    %v4990 = vmul.f32 %v4847, %v4702
    %v4991 = vmul.f32 %v4847, %v4703
    %v4992 = vmul.f32 %v4847, %v4704
    %v4993 = vmul.f32 %v4847, %v4705
    %v4994 = vmul.f32 %v4852, %v4706
    %v4995 = vmul.f32 %v4852, %v4707
    %v4996 = vmul.f32 %v4852, %v4708
    %v4997 = vmul.f32 %v4852, %v4709
    %v4998 = vmul.f32 %v4857, %v4710
    %v4999 = vmul.f32 %v4857, %v4711
    %v5000 = vmul.f32 %v4857, %v4712
    %v5001 = vmul.f32 %v4857, %v4713
    %v5002 = vmul.f32 %v4862, %v4714
    %v5003 = vmul.f32 %v4862, %v4715
    %v5004 = vmul.f32 %v4862, %v4716
    %v5005 = vmul.f32 %v4862, %v4717
    %v5006 = vmul.f32 %v4867, %v4718
    %v5007 = vmul.f32 %v4867, %v4719
    %v5008 = vmul.f32 %v4867, %v4720
    %v5009 = vmul.f32 %v4867, %v4721
    %v5010 = vmul.f32 %v4872, %v4722
    %v5011 = vmul.f32 %v4872, %v4723
    %v5012 = vmul.f32 %v4872, %v4724
    %v5013 = vmul.f32 %v4872, %v4725
    %v5014 = vmul.f32 %v4877, %v4726
    %v5015 = vmul.f32 %v4877, %v4727
    %v5016 = vmul.f32 %v4877, %v4728
    %v5017 = vmul.f32 %v4877, %v4729
    %v5018 = vmul.f32 %v4882, %v4730
    %v5019 = vmul.f32 %v4882, %v4731
    %v5020 = vmul.f32 %v4882, %v4732
    %v5021 = vmul.f32 %v4882, %v4733
    %v5022 = vmul.f32 %v4887, %v4734
    %v5023 = vmul.f32 %v4887, %v4735
    %v5024 = vmul.f32 %v4887, %v4736
    %v5025 = vmul.f32 %v4887, %v4737
    %v5026 = vmul.f32 %v4892, %v4738
    %v5027 = vmul.f32 %v4892, %v4739
    %v5028 = vmul.f32 %v4892, %v4740
    %v5029 = vmul.f32 %v4892, %v4741
    %v5030 = vmul.f32 %v4897, %v4742
    %v5031 = vmul.f32 %v4897, %v4743
    %v5032 = vmul.f32 %v4897, %v4744
    %v5033 = vmul.f32 %v4897, %v4745
    %v5034 = vmul.f32 %v4902, %v4746
    %v5035 = vmul.f32 %v4902, %v4747
    %v5036 = vmul.f32 %v4902, %v4748
    %v5037 = vmul.f32 %v4902, %v4749
    %v5038 = vmul.f32 %v4907, %v4750
    %v5039 = vmul.f32 %v4907, %v4751
    %v5040 = vmul.f32 %v4907, %v4752
    %v5041 = vmul.f32 %v4907, %v4753
    %v5042 = vmul.f32 %v4912, %v4754
    %v5043 = vmul.f32 %v4912, %v4755
    %v5044 = vmul.f32 %v4912, %v4756
    %v5045 = vmul.f32 %v4912, %v4757
    %v5046 = vmul.f32 %v4917, %v4758
    %v5047 = vmul.f32 %v4917, %v4759
    %v5048 = vmul.f32 %v4917, %v4760
    %v5049 = vmul.f32 %v4917, %v4761
    %v5050 = vmul.f32 %v4922, %v4762
    %v5051 = vmul.f32 %v4922, %v4763
    %v5052 = vmul.f32 %v4922, %v4764
    %v5053 = vmul.f32 %v4922, %v4765
    %v5054 = vmul.f32 %v4927, %v4766
    %v5055 = vmul.f32 %v4927, %v4767
    %v5056 = vmul.f32 %v4927, %v4768
    %v5057 = vmul.f32 %v4927, %v4769
    %v5058 = vmul.f32 %v4932, %v4770
    %v5059 = vmul.f32 %v4932, %v4771
    %v5060 = vmul.f32 %v4932, %v4772
    %v5061 = vmul.f32 %v4932, %v4773
    %v5062 = vadd.f32 %v4934, %v4938
    %v5063 = vadd.f32 %v5062, %v4942
    %v5064 = vadd.f32 %v5063, %v4946
    %v5065 = vadd.f32 %v5064, %v4950
    %v5066 = vadd.f32 %v5065, %v4954
    %v5067 = vadd.f32 %v5066, %v4958
    %v5068 = vadd.f32 %v5067, %v4962
    %v5069 = vadd.f32 %v5068, %v4966
    %v5070 = vadd.f32 %v5069, %v4970
    %v5071 = vadd.f32 %v5070, %v4974
    %v5072 = vadd.f32 %v5071, %v4978
    %v5073 = vadd.f32 %v5072, %v4982
    %v5074 = vadd.f32 %v5073, %v4986
    %v5075 = vadd.f32 %v5074, %v4990
    %v5076 = vadd.f32 %v5075, %v4994
    %v5077 = vadd.f32 %v5076, %v4998
    %v5078 = vadd.f32 %v5077, %v5002
    %v5079 = vadd.f32 %v5078, %v5006
    %v5080 = vadd.f32 %v5079, %v5010
    %v5081 = vadd.f32 %v5080, %v5014
    %v5082 = vadd.f32 %v5081, %v5018
    %v5083 = vadd.f32 %v5082, %v5022
    %v5084 = vadd.f32 %v5083, %v5026
    %v5085 = vadd.f32 %v5084, %v5030
    %v5086 = vadd.f32 %v5085, %v5034
    %v5087 = vadd.f32 %v5086, %v5038
    %v5088 = vadd.f32 %v5087, %v5042
    %v5089 = vadd.f32 %v5088, %v5046
    %v5090 = vadd.f32 %v5089, %v5050
    %v5091 = vadd.f32 %v5090, %v5054
    %v5092 = vadd.f32 %v5091, %v5058
    %v5093 = vrot.slane %v5092, 4
    %v5094 = vadd.f32 %v5092, %v5093
    %v5095 = vrot.slane %v5094, 2
    %v5096 = vadd.f32 %v5094, %v5095
    %v5097 = vrot.slane %v5096, 1
    %v5098 = vadd.f32 %v5096, %v5097
    %v5099 = vadd.f32 %v4935, %v4939
    %v5100 = vadd.f32 %v5099, %v4943
    %v5101 = vadd.f32 %v5100, %v4947
    %v5102 = vadd.f32 %v5101, %v4951
    %v5103 = vadd.f32 %v5102, %v4955
    %v5104 = vadd.f32 %v5103, %v4959
    %v5105 = vadd.f32 %v5104, %v4963
    %v5106 = vadd.f32 %v5105, %v4967
    %v5107 = vadd.f32 %v5106, %v4971
    %v5108 = vadd.f32 %v5107, %v4975
    %v5109 = vadd.f32 %v5108, %v4979
    %v5110 = vadd.f32 %v5109, %v4983
    %v5111 = vadd.f32 %v5110, %v4987
    %v5112 = vadd.f32 %v5111, %v4991
    %v5113 = vadd.f32 %v5112, %v4995
    %v5114 = vadd.f32 %v5113, %v4999
    %v5115 = vadd.f32 %v5114, %v5003
    %v5116 = vadd.f32 %v5115, %v5007
    %v5117 = vadd.f32 %v5116, %v5011
    %v5118 = vadd.f32 %v5117, %v5015
    %v5119 = vadd.f32 %v5118, %v5019
    %v5120 = vadd.f32 %v5119, %v5023
    %v5121 = vadd.f32 %v5120, %v5027
    %v5122 = vadd.f32 %v5121, %v5031
    %v5123 = vadd.f32 %v5122, %v5035
    %v5124 = vadd.f32 %v5123, %v5039
    %v5125 = vadd.f32 %v5124, %v5043
    %v5126 = vadd.f32 %v5125, %v5047
    %v5127 = vadd.f32 %v5126, %v5051
    %v5128 = vadd.f32 %v5127, %v5055
    %v5129 = vadd.f32 %v5128, %v5059
    %v5130 = vrot.slane %v5129, 4
    %v5131 = vadd.f32 %v5129, %v5130
    %v5132 = vrot.slane %v5131, 2
    %v5133 = vadd.f32 %v5131, %v5132
    %v5134 = vrot.slane %v5133, 1
    %v5135 = vadd.f32 %v5133, %v5134
    %v5136 = vadd.f32 %v4936, %v4940
    %v5137 = vadd.f32 %v5136, %v4944
    %v5138 = vadd.f32 %v5137, %v4948
    %v5139 = vadd.f32 %v5138, %v4952
    %v5140 = vadd.f32 %v5139, %v4956
    %v5141 = vadd.f32 %v5140, %v4960
    %v5142 = vadd.f32 %v5141, %v4964
    %v5143 = vadd.f32 %v5142, %v4968
    %v5144 = vadd.f32 %v5143, %v4972
    %v5145 = vadd.f32 %v5144, %v4976
    %v5146 = vadd.f32 %v5145, %v4980
    %v5147 = vadd.f32 %v5146, %v4984
    %v5148 = vadd.f32 %v5147, %v4988
    %v5149 = vadd.f32 %v5148, %v4992
    %v5150 = vadd.f32 %v5149, %v4996
    %v5151 = vadd.f32 %v5150, %v5000
    %v5152 = vadd.f32 %v5151, %v5004
    %v5153 = vadd.f32 %v5152, %v5008
    %v5154 = vadd.f32 %v5153, %v5012
    %v5155 = vadd.f32 %v5154, %v5016
    %v5156 = vadd.f32 %v5155, %v5020
    %v5157 = vadd.f32 %v5156, %v5024
    %v5158 = vadd.f32 %v5157, %v5028
    %v5159 = vadd.f32 %v5158, %v5032
    %v5160 = vadd.f32 %v5159, %v5036
    %v5161 = vadd.f32 %v5160, %v5040
    %v5162 = vadd.f32 %v5161, %v5044
    %v5163 = vadd.f32 %v5162, %v5048
    %v5164 = vadd.f32 %v5163, %v5052
    %v5165 = vadd.f32 %v5164, %v5056
    %v5166 = vadd.f32 %v5165, %v5060
    %v5167 = vrot.slane %v5166, 4
    %v5168 = vadd.f32 %v5166, %v5167
    %v5169 = vrot.slane %v5168, 2
    %v5170 = vadd.f32 %v5168, %v5169
    %v5171 = vrot.slane %v5170, 1
    %v5172 = vadd.f32 %v5170, %v5171
    %v5173 = vadd.f32 %v4937, %v4941
    %v5174 = vadd.f32 %v5173, %v4945
    %v5175 = vadd.f32 %v5174, %v4949
    %v5176 = vadd.f32 %v5175, %v4953
    %v5177 = vadd.f32 %v5176, %v4957
    %v5178 = vadd.f32 %v5177, %v4961
    %v5179 = vadd.f32 %v5178, %v4965
    %v5180 = vadd.f32 %v5179, %v4969
    %v5181 = vadd.f32 %v5180, %v4973
    %v5182 = vadd.f32 %v5181, %v4977
    %v5183 = vadd.f32 %v5182, %v4981
    %v5184 = vadd.f32 %v5183, %v4985
    %v5185 = vadd.f32 %v5184, %v4989
    %v5186 = vadd.f32 %v5185, %v4993
    %v5187 = vadd.f32 %v5186, %v4997
    %v5188 = vadd.f32 %v5187, %v5001
    %v5189 = vadd.f32 %v5188, %v5005
    %v5190 = vadd.f32 %v5189, %v5009
    %v5191 = vadd.f32 %v5190, %v5013
    %v5192 = vadd.f32 %v5191, %v5017
    %v5193 = vadd.f32 %v5192, %v5021
    %v5194 = vadd.f32 %v5193, %v5025
    %v5195 = vadd.f32 %v5194, %v5029
    %v5196 = vadd.f32 %v5195, %v5033
    %v5197 = vadd.f32 %v5196, %v5037
    %v5198 = vadd.f32 %v5197, %v5041
    %v5199 = vadd.f32 %v5198, %v5045
    %v5200 = vadd.f32 %v5199, %v5049
    %v5201 = vadd.f32 %v5200, %v5053
    %v5202 = vadd.f32 %v5201, %v5057
    %v5203 = vadd.f32 %v5202, %v5061
    %v5204 = vrot.slane %v5203, 4
    %v5205 = vadd.f32 %v5203, %v5204
    %v5206 = vrot.slane %v5205, 2
    %v5207 = vadd.f32 %v5205, %v5206
    %v5208 = vrot.slane %v5207, 1
    %v5209 = vadd.f32 %v5207, %v5208
    %5211 = vset.pattern.permute.xlu0 0
    %5212 = vperm.xlu0 %5211, %v329
    %v5213 = vpop.permute.xlu0 %5212
    %v5215 = vlaneseq
    %v5216 = vshrl.u32 %v5215, 7
    %v5217 = vsub.s32 0, %v5216
    %v5218 = vrot.slane %v5213, %v5217
    %v5219 = vadd.f32 %v5098, %v5218
    %v5220 = vadd.f32 %v5135, %v5218
    %v5221 = vadd.f32 %v5172, %v5218
    %v5222 = vadd.f32 %v5209, %v5218
    %v5227 = vcombine.low %v5219, %v5220
    %v5228 = vcombine.low %v5221, %v5222
    %v5230 = vunpack.c.l.s4 1966171168
    %v5231 = vunpack.c.0.s8 %v5230
    %v5232 = vlaneseq
    %v5233 = vshrl.u32 %v5232, 7
    %v5234 = vsub.s32 %v5231, %v5233
    %v5235 = vrot.slane %v5227, %v5234
    %v5237 = vunpack.c.l.s4 1966171168
    %v5238 = vunpack.c.0.s8 %v5237
    %v5239 = vlaneseq
    %v5240 = vshrl.u32 %v5239, 7
    %v5241 = vsub.s32 %v5238, %v5240
    %v5242 = vrot.slane %v5228, %v5241
    %v5243 = vcombine.low %v5235, %v5242
    %v5245 = vunpack.c.l.s4 1966171168
    %v5246 = vunpack.c.0.s8 %v5245
    %v5247 = vlaneseq
    %v5248 = vshrl.u32 %v5247, 7
    %v5249 = vsub.s32 %v5246, %v5248
    %v5250 = vrot.slane %v5243, %v5249
    %v5252 = vlaneseq
    %vm5253 = vcmp.ge.s32.totalorder %v5252, 0
    %vm5254 = vcmp.lt.s32.totalorder %v5252, 512
    %vm5255 = vmand %vm5253, %vm5254
    %5256 = vst.msk [vmem:[#allocation3] sm:$0xf] %vm5255, %v5250
    %v5257 = vld [vmem:[%s0 + $0x4] sm:$0xf]
    %v5259 = vlaneseq
    %v5260 = vshrl.u32 %v5259, 7
    %v5261 = vsub.s32 0, %v5260
    %v5262 = vrot.slane %v5257, %v5261
    %v5263 = vlaneseq
    %v5264 = vshrl.u32 %v5263, 7
    %v5265 = vsub.s32 1, %v5264
    %v5266 = vrot.slane %v5257, %v5265
    %v5267 = vlaneseq
    %v5268 = vshrl.u32 %v5267, 7
    %v5269 = vsub.s32 2, %v5268
    %v5270 = vrot.slane %v5257, %v5269
    %v5271 = vlaneseq
    %v5272 = vshrl.u32 %v5271, 7
    %v5273 = vsub.s32 3, %v5272
    %v5274 = vrot.slane %v5257, %v5273
    %v5279 = vmul.f32 %v334, %v5262
    %v5280 = vmul.f32 %v334, %v5266
    %v5281 = vmul.f32 %v334, %v5270
    %v5282 = vmul.f32 %v334, %v5274
    %v5283 = vmul.f32 %v339, %v5262
    %v5284 = vmul.f32 %v339, %v5266
    %v5285 = vmul.f32 %v339, %v5270
    %v5286 = vmul.f32 %v339, %v5274
    %v5287 = vmul.f32 %v344, %v5262
    %v5288 = vmul.f32 %v344, %v5266
    %v5289 = vmul.f32 %v344, %v5270
    %v5290 = vmul.f32 %v344, %v5274
    %v5291 = vmul.f32 %v349, %v5262
    %v5292 = vmul.f32 %v349, %v5266
    %v5293 = vmul.f32 %v349, %v5270
    %v5294 = vmul.f32 %v349, %v5274
    %v5295 = vmul.f32 %v354, %v5262
    %v5296 = vmul.f32 %v354, %v5266
    %v5297 = vmul.f32 %v354, %v5270
    %v5298 = vmul.f32 %v354, %v5274
    %v5299 = vmul.f32 %v359, %v5262
    %v5300 = vmul.f32 %v359, %v5266
    %v5301 = vmul.f32 %v359, %v5270
    %v5302 = vmul.f32 %v359, %v5274
    %v5303 = vmul.f32 %v364, %v5262
    %v5304 = vmul.f32 %v364, %v5266
    %v5305 = vmul.f32 %v364, %v5270
    %v5306 = vmul.f32 %v364, %v5274
    %v5307 = vmul.f32 %v369, %v5262
    %v5308 = vmul.f32 %v369, %v5266
    %v5309 = vmul.f32 %v369, %v5270
    %v5310 = vmul.f32 %v369, %v5274
    %v5311 = vmul.f32 %v374, %v5262
    %v5312 = vmul.f32 %v374, %v5266
    %v5313 = vmul.f32 %v374, %v5270
    %v5314 = vmul.f32 %v374, %v5274
    %v5315 = vmul.f32 %v379, %v5262
    %v5316 = vmul.f32 %v379, %v5266
    %v5317 = vmul.f32 %v379, %v5270
    %v5318 = vmul.f32 %v379, %v5274
    %v5319 = vmul.f32 %v384, %v5262
    %v5320 = vmul.f32 %v384, %v5266
    %v5321 = vmul.f32 %v384, %v5270
    %v5322 = vmul.f32 %v384, %v5274
    %v5323 = vmul.f32 %v389, %v5262
    %v5324 = vmul.f32 %v389, %v5266
    %v5325 = vmul.f32 %v389, %v5270
    %v5326 = vmul.f32 %v389, %v5274
    %v5327 = vmul.f32 %v394, %v5262
    %v5328 = vmul.f32 %v394, %v5266
    %v5329 = vmul.f32 %v394, %v5270
    %v5330 = vmul.f32 %v394, %v5274
    %v5331 = vmul.f32 %v399, %v5262
    %v5332 = vmul.f32 %v399, %v5266
    %v5333 = vmul.f32 %v399, %v5270
    %v5334 = vmul.f32 %v399, %v5274
    %v5335 = vmul.f32 %v404, %v5262
    %v5336 = vmul.f32 %v404, %v5266
    %v5337 = vmul.f32 %v404, %v5270
    %v5338 = vmul.f32 %v404, %v5274
    %v5339 = vmul.f32 %v409, %v5262
    %v5340 = vmul.f32 %v409, %v5266
    %v5341 = vmul.f32 %v409, %v5270
    %v5342 = vmul.f32 %v409, %v5274
    %v5343 = vmul.f32 %v414, %v5262
    %v5344 = vmul.f32 %v414, %v5266
    %v5345 = vmul.f32 %v414, %v5270
    %v5346 = vmul.f32 %v414, %v5274
    %v5347 = vmul.f32 %v419, %v5262
    %v5348 = vmul.f32 %v419, %v5266
    %v5349 = vmul.f32 %v419, %v5270
    %v5350 = vmul.f32 %v419, %v5274
    %v5351 = vmul.f32 %v424, %v5262
    %v5352 = vmul.f32 %v424, %v5266
    %v5353 = vmul.f32 %v424, %v5270
    %v5354 = vmul.f32 %v424, %v5274
    %v5355 = vmul.f32 %v429, %v5262
    %v5356 = vmul.f32 %v429, %v5266
    %v5357 = vmul.f32 %v429, %v5270
    %v5358 = vmul.f32 %v429, %v5274
    %v5359 = vmul.f32 %v434, %v5262
    %v5360 = vmul.f32 %v434, %v5266
    %v5361 = vmul.f32 %v434, %v5270
    %v5362 = vmul.f32 %v434, %v5274
    %v5363 = vmul.f32 %v439, %v5262
    %v5364 = vmul.f32 %v439, %v5266
    %v5365 = vmul.f32 %v439, %v5270
    %v5366 = vmul.f32 %v439, %v5274
    %v5367 = vmul.f32 %v444, %v5262
    %v5368 = vmul.f32 %v444, %v5266
    %v5369 = vmul.f32 %v444, %v5270
    %v5370 = vmul.f32 %v444, %v5274
    %v5371 = vmul.f32 %v449, %v5262
    %v5372 = vmul.f32 %v449, %v5266
    %v5373 = vmul.f32 %v449, %v5270
    %v5374 = vmul.f32 %v449, %v5274
    %v5375 = vmul.f32 %v454, %v5262
    %v5376 = vmul.f32 %v454, %v5266
    %v5377 = vmul.f32 %v454, %v5270
    %v5378 = vmul.f32 %v454, %v5274
    %v5379 = vmul.f32 %v459, %v5262
    %v5380 = vmul.f32 %v459, %v5266
    %v5381 = vmul.f32 %v459, %v5270
    %v5382 = vmul.f32 %v459, %v5274
    %v5383 = vmul.f32 %v464, %v5262
    %v5384 = vmul.f32 %v464, %v5266
    %v5385 = vmul.f32 %v464, %v5270
    %v5386 = vmul.f32 %v464, %v5274
    %v5387 = vmul.f32 %v469, %v5262
    %v5388 = vmul.f32 %v469, %v5266
    %v5389 = vmul.f32 %v469, %v5270
    %v5390 = vmul.f32 %v469, %v5274
    %v5391 = vmul.f32 %v474, %v5262
    %v5392 = vmul.f32 %v474, %v5266
    %v5393 = vmul.f32 %v474, %v5270
    %v5394 = vmul.f32 %v474, %v5274
    %v5395 = vmul.f32 %v479, %v5262
    %v5396 = vmul.f32 %v479, %v5266
    %v5397 = vmul.f32 %v479, %v5270
    %v5398 = vmul.f32 %v479, %v5274
    %v5399 = vmul.f32 %v484, %v5262
    %v5400 = vmul.f32 %v484, %v5266
    %v5401 = vmul.f32 %v484, %v5270
    %v5402 = vmul.f32 %v484, %v5274
    %v5403 = vmul.f32 %v489, %v5262
    %v5404 = vmul.f32 %v489, %v5266
    %v5405 = vmul.f32 %v489, %v5270
    %v5406 = vmul.f32 %v489, %v5274
    %v5407 = vadd.f32 %v5279, %v643
    %v5408 = vadd.f32 %v5280, %v643
    %v5409 = vadd.f32 %v5281, %v643
    %v5410 = vadd.f32 %v5282, %v643
    %v5411 = vadd.f32 %v5283, %v648
    %v5412 = vadd.f32 %v5284, %v648
    %v5413 = vadd.f32 %v5285, %v648
    %v5414 = vadd.f32 %v5286, %v648
    %v5415 = vadd.f32 %v5287, %v653
    %v5416 = vadd.f32 %v5288, %v653
    %v5417 = vadd.f32 %v5289, %v653
    %v5418 = vadd.f32 %v5290, %v653
    %v5419 = vadd.f32 %v5291, %v658
    %v5420 = vadd.f32 %v5292, %v658
    %v5421 = vadd.f32 %v5293, %v658
    %v5422 = vadd.f32 %v5294, %v658
    %v5423 = vadd.f32 %v5295, %v663
    %v5424 = vadd.f32 %v5296, %v663
    %v5425 = vadd.f32 %v5297, %v663
    %v5426 = vadd.f32 %v5298, %v663
    %v5427 = vadd.f32 %v5299, %v668
    %v5428 = vadd.f32 %v5300, %v668
    %v5429 = vadd.f32 %v5301, %v668
    %v5430 = vadd.f32 %v5302, %v668
    %v5431 = vadd.f32 %v5303, %v673
    %v5432 = vadd.f32 %v5304, %v673
    %v5433 = vadd.f32 %v5305, %v673
    %v5434 = vadd.f32 %v5306, %v673
    %v5435 = vadd.f32 %v5307, %v678
    %v5436 = vadd.f32 %v5308, %v678
    %v5437 = vadd.f32 %v5309, %v678
    %v5438 = vadd.f32 %v5310, %v678
    %v5439 = vadd.f32 %v5311, %v683
    %v5440 = vadd.f32 %v5312, %v683
    %v5441 = vadd.f32 %v5313, %v683
    %v5442 = vadd.f32 %v5314, %v683
    %v5443 = vadd.f32 %v5315, %v688
    %v5444 = vadd.f32 %v5316, %v688
    %v5445 = vadd.f32 %v5317, %v688
    %v5446 = vadd.f32 %v5318, %v688
    %v5447 = vadd.f32 %v5319, %v693
    %v5448 = vadd.f32 %v5320, %v693
    %v5449 = vadd.f32 %v5321, %v693
    %v5450 = vadd.f32 %v5322, %v693
    %v5451 = vadd.f32 %v5323, %v698
    %v5452 = vadd.f32 %v5324, %v698
    %v5453 = vadd.f32 %v5325, %v698
    %v5454 = vadd.f32 %v5326, %v698
    %v5455 = vadd.f32 %v5327, %v703
    %v5456 = vadd.f32 %v5328, %v703
    %v5457 = vadd.f32 %v5329, %v703
    %v5458 = vadd.f32 %v5330, %v703
    %v5459 = vadd.f32 %v5331, %v708
    %v5460 = vadd.f32 %v5332, %v708
    %v5461 = vadd.f32 %v5333, %v708
    %v5462 = vadd.f32 %v5334, %v708
    %v5463 = vadd.f32 %v5335, %v713
    %v5464 = vadd.f32 %v5336, %v713
    %v5465 = vadd.f32 %v5337, %v713
    %v5466 = vadd.f32 %v5338, %v713
    %v5467 = vadd.f32 %v5339, %v718
    %v5468 = vadd.f32 %v5340, %v718
    %v5469 = vadd.f32 %v5341, %v718
    %v5470 = vadd.f32 %v5342, %v718
    %v5471 = vadd.f32 %v5343, %v723
    %v5472 = vadd.f32 %v5344, %v723
    %v5473 = vadd.f32 %v5345, %v723
    %v5474 = vadd.f32 %v5346, %v723
    %v5475 = vadd.f32 %v5347, %v728
    %v5476 = vadd.f32 %v5348, %v728
    %v5477 = vadd.f32 %v5349, %v728
    %v5478 = vadd.f32 %v5350, %v728
    %v5479 = vadd.f32 %v5351, %v733
    %v5480 = vadd.f32 %v5352, %v733
    %v5481 = vadd.f32 %v5353, %v733
    %v5482 = vadd.f32 %v5354, %v733
    %v5483 = vadd.f32 %v5355, %v738
    %v5484 = vadd.f32 %v5356, %v738
    %v5485 = vadd.f32 %v5357, %v738
    %v5486 = vadd.f32 %v5358, %v738
    %v5487 = vadd.f32 %v5359, %v743
    %v5488 = vadd.f32 %v5360, %v743
    %v5489 = vadd.f32 %v5361, %v743
    %v5490 = vadd.f32 %v5362, %v743
    %v5491 = vadd.f32 %v5363, %v748
    %v5492 = vadd.f32 %v5364, %v748
    %v5493 = vadd.f32 %v5365, %v748
    %v5494 = vadd.f32 %v5366, %v748
    %v5495 = vadd.f32 %v5367, %v753
    %v5496 = vadd.f32 %v5368, %v753
    %v5497 = vadd.f32 %v5369, %v753
    %v5498 = vadd.f32 %v5370, %v753
    %v5499 = vadd.f32 %v5371, %v758
    %v5500 = vadd.f32 %v5372, %v758
    %v5501 = vadd.f32 %v5373, %v758
    %v5502 = vadd.f32 %v5374, %v758
    %v5503 = vadd.f32 %v5375, %v763
    %v5504 = vadd.f32 %v5376, %v763
    %v5505 = vadd.f32 %v5377, %v763
    %v5506 = vadd.f32 %v5378, %v763
    %v5507 = vadd.f32 %v5379, %v768
    %v5508 = vadd.f32 %v5380, %v768
    %v5509 = vadd.f32 %v5381, %v768
    %v5510 = vadd.f32 %v5382, %v768
    %v5511 = vadd.f32 %v5383, %v773
    %v5512 = vadd.f32 %v5384, %v773
    %v5513 = vadd.f32 %v5385, %v773
    %v5514 = vadd.f32 %v5386, %v773
    %v5515 = vadd.f32 %v5387, %v778
    %v5516 = vadd.f32 %v5388, %v778
    %v5517 = vadd.f32 %v5389, %v778
    %v5518 = vadd.f32 %v5390, %v778
    %v5519 = vadd.f32 %v5391, %v783
    %v5520 = vadd.f32 %v5392, %v783
    %v5521 = vadd.f32 %v5393, %v783
    %v5522 = vadd.f32 %v5394, %v783
    %v5523 = vadd.f32 %v5395, %v788
    %v5524 = vadd.f32 %v5396, %v788
    %v5525 = vadd.f32 %v5397, %v788
    %v5526 = vadd.f32 %v5398, %v788
    %v5527 = vadd.f32 %v5399, %v793
    %v5528 = vadd.f32 %v5400, %v793
    %v5529 = vadd.f32 %v5401, %v793
    %v5530 = vadd.f32 %v5402, %v793
    %v5531 = vadd.f32 %v5403, %v798
    %v5532 = vadd.f32 %v5404, %v798
    %v5533 = vadd.f32 %v5405, %v798
    %v5534 = vadd.f32 %v5406, %v798
    %vm5535 = vcmp.gt.f32.partialorder %v5407, 0.0
    %vm5536 = vcmp.gt.f32.partialorder %v5408, 0.0
    %vm5537 = vcmp.gt.f32.partialorder %v5409, 0.0
    %vm5538 = vcmp.gt.f32.partialorder %v5410, 0.0
    %vm5539 = vcmp.gt.f32.partialorder %v5411, 0.0
    %vm5540 = vcmp.gt.f32.partialorder %v5412, 0.0
    %vm5541 = vcmp.gt.f32.partialorder %v5413, 0.0
    %vm5542 = vcmp.gt.f32.partialorder %v5414, 0.0
    %vm5543 = vcmp.gt.f32.partialorder %v5415, 0.0
    %vm5544 = vcmp.gt.f32.partialorder %v5416, 0.0
    %vm5545 = vcmp.gt.f32.partialorder %v5417, 0.0
    %vm5546 = vcmp.gt.f32.partialorder %v5418, 0.0
    %vm5547 = vcmp.gt.f32.partialorder %v5419, 0.0
    %vm5548 = vcmp.gt.f32.partialorder %v5420, 0.0
    %vm5549 = vcmp.gt.f32.partialorder %v5421, 0.0
    %vm5550 = vcmp.gt.f32.partialorder %v5422, 0.0
    %vm5551 = vcmp.gt.f32.partialorder %v5423, 0.0
    %vm5552 = vcmp.gt.f32.partialorder %v5424, 0.0
    %vm5553 = vcmp.gt.f32.partialorder %v5425, 0.0
    %vm5554 = vcmp.gt.f32.partialorder %v5426, 0.0
    %vm5555 = vcmp.gt.f32.partialorder %v5427, 0.0
    %vm5556 = vcmp.gt.f32.partialorder %v5428, 0.0
    %vm5557 = vcmp.gt.f32.partialorder %v5429, 0.0
    %vm5558 = vcmp.gt.f32.partialorder %v5430, 0.0
    %vm5559 = vcmp.gt.f32.partialorder %v5431, 0.0
    %vm5560 = vcmp.gt.f32.partialorder %v5432, 0.0
    %vm5561 = vcmp.gt.f32.partialorder %v5433, 0.0
    %vm5562 = vcmp.gt.f32.partialorder %v5434, 0.0
    %vm5563 = vcmp.gt.f32.partialorder %v5435, 0.0
    %vm5564 = vcmp.gt.f32.partialorder %v5436, 0.0
    %vm5565 = vcmp.gt.f32.partialorder %v5437, 0.0
    %vm5566 = vcmp.gt.f32.partialorder %v5438, 0.0
    %vm5567 = vcmp.gt.f32.partialorder %v5439, 0.0
    %vm5568 = vcmp.gt.f32.partialorder %v5440, 0.0
    %vm5569 = vcmp.gt.f32.partialorder %v5441, 0.0
    %vm5570 = vcmp.gt.f32.partialorder %v5442, 0.0
    %vm5571 = vcmp.gt.f32.partialorder %v5443, 0.0
    %vm5572 = vcmp.gt.f32.partialorder %v5444, 0.0
    %vm5573 = vcmp.gt.f32.partialorder %v5445, 0.0
    %vm5574 = vcmp.gt.f32.partialorder %v5446, 0.0
    %vm5575 = vcmp.gt.f32.partialorder %v5447, 0.0
    %vm5576 = vcmp.gt.f32.partialorder %v5448, 0.0
    %vm5577 = vcmp.gt.f32.partialorder %v5449, 0.0
    %vm5578 = vcmp.gt.f32.partialorder %v5450, 0.0
    %vm5579 = vcmp.gt.f32.partialorder %v5451, 0.0
    %vm5580 = vcmp.gt.f32.partialorder %v5452, 0.0
    %vm5581 = vcmp.gt.f32.partialorder %v5453, 0.0
    %vm5582 = vcmp.gt.f32.partialorder %v5454, 0.0
    %vm5583 = vcmp.gt.f32.partialorder %v5455, 0.0
    %vm5584 = vcmp.gt.f32.partialorder %v5456, 0.0
    %vm5585 = vcmp.gt.f32.partialorder %v5457, 0.0
    %vm5586 = vcmp.gt.f32.partialorder %v5458, 0.0
    %vm5587 = vcmp.gt.f32.partialorder %v5459, 0.0
    %vm5588 = vcmp.gt.f32.partialorder %v5460, 0.0
    %vm5589 = vcmp.gt.f32.partialorder %v5461, 0.0
    %vm5590 = vcmp.gt.f32.partialorder %v5462, 0.0
    %vm5591 = vcmp.gt.f32.partialorder %v5463, 0.0
    %vm5592 = vcmp.gt.f32.partialorder %v5464, 0.0
    %vm5593 = vcmp.gt.f32.partialorder %v5465, 0.0
    %vm5594 = vcmp.gt.f32.partialorder %v5466, 0.0
    %vm5595 = vcmp.gt.f32.partialorder %v5467, 0.0
    %vm5596 = vcmp.gt.f32.partialorder %v5468, 0.0
    %vm5597 = vcmp.gt.f32.partialorder %v5469, 0.0
    %vm5598 = vcmp.gt.f32.partialorder %v5470, 0.0
    %vm5599 = vcmp.gt.f32.partialorder %v5471, 0.0
    %vm5600 = vcmp.gt.f32.partialorder %v5472, 0.0
    %vm5601 = vcmp.gt.f32.partialorder %v5473, 0.0
    %vm5602 = vcmp.gt.f32.partialorder %v5474, 0.0
    %vm5603 = vcmp.gt.f32.partialorder %v5475, 0.0
    %vm5604 = vcmp.gt.f32.partialorder %v5476, 0.0
    %vm5605 = vcmp.gt.f32.partialorder %v5477, 0.0
    %vm5606 = vcmp.gt.f32.partialorder %v5478, 0.0
    %vm5607 = vcmp.gt.f32.partialorder %v5479, 0.0
    %vm5608 = vcmp.gt.f32.partialorder %v5480, 0.0
    %vm5609 = vcmp.gt.f32.partialorder %v5481, 0.0
    %vm5610 = vcmp.gt.f32.partialorder %v5482, 0.0
    %vm5611 = vcmp.gt.f32.partialorder %v5483, 0.0
    %vm5612 = vcmp.gt.f32.partialorder %v5484, 0.0
    %vm5613 = vcmp.gt.f32.partialorder %v5485, 0.0
    %vm5614 = vcmp.gt.f32.partialorder %v5486, 0.0
    %vm5615 = vcmp.gt.f32.partialorder %v5487, 0.0
    %vm5616 = vcmp.gt.f32.partialorder %v5488, 0.0
    %vm5617 = vcmp.gt.f32.partialorder %v5489, 0.0
    %vm5618 = vcmp.gt.f32.partialorder %v5490, 0.0
    %vm5619 = vcmp.gt.f32.partialorder %v5491, 0.0
    %vm5620 = vcmp.gt.f32.partialorder %v5492, 0.0
    %vm5621 = vcmp.gt.f32.partialorder %v5493, 0.0
    %vm5622 = vcmp.gt.f32.partialorder %v5494, 0.0
    %vm5623 = vcmp.gt.f32.partialorder %v5495, 0.0
    %vm5624 = vcmp.gt.f32.partialorder %v5496, 0.0
    %vm5625 = vcmp.gt.f32.partialorder %v5497, 0.0
    %vm5626 = vcmp.gt.f32.partialorder %v5498, 0.0
    %vm5627 = vcmp.gt.f32.partialorder %v5499, 0.0
    %vm5628 = vcmp.gt.f32.partialorder %v5500, 0.0
    %vm5629 = vcmp.gt.f32.partialorder %v5501, 0.0
    %vm5630 = vcmp.gt.f32.partialorder %v5502, 0.0
    %vm5631 = vcmp.gt.f32.partialorder %v5503, 0.0
    %vm5632 = vcmp.gt.f32.partialorder %v5504, 0.0
    %vm5633 = vcmp.gt.f32.partialorder %v5505, 0.0
    %vm5634 = vcmp.gt.f32.partialorder %v5506, 0.0
    %vm5635 = vcmp.gt.f32.partialorder %v5507, 0.0
    %vm5636 = vcmp.gt.f32.partialorder %v5508, 0.0
    %vm5637 = vcmp.gt.f32.partialorder %v5509, 0.0
    %vm5638 = vcmp.gt.f32.partialorder %v5510, 0.0
    %vm5639 = vcmp.gt.f32.partialorder %v5511, 0.0
    %vm5640 = vcmp.gt.f32.partialorder %v5512, 0.0
    %vm5641 = vcmp.gt.f32.partialorder %v5513, 0.0
    %vm5642 = vcmp.gt.f32.partialorder %v5514, 0.0
    %vm5643 = vcmp.gt.f32.partialorder %v5515, 0.0
    %vm5644 = vcmp.gt.f32.partialorder %v5516, 0.0
    %vm5645 = vcmp.gt.f32.partialorder %v5517, 0.0
    %vm5646 = vcmp.gt.f32.partialorder %v5518, 0.0
    %vm5647 = vcmp.gt.f32.partialorder %v5519, 0.0
    %vm5648 = vcmp.gt.f32.partialorder %v5520, 0.0
    %vm5649 = vcmp.gt.f32.partialorder %v5521, 0.0
    %vm5650 = vcmp.gt.f32.partialorder %v5522, 0.0
    %vm5651 = vcmp.gt.f32.partialorder %v5523, 0.0
    %vm5652 = vcmp.gt.f32.partialorder %v5524, 0.0
    %vm5653 = vcmp.gt.f32.partialorder %v5525, 0.0
    %vm5654 = vcmp.gt.f32.partialorder %v5526, 0.0
    %vm5655 = vcmp.gt.f32.partialorder %v5527, 0.0
    %vm5656 = vcmp.gt.f32.partialorder %v5528, 0.0
    %vm5657 = vcmp.gt.f32.partialorder %v5529, 0.0
    %vm5658 = vcmp.gt.f32.partialorder %v5530, 0.0
    %vm5659 = vcmp.gt.f32.partialorder %v5531, 0.0
    %vm5660 = vcmp.gt.f32.partialorder %v5532, 0.0
    %vm5661 = vcmp.gt.f32.partialorder %v5533, 0.0
    %vm5662 = vcmp.gt.f32.partialorder %v5534, 0.0
    %v5663 = vmul.f32 %v5407, 0.01
    %v5664 = vmul.f32 %v5408, 0.01
    %v5665 = vmul.f32 %v5409, 0.01
    %v5666 = vmul.f32 %v5410, 0.01
    %v5667 = vmul.f32 %v5411, 0.01
    %v5668 = vmul.f32 %v5412, 0.01
    %v5669 = vmul.f32 %v5413, 0.01
    %v5670 = vmul.f32 %v5414, 0.01
    %v5671 = vmul.f32 %v5415, 0.01
    %v5672 = vmul.f32 %v5416, 0.01
    %v5673 = vmul.f32 %v5417, 0.01
    %v5674 = vmul.f32 %v5418, 0.01
    %v5675 = vmul.f32 %v5419, 0.01
    %v5676 = vmul.f32 %v5420, 0.01
    %v5677 = vmul.f32 %v5421, 0.01
    %v5678 = vmul.f32 %v5422, 0.01
    %v5679 = vmul.f32 %v5423, 0.01
    %v5680 = vmul.f32 %v5424, 0.01
    %v5681 = vmul.f32 %v5425, 0.01
    %v5682 = vmul.f32 %v5426, 0.01
    %v5683 = vmul.f32 %v5427, 0.01
    %v5684 = vmul.f32 %v5428, 0.01
    %v5685 = vmul.f32 %v5429, 0.01
    %v5686 = vmul.f32 %v5430, 0.01
    %v5687 = vmul.f32 %v5431, 0.01
    %v5688 = vmul.f32 %v5432, 0.01
    %v5689 = vmul.f32 %v5433, 0.01
    %v5690 = vmul.f32 %v5434, 0.01
    %v5691 = vmul.f32 %v5435, 0.01
    %v5692 = vmul.f32 %v5436, 0.01
    %v5693 = vmul.f32 %v5437, 0.01
    %v5694 = vmul.f32 %v5438, 0.01
    %v5695 = vmul.f32 %v5439, 0.01
    %v5696 = vmul.f32 %v5440, 0.01
    %v5697 = vmul.f32 %v5441, 0.01
    %v5698 = vmul.f32 %v5442, 0.01
    %v5699 = vmul.f32 %v5443, 0.01
    %v5700 = vmul.f32 %v5444, 0.01
    %v5701 = vmul.f32 %v5445, 0.01
    %v5702 = vmul.f32 %v5446, 0.01
    %v5703 = vmul.f32 %v5447, 0.01
    %v5704 = vmul.f32 %v5448, 0.01
    %v5705 = vmul.f32 %v5449, 0.01
    %v5706 = vmul.f32 %v5450, 0.01
    %v5707 = vmul.f32 %v5451, 0.01
    %v5708 = vmul.f32 %v5452, 0.01
    %v5709 = vmul.f32 %v5453, 0.01
    %v5710 = vmul.f32 %v5454, 0.01
    %v5711 = vmul.f32 %v5455, 0.01
    %v5712 = vmul.f32 %v5456, 0.01
    %v5713 = vmul.f32 %v5457, 0.01
    %v5714 = vmul.f32 %v5458, 0.01
    %v5715 = vmul.f32 %v5459, 0.01
    %v5716 = vmul.f32 %v5460, 0.01
    %v5717 = vmul.f32 %v5461, 0.01
    %v5718 = vmul.f32 %v5462, 0.01
    %v5719 = vmul.f32 %v5463, 0.01
    %v5720 = vmul.f32 %v5464, 0.01
    %v5721 = vmul.f32 %v5465, 0.01
    %v5722 = vmul.f32 %v5466, 0.01
    %v5723 = vmul.f32 %v5467, 0.01
    %v5724 = vmul.f32 %v5468, 0.01
    %v5725 = vmul.f32 %v5469, 0.01
    %v5726 = vmul.f32 %v5470, 0.01
    %v5727 = vmul.f32 %v5471, 0.01
    %v5728 = vmul.f32 %v5472, 0.01
    %v5729 = vmul.f32 %v5473, 0.01
    %v5730 = vmul.f32 %v5474, 0.01
    %v5731 = vmul.f32 %v5475, 0.01
    %v5732 = vmul.f32 %v5476, 0.01
    %v5733 = vmul.f32 %v5477, 0.01
    %v5734 = vmul.f32 %v5478, 0.01
    %v5735 = vmul.f32 %v5479, 0.01
    %v5736 = vmul.f32 %v5480, 0.01
    %v5737 = vmul.f32 %v5481, 0.01
    %v5738 = vmul.f32 %v5482, 0.01
    %v5739 = vmul.f32 %v5483, 0.01
    %v5740 = vmul.f32 %v5484, 0.01
    %v5741 = vmul.f32 %v5485, 0.01
    %v5742 = vmul.f32 %v5486, 0.01
    %v5743 = vmul.f32 %v5487, 0.01
    %v5744 = vmul.f32 %v5488, 0.01
    %v5745 = vmul.f32 %v5489, 0.01
    %v5746 = vmul.f32 %v5490, 0.01
    %v5747 = vmul.f32 %v5491, 0.01
    %v5748 = vmul.f32 %v5492, 0.01
    %v5749 = vmul.f32 %v5493, 0.01
    %v5750 = vmul.f32 %v5494, 0.01
    %v5751 = vmul.f32 %v5495, 0.01
    %v5752 = vmul.f32 %v5496, 0.01
    %v5753 = vmul.f32 %v5497, 0.01
    %v5754 = vmul.f32 %v5498, 0.01
    %v5755 = vmul.f32 %v5499, 0.01
    %v5756 = vmul.f32 %v5500, 0.01
    %v5757 = vmul.f32 %v5501, 0.01
    %v5758 = vmul.f32 %v5502, 0.01
    %v5759 = vmul.f32 %v5503, 0.01
    %v5760 = vmul.f32 %v5504, 0.01
    %v5761 = vmul.f32 %v5505, 0.01
    %v5762 = vmul.f32 %v5506, 0.01
    %v5763 = vmul.f32 %v5507, 0.01
    %v5764 = vmul.f32 %v5508, 0.01
    %v5765 = vmul.f32 %v5509, 0.01
    %v5766 = vmul.f32 %v5510, 0.01
    %v5767 = vmul.f32 %v5511, 0.01
    %v5768 = vmul.f32 %v5512, 0.01
    %v5769 = vmul.f32 %v5513, 0.01
    %v5770 = vmul.f32 %v5514, 0.01
    %v5771 = vmul.f32 %v5515, 0.01
    %v5772 = vmul.f32 %v5516, 0.01
    %v5773 = vmul.f32 %v5517, 0.01
    %v5774 = vmul.f32 %v5518, 0.01
    %v5775 = vmul.f32 %v5519, 0.01
    %v5776 = vmul.f32 %v5520, 0.01
    %v5777 = vmul.f32 %v5521, 0.01
    %v5778 = vmul.f32 %v5522, 0.01
    %v5779 = vmul.f32 %v5523, 0.01
    %v5780 = vmul.f32 %v5524, 0.01
    %v5781 = vmul.f32 %v5525, 0.01
    %v5782 = vmul.f32 %v5526, 0.01
    %v5783 = vmul.f32 %v5527, 0.01
    %v5784 = vmul.f32 %v5528, 0.01
    %v5785 = vmul.f32 %v5529, 0.01
    %v5786 = vmul.f32 %v5530, 0.01
    %v5787 = vmul.f32 %v5531, 0.01
    %v5788 = vmul.f32 %v5532, 0.01
    %v5789 = vmul.f32 %v5533, 0.01
    %v5790 = vmul.f32 %v5534, 0.01
    %v5791 = vsel %vm5535, %v5407, %v5663
    %v5792 = vsel %vm5536, %v5408, %v5664
    %v5793 = vsel %vm5537, %v5409, %v5665
    %v5794 = vsel %vm5538, %v5410, %v5666
    %v5795 = vsel %vm5539, %v5411, %v5667
    %v5796 = vsel %vm5540, %v5412, %v5668
    %v5797 = vsel %vm5541, %v5413, %v5669
    %v5798 = vsel %vm5542, %v5414, %v5670
    %v5799 = vsel %vm5543, %v5415, %v5671
    %v5800 = vsel %vm5544, %v5416, %v5672
    %v5801 = vsel %vm5545, %v5417, %v5673
    %v5802 = vsel %vm5546, %v5418, %v5674
    %v5803 = vsel %vm5547, %v5419, %v5675
    %v5804 = vsel %vm5548, %v5420, %v5676
    %v5805 = vsel %vm5549, %v5421, %v5677
    %v5806 = vsel %vm5550, %v5422, %v5678
    %v5807 = vsel %vm5551, %v5423, %v5679
    %v5808 = vsel %vm5552, %v5424, %v5680
    %v5809 = vsel %vm5553, %v5425, %v5681
    %v5810 = vsel %vm5554, %v5426, %v5682
    %v5811 = vsel %vm5555, %v5427, %v5683
    %v5812 = vsel %vm5556, %v5428, %v5684
    %v5813 = vsel %vm5557, %v5429, %v5685
    %v5814 = vsel %vm5558, %v5430, %v5686
    %v5815 = vsel %vm5559, %v5431, %v5687
    %v5816 = vsel %vm5560, %v5432, %v5688
    %v5817 = vsel %vm5561, %v5433, %v5689
    %v5818 = vsel %vm5562, %v5434, %v5690
    %v5819 = vsel %vm5563, %v5435, %v5691
    %v5820 = vsel %vm5564, %v5436, %v5692
    %v5821 = vsel %vm5565, %v5437, %v5693
    %v5822 = vsel %vm5566, %v5438, %v5694
    %v5823 = vsel %vm5567, %v5439, %v5695
    %v5824 = vsel %vm5568, %v5440, %v5696
    %v5825 = vsel %vm5569, %v5441, %v5697
    %v5826 = vsel %vm5570, %v5442, %v5698
    %v5827 = vsel %vm5571, %v5443, %v5699
    %v5828 = vsel %vm5572, %v5444, %v5700
    %v5829 = vsel %vm5573, %v5445, %v5701
    %v5830 = vsel %vm5574, %v5446, %v5702
    %v5831 = vsel %vm5575, %v5447, %v5703
    %v5832 = vsel %vm5576, %v5448, %v5704
    %v5833 = vsel %vm5577, %v5449, %v5705
    %v5834 = vsel %vm5578, %v5450, %v5706
    %v5835 = vsel %vm5579, %v5451, %v5707
    %v5836 = vsel %vm5580, %v5452, %v5708
    %v5837 = vsel %vm5581, %v5453, %v5709
    %v5838 = vsel %vm5582, %v5454, %v5710
    %v5839 = vsel %vm5583, %v5455, %v5711
    %v5840 = vsel %vm5584, %v5456, %v5712
    %v5841 = vsel %vm5585, %v5457, %v5713
    %v5842 = vsel %vm5586, %v5458, %v5714
    %v5843 = vsel %vm5587, %v5459, %v5715
    %v5844 = vsel %vm5588, %v5460, %v5716
    %v5845 = vsel %vm5589, %v5461, %v5717
    %v5846 = vsel %vm5590, %v5462, %v5718
    %v5847 = vsel %vm5591, %v5463, %v5719
    %v5848 = vsel %vm5592, %v5464, %v5720
    %v5849 = vsel %vm5593, %v5465, %v5721
    %v5850 = vsel %vm5594, %v5466, %v5722
    %v5851 = vsel %vm5595, %v5467, %v5723
    %v5852 = vsel %vm5596, %v5468, %v5724
    %v5853 = vsel %vm5597, %v5469, %v5725
    %v5854 = vsel %vm5598, %v5470, %v5726
    %v5855 = vsel %vm5599, %v5471, %v5727
    %v5856 = vsel %vm5600, %v5472, %v5728
    %v5857 = vsel %vm5601, %v5473, %v5729
    %v5858 = vsel %vm5602, %v5474, %v5730
    %v5859 = vsel %vm5603, %v5475, %v5731
    %v5860 = vsel %vm5604, %v5476, %v5732
    %v5861 = vsel %vm5605, %v5477, %v5733
    %v5862 = vsel %vm5606, %v5478, %v5734
    %v5863 = vsel %vm5607, %v5479, %v5735
    %v5864 = vsel %vm5608, %v5480, %v5736
    %v5865 = vsel %vm5609, %v5481, %v5737
    %v5866 = vsel %vm5610, %v5482, %v5738
    %v5867 = vsel %vm5611, %v5483, %v5739
    %v5868 = vsel %vm5612, %v5484, %v5740
    %v5869 = vsel %vm5613, %v5485, %v5741
    %v5870 = vsel %vm5614, %v5486, %v5742
    %v5871 = vsel %vm5615, %v5487, %v5743
    %v5872 = vsel %vm5616, %v5488, %v5744
    %v5873 = vsel %vm5617, %v5489, %v5745
    %v5874 = vsel %vm5618, %v5490, %v5746
    %v5875 = vsel %vm5619, %v5491, %v5747
    %v5876 = vsel %vm5620, %v5492, %v5748
    %v5877 = vsel %vm5621, %v5493, %v5749
    %v5878 = vsel %vm5622, %v5494, %v5750
    %v5879 = vsel %vm5623, %v5495, %v5751
    %v5880 = vsel %vm5624, %v5496, %v5752
    %v5881 = vsel %vm5625, %v5497, %v5753
    %v5882 = vsel %vm5626, %v5498, %v5754
    %v5883 = vsel %vm5627, %v5499, %v5755
    %v5884 = vsel %vm5628, %v5500, %v5756
    %v5885 = vsel %vm5629, %v5501, %v5757
    %v5886 = vsel %vm5630, %v5502, %v5758
    %v5887 = vsel %vm5631, %v5503, %v5759
    %v5888 = vsel %vm5632, %v5504, %v5760
    %v5889 = vsel %vm5633, %v5505, %v5761
    %v5890 = vsel %vm5634, %v5506, %v5762
    %v5891 = vsel %vm5635, %v5507, %v5763
    %v5892 = vsel %vm5636, %v5508, %v5764
    %v5893 = vsel %vm5637, %v5509, %v5765
    %v5894 = vsel %vm5638, %v5510, %v5766
    %v5895 = vsel %vm5639, %v5511, %v5767
    %v5896 = vsel %vm5640, %v5512, %v5768
    %v5897 = vsel %vm5641, %v5513, %v5769
    %v5898 = vsel %vm5642, %v5514, %v5770
    %v5899 = vsel %vm5643, %v5515, %v5771
    %v5900 = vsel %vm5644, %v5516, %v5772
    %v5901 = vsel %vm5645, %v5517, %v5773
    %v5902 = vsel %vm5646, %v5518, %v5774
    %v5903 = vsel %vm5647, %v5519, %v5775
    %v5904 = vsel %vm5648, %v5520, %v5776
    %v5905 = vsel %vm5649, %v5521, %v5777
    %v5906 = vsel %vm5650, %v5522, %v5778
    %v5907 = vsel %vm5651, %v5523, %v5779
    %v5908 = vsel %vm5652, %v5524, %v5780
    %v5909 = vsel %vm5653, %v5525, %v5781
    %v5910 = vsel %vm5654, %v5526, %v5782
    %v5911 = vsel %vm5655, %v5527, %v5783
    %v5912 = vsel %vm5656, %v5528, %v5784
    %v5913 = vsel %vm5657, %v5529, %v5785
    %v5914 = vsel %vm5658, %v5530, %v5786
    %v5915 = vsel %vm5659, %v5531, %v5787
    %v5916 = vsel %vm5660, %v5532, %v5788
    %v5917 = vsel %vm5661, %v5533, %v5789
    %v5918 = vsel %vm5662, %v5534, %v5790
    %v5919 = vpack.c.bf16 %v5795, %v5791
    %v5920 = vpack.c.bf16 %v5796, %v5792
    %v5921 = vpack.c.bf16 %v5797, %v5793
    %v5922 = vpack.c.bf16 %v5798, %v5794
    %v5923 = vpack.c.bf16 %v5803, %v5799
    %v5924 = vpack.c.bf16 %v5804, %v5800
    %v5925 = vpack.c.bf16 %v5805, %v5801
    %v5926 = vpack.c.bf16 %v5806, %v5802
    %v5927 = vpack.c.bf16 %v5811, %v5807
    %v5928 = vpack.c.bf16 %v5812, %v5808
    %v5929 = vpack.c.bf16 %v5813, %v5809
    %v5930 = vpack.c.bf16 %v5814, %v5810
    %v5931 = vpack.c.bf16 %v5819, %v5815
    %v5932 = vpack.c.bf16 %v5820, %v5816
    %v5933 = vpack.c.bf16 %v5821, %v5817
    %v5934 = vpack.c.bf16 %v5822, %v5818
    %v5935 = vpack.c.bf16 %v5827, %v5823
    %v5936 = vpack.c.bf16 %v5828, %v5824
    %v5937 = vpack.c.bf16 %v5829, %v5825
    %v5938 = vpack.c.bf16 %v5830, %v5826
    %v5939 = vpack.c.bf16 %v5835, %v5831
    %v5940 = vpack.c.bf16 %v5836, %v5832
    %v5941 = vpack.c.bf16 %v5837, %v5833
    %v5942 = vpack.c.bf16 %v5838, %v5834
    %v5943 = vpack.c.bf16 %v5843, %v5839
    %v5944 = vpack.c.bf16 %v5844, %v5840
    %v5945 = vpack.c.bf16 %v5845, %v5841
    %v5946 = vpack.c.bf16 %v5846, %v5842
    %v5947 = vpack.c.bf16 %v5851, %v5847
    %v5948 = vpack.c.bf16 %v5852, %v5848
    %v5949 = vpack.c.bf16 %v5853, %v5849
    %v5950 = vpack.c.bf16 %v5854, %v5850
    %v5951 = vpack.c.bf16 %v5859, %v5855
    %v5952 = vpack.c.bf16 %v5860, %v5856
    %v5953 = vpack.c.bf16 %v5861, %v5857
    %v5954 = vpack.c.bf16 %v5862, %v5858
    %v5955 = vpack.c.bf16 %v5867, %v5863
    %v5956 = vpack.c.bf16 %v5868, %v5864
    %v5957 = vpack.c.bf16 %v5869, %v5865
    %v5958 = vpack.c.bf16 %v5870, %v5866
    %v5959 = vpack.c.bf16 %v5875, %v5871
    %v5960 = vpack.c.bf16 %v5876, %v5872
    %v5961 = vpack.c.bf16 %v5877, %v5873
    %v5962 = vpack.c.bf16 %v5878, %v5874
    %v5963 = vpack.c.bf16 %v5883, %v5879
    %v5964 = vpack.c.bf16 %v5884, %v5880
    %v5965 = vpack.c.bf16 %v5885, %v5881
    %v5966 = vpack.c.bf16 %v5886, %v5882
    %v5967 = vpack.c.bf16 %v5891, %v5887
    %v5968 = vpack.c.bf16 %v5892, %v5888
    %v5969 = vpack.c.bf16 %v5893, %v5889
    %v5970 = vpack.c.bf16 %v5894, %v5890
    %v5971 = vpack.c.bf16 %v5899, %v5895
    %v5972 = vpack.c.bf16 %v5900, %v5896
    %v5973 = vpack.c.bf16 %v5901, %v5897
    %v5974 = vpack.c.bf16 %v5902, %v5898
    %v5975 = vpack.c.bf16 %v5907, %v5903
    %v5976 = vpack.c.bf16 %v5908, %v5904
    %v5977 = vpack.c.bf16 %v5909, %v5905
    %v5978 = vpack.c.bf16 %v5910, %v5906
    %v5979 = vpack.c.bf16 %v5915, %v5911
    %v5980 = vpack.c.bf16 %v5916, %v5912
    %v5981 = vpack.c.bf16 %v5917, %v5913
    %v5982 = vpack.c.bf16 %v5918, %v5914
    %5983 = vmatprep.subr.bf16.mxu0 %v5948
    %5984 = vmatpush1.bf16.msra.mxu0 %v5947
    %5985 = vmatprep.subr.bf16.mxu0 %v5944
    %5986 = vmatpush1.bf16.msra.mxu0 %v5943
    %5987 = vmatprep.subr.bf16.mxu0 %v5940
    %5988 = vmatpush1.bf16.msra.mxu0 %v5939
    %5989 = vmatprep.subr.bf16.mxu0 %v5936
    %5990 = vmatpush1.bf16.msra.mxu0 %v5935
    %5991 = vmatprep.subr.bf16.mxu0 %v5932
    %5992 = vmatpush1.bf16.msra.mxu0 %v5931
    %5993 = vmatprep.subr.bf16.mxu0 %v5928
    %5994 = vmatpush1.bf16.msra.mxu0 %v5927
    %5995 = vmatprep.subr.bf16.mxu0 %v5924
    %5996 = vmatpush1.bf16.msra.mxu0 %v5923
    %5997 = vmatprep.subr.bf16.mxu0 %v5920
    %5998 = vmatpush1.bf16.msra.mxu0 %v5919
    %5999 = vmatprep.subr.bf16.mxu0 %v5980
    %6000 = vmatpush2.bf16.msra.mxu0 %v5979
    %6001 = vmatprep.subr.bf16.mxu0 %v5976
    %6002 = vmatpush2.bf16.msra.mxu0 %v5975
    %6003 = vmatprep.subr.bf16.mxu0 %v5972
    %6004 = vmatpush2.bf16.msra.mxu0 %v5971
    %6005 = vmatprep.subr.bf16.mxu0 %v5968
    %6006 = vmatpush2.bf16.msra.mxu0 %v5967
    %6007 = vmatprep.subr.bf16.mxu0 %v5964
    %6008 = vmatpush2.bf16.msra.mxu0 %v5963
    %6009 = vmatprep.subr.bf16.mxu0 %v5960
    %6010 = vmatpush2.bf16.msra.mxu0 %v5959
    %6011 = vmatprep.subr.bf16.mxu0 %v5956
    %6012 = vmatpush2.bf16.msra.mxu0 %v5955
    %6013 = vmatprep.subr.bf16.mxu0 %v5952
    %6014 = vmatpush2.bf16.msra.mxu0 %v5951
    %6015 = vmatprep.mubr.bf16.mxu0 %v1633
    %6016 = vmatmul.mubr.bf16.gmra.mxu0 %v1632
    %v6017 = vpop.f32.mrf.mxu0
    %v6018 = vadd.f32 %v1379, %v6017
    %v6019 = vpop.f32.mrf.mxu0
    %v6020 = vadd.f32 %v1379, %v6019
    %v6021 = vpop.f32.mrf.mxu0
    %v6022 = vadd.f32 %v1384, %v6021
    %v6023 = vpop.f32.mrf.mxu0
    %v6024 = vadd.f32 %v1384, %v6023
    %6025 = vmatprep.mubr.bf16.mxu0 %v1635
    %6026 = vmatmul.mubr.bf16.gmra.mxu0 %v1634
    %v6027 = vpop.f32.mrf.mxu0
    %v6028 = vadd.f32 %v1389, %v6027
    %v6029 = vpop.f32.mrf.mxu0
    %v6030 = vadd.f32 %v1389, %v6029
    %v6031 = vpop.f32.mrf.mxu0
    %v6032 = vadd.f32 %v1394, %v6031
    %v6033 = vpop.f32.mrf.mxu0
    %v6034 = vadd.f32 %v1394, %v6033
    %6035 = vmatprep.mubr.bf16.mxu0 %v1637
    %6036 = vmatmul.mubr.bf16.gmra.mxu0 %v1636
    %v6037 = vpop.f32.mrf.mxu0
    %v6038 = vadd.f32 %v1399, %v6037
    %v6039 = vpop.f32.mrf.mxu0
    %v6040 = vadd.f32 %v1399, %v6039
    %v6041 = vpop.f32.mrf.mxu0
    %v6042 = vadd.f32 %v1404, %v6041
    %v6043 = vpop.f32.mrf.mxu0
    %v6044 = vadd.f32 %v1404, %v6043
    %6045 = vmatprep.mubr.bf16.mxu0 %v1639
    %6046 = vmatmul.mubr.bf16.gmra.mxu0 %v1638
    %v6047 = vpop.f32.mrf.mxu0
    %v6048 = vadd.f32 %v1409, %v6047
    %v6049 = vpop.f32.mrf.mxu0
    %v6050 = vadd.f32 %v1409, %v6049
    %v6051 = vpop.f32.mrf.mxu0
    %v6052 = vadd.f32 %v1414, %v6051
    %v6053 = vpop.f32.mrf.mxu0
    %v6054 = vadd.f32 %v1414, %v6053
    %6055 = vmatprep.mubr.bf16.mxu0 %v1641
    %6056 = vmatmul.mubr.bf16.gmra.mxu0 %v1640
    %v6057 = vpop.f32.mrf.mxu0
    %v6058 = vadd.f32 %v1419, %v6057
    %v6059 = vpop.f32.mrf.mxu0
    %v6060 = vadd.f32 %v1419, %v6059
    %v6061 = vpop.f32.mrf.mxu0
    %v6062 = vadd.f32 %v1424, %v6061
    %v6063 = vpop.f32.mrf.mxu0
    %v6064 = vadd.f32 %v1424, %v6063
    %6065 = vmatprep.mubr.bf16.mxu0 %v1643
    %6066 = vmatmul.mubr.bf16.gmra.mxu0 %v1642
    %v6067 = vpop.f32.mrf.mxu0
    %v6068 = vadd.f32 %v1429, %v6067
    %v6069 = vpop.f32.mrf.mxu0
    %v6070 = vadd.f32 %v1429, %v6069
    %v6071 = vpop.f32.mrf.mxu0
    %v6072 = vadd.f32 %v1434, %v6071
    %v6073 = vpop.f32.mrf.mxu0
    %v6074 = vadd.f32 %v1434, %v6073
    %6075 = vmatprep.mubr.bf16.mxu0 %v1645
    %6076 = vmatmul.mubr.bf16.gmra.mxu0 %v1644
    %v6077 = vpop.f32.mrf.mxu0
    %v6078 = vadd.f32 %v1439, %v6077
    %v6079 = vpop.f32.mrf.mxu0
    %v6080 = vadd.f32 %v1439, %v6079
    %v6081 = vpop.f32.mrf.mxu0
    %v6082 = vadd.f32 %v1444, %v6081
    %v6083 = vpop.f32.mrf.mxu0
    %v6084 = vadd.f32 %v1444, %v6083
    %6085 = vmatprep.mubr.bf16.mxu0 %v1647
    %6086 = vmatmul.mubr.bf16.gmra.mxu0 %v1646
    %v6087 = vpop.f32.mrf.mxu0
    %v6088 = vadd.f32 %v1449, %v6087
    %v6089 = vpop.f32.mrf.mxu0
    %v6090 = vadd.f32 %v1449, %v6089
    %v6091 = vpop.f32.mrf.mxu0
    %v6092 = vadd.f32 %v1454, %v6091
    %v6093 = vpop.f32.mrf.mxu0
    %v6094 = vadd.f32 %v1454, %v6093
    %6095 = vmatprep.mubr.bf16.mxu0 %v1649
    %6096 = vmatmul.mubr.bf16.gmra.mxu0 %v1648
    %v6097 = vpop.f32.mrf.mxu0
    %v6098 = vadd.f32 %v1459, %v6097
    %v6099 = vpop.f32.mrf.mxu0
    %v6100 = vadd.f32 %v1459, %v6099
    %v6101 = vpop.f32.mrf.mxu0
    %v6102 = vadd.f32 %v1464, %v6101
    %v6103 = vpop.f32.mrf.mxu0
    %v6104 = vadd.f32 %v1464, %v6103
    %6105 = vmatprep.mubr.bf16.mxu0 %v1651
    %6106 = vmatmul.mubr.bf16.gmra.mxu0 %v1650
    %v6107 = vpop.f32.mrf.mxu0
    %v6108 = vadd.f32 %v1469, %v6107
    %v6109 = vpop.f32.mrf.mxu0
    %v6110 = vadd.f32 %v1469, %v6109
    %v6111 = vpop.f32.mrf.mxu0
    %v6112 = vadd.f32 %v1474, %v6111
    %v6113 = vpop.f32.mrf.mxu0
    %v6114 = vadd.f32 %v1474, %v6113
    %6115 = vmatprep.mubr.bf16.mxu0 %v1653
    %6116 = vmatmul.mubr.bf16.gmra.mxu0 %v1652
    %v6117 = vpop.f32.mrf.mxu0
    %v6118 = vadd.f32 %v1479, %v6117
    %v6119 = vpop.f32.mrf.mxu0
    %v6120 = vadd.f32 %v1479, %v6119
    %v6121 = vpop.f32.mrf.mxu0
    %v6122 = vadd.f32 %v1484, %v6121
    %v6123 = vpop.f32.mrf.mxu0
    %v6124 = vadd.f32 %v1484, %v6123
    %6125 = vmatprep.mubr.bf16.mxu0 %v1655
    %6126 = vmatmul.mubr.bf16.gmra.mxu0 %v1654
    %v6127 = vpop.f32.mrf.mxu0
    %v6128 = vadd.f32 %v1489, %v6127
    %v6129 = vpop.f32.mrf.mxu0
    %v6130 = vadd.f32 %v1489, %v6129
    %v6131 = vpop.f32.mrf.mxu0
    %v6132 = vadd.f32 %v1494, %v6131
    %v6133 = vpop.f32.mrf.mxu0
    %v6134 = vadd.f32 %v1494, %v6133
    %6135 = vmatprep.mubr.bf16.mxu0 %v1657
    %6136 = vmatmul.mubr.bf16.gmra.mxu0 %v1656
    %v6137 = vpop.f32.mrf.mxu0
    %v6138 = vadd.f32 %v1499, %v6137
    %v6139 = vpop.f32.mrf.mxu0
    %v6140 = vadd.f32 %v1499, %v6139
    %v6141 = vpop.f32.mrf.mxu0
    %v6142 = vadd.f32 %v1504, %v6141
    %v6143 = vpop.f32.mrf.mxu0
    %v6144 = vadd.f32 %v1504, %v6143
    %6145 = vmatprep.mubr.bf16.mxu0 %v1659
    %6146 = vmatmul.mubr.bf16.gmra.mxu0 %v1658
    %v6147 = vpop.f32.mrf.mxu0
    %v6148 = vadd.f32 %v1509, %v6147
    %v6149 = vpop.f32.mrf.mxu0
    %v6150 = vadd.f32 %v1509, %v6149
    %v6151 = vpop.f32.mrf.mxu0
    %v6152 = vadd.f32 %v1514, %v6151
    %v6153 = vpop.f32.mrf.mxu0
    %v6154 = vadd.f32 %v1514, %v6153
    %6155 = vmatprep.mubr.bf16.mxu0 %v1661
    %6156 = vmatmul.mubr.bf16.gmra.mxu0 %v1660
    %v6157 = vpop.f32.mrf.mxu0
    %v6158 = vadd.f32 %v1519, %v6157
    %v6159 = vpop.f32.mrf.mxu0
    %v6160 = vadd.f32 %v1519, %v6159
    %v6161 = vpop.f32.mrf.mxu0
    %v6162 = vadd.f32 %v1524, %v6161
    %v6163 = vpop.f32.mrf.mxu0
    %v6164 = vadd.f32 %v1524, %v6163
    %6165 = vmatprep.mubr.bf16.mxu0 %v1663
    %6166 = vmatmul.mubr.bf16.gmra.mxu0 %v1662
    %v6167 = vpop.f32.mrf.mxu0
    %v6168 = vadd.f32 %v1529, %v6167
    %v6169 = vpop.f32.mrf.mxu0
    %v6170 = vadd.f32 %v1529, %v6169
    %v6171 = vpop.f32.mrf.mxu0
    %v6172 = vadd.f32 %v1534, %v6171
    %v6173 = vpop.f32.mrf.mxu0
    %v6174 = vadd.f32 %v1534, %v6173
    %6175 = vdwg.mxu0
    %6176 = vmatprep.subr.bf16.mxu0 %v5950
    %6177 = vmatpush1.bf16.msra.mxu0 %v5949
    %6178 = vmatprep.subr.bf16.mxu0 %v5946
    %6179 = vmatpush1.bf16.msra.mxu0 %v5945
    %6180 = vmatprep.subr.bf16.mxu0 %v5942
    %6181 = vmatpush1.bf16.msra.mxu0 %v5941
    %6182 = vmatprep.subr.bf16.mxu0 %v5938
    %6183 = vmatpush1.bf16.msra.mxu0 %v5937
    %6184 = vmatprep.subr.bf16.mxu0 %v5934
    %6185 = vmatpush1.bf16.msra.mxu0 %v5933
    %6186 = vmatprep.subr.bf16.mxu0 %v5930
    %6187 = vmatpush1.bf16.msra.mxu0 %v5929
    %6188 = vmatprep.subr.bf16.mxu0 %v5926
    %6189 = vmatpush1.bf16.msra.mxu0 %v5925
    %6190 = vmatprep.subr.bf16.mxu0 %v5922
    %6191 = vmatpush1.bf16.msra.mxu0 %v5921
    %6192 = vmatprep.subr.bf16.mxu0 %v5982
    %6193 = vmatpush2.bf16.msra.mxu0 %v5981
    %6194 = vmatprep.subr.bf16.mxu0 %v5978
    %6195 = vmatpush2.bf16.msra.mxu0 %v5977
    %6196 = vmatprep.subr.bf16.mxu0 %v5974
    %6197 = vmatpush2.bf16.msra.mxu0 %v5973
    %6198 = vmatprep.subr.bf16.mxu0 %v5970
    %6199 = vmatpush2.bf16.msra.mxu0 %v5969
    %6200 = vmatprep.subr.bf16.mxu0 %v5966
    %6201 = vmatpush2.bf16.msra.mxu0 %v5965
    %6202 = vmatprep.subr.bf16.mxu0 %v5962
    %6203 = vmatpush2.bf16.msra.mxu0 %v5961
    %6204 = vmatprep.subr.bf16.mxu0 %v5958
    %6205 = vmatpush2.bf16.msra.mxu0 %v5957
    %6206 = vmatprep.subr.bf16.mxu0 %v5954
    %6207 = vmatpush2.bf16.msra.mxu0 %v5953
    %6208 = vmatprep.mubr.bf16.mxu0 %v1633
    %6209 = vmatmul.mubr.bf16.gmra.mxu0 %v1632
    %v6210 = vpop.f32.mrf.mxu0
    %v6211 = vadd.f32 %v1379, %v6210
    %v6212 = vpop.f32.mrf.mxu0
    %v6213 = vadd.f32 %v1379, %v6212
    %v6214 = vpop.f32.mrf.mxu0
    %v6215 = vadd.f32 %v1384, %v6214
    %v6216 = vpop.f32.mrf.mxu0
    %v6217 = vadd.f32 %v1384, %v6216
    %6218 = vmatprep.mubr.bf16.mxu0 %v1635
    %6219 = vmatmul.mubr.bf16.gmra.mxu0 %v1634
    %v6220 = vpop.f32.mrf.mxu0
    %v6221 = vadd.f32 %v1389, %v6220
    %v6222 = vpop.f32.mrf.mxu0
    %v6223 = vadd.f32 %v1389, %v6222
    %v6224 = vpop.f32.mrf.mxu0
    %v6225 = vadd.f32 %v1394, %v6224
    %v6226 = vpop.f32.mrf.mxu0
    %v6227 = vadd.f32 %v1394, %v6226
    %6228 = vmatprep.mubr.bf16.mxu0 %v1637
    %6229 = vmatmul.mubr.bf16.gmra.mxu0 %v1636
    %v6230 = vpop.f32.mrf.mxu0
    %v6231 = vadd.f32 %v1399, %v6230
    %v6232 = vpop.f32.mrf.mxu0
    %v6233 = vadd.f32 %v1399, %v6232
    %v6234 = vpop.f32.mrf.mxu0
    %v6235 = vadd.f32 %v1404, %v6234
    %v6236 = vpop.f32.mrf.mxu0
    %v6237 = vadd.f32 %v1404, %v6236
    %6238 = vmatprep.mubr.bf16.mxu0 %v1639
    %6239 = vmatmul.mubr.bf16.gmra.mxu0 %v1638
    %v6240 = vpop.f32.mrf.mxu0
    %v6241 = vadd.f32 %v1409, %v6240
    %v6242 = vpop.f32.mrf.mxu0
    %v6243 = vadd.f32 %v1409, %v6242
    %v6244 = vpop.f32.mrf.mxu0
    %v6245 = vadd.f32 %v1414, %v6244
    %v6246 = vpop.f32.mrf.mxu0
    %v6247 = vadd.f32 %v1414, %v6246
    %6248 = vmatprep.mubr.bf16.mxu0 %v1641
    %6249 = vmatmul.mubr.bf16.gmra.mxu0 %v1640
    %v6250 = vpop.f32.mrf.mxu0
    %v6251 = vadd.f32 %v1419, %v6250
    %v6252 = vpop.f32.mrf.mxu0
    %v6253 = vadd.f32 %v1419, %v6252
    %v6254 = vpop.f32.mrf.mxu0
    %v6255 = vadd.f32 %v1424, %v6254
    %v6256 = vpop.f32.mrf.mxu0
    %v6257 = vadd.f32 %v1424, %v6256
    %6258 = vmatprep.mubr.bf16.mxu0 %v1643
    %6259 = vmatmul.mubr.bf16.gmra.mxu0 %v1642
    %v6260 = vpop.f32.mrf.mxu0
    %v6261 = vadd.f32 %v1429, %v6260
    %v6262 = vpop.f32.mrf.mxu0
    %v6263 = vadd.f32 %v1429, %v6262
    %v6264 = vpop.f32.mrf.mxu0
    %v6265 = vadd.f32 %v1434, %v6264
    %v6266 = vpop.f32.mrf.mxu0
    %v6267 = vadd.f32 %v1434, %v6266
    %6268 = vmatprep.mubr.bf16.mxu0 %v1645
    %6269 = vmatmul.mubr.bf16.gmra.mxu0 %v1644
    %v6270 = vpop.f32.mrf.mxu0
    %v6271 = vadd.f32 %v1439, %v6270
    %v6272 = vpop.f32.mrf.mxu0
    %v6273 = vadd.f32 %v1439, %v6272
    %v6274 = vpop.f32.mrf.mxu0
    %v6275 = vadd.f32 %v1444, %v6274
    %v6276 = vpop.f32.mrf.mxu0
    %v6277 = vadd.f32 %v1444, %v6276
    %6278 = vmatprep.mubr.bf16.mxu0 %v1647
    %6279 = vmatmul.mubr.bf16.gmra.mxu0 %v1646
    %v6280 = vpop.f32.mrf.mxu0
    %v6281 = vadd.f32 %v1449, %v6280
    %v6282 = vpop.f32.mrf.mxu0
    %v6283 = vadd.f32 %v1449, %v6282
    %v6284 = vpop.f32.mrf.mxu0
    %v6285 = vadd.f32 %v1454, %v6284
    %v6286 = vpop.f32.mrf.mxu0
    %v6287 = vadd.f32 %v1454, %v6286
    %6288 = vmatprep.mubr.bf16.mxu0 %v1649
    %6289 = vmatmul.mubr.bf16.gmra.mxu0 %v1648
    %v6290 = vpop.f32.mrf.mxu0
    %v6291 = vadd.f32 %v1459, %v6290
    %v6292 = vpop.f32.mrf.mxu0
    %v6293 = vadd.f32 %v1459, %v6292
    %v6294 = vpop.f32.mrf.mxu0
    %v6295 = vadd.f32 %v1464, %v6294
    %v6296 = vpop.f32.mrf.mxu0
    %v6297 = vadd.f32 %v1464, %v6296
    %6298 = vmatprep.mubr.bf16.mxu0 %v1651
    %6299 = vmatmul.mubr.bf16.gmra.mxu0 %v1650
    %v6300 = vpop.f32.mrf.mxu0
    %v6301 = vadd.f32 %v1469, %v6300
    %v6302 = vpop.f32.mrf.mxu0
    %v6303 = vadd.f32 %v1469, %v6302
    %v6304 = vpop.f32.mrf.mxu0
    %v6305 = vadd.f32 %v1474, %v6304
    %v6306 = vpop.f32.mrf.mxu0
    %v6307 = vadd.f32 %v1474, %v6306
    %6308 = vmatprep.mubr.bf16.mxu0 %v1653
    %6309 = vmatmul.mubr.bf16.gmra.mxu0 %v1652
    %v6310 = vpop.f32.mrf.mxu0
    %v6311 = vadd.f32 %v1479, %v6310
    %v6312 = vpop.f32.mrf.mxu0
    %v6313 = vadd.f32 %v1479, %v6312
    %v6314 = vpop.f32.mrf.mxu0
    %v6315 = vadd.f32 %v1484, %v6314
    %v6316 = vpop.f32.mrf.mxu0
    %v6317 = vadd.f32 %v1484, %v6316
    %6318 = vmatprep.mubr.bf16.mxu0 %v1655
    %6319 = vmatmul.mubr.bf16.gmra.mxu0 %v1654
    %v6320 = vpop.f32.mrf.mxu0
    %v6321 = vadd.f32 %v1489, %v6320
    %v6322 = vpop.f32.mrf.mxu0
    %v6323 = vadd.f32 %v1489, %v6322
    %v6324 = vpop.f32.mrf.mxu0
    %v6325 = vadd.f32 %v1494, %v6324
    %v6326 = vpop.f32.mrf.mxu0
    %v6327 = vadd.f32 %v1494, %v6326
    %6328 = vmatprep.mubr.bf16.mxu0 %v1657
    %6329 = vmatmul.mubr.bf16.gmra.mxu0 %v1656
    %v6330 = vpop.f32.mrf.mxu0
    %v6331 = vadd.f32 %v1499, %v6330
    %v6332 = vpop.f32.mrf.mxu0
    %v6333 = vadd.f32 %v1499, %v6332
    %v6334 = vpop.f32.mrf.mxu0
    %v6335 = vadd.f32 %v1504, %v6334
    %v6336 = vpop.f32.mrf.mxu0
    %v6337 = vadd.f32 %v1504, %v6336
    %6338 = vmatprep.mubr.bf16.mxu0 %v1659
    %6339 = vmatmul.mubr.bf16.gmra.mxu0 %v1658
    %v6340 = vpop.f32.mrf.mxu0
    %v6341 = vadd.f32 %v1509, %v6340
    %v6342 = vpop.f32.mrf.mxu0
    %v6343 = vadd.f32 %v1509, %v6342
    %v6344 = vpop.f32.mrf.mxu0
    %v6345 = vadd.f32 %v1514, %v6344
    %v6346 = vpop.f32.mrf.mxu0
    %v6347 = vadd.f32 %v1514, %v6346
    %6348 = vmatprep.mubr.bf16.mxu0 %v1661
    %6349 = vmatmul.mubr.bf16.gmra.mxu0 %v1660
    %v6350 = vpop.f32.mrf.mxu0
    %v6351 = vadd.f32 %v1519, %v6350
    %v6352 = vpop.f32.mrf.mxu0
    %v6353 = vadd.f32 %v1519, %v6352
    %v6354 = vpop.f32.mrf.mxu0
    %v6355 = vadd.f32 %v1524, %v6354
    %v6356 = vpop.f32.mrf.mxu0
    %v6357 = vadd.f32 %v1524, %v6356
    %6358 = vmatprep.mubr.bf16.mxu0 %v1663
    %6359 = vmatmul.mubr.bf16.gmra.mxu0 %v1662
    %v6360 = vpop.f32.mrf.mxu0
    %v6361 = vadd.f32 %v1529, %v6360
    %v6362 = vpop.f32.mrf.mxu0
    %v6363 = vadd.f32 %v1529, %v6362
    %v6364 = vpop.f32.mrf.mxu0
    %v6365 = vadd.f32 %v1534, %v6364
    %v6366 = vpop.f32.mrf.mxu0
    %v6367 = vadd.f32 %v1534, %v6366
    %6368 = vdwg.mxu0
    %vm6369 = vcmp.gt.f32.partialorder %v6018, 0.0
    %vm6370 = vcmp.gt.f32.partialorder %v6020, 0.0
    %vm6371 = vcmp.gt.f32.partialorder %v6211, 0.0
    %vm6372 = vcmp.gt.f32.partialorder %v6213, 0.0
    %vm6373 = vcmp.gt.f32.partialorder %v6022, 0.0
    %vm6374 = vcmp.gt.f32.partialorder %v6024, 0.0
    %vm6375 = vcmp.gt.f32.partialorder %v6215, 0.0
    %vm6376 = vcmp.gt.f32.partialorder %v6217, 0.0
    %vm6377 = vcmp.gt.f32.partialorder %v6028, 0.0
    %vm6378 = vcmp.gt.f32.partialorder %v6030, 0.0
    %vm6379 = vcmp.gt.f32.partialorder %v6221, 0.0
    %vm6380 = vcmp.gt.f32.partialorder %v6223, 0.0
    %vm6381 = vcmp.gt.f32.partialorder %v6032, 0.0
    %vm6382 = vcmp.gt.f32.partialorder %v6034, 0.0
    %vm6383 = vcmp.gt.f32.partialorder %v6225, 0.0
    %vm6384 = vcmp.gt.f32.partialorder %v6227, 0.0
    %vm6385 = vcmp.gt.f32.partialorder %v6038, 0.0
    %vm6386 = vcmp.gt.f32.partialorder %v6040, 0.0
    %vm6387 = vcmp.gt.f32.partialorder %v6231, 0.0
    %vm6388 = vcmp.gt.f32.partialorder %v6233, 0.0
    %vm6389 = vcmp.gt.f32.partialorder %v6042, 0.0
    %vm6390 = vcmp.gt.f32.partialorder %v6044, 0.0
    %vm6391 = vcmp.gt.f32.partialorder %v6235, 0.0
    %vm6392 = vcmp.gt.f32.partialorder %v6237, 0.0
    %vm6393 = vcmp.gt.f32.partialorder %v6048, 0.0
    %vm6394 = vcmp.gt.f32.partialorder %v6050, 0.0
    %vm6395 = vcmp.gt.f32.partialorder %v6241, 0.0
    %vm6396 = vcmp.gt.f32.partialorder %v6243, 0.0
    %vm6397 = vcmp.gt.f32.partialorder %v6052, 0.0
    %vm6398 = vcmp.gt.f32.partialorder %v6054, 0.0
    %vm6399 = vcmp.gt.f32.partialorder %v6245, 0.0
    %vm6400 = vcmp.gt.f32.partialorder %v6247, 0.0
    %vm6401 = vcmp.gt.f32.partialorder %v6058, 0.0
    %vm6402 = vcmp.gt.f32.partialorder %v6060, 0.0
    %vm6403 = vcmp.gt.f32.partialorder %v6251, 0.0
    %vm6404 = vcmp.gt.f32.partialorder %v6253, 0.0
    %vm6405 = vcmp.gt.f32.partialorder %v6062, 0.0
    %vm6406 = vcmp.gt.f32.partialorder %v6064, 0.0
    %vm6407 = vcmp.gt.f32.partialorder %v6255, 0.0
    %vm6408 = vcmp.gt.f32.partialorder %v6257, 0.0
    %vm6409 = vcmp.gt.f32.partialorder %v6068, 0.0
    %vm6410 = vcmp.gt.f32.partialorder %v6070, 0.0
    %vm6411 = vcmp.gt.f32.partialorder %v6261, 0.0
    %vm6412 = vcmp.gt.f32.partialorder %v6263, 0.0
    %vm6413 = vcmp.gt.f32.partialorder %v6072, 0.0
    %vm6414 = vcmp.gt.f32.partialorder %v6074, 0.0
    %vm6415 = vcmp.gt.f32.partialorder %v6265, 0.0
    %vm6416 = vcmp.gt.f32.partialorder %v6267, 0.0
    %vm6417 = vcmp.gt.f32.partialorder %v6078, 0.0
    %vm6418 = vcmp.gt.f32.partialorder %v6080, 0.0
    %vm6419 = vcmp.gt.f32.partialorder %v6271, 0.0
    %vm6420 = vcmp.gt.f32.partialorder %v6273, 0.0
    %vm6421 = vcmp.gt.f32.partialorder %v6082, 0.0
    %vm6422 = vcmp.gt.f32.partialorder %v6084, 0.0
    %vm6423 = vcmp.gt.f32.partialorder %v6275, 0.0
    %vm6424 = vcmp.gt.f32.partialorder %v6277, 0.0
    %vm6425 = vcmp.gt.f32.partialorder %v6088, 0.0
    %vm6426 = vcmp.gt.f32.partialorder %v6090, 0.0
    %vm6427 = vcmp.gt.f32.partialorder %v6281, 0.0
    %vm6428 = vcmp.gt.f32.partialorder %v6283, 0.0
    %vm6429 = vcmp.gt.f32.partialorder %v6092, 0.0
    %vm6430 = vcmp.gt.f32.partialorder %v6094, 0.0
    %vm6431 = vcmp.gt.f32.partialorder %v6285, 0.0
    %vm6432 = vcmp.gt.f32.partialorder %v6287, 0.0
    %vm6433 = vcmp.gt.f32.partialorder %v6098, 0.0
    %vm6434 = vcmp.gt.f32.partialorder %v6100, 0.0
    %vm6435 = vcmp.gt.f32.partialorder %v6291, 0.0
    %vm6436 = vcmp.gt.f32.partialorder %v6293, 0.0
    %vm6437 = vcmp.gt.f32.partialorder %v6102, 0.0
    %vm6438 = vcmp.gt.f32.partialorder %v6104, 0.0
    %vm6439 = vcmp.gt.f32.partialorder %v6295, 0.0
    %vm6440 = vcmp.gt.f32.partialorder %v6297, 0.0
    %vm6441 = vcmp.gt.f32.partialorder %v6108, 0.0
    %vm6442 = vcmp.gt.f32.partialorder %v6110, 0.0
    %vm6443 = vcmp.gt.f32.partialorder %v6301, 0.0
    %vm6444 = vcmp.gt.f32.partialorder %v6303, 0.0
    %vm6445 = vcmp.gt.f32.partialorder %v6112, 0.0
    %vm6446 = vcmp.gt.f32.partialorder %v6114, 0.0
    %vm6447 = vcmp.gt.f32.partialorder %v6305, 0.0
    %vm6448 = vcmp.gt.f32.partialorder %v6307, 0.0
    %vm6449 = vcmp.gt.f32.partialorder %v6118, 0.0
    %vm6450 = vcmp.gt.f32.partialorder %v6120, 0.0
    %vm6451 = vcmp.gt.f32.partialorder %v6311, 0.0
    %vm6452 = vcmp.gt.f32.partialorder %v6313, 0.0
    %vm6453 = vcmp.gt.f32.partialorder %v6122, 0.0
    %vm6454 = vcmp.gt.f32.partialorder %v6124, 0.0
    %vm6455 = vcmp.gt.f32.partialorder %v6315, 0.0
    %vm6456 = vcmp.gt.f32.partialorder %v6317, 0.0
    %vm6457 = vcmp.gt.f32.partialorder %v6128, 0.0
    %vm6458 = vcmp.gt.f32.partialorder %v6130, 0.0
    %vm6459 = vcmp.gt.f32.partialorder %v6321, 0.0
    %vm6460 = vcmp.gt.f32.partialorder %v6323, 0.0
    %vm6461 = vcmp.gt.f32.partialorder %v6132, 0.0
    %vm6462 = vcmp.gt.f32.partialorder %v6134, 0.0
    %vm6463 = vcmp.gt.f32.partialorder %v6325, 0.0
    %vm6464 = vcmp.gt.f32.partialorder %v6327, 0.0
    %vm6465 = vcmp.gt.f32.partialorder %v6138, 0.0
    %vm6466 = vcmp.gt.f32.partialorder %v6140, 0.0
    %vm6467 = vcmp.gt.f32.partialorder %v6331, 0.0
    %vm6468 = vcmp.gt.f32.partialorder %v6333, 0.0
    %vm6469 = vcmp.gt.f32.partialorder %v6142, 0.0
    %vm6470 = vcmp.gt.f32.partialorder %v6144, 0.0
    %vm6471 = vcmp.gt.f32.partialorder %v6335, 0.0
    %vm6472 = vcmp.gt.f32.partialorder %v6337, 0.0
    %vm6473 = vcmp.gt.f32.partialorder %v6148, 0.0
    %vm6474 = vcmp.gt.f32.partialorder %v6150, 0.0
    %vm6475 = vcmp.gt.f32.partialorder %v6341, 0.0
    %vm6476 = vcmp.gt.f32.partialorder %v6343, 0.0
    %vm6477 = vcmp.gt.f32.partialorder %v6152, 0.0
    %vm6478 = vcmp.gt.f32.partialorder %v6154, 0.0
    %vm6479 = vcmp.gt.f32.partialorder %v6345, 0.0
    %vm6480 = vcmp.gt.f32.partialorder %v6347, 0.0
    %vm6481 = vcmp.gt.f32.partialorder %v6158, 0.0
    %vm6482 = vcmp.gt.f32.partialorder %v6160, 0.0
    %vm6483 = vcmp.gt.f32.partialorder %v6351, 0.0
    %vm6484 = vcmp.gt.f32.partialorder %v6353, 0.0
    %vm6485 = vcmp.gt.f32.partialorder %v6162, 0.0
    %vm6486 = vcmp.gt.f32.partialorder %v6164, 0.0
    %vm6487 = vcmp.gt.f32.partialorder %v6355, 0.0
    %vm6488 = vcmp.gt.f32.partialorder %v6357, 0.0
    %vm6489 = vcmp.gt.f32.partialorder %v6168, 0.0
    %vm6490 = vcmp.gt.f32.partialorder %v6170, 0.0
    %vm6491 = vcmp.gt.f32.partialorder %v6361, 0.0
    %vm6492 = vcmp.gt.f32.partialorder %v6363, 0.0
    %vm6493 = vcmp.gt.f32.partialorder %v6172, 0.0
    %vm6494 = vcmp.gt.f32.partialorder %v6174, 0.0
    %vm6495 = vcmp.gt.f32.partialorder %v6365, 0.0
    %vm6496 = vcmp.gt.f32.partialorder %v6367, 0.0
    %v6497 = vmul.f32 %v6018, 0.01
    %v6498 = vmul.f32 %v6020, 0.01
    %v6499 = vmul.f32 %v6211, 0.01
    %v6500 = vmul.f32 %v6213, 0.01
    %v6501 = vmul.f32 %v6022, 0.01
    %v6502 = vmul.f32 %v6024, 0.01
    %v6503 = vmul.f32 %v6215, 0.01
    %v6504 = vmul.f32 %v6217, 0.01
    %v6505 = vmul.f32 %v6028, 0.01
    %v6506 = vmul.f32 %v6030, 0.01
    %v6507 = vmul.f32 %v6221, 0.01
    %v6508 = vmul.f32 %v6223, 0.01
    %v6509 = vmul.f32 %v6032, 0.01
    %v6510 = vmul.f32 %v6034, 0.01
    %v6511 = vmul.f32 %v6225, 0.01
    %v6512 = vmul.f32 %v6227, 0.01
    %v6513 = vmul.f32 %v6038, 0.01
    %v6514 = vmul.f32 %v6040, 0.01
    %v6515 = vmul.f32 %v6231, 0.01
    %v6516 = vmul.f32 %v6233, 0.01
    %v6517 = vmul.f32 %v6042, 0.01
    %v6518 = vmul.f32 %v6044, 0.01
    %v6519 = vmul.f32 %v6235, 0.01
    %v6520 = vmul.f32 %v6237, 0.01
    %v6521 = vmul.f32 %v6048, 0.01
    %v6522 = vmul.f32 %v6050, 0.01
    %v6523 = vmul.f32 %v6241, 0.01
    %v6524 = vmul.f32 %v6243, 0.01
    %v6525 = vmul.f32 %v6052, 0.01
    %v6526 = vmul.f32 %v6054, 0.01
    %v6527 = vmul.f32 %v6245, 0.01
    %v6528 = vmul.f32 %v6247, 0.01
    %v6529 = vmul.f32 %v6058, 0.01
    %v6530 = vmul.f32 %v6060, 0.01
    %v6531 = vmul.f32 %v6251, 0.01
    %v6532 = vmul.f32 %v6253, 0.01
    %v6533 = vmul.f32 %v6062, 0.01
    %v6534 = vmul.f32 %v6064, 0.01
    %v6535 = vmul.f32 %v6255, 0.01
    %v6536 = vmul.f32 %v6257, 0.01
    %v6537 = vmul.f32 %v6068, 0.01
    %v6538 = vmul.f32 %v6070, 0.01
    %v6539 = vmul.f32 %v6261, 0.01
    %v6540 = vmul.f32 %v6263, 0.01
    %v6541 = vmul.f32 %v6072, 0.01
    %v6542 = vmul.f32 %v6074, 0.01
    %v6543 = vmul.f32 %v6265, 0.01
    %v6544 = vmul.f32 %v6267, 0.01
    %v6545 = vmul.f32 %v6078, 0.01
    %v6546 = vmul.f32 %v6080, 0.01
    %v6547 = vmul.f32 %v6271, 0.01
    %v6548 = vmul.f32 %v6273, 0.01
    %v6549 = vmul.f32 %v6082, 0.01
    %v6550 = vmul.f32 %v6084, 0.01
    %v6551 = vmul.f32 %v6275, 0.01
    %v6552 = vmul.f32 %v6277, 0.01
    %v6553 = vmul.f32 %v6088, 0.01
    %v6554 = vmul.f32 %v6090, 0.01
    %v6555 = vmul.f32 %v6281, 0.01
    %v6556 = vmul.f32 %v6283, 0.01
    %v6557 = vmul.f32 %v6092, 0.01
    %v6558 = vmul.f32 %v6094, 0.01
    %v6559 = vmul.f32 %v6285, 0.01
    %v6560 = vmul.f32 %v6287, 0.01
    %v6561 = vmul.f32 %v6098, 0.01
    %v6562 = vmul.f32 %v6100, 0.01
    %v6563 = vmul.f32 %v6291, 0.01
    %v6564 = vmul.f32 %v6293, 0.01
    %v6565 = vmul.f32 %v6102, 0.01
    %v6566 = vmul.f32 %v6104, 0.01
    %v6567 = vmul.f32 %v6295, 0.01
    %v6568 = vmul.f32 %v6297, 0.01
    %v6569 = vmul.f32 %v6108, 0.01
    %v6570 = vmul.f32 %v6110, 0.01
    %v6571 = vmul.f32 %v6301, 0.01
    %v6572 = vmul.f32 %v6303, 0.01
    %v6573 = vmul.f32 %v6112, 0.01
    %v6574 = vmul.f32 %v6114, 0.01
    %v6575 = vmul.f32 %v6305, 0.01
    %v6576 = vmul.f32 %v6307, 0.01
    %v6577 = vmul.f32 %v6118, 0.01
    %v6578 = vmul.f32 %v6120, 0.01
    %v6579 = vmul.f32 %v6311, 0.01
    %v6580 = vmul.f32 %v6313, 0.01
    %v6581 = vmul.f32 %v6122, 0.01
    %v6582 = vmul.f32 %v6124, 0.01
    %v6583 = vmul.f32 %v6315, 0.01
    %v6584 = vmul.f32 %v6317, 0.01
    %v6585 = vmul.f32 %v6128, 0.01
    %v6586 = vmul.f32 %v6130, 0.01
    %v6587 = vmul.f32 %v6321, 0.01
    %v6588 = vmul.f32 %v6323, 0.01
    %v6589 = vmul.f32 %v6132, 0.01
    %v6590 = vmul.f32 %v6134, 0.01
    %v6591 = vmul.f32 %v6325, 0.01
    %v6592 = vmul.f32 %v6327, 0.01
    %v6593 = vmul.f32 %v6138, 0.01
    %v6594 = vmul.f32 %v6140, 0.01
    %v6595 = vmul.f32 %v6331, 0.01
    %v6596 = vmul.f32 %v6333, 0.01
    %v6597 = vmul.f32 %v6142, 0.01
    %v6598 = vmul.f32 %v6144, 0.01
    %v6599 = vmul.f32 %v6335, 0.01
    %v6600 = vmul.f32 %v6337, 0.01
    %v6601 = vmul.f32 %v6148, 0.01
    %v6602 = vmul.f32 %v6150, 0.01
    %v6603 = vmul.f32 %v6341, 0.01
    %v6604 = vmul.f32 %v6343, 0.01
    %v6605 = vmul.f32 %v6152, 0.01
    %v6606 = vmul.f32 %v6154, 0.01
    %v6607 = vmul.f32 %v6345, 0.01
    %v6608 = vmul.f32 %v6347, 0.01
    %v6609 = vmul.f32 %v6158, 0.01
    %v6610 = vmul.f32 %v6160, 0.01
    %v6611 = vmul.f32 %v6351, 0.01
    %v6612 = vmul.f32 %v6353, 0.01
    %v6613 = vmul.f32 %v6162, 0.01
    %v6614 = vmul.f32 %v6164, 0.01
    %v6615 = vmul.f32 %v6355, 0.01
    %v6616 = vmul.f32 %v6357, 0.01
    %v6617 = vmul.f32 %v6168, 0.01
    %v6618 = vmul.f32 %v6170, 0.01
    %v6619 = vmul.f32 %v6361, 0.01
    %v6620 = vmul.f32 %v6363, 0.01
    %v6621 = vmul.f32 %v6172, 0.01
    %v6622 = vmul.f32 %v6174, 0.01
    %v6623 = vmul.f32 %v6365, 0.01
    %v6624 = vmul.f32 %v6367, 0.01
    %v6625 = vsel %vm6369, %v6018, %v6497
    %v6626 = vsel %vm6370, %v6020, %v6498
    %v6627 = vsel %vm6371, %v6211, %v6499
    %v6628 = vsel %vm6372, %v6213, %v6500
    %v6629 = vsel %vm6373, %v6022, %v6501
    %v6630 = vsel %vm6374, %v6024, %v6502
    %v6631 = vsel %vm6375, %v6215, %v6503
    %v6632 = vsel %vm6376, %v6217, %v6504
    %v6633 = vsel %vm6377, %v6028, %v6505
    %v6634 = vsel %vm6378, %v6030, %v6506
    %v6635 = vsel %vm6379, %v6221, %v6507
    %v6636 = vsel %vm6380, %v6223, %v6508
    %v6637 = vsel %vm6381, %v6032, %v6509
    %v6638 = vsel %vm6382, %v6034, %v6510
    %v6639 = vsel %vm6383, %v6225, %v6511
    %v6640 = vsel %vm6384, %v6227, %v6512
    %v6641 = vsel %vm6385, %v6038, %v6513
    %v6642 = vsel %vm6386, %v6040, %v6514
    %v6643 = vsel %vm6387, %v6231, %v6515
    %v6644 = vsel %vm6388, %v6233, %v6516
    %v6645 = vsel %vm6389, %v6042, %v6517
    %v6646 = vsel %vm6390, %v6044, %v6518
    %v6647 = vsel %vm6391, %v6235, %v6519
    %v6648 = vsel %vm6392, %v6237, %v6520
    %v6649 = vsel %vm6393, %v6048, %v6521
    %v6650 = vsel %vm6394, %v6050, %v6522
    %v6651 = vsel %vm6395, %v6241, %v6523
    %v6652 = vsel %vm6396, %v6243, %v6524
    %v6653 = vsel %vm6397, %v6052, %v6525
    %v6654 = vsel %vm6398, %v6054, %v6526
    %v6655 = vsel %vm6399, %v6245, %v6527
    %v6656 = vsel %vm6400, %v6247, %v6528
    %v6657 = vsel %vm6401, %v6058, %v6529
    %v6658 = vsel %vm6402, %v6060, %v6530
    %v6659 = vsel %vm6403, %v6251, %v6531
    %v6660 = vsel %vm6404, %v6253, %v6532
    %v6661 = vsel %vm6405, %v6062, %v6533
    %v6662 = vsel %vm6406, %v6064, %v6534
    %v6663 = vsel %vm6407, %v6255, %v6535
    %v6664 = vsel %vm6408, %v6257, %v6536
    %v6665 = vsel %vm6409, %v6068, %v6537
    %v6666 = vsel %vm6410, %v6070, %v6538
    %v6667 = vsel %vm6411, %v6261, %v6539
    %v6668 = vsel %vm6412, %v6263, %v6540
    %v6669 = vsel %vm6413, %v6072, %v6541
    %v6670 = vsel %vm6414, %v6074, %v6542
    %v6671 = vsel %vm6415, %v6265, %v6543
    %v6672 = vsel %vm6416, %v6267, %v6544
    %v6673 = vsel %vm6417, %v6078, %v6545
    %v6674 = vsel %vm6418, %v6080, %v6546
    %v6675 = vsel %vm6419, %v6271, %v6547
    %v6676 = vsel %vm6420, %v6273, %v6548
    %v6677 = vsel %vm6421, %v6082, %v6549
    %v6678 = vsel %vm6422, %v6084, %v6550
    %v6679 = vsel %vm6423, %v6275, %v6551
    %v6680 = vsel %vm6424, %v6277, %v6552
    %v6681 = vsel %vm6425, %v6088, %v6553
    %v6682 = vsel %vm6426, %v6090, %v6554
    %v6683 = vsel %vm6427, %v6281, %v6555
    %v6684 = vsel %vm6428, %v6283, %v6556
    %v6685 = vsel %vm6429, %v6092, %v6557
    %v6686 = vsel %vm6430, %v6094, %v6558
    %v6687 = vsel %vm6431, %v6285, %v6559
    %v6688 = vsel %vm6432, %v6287, %v6560
    %v6689 = vsel %vm6433, %v6098, %v6561
    %v6690 = vsel %vm6434, %v6100, %v6562
    %v6691 = vsel %vm6435, %v6291, %v6563
    %v6692 = vsel %vm6436, %v6293, %v6564
    %v6693 = vsel %vm6437, %v6102, %v6565
    %v6694 = vsel %vm6438, %v6104, %v6566
    %v6695 = vsel %vm6439, %v6295, %v6567
    %v6696 = vsel %vm6440, %v6297, %v6568
    %v6697 = vsel %vm6441, %v6108, %v6569
    %v6698 = vsel %vm6442, %v6110, %v6570
    %v6699 = vsel %vm6443, %v6301, %v6571
    %v6700 = vsel %vm6444, %v6303, %v6572
    %v6701 = vsel %vm6445, %v6112, %v6573
    %v6702 = vsel %vm6446, %v6114, %v6574
    %v6703 = vsel %vm6447, %v6305, %v6575
    %v6704 = vsel %vm6448, %v6307, %v6576
    %v6705 = vsel %vm6449, %v6118, %v6577
    %v6706 = vsel %vm6450, %v6120, %v6578
    %v6707 = vsel %vm6451, %v6311, %v6579
    %v6708 = vsel %vm6452, %v6313, %v6580
    %v6709 = vsel %vm6453, %v6122, %v6581
    %v6710 = vsel %vm6454, %v6124, %v6582
    %v6711 = vsel %vm6455, %v6315, %v6583
    %v6712 = vsel %vm6456, %v6317, %v6584
    %v6713 = vsel %vm6457, %v6128, %v6585
    %v6714 = vsel %vm6458, %v6130, %v6586
    %v6715 = vsel %vm6459, %v6321, %v6587
    %v6716 = vsel %vm6460, %v6323, %v6588
    %v6717 = vsel %vm6461, %v6132, %v6589
    %v6718 = vsel %vm6462, %v6134, %v6590
    %v6719 = vsel %vm6463, %v6325, %v6591
    %v6720 = vsel %vm6464, %v6327, %v6592
    %v6721 = vsel %vm6465, %v6138, %v6593
    %v6722 = vsel %vm6466, %v6140, %v6594
    %v6723 = vsel %vm6467, %v6331, %v6595
    %v6724 = vsel %vm6468, %v6333, %v6596
    %v6725 = vsel %vm6469, %v6142, %v6597
    %v6726 = vsel %vm6470, %v6144, %v6598
    %v6727 = vsel %vm6471, %v6335, %v6599
    %v6728 = vsel %vm6472, %v6337, %v6600
    %v6729 = vsel %vm6473, %v6148, %v6601
    %v6730 = vsel %vm6474, %v6150, %v6602
    %v6731 = vsel %vm6475, %v6341, %v6603
    %v6732 = vsel %vm6476, %v6343, %v6604
    %v6733 = vsel %vm6477, %v6152, %v6605
    %v6734 = vsel %vm6478, %v6154, %v6606
    %v6735 = vsel %vm6479, %v6345, %v6607
    %v6736 = vsel %vm6480, %v6347, %v6608
    %v6737 = vsel %vm6481, %v6158, %v6609
    %v6738 = vsel %vm6482, %v6160, %v6610
    %v6739 = vsel %vm6483, %v6351, %v6611
    %v6740 = vsel %vm6484, %v6353, %v6612
    %v6741 = vsel %vm6485, %v6162, %v6613
    %v6742 = vsel %vm6486, %v6164, %v6614
    %v6743 = vsel %vm6487, %v6355, %v6615
    %v6744 = vsel %vm6488, %v6357, %v6616
    %v6745 = vsel %vm6489, %v6168, %v6617
    %v6746 = vsel %vm6490, %v6170, %v6618
    %v6747 = vsel %vm6491, %v6361, %v6619
    %v6748 = vsel %vm6492, %v6363, %v6620
    %v6749 = vsel %vm6493, %v6172, %v6621
    %v6750 = vsel %vm6494, %v6174, %v6622
    %v6751 = vsel %vm6495, %v6365, %v6623
    %v6752 = vsel %vm6496, %v6367, %v6624
    %v6753 = vpack.c.bf16 %v6629, %v6625
    %v6754 = vpack.c.bf16 %v6630, %v6626
    %v6755 = vpack.c.bf16 %v6631, %v6627
    %v6756 = vpack.c.bf16 %v6632, %v6628
    %v6757 = vpack.c.bf16 %v6637, %v6633
    %v6758 = vpack.c.bf16 %v6638, %v6634
    %v6759 = vpack.c.bf16 %v6639, %v6635
    %v6760 = vpack.c.bf16 %v6640, %v6636
    %v6761 = vpack.c.bf16 %v6645, %v6641
    %v6762 = vpack.c.bf16 %v6646, %v6642
    %v6763 = vpack.c.bf16 %v6647, %v6643
    %v6764 = vpack.c.bf16 %v6648, %v6644
    %v6765 = vpack.c.bf16 %v6653, %v6649
    %v6766 = vpack.c.bf16 %v6654, %v6650
    %v6767 = vpack.c.bf16 %v6655, %v6651
    %v6768 = vpack.c.bf16 %v6656, %v6652
    %v6769 = vpack.c.bf16 %v6661, %v6657
    %v6770 = vpack.c.bf16 %v6662, %v6658
    %v6771 = vpack.c.bf16 %v6663, %v6659
    %v6772 = vpack.c.bf16 %v6664, %v6660
    %v6773 = vpack.c.bf16 %v6669, %v6665
    %v6774 = vpack.c.bf16 %v6670, %v6666
    %v6775 = vpack.c.bf16 %v6671, %v6667
    %v6776 = vpack.c.bf16 %v6672, %v6668
    %v6777 = vpack.c.bf16 %v6677, %v6673
    %v6778 = vpack.c.bf16 %v6678, %v6674
    %v6779 = vpack.c.bf16 %v6679, %v6675
    %v6780 = vpack.c.bf16 %v6680, %v6676
    %v6781 = vpack.c.bf16 %v6685, %v6681
    %v6782 = vpack.c.bf16 %v6686, %v6682
    %v6783 = vpack.c.bf16 %v6687, %v6683
    %v6784 = vpack.c.bf16 %v6688, %v6684
    %v6785 = vpack.c.bf16 %v6693, %v6689
    %v6786 = vpack.c.bf16 %v6694, %v6690
    %v6787 = vpack.c.bf16 %v6695, %v6691
    %v6788 = vpack.c.bf16 %v6696, %v6692
    %v6789 = vpack.c.bf16 %v6701, %v6697
    %v6790 = vpack.c.bf16 %v6702, %v6698
    %v6791 = vpack.c.bf16 %v6703, %v6699
    %v6792 = vpack.c.bf16 %v6704, %v6700
    %v6793 = vpack.c.bf16 %v6709, %v6705
    %v6794 = vpack.c.bf16 %v6710, %v6706
    %v6795 = vpack.c.bf16 %v6711, %v6707
    %v6796 = vpack.c.bf16 %v6712, %v6708
    %v6797 = vpack.c.bf16 %v6717, %v6713
    %v6798 = vpack.c.bf16 %v6718, %v6714
    %v6799 = vpack.c.bf16 %v6719, %v6715
    %v6800 = vpack.c.bf16 %v6720, %v6716
    %v6801 = vpack.c.bf16 %v6725, %v6721
    %v6802 = vpack.c.bf16 %v6726, %v6722
    %v6803 = vpack.c.bf16 %v6727, %v6723
    %v6804 = vpack.c.bf16 %v6728, %v6724
    %v6805 = vpack.c.bf16 %v6733, %v6729
    %v6806 = vpack.c.bf16 %v6734, %v6730
    %v6807 = vpack.c.bf16 %v6735, %v6731
    %v6808 = vpack.c.bf16 %v6736, %v6732
    %v6809 = vpack.c.bf16 %v6741, %v6737
    %v6810 = vpack.c.bf16 %v6742, %v6738
    %v6811 = vpack.c.bf16 %v6743, %v6739
    %v6812 = vpack.c.bf16 %v6744, %v6740
    %v6813 = vpack.c.bf16 %v6749, %v6745
    %v6814 = vpack.c.bf16 %v6750, %v6746
    %v6815 = vpack.c.bf16 %v6751, %v6747
    %v6816 = vpack.c.bf16 %v6752, %v6748
    %6817 = vmatprep.subr.bf16.mxu0 %v6782
    %6818 = vmatpush1.bf16.msra.mxu0 %v6781
    %6819 = vmatprep.subr.bf16.mxu0 %v6778
    %6820 = vmatpush1.bf16.msra.mxu0 %v6777
    %6821 = vmatprep.subr.bf16.mxu0 %v6774
    %6822 = vmatpush1.bf16.msra.mxu0 %v6773
    %6823 = vmatprep.subr.bf16.mxu0 %v6770
    %6824 = vmatpush1.bf16.msra.mxu0 %v6769
    %6825 = vmatprep.subr.bf16.mxu0 %v6766
    %6826 = vmatpush1.bf16.msra.mxu0 %v6765
    %6827 = vmatprep.subr.bf16.mxu0 %v6762
    %6828 = vmatpush1.bf16.msra.mxu0 %v6761
    %6829 = vmatprep.subr.bf16.mxu0 %v6758
    %6830 = vmatpush1.bf16.msra.mxu0 %v6757
    %6831 = vmatprep.subr.bf16.mxu0 %v6754
    %6832 = vmatpush1.bf16.msra.mxu0 %v6753
    %6833 = vmatprep.subr.bf16.mxu0 %v6814
    %6834 = vmatpush2.bf16.msra.mxu0 %v6813
    %6835 = vmatprep.subr.bf16.mxu0 %v6810
    %6836 = vmatpush2.bf16.msra.mxu0 %v6809
    %6837 = vmatprep.subr.bf16.mxu0 %v6806
    %6838 = vmatpush2.bf16.msra.mxu0 %v6805
    %6839 = vmatprep.subr.bf16.mxu0 %v6802
    %6840 = vmatpush2.bf16.msra.mxu0 %v6801
    %6841 = vmatprep.subr.bf16.mxu0 %v6798
    %6842 = vmatpush2.bf16.msra.mxu0 %v6797
    %6843 = vmatprep.subr.bf16.mxu0 %v6794
    %6844 = vmatpush2.bf16.msra.mxu0 %v6793
    %6845 = vmatprep.subr.bf16.mxu0 %v6790
    %6846 = vmatpush2.bf16.msra.mxu0 %v6789
    %6847 = vmatprep.subr.bf16.mxu0 %v6786
    %6848 = vmatpush2.bf16.msra.mxu0 %v6785
    %6849 = vmatprep.mubr.bf16.mxu0 %v2787
    %6850 = vmatmul.mubr.bf16.gmra.mxu0 %v2786
    %v6851 = vpop.f32.mrf.mxu0
    %v6852 = vadd.f32 %v2533, %v6851
    %v6853 = vpop.f32.mrf.mxu0
    %v6854 = vadd.f32 %v2533, %v6853
    %v6855 = vpop.f32.mrf.mxu0
    %v6856 = vadd.f32 %v2538, %v6855
    %v6857 = vpop.f32.mrf.mxu0
    %v6858 = vadd.f32 %v2538, %v6857
    %6859 = vmatprep.mubr.bf16.mxu0 %v2789
    %6860 = vmatmul.mubr.bf16.gmra.mxu0 %v2788
    %v6861 = vpop.f32.mrf.mxu0
    %v6862 = vadd.f32 %v2543, %v6861
    %v6863 = vpop.f32.mrf.mxu0
    %v6864 = vadd.f32 %v2543, %v6863
    %v6865 = vpop.f32.mrf.mxu0
    %v6866 = vadd.f32 %v2548, %v6865
    %v6867 = vpop.f32.mrf.mxu0
    %v6868 = vadd.f32 %v2548, %v6867
    %6869 = vmatprep.mubr.bf16.mxu0 %v2791
    %6870 = vmatmul.mubr.bf16.gmra.mxu0 %v2790
    %v6871 = vpop.f32.mrf.mxu0
    %v6872 = vadd.f32 %v2553, %v6871
    %v6873 = vpop.f32.mrf.mxu0
    %v6874 = vadd.f32 %v2553, %v6873
    %v6875 = vpop.f32.mrf.mxu0
    %v6876 = vadd.f32 %v2558, %v6875
    %v6877 = vpop.f32.mrf.mxu0
    %v6878 = vadd.f32 %v2558, %v6877
    %6879 = vmatprep.mubr.bf16.mxu0 %v2793
    %6880 = vmatmul.mubr.bf16.gmra.mxu0 %v2792
    %v6881 = vpop.f32.mrf.mxu0
    %v6882 = vadd.f32 %v2563, %v6881
    %v6883 = vpop.f32.mrf.mxu0
    %v6884 = vadd.f32 %v2563, %v6883
    %v6885 = vpop.f32.mrf.mxu0
    %v6886 = vadd.f32 %v2568, %v6885
    %v6887 = vpop.f32.mrf.mxu0
    %v6888 = vadd.f32 %v2568, %v6887
    %6889 = vmatprep.mubr.bf16.mxu0 %v2795
    %6890 = vmatmul.mubr.bf16.gmra.mxu0 %v2794
    %v6891 = vpop.f32.mrf.mxu0
    %v6892 = vadd.f32 %v2573, %v6891
    %v6893 = vpop.f32.mrf.mxu0
    %v6894 = vadd.f32 %v2573, %v6893
    %v6895 = vpop.f32.mrf.mxu0
    %v6896 = vadd.f32 %v2578, %v6895
    %v6897 = vpop.f32.mrf.mxu0
    %v6898 = vadd.f32 %v2578, %v6897
    %6899 = vmatprep.mubr.bf16.mxu0 %v2797
    %6900 = vmatmul.mubr.bf16.gmra.mxu0 %v2796
    %v6901 = vpop.f32.mrf.mxu0
    %v6902 = vadd.f32 %v2583, %v6901
    %v6903 = vpop.f32.mrf.mxu0
    %v6904 = vadd.f32 %v2583, %v6903
    %v6905 = vpop.f32.mrf.mxu0
    %v6906 = vadd.f32 %v2588, %v6905
    %v6907 = vpop.f32.mrf.mxu0
    %v6908 = vadd.f32 %v2588, %v6907
    %6909 = vmatprep.mubr.bf16.mxu0 %v2799
    %6910 = vmatmul.mubr.bf16.gmra.mxu0 %v2798
    %v6911 = vpop.f32.mrf.mxu0
    %v6912 = vadd.f32 %v2593, %v6911
    %v6913 = vpop.f32.mrf.mxu0
    %v6914 = vadd.f32 %v2593, %v6913
    %v6915 = vpop.f32.mrf.mxu0
    %v6916 = vadd.f32 %v2598, %v6915
    %v6917 = vpop.f32.mrf.mxu0
    %v6918 = vadd.f32 %v2598, %v6917
    %6919 = vmatprep.mubr.bf16.mxu0 %v2801
    %6920 = vmatmul.mubr.bf16.gmra.mxu0 %v2800
    %v6921 = vpop.f32.mrf.mxu0
    %v6922 = vadd.f32 %v2603, %v6921
    %v6923 = vpop.f32.mrf.mxu0
    %v6924 = vadd.f32 %v2603, %v6923
    %v6925 = vpop.f32.mrf.mxu0
    %v6926 = vadd.f32 %v2608, %v6925
    %v6927 = vpop.f32.mrf.mxu0
    %v6928 = vadd.f32 %v2608, %v6927
    %6929 = vmatprep.mubr.bf16.mxu0 %v2803
    %6930 = vmatmul.mubr.bf16.gmra.mxu0 %v2802
    %v6931 = vpop.f32.mrf.mxu0
    %v6932 = vadd.f32 %v2613, %v6931
    %v6933 = vpop.f32.mrf.mxu0
    %v6934 = vadd.f32 %v2613, %v6933
    %v6935 = vpop.f32.mrf.mxu0
    %v6936 = vadd.f32 %v2618, %v6935
    %v6937 = vpop.f32.mrf.mxu0
    %v6938 = vadd.f32 %v2618, %v6937
    %6939 = vmatprep.mubr.bf16.mxu0 %v2805
    %6940 = vmatmul.mubr.bf16.gmra.mxu0 %v2804
    %v6941 = vpop.f32.mrf.mxu0
    %v6942 = vadd.f32 %v2623, %v6941
    %v6943 = vpop.f32.mrf.mxu0
    %v6944 = vadd.f32 %v2623, %v6943
    %v6945 = vpop.f32.mrf.mxu0
    %v6946 = vadd.f32 %v2628, %v6945
    %v6947 = vpop.f32.mrf.mxu0
    %v6948 = vadd.f32 %v2628, %v6947
    %6949 = vmatprep.mubr.bf16.mxu0 %v2807
    %6950 = vmatmul.mubr.bf16.gmra.mxu0 %v2806
    %v6951 = vpop.f32.mrf.mxu0
    %v6952 = vadd.f32 %v2633, %v6951
    %v6953 = vpop.f32.mrf.mxu0
    %v6954 = vadd.f32 %v2633, %v6953
    %v6955 = vpop.f32.mrf.mxu0
    %v6956 = vadd.f32 %v2638, %v6955
    %v6957 = vpop.f32.mrf.mxu0
    %v6958 = vadd.f32 %v2638, %v6957
    %6959 = vmatprep.mubr.bf16.mxu0 %v2809
    %6960 = vmatmul.mubr.bf16.gmra.mxu0 %v2808
    %v6961 = vpop.f32.mrf.mxu0
    %v6962 = vadd.f32 %v2643, %v6961
    %v6963 = vpop.f32.mrf.mxu0
    %v6964 = vadd.f32 %v2643, %v6963
    %v6965 = vpop.f32.mrf.mxu0
    %v6966 = vadd.f32 %v2648, %v6965
    %v6967 = vpop.f32.mrf.mxu0
    %v6968 = vadd.f32 %v2648, %v6967
    %6969 = vmatprep.mubr.bf16.mxu0 %v2811
    %6970 = vmatmul.mubr.bf16.gmra.mxu0 %v2810
    %v6971 = vpop.f32.mrf.mxu0
    %v6972 = vadd.f32 %v2653, %v6971
    %v6973 = vpop.f32.mrf.mxu0
    %v6974 = vadd.f32 %v2653, %v6973
    %v6975 = vpop.f32.mrf.mxu0
    %v6976 = vadd.f32 %v2658, %v6975
    %v6977 = vpop.f32.mrf.mxu0
    %v6978 = vadd.f32 %v2658, %v6977
    %6979 = vmatprep.mubr.bf16.mxu0 %v2813
    %6980 = vmatmul.mubr.bf16.gmra.mxu0 %v2812
    %v6981 = vpop.f32.mrf.mxu0
    %v6982 = vadd.f32 %v2663, %v6981
    %v6983 = vpop.f32.mrf.mxu0
    %v6984 = vadd.f32 %v2663, %v6983
    %v6985 = vpop.f32.mrf.mxu0
    %v6986 = vadd.f32 %v2668, %v6985
    %v6987 = vpop.f32.mrf.mxu0
    %v6988 = vadd.f32 %v2668, %v6987
    %6989 = vmatprep.mubr.bf16.mxu0 %v2815
    %6990 = vmatmul.mubr.bf16.gmra.mxu0 %v2814
    %v6991 = vpop.f32.mrf.mxu0
    %v6992 = vadd.f32 %v2673, %v6991
    %v6993 = vpop.f32.mrf.mxu0
    %v6994 = vadd.f32 %v2673, %v6993
    %v6995 = vpop.f32.mrf.mxu0
    %v6996 = vadd.f32 %v2678, %v6995
    %v6997 = vpop.f32.mrf.mxu0
    %v6998 = vadd.f32 %v2678, %v6997
    %6999 = vmatprep.mubr.bf16.mxu0 %v2817
    %7000 = vmatmul.mubr.bf16.gmra.mxu0 %v2816
    %v7001 = vpop.f32.mrf.mxu0
    %v7002 = vadd.f32 %v2683, %v7001
    %v7003 = vpop.f32.mrf.mxu0
    %v7004 = vadd.f32 %v2683, %v7003
    %v7005 = vpop.f32.mrf.mxu0
    %v7006 = vadd.f32 %v2688, %v7005
    %v7007 = vpop.f32.mrf.mxu0
    %v7008 = vadd.f32 %v2688, %v7007
    %7009 = vdwg.mxu0
    %7010 = vmatprep.subr.bf16.mxu0 %v6784
    %7011 = vmatpush1.bf16.msra.mxu0 %v6783
    %7012 = vmatprep.subr.bf16.mxu0 %v6780
    %7013 = vmatpush1.bf16.msra.mxu0 %v6779
    %7014 = vmatprep.subr.bf16.mxu0 %v6776
    %7015 = vmatpush1.bf16.msra.mxu0 %v6775
    %7016 = vmatprep.subr.bf16.mxu0 %v6772
    %7017 = vmatpush1.bf16.msra.mxu0 %v6771
    %7018 = vmatprep.subr.bf16.mxu0 %v6768
    %7019 = vmatpush1.bf16.msra.mxu0 %v6767
    %7020 = vmatprep.subr.bf16.mxu0 %v6764
    %7021 = vmatpush1.bf16.msra.mxu0 %v6763
    %7022 = vmatprep.subr.bf16.mxu0 %v6760
    %7023 = vmatpush1.bf16.msra.mxu0 %v6759
    %7024 = vmatprep.subr.bf16.mxu0 %v6756
    %7025 = vmatpush1.bf16.msra.mxu0 %v6755
    %7026 = vmatprep.subr.bf16.mxu0 %v6816
    %7027 = vmatpush2.bf16.msra.mxu0 %v6815
    %7028 = vmatprep.subr.bf16.mxu0 %v6812
    %7029 = vmatpush2.bf16.msra.mxu0 %v6811
    %7030 = vmatprep.subr.bf16.mxu0 %v6808
    %7031 = vmatpush2.bf16.msra.mxu0 %v6807
    %7032 = vmatprep.subr.bf16.mxu0 %v6804
    %7033 = vmatpush2.bf16.msra.mxu0 %v6803
    %7034 = vmatprep.subr.bf16.mxu0 %v6800
    %7035 = vmatpush2.bf16.msra.mxu0 %v6799
    %7036 = vmatprep.subr.bf16.mxu0 %v6796
    %7037 = vmatpush2.bf16.msra.mxu0 %v6795
    %7038 = vmatprep.subr.bf16.mxu0 %v6792
    %7039 = vmatpush2.bf16.msra.mxu0 %v6791
    %7040 = vmatprep.subr.bf16.mxu0 %v6788
    %7041 = vmatpush2.bf16.msra.mxu0 %v6787
    %7042 = vmatprep.mubr.bf16.mxu0 %v2787
    %7043 = vmatmul.mubr.bf16.gmra.mxu0 %v2786
    %v7044 = vpop.f32.mrf.mxu0
    %v7045 = vadd.f32 %v2533, %v7044
    %v7046 = vpop.f32.mrf.mxu0
    %v7047 = vadd.f32 %v2533, %v7046
    %v7048 = vpop.f32.mrf.mxu0
    %v7049 = vadd.f32 %v2538, %v7048
    %v7050 = vpop.f32.mrf.mxu0
    %v7051 = vadd.f32 %v2538, %v7050
    %7052 = vmatprep.mubr.bf16.mxu0 %v2789
    %7053 = vmatmul.mubr.bf16.gmra.mxu0 %v2788
    %v7054 = vpop.f32.mrf.mxu0
    %v7055 = vadd.f32 %v2543, %v7054
    %v7056 = vpop.f32.mrf.mxu0
    %v7057 = vadd.f32 %v2543, %v7056
    %v7058 = vpop.f32.mrf.mxu0
    %v7059 = vadd.f32 %v2548, %v7058
    %v7060 = vpop.f32.mrf.mxu0
    %v7061 = vadd.f32 %v2548, %v7060
    %7062 = vmatprep.mubr.bf16.mxu0 %v2791
    %7063 = vmatmul.mubr.bf16.gmra.mxu0 %v2790
    %v7064 = vpop.f32.mrf.mxu0
    %v7065 = vadd.f32 %v2553, %v7064
    %v7066 = vpop.f32.mrf.mxu0
    %v7067 = vadd.f32 %v2553, %v7066
    %v7068 = vpop.f32.mrf.mxu0
    %v7069 = vadd.f32 %v2558, %v7068
    %v7070 = vpop.f32.mrf.mxu0
    %v7071 = vadd.f32 %v2558, %v7070
    %7072 = vmatprep.mubr.bf16.mxu0 %v2793
    %7073 = vmatmul.mubr.bf16.gmra.mxu0 %v2792
    %v7074 = vpop.f32.mrf.mxu0
    %v7075 = vadd.f32 %v2563, %v7074
    %v7076 = vpop.f32.mrf.mxu0
    %v7077 = vadd.f32 %v2563, %v7076
    %v7078 = vpop.f32.mrf.mxu0
    %v7079 = vadd.f32 %v2568, %v7078
    %v7080 = vpop.f32.mrf.mxu0
    %v7081 = vadd.f32 %v2568, %v7080
    %7082 = vmatprep.mubr.bf16.mxu0 %v2795
    %7083 = vmatmul.mubr.bf16.gmra.mxu0 %v2794
    %v7084 = vpop.f32.mrf.mxu0
    %v7085 = vadd.f32 %v2573, %v7084
    %v7086 = vpop.f32.mrf.mxu0
    %v7087 = vadd.f32 %v2573, %v7086
    %v7088 = vpop.f32.mrf.mxu0
    %v7089 = vadd.f32 %v2578, %v7088
    %v7090 = vpop.f32.mrf.mxu0
    %v7091 = vadd.f32 %v2578, %v7090
    %7092 = vmatprep.mubr.bf16.mxu0 %v2797
    %7093 = vmatmul.mubr.bf16.gmra.mxu0 %v2796
    %v7094 = vpop.f32.mrf.mxu0
    %v7095 = vadd.f32 %v2583, %v7094
    %v7096 = vpop.f32.mrf.mxu0
    %v7097 = vadd.f32 %v2583, %v7096
    %v7098 = vpop.f32.mrf.mxu0
    %v7099 = vadd.f32 %v2588, %v7098
    %v7100 = vpop.f32.mrf.mxu0
    %v7101 = vadd.f32 %v2588, %v7100
    %7102 = vmatprep.mubr.bf16.mxu0 %v2799
    %7103 = vmatmul.mubr.bf16.gmra.mxu0 %v2798
    %v7104 = vpop.f32.mrf.mxu0
    %v7105 = vadd.f32 %v2593, %v7104
    %v7106 = vpop.f32.mrf.mxu0
    %v7107 = vadd.f32 %v2593, %v7106
    %v7108 = vpop.f32.mrf.mxu0
    %v7109 = vadd.f32 %v2598, %v7108
    %v7110 = vpop.f32.mrf.mxu0
    %v7111 = vadd.f32 %v2598, %v7110
    %7112 = vmatprep.mubr.bf16.mxu0 %v2801
    %7113 = vmatmul.mubr.bf16.gmra.mxu0 %v2800
    %v7114 = vpop.f32.mrf.mxu0
    %v7115 = vadd.f32 %v2603, %v7114
    %v7116 = vpop.f32.mrf.mxu0
    %v7117 = vadd.f32 %v2603, %v7116
    %v7118 = vpop.f32.mrf.mxu0
    %v7119 = vadd.f32 %v2608, %v7118
    %v7120 = vpop.f32.mrf.mxu0
    %v7121 = vadd.f32 %v2608, %v7120
    %7122 = vmatprep.mubr.bf16.mxu0 %v2803
    %7123 = vmatmul.mubr.bf16.gmra.mxu0 %v2802
    %v7124 = vpop.f32.mrf.mxu0
    %v7125 = vadd.f32 %v2613, %v7124
    %v7126 = vpop.f32.mrf.mxu0
    %v7127 = vadd.f32 %v2613, %v7126
    %v7128 = vpop.f32.mrf.mxu0
    %v7129 = vadd.f32 %v2618, %v7128
    %v7130 = vpop.f32.mrf.mxu0
    %v7131 = vadd.f32 %v2618, %v7130
    %7132 = vmatprep.mubr.bf16.mxu0 %v2805
    %7133 = vmatmul.mubr.bf16.gmra.mxu0 %v2804
    %v7134 = vpop.f32.mrf.mxu0
    %v7135 = vadd.f32 %v2623, %v7134
    %v7136 = vpop.f32.mrf.mxu0
    %v7137 = vadd.f32 %v2623, %v7136
    %v7138 = vpop.f32.mrf.mxu0
    %v7139 = vadd.f32 %v2628, %v7138
    %v7140 = vpop.f32.mrf.mxu0
    %v7141 = vadd.f32 %v2628, %v7140
    %7142 = vmatprep.mubr.bf16.mxu0 %v2807
    %7143 = vmatmul.mubr.bf16.gmra.mxu0 %v2806
    %v7144 = vpop.f32.mrf.mxu0
    %v7145 = vadd.f32 %v2633, %v7144
    %v7146 = vpop.f32.mrf.mxu0
    %v7147 = vadd.f32 %v2633, %v7146
    %v7148 = vpop.f32.mrf.mxu0
    %v7149 = vadd.f32 %v2638, %v7148
    %v7150 = vpop.f32.mrf.mxu0
    %v7151 = vadd.f32 %v2638, %v7150
    %7152 = vmatprep.mubr.bf16.mxu0 %v2809
    %7153 = vmatmul.mubr.bf16.gmra.mxu0 %v2808
    %v7154 = vpop.f32.mrf.mxu0
    %v7155 = vadd.f32 %v2643, %v7154
    %v7156 = vpop.f32.mrf.mxu0
    %v7157 = vadd.f32 %v2643, %v7156
    %v7158 = vpop.f32.mrf.mxu0
    %v7159 = vadd.f32 %v2648, %v7158
    %v7160 = vpop.f32.mrf.mxu0
    %v7161 = vadd.f32 %v2648, %v7160
    %7162 = vmatprep.mubr.bf16.mxu0 %v2811
    %7163 = vmatmul.mubr.bf16.gmra.mxu0 %v2810
    %v7164 = vpop.f32.mrf.mxu0
    %v7165 = vadd.f32 %v2653, %v7164
    %v7166 = vpop.f32.mrf.mxu0
    %v7167 = vadd.f32 %v2653, %v7166
    %v7168 = vpop.f32.mrf.mxu0
    %v7169 = vadd.f32 %v2658, %v7168
    %v7170 = vpop.f32.mrf.mxu0
    %v7171 = vadd.f32 %v2658, %v7170
    %7172 = vmatprep.mubr.bf16.mxu0 %v2813
    %7173 = vmatmul.mubr.bf16.gmra.mxu0 %v2812
    %v7174 = vpop.f32.mrf.mxu0
    %v7175 = vadd.f32 %v2663, %v7174
    %v7176 = vpop.f32.mrf.mxu0
    %v7177 = vadd.f32 %v2663, %v7176
    %v7178 = vpop.f32.mrf.mxu0
    %v7179 = vadd.f32 %v2668, %v7178
    %v7180 = vpop.f32.mrf.mxu0
    %v7181 = vadd.f32 %v2668, %v7180
    %7182 = vmatprep.mubr.bf16.mxu0 %v2815
    %7183 = vmatmul.mubr.bf16.gmra.mxu0 %v2814
    %v7184 = vpop.f32.mrf.mxu0
    %v7185 = vadd.f32 %v2673, %v7184
    %v7186 = vpop.f32.mrf.mxu0
    %v7187 = vadd.f32 %v2673, %v7186
    %v7188 = vpop.f32.mrf.mxu0
    %v7189 = vadd.f32 %v2678, %v7188
    %v7190 = vpop.f32.mrf.mxu0
    %v7191 = vadd.f32 %v2678, %v7190
    %7192 = vmatprep.mubr.bf16.mxu0 %v2817
    %7193 = vmatmul.mubr.bf16.gmra.mxu0 %v2816
    %v7194 = vpop.f32.mrf.mxu0
    %v7195 = vadd.f32 %v2683, %v7194
    %v7196 = vpop.f32.mrf.mxu0
    %v7197 = vadd.f32 %v2683, %v7196
    %v7198 = vpop.f32.mrf.mxu0
    %v7199 = vadd.f32 %v2688, %v7198
    %v7200 = vpop.f32.mrf.mxu0
    %v7201 = vadd.f32 %v2688, %v7200
    %7202 = vdwg.mxu0
    %vm7203 = vcmp.gt.f32.partialorder %v6852, 0.0
    %vm7204 = vcmp.gt.f32.partialorder %v6854, 0.0
    %vm7205 = vcmp.gt.f32.partialorder %v7045, 0.0
    %vm7206 = vcmp.gt.f32.partialorder %v7047, 0.0
    %vm7207 = vcmp.gt.f32.partialorder %v6856, 0.0
    %vm7208 = vcmp.gt.f32.partialorder %v6858, 0.0
    %vm7209 = vcmp.gt.f32.partialorder %v7049, 0.0
    %vm7210 = vcmp.gt.f32.partialorder %v7051, 0.0
    %vm7211 = vcmp.gt.f32.partialorder %v6862, 0.0
    %vm7212 = vcmp.gt.f32.partialorder %v6864, 0.0
    %vm7213 = vcmp.gt.f32.partialorder %v7055, 0.0
    %vm7214 = vcmp.gt.f32.partialorder %v7057, 0.0
    %vm7215 = vcmp.gt.f32.partialorder %v6866, 0.0
    %vm7216 = vcmp.gt.f32.partialorder %v6868, 0.0
    %vm7217 = vcmp.gt.f32.partialorder %v7059, 0.0
    %vm7218 = vcmp.gt.f32.partialorder %v7061, 0.0
    %vm7219 = vcmp.gt.f32.partialorder %v6872, 0.0
    %vm7220 = vcmp.gt.f32.partialorder %v6874, 0.0
    %vm7221 = vcmp.gt.f32.partialorder %v7065, 0.0
    %vm7222 = vcmp.gt.f32.partialorder %v7067, 0.0
    %vm7223 = vcmp.gt.f32.partialorder %v6876, 0.0
    %vm7224 = vcmp.gt.f32.partialorder %v6878, 0.0
    %vm7225 = vcmp.gt.f32.partialorder %v7069, 0.0
    %vm7226 = vcmp.gt.f32.partialorder %v7071, 0.0
    %vm7227 = vcmp.gt.f32.partialorder %v6882, 0.0
    %vm7228 = vcmp.gt.f32.partialorder %v6884, 0.0
    %vm7229 = vcmp.gt.f32.partialorder %v7075, 0.0
    %vm7230 = vcmp.gt.f32.partialorder %v7077, 0.0
    %vm7231 = vcmp.gt.f32.partialorder %v6886, 0.0
    %vm7232 = vcmp.gt.f32.partialorder %v6888, 0.0
    %vm7233 = vcmp.gt.f32.partialorder %v7079, 0.0
    %vm7234 = vcmp.gt.f32.partialorder %v7081, 0.0
    %vm7235 = vcmp.gt.f32.partialorder %v6892, 0.0
    %vm7236 = vcmp.gt.f32.partialorder %v6894, 0.0
    %vm7237 = vcmp.gt.f32.partialorder %v7085, 0.0
    %vm7238 = vcmp.gt.f32.partialorder %v7087, 0.0
    %vm7239 = vcmp.gt.f32.partialorder %v6896, 0.0
    %vm7240 = vcmp.gt.f32.partialorder %v6898, 0.0
    %vm7241 = vcmp.gt.f32.partialorder %v7089, 0.0
    %vm7242 = vcmp.gt.f32.partialorder %v7091, 0.0
    %vm7243 = vcmp.gt.f32.partialorder %v6902, 0.0
    %vm7244 = vcmp.gt.f32.partialorder %v6904, 0.0
    %vm7245 = vcmp.gt.f32.partialorder %v7095, 0.0
    %vm7246 = vcmp.gt.f32.partialorder %v7097, 0.0
    %vm7247 = vcmp.gt.f32.partialorder %v6906, 0.0
    %vm7248 = vcmp.gt.f32.partialorder %v6908, 0.0
    %vm7249 = vcmp.gt.f32.partialorder %v7099, 0.0
    %vm7250 = vcmp.gt.f32.partialorder %v7101, 0.0
    %vm7251 = vcmp.gt.f32.partialorder %v6912, 0.0
    %vm7252 = vcmp.gt.f32.partialorder %v6914, 0.0
    %vm7253 = vcmp.gt.f32.partialorder %v7105, 0.0
    %vm7254 = vcmp.gt.f32.partialorder %v7107, 0.0
    %vm7255 = vcmp.gt.f32.partialorder %v6916, 0.0
    %vm7256 = vcmp.gt.f32.partialorder %v6918, 0.0
    %vm7257 = vcmp.gt.f32.partialorder %v7109, 0.0
    %vm7258 = vcmp.gt.f32.partialorder %v7111, 0.0
    %vm7259 = vcmp.gt.f32.partialorder %v6922, 0.0
    %vm7260 = vcmp.gt.f32.partialorder %v6924, 0.0
    %vm7261 = vcmp.gt.f32.partialorder %v7115, 0.0
    %vm7262 = vcmp.gt.f32.partialorder %v7117, 0.0
    %vm7263 = vcmp.gt.f32.partialorder %v6926, 0.0
    %vm7264 = vcmp.gt.f32.partialorder %v6928, 0.0
    %vm7265 = vcmp.gt.f32.partialorder %v7119, 0.0
    %vm7266 = vcmp.gt.f32.partialorder %v7121, 0.0
    %vm7267 = vcmp.gt.f32.partialorder %v6932, 0.0
    %vm7268 = vcmp.gt.f32.partialorder %v6934, 0.0
    %vm7269 = vcmp.gt.f32.partialorder %v7125, 0.0
    %vm7270 = vcmp.gt.f32.partialorder %v7127, 0.0
    %vm7271 = vcmp.gt.f32.partialorder %v6936, 0.0
    %vm7272 = vcmp.gt.f32.partialorder %v6938, 0.0
    %vm7273 = vcmp.gt.f32.partialorder %v7129, 0.0
    %vm7274 = vcmp.gt.f32.partialorder %v7131, 0.0
    %vm7275 = vcmp.gt.f32.partialorder %v6942, 0.0
    %vm7276 = vcmp.gt.f32.partialorder %v6944, 0.0
    %vm7277 = vcmp.gt.f32.partialorder %v7135, 0.0
    %vm7278 = vcmp.gt.f32.partialorder %v7137, 0.0
    %vm7279 = vcmp.gt.f32.partialorder %v6946, 0.0
    %vm7280 = vcmp.gt.f32.partialorder %v6948, 0.0
    %vm7281 = vcmp.gt.f32.partialorder %v7139, 0.0
    %vm7282 = vcmp.gt.f32.partialorder %v7141, 0.0
    %vm7283 = vcmp.gt.f32.partialorder %v6952, 0.0
    %vm7284 = vcmp.gt.f32.partialorder %v6954, 0.0
    %vm7285 = vcmp.gt.f32.partialorder %v7145, 0.0
    %vm7286 = vcmp.gt.f32.partialorder %v7147, 0.0
    %vm7287 = vcmp.gt.f32.partialorder %v6956, 0.0
    %vm7288 = vcmp.gt.f32.partialorder %v6958, 0.0
    %vm7289 = vcmp.gt.f32.partialorder %v7149, 0.0
    %vm7290 = vcmp.gt.f32.partialorder %v7151, 0.0
    %vm7291 = vcmp.gt.f32.partialorder %v6962, 0.0
    %vm7292 = vcmp.gt.f32.partialorder %v6964, 0.0
    %vm7293 = vcmp.gt.f32.partialorder %v7155, 0.0
    %vm7294 = vcmp.gt.f32.partialorder %v7157, 0.0
    %vm7295 = vcmp.gt.f32.partialorder %v6966, 0.0
    %vm7296 = vcmp.gt.f32.partialorder %v6968, 0.0
    %vm7297 = vcmp.gt.f32.partialorder %v7159, 0.0
    %vm7298 = vcmp.gt.f32.partialorder %v7161, 0.0
    %vm7299 = vcmp.gt.f32.partialorder %v6972, 0.0
    %vm7300 = vcmp.gt.f32.partialorder %v6974, 0.0
    %vm7301 = vcmp.gt.f32.partialorder %v7165, 0.0
    %vm7302 = vcmp.gt.f32.partialorder %v7167, 0.0
    %vm7303 = vcmp.gt.f32.partialorder %v6976, 0.0
    %vm7304 = vcmp.gt.f32.partialorder %v6978, 0.0
    %vm7305 = vcmp.gt.f32.partialorder %v7169, 0.0
    %vm7306 = vcmp.gt.f32.partialorder %v7171, 0.0
    %vm7307 = vcmp.gt.f32.partialorder %v6982, 0.0
    %vm7308 = vcmp.gt.f32.partialorder %v6984, 0.0
    %vm7309 = vcmp.gt.f32.partialorder %v7175, 0.0
    %vm7310 = vcmp.gt.f32.partialorder %v7177, 0.0
    %vm7311 = vcmp.gt.f32.partialorder %v6986, 0.0
    %vm7312 = vcmp.gt.f32.partialorder %v6988, 0.0
    %vm7313 = vcmp.gt.f32.partialorder %v7179, 0.0
    %vm7314 = vcmp.gt.f32.partialorder %v7181, 0.0
    %vm7315 = vcmp.gt.f32.partialorder %v6992, 0.0
    %vm7316 = vcmp.gt.f32.partialorder %v6994, 0.0
    %vm7317 = vcmp.gt.f32.partialorder %v7185, 0.0
    %vm7318 = vcmp.gt.f32.partialorder %v7187, 0.0
    %vm7319 = vcmp.gt.f32.partialorder %v6996, 0.0
    %vm7320 = vcmp.gt.f32.partialorder %v6998, 0.0
    %vm7321 = vcmp.gt.f32.partialorder %v7189, 0.0
    %vm7322 = vcmp.gt.f32.partialorder %v7191, 0.0
    %vm7323 = vcmp.gt.f32.partialorder %v7002, 0.0
    %vm7324 = vcmp.gt.f32.partialorder %v7004, 0.0
    %vm7325 = vcmp.gt.f32.partialorder %v7195, 0.0
    %vm7326 = vcmp.gt.f32.partialorder %v7197, 0.0
    %vm7327 = vcmp.gt.f32.partialorder %v7006, 0.0
    %vm7328 = vcmp.gt.f32.partialorder %v7008, 0.0
    %vm7329 = vcmp.gt.f32.partialorder %v7199, 0.0
    %vm7330 = vcmp.gt.f32.partialorder %v7201, 0.0
    %v7331 = vmul.f32 %v6852, 0.01
    %v7332 = vmul.f32 %v6854, 0.01
    %v7333 = vmul.f32 %v7045, 0.01
    %v7334 = vmul.f32 %v7047, 0.01
    %v7335 = vmul.f32 %v6856, 0.01
    %v7336 = vmul.f32 %v6858, 0.01
    %v7337 = vmul.f32 %v7049, 0.01
    %v7338 = vmul.f32 %v7051, 0.01
    %v7339 = vmul.f32 %v6862, 0.01
    %v7340 = vmul.f32 %v6864, 0.01
    %v7341 = vmul.f32 %v7055, 0.01
    %v7342 = vmul.f32 %v7057, 0.01
    %v7343 = vmul.f32 %v6866, 0.01
    %v7344 = vmul.f32 %v6868, 0.01
    %v7345 = vmul.f32 %v7059, 0.01
    %v7346 = vmul.f32 %v7061, 0.01
    %v7347 = vmul.f32 %v6872, 0.01
    %v7348 = vmul.f32 %v6874, 0.01
    %v7349 = vmul.f32 %v7065, 0.01
    %v7350 = vmul.f32 %v7067, 0.01
    %v7351 = vmul.f32 %v6876, 0.01
    %v7352 = vmul.f32 %v6878, 0.01
    %v7353 = vmul.f32 %v7069, 0.01
    %v7354 = vmul.f32 %v7071, 0.01
    %v7355 = vmul.f32 %v6882, 0.01
    %v7356 = vmul.f32 %v6884, 0.01
    %v7357 = vmul.f32 %v7075, 0.01
    %v7358 = vmul.f32 %v7077, 0.01
    %v7359 = vmul.f32 %v6886, 0.01
    %v7360 = vmul.f32 %v6888, 0.01
    %v7361 = vmul.f32 %v7079, 0.01
    %v7362 = vmul.f32 %v7081, 0.01
    %v7363 = vmul.f32 %v6892, 0.01
    %v7364 = vmul.f32 %v6894, 0.01
    %v7365 = vmul.f32 %v7085, 0.01
    %v7366 = vmul.f32 %v7087, 0.01
    %v7367 = vmul.f32 %v6896, 0.01
    %v7368 = vmul.f32 %v6898, 0.01
    %v7369 = vmul.f32 %v7089, 0.01
    %v7370 = vmul.f32 %v7091, 0.01
    %v7371 = vmul.f32 %v6902, 0.01
    %v7372 = vmul.f32 %v6904, 0.01
    %v7373 = vmul.f32 %v7095, 0.01
    %v7374 = vmul.f32 %v7097, 0.01
    %v7375 = vmul.f32 %v6906, 0.01
    %v7376 = vmul.f32 %v6908, 0.01
    %v7377 = vmul.f32 %v7099, 0.01
    %v7378 = vmul.f32 %v7101, 0.01
    %v7379 = vmul.f32 %v6912, 0.01
    %v7380 = vmul.f32 %v6914, 0.01
    %v7381 = vmul.f32 %v7105, 0.01
    %v7382 = vmul.f32 %v7107, 0.01
    %v7383 = vmul.f32 %v6916, 0.01
    %v7384 = vmul.f32 %v6918, 0.01
    %v7385 = vmul.f32 %v7109, 0.01
    %v7386 = vmul.f32 %v7111, 0.01
    %v7387 = vmul.f32 %v6922, 0.01
    %v7388 = vmul.f32 %v6924, 0.01
    %v7389 = vmul.f32 %v7115, 0.01
    %v7390 = vmul.f32 %v7117, 0.01
    %v7391 = vmul.f32 %v6926, 0.01
    %v7392 = vmul.f32 %v6928, 0.01
    %v7393 = vmul.f32 %v7119, 0.01
    %v7394 = vmul.f32 %v7121, 0.01
    %v7395 = vmul.f32 %v6932, 0.01
    %v7396 = vmul.f32 %v6934, 0.01
    %v7397 = vmul.f32 %v7125, 0.01
    %v7398 = vmul.f32 %v7127, 0.01
    %v7399 = vmul.f32 %v6936, 0.01
    %v7400 = vmul.f32 %v6938, 0.01
    %v7401 = vmul.f32 %v7129, 0.01
    %v7402 = vmul.f32 %v7131, 0.01
    %v7403 = vmul.f32 %v6942, 0.01
    %v7404 = vmul.f32 %v6944, 0.01
    %v7405 = vmul.f32 %v7135, 0.01
    %v7406 = vmul.f32 %v7137, 0.01
    %v7407 = vmul.f32 %v6946, 0.01
    %v7408 = vmul.f32 %v6948, 0.01
    %v7409 = vmul.f32 %v7139, 0.01
    %v7410 = vmul.f32 %v7141, 0.01
    %v7411 = vmul.f32 %v6952, 0.01
    %v7412 = vmul.f32 %v6954, 0.01
    %v7413 = vmul.f32 %v7145, 0.01
    %v7414 = vmul.f32 %v7147, 0.01
    %v7415 = vmul.f32 %v6956, 0.01
    %v7416 = vmul.f32 %v6958, 0.01
    %v7417 = vmul.f32 %v7149, 0.01
    %v7418 = vmul.f32 %v7151, 0.01
    %v7419 = vmul.f32 %v6962, 0.01
    %v7420 = vmul.f32 %v6964, 0.01
    %v7421 = vmul.f32 %v7155, 0.01
    %v7422 = vmul.f32 %v7157, 0.01
    %v7423 = vmul.f32 %v6966, 0.01
    %v7424 = vmul.f32 %v6968, 0.01
    %v7425 = vmul.f32 %v7159, 0.01
    %v7426 = vmul.f32 %v7161, 0.01
    %v7427 = vmul.f32 %v6972, 0.01
    %v7428 = vmul.f32 %v6974, 0.01
    %v7429 = vmul.f32 %v7165, 0.01
    %v7430 = vmul.f32 %v7167, 0.01
    %v7431 = vmul.f32 %v6976, 0.01
    %v7432 = vmul.f32 %v6978, 0.01
    %v7433 = vmul.f32 %v7169, 0.01
    %v7434 = vmul.f32 %v7171, 0.01
    %v7435 = vmul.f32 %v6982, 0.01
    %v7436 = vmul.f32 %v6984, 0.01
    %v7437 = vmul.f32 %v7175, 0.01
    %v7438 = vmul.f32 %v7177, 0.01
    %v7439 = vmul.f32 %v6986, 0.01
    %v7440 = vmul.f32 %v6988, 0.01
    %v7441 = vmul.f32 %v7179, 0.01
    %v7442 = vmul.f32 %v7181, 0.01
    %v7443 = vmul.f32 %v6992, 0.01
    %v7444 = vmul.f32 %v6994, 0.01
    %v7445 = vmul.f32 %v7185, 0.01
    %v7446 = vmul.f32 %v7187, 0.01
    %v7447 = vmul.f32 %v6996, 0.01
    %v7448 = vmul.f32 %v6998, 0.01
    %v7449 = vmul.f32 %v7189, 0.01
    %v7450 = vmul.f32 %v7191, 0.01
    %v7451 = vmul.f32 %v7002, 0.01
    %v7452 = vmul.f32 %v7004, 0.01
    %v7453 = vmul.f32 %v7195, 0.01
    %v7454 = vmul.f32 %v7197, 0.01
    %v7455 = vmul.f32 %v7006, 0.01
    %v7456 = vmul.f32 %v7008, 0.01
    %v7457 = vmul.f32 %v7199, 0.01
    %v7458 = vmul.f32 %v7201, 0.01
    %v7459 = vsel %vm7203, %v6852, %v7331
    %v7460 = vsel %vm7204, %v6854, %v7332
    %v7461 = vsel %vm7205, %v7045, %v7333
    %v7462 = vsel %vm7206, %v7047, %v7334
    %v7463 = vsel %vm7207, %v6856, %v7335
    %v7464 = vsel %vm7208, %v6858, %v7336
    %v7465 = vsel %vm7209, %v7049, %v7337
    %v7466 = vsel %vm7210, %v7051, %v7338
    %v7467 = vsel %vm7211, %v6862, %v7339
    %v7468 = vsel %vm7212, %v6864, %v7340
    %v7469 = vsel %vm7213, %v7055, %v7341
    %v7470 = vsel %vm7214, %v7057, %v7342
    %v7471 = vsel %vm7215, %v6866, %v7343
    %v7472 = vsel %vm7216, %v6868, %v7344
    %v7473 = vsel %vm7217, %v7059, %v7345
    %v7474 = vsel %vm7218, %v7061, %v7346
    %v7475 = vsel %vm7219, %v6872, %v7347
    %v7476 = vsel %vm7220, %v6874, %v7348
    %v7477 = vsel %vm7221, %v7065, %v7349
    %v7478 = vsel %vm7222, %v7067, %v7350
    %v7479 = vsel %vm7223, %v6876, %v7351
    %v7480 = vsel %vm7224, %v6878, %v7352
    %v7481 = vsel %vm7225, %v7069, %v7353
    %v7482 = vsel %vm7226, %v7071, %v7354
    %v7483 = vsel %vm7227, %v6882, %v7355
    %v7484 = vsel %vm7228, %v6884, %v7356
    %v7485 = vsel %vm7229, %v7075, %v7357
    %v7486 = vsel %vm7230, %v7077, %v7358
    %v7487 = vsel %vm7231, %v6886, %v7359
    %v7488 = vsel %vm7232, %v6888, %v7360
    %v7489 = vsel %vm7233, %v7079, %v7361
    %v7490 = vsel %vm7234, %v7081, %v7362
    %v7491 = vsel %vm7235, %v6892, %v7363
    %v7492 = vsel %vm7236, %v6894, %v7364
    %v7493 = vsel %vm7237, %v7085, %v7365
    %v7494 = vsel %vm7238, %v7087, %v7366
    %v7495 = vsel %vm7239, %v6896, %v7367
    %v7496 = vsel %vm7240, %v6898, %v7368
    %v7497 = vsel %vm7241, %v7089, %v7369
    %v7498 = vsel %vm7242, %v7091, %v7370
    %v7499 = vsel %vm7243, %v6902, %v7371
    %v7500 = vsel %vm7244, %v6904, %v7372
    %v7501 = vsel %vm7245, %v7095, %v7373
    %v7502 = vsel %vm7246, %v7097, %v7374
    %v7503 = vsel %vm7247, %v6906, %v7375
    %v7504 = vsel %vm7248, %v6908, %v7376
    %v7505 = vsel %vm7249, %v7099, %v7377
    %v7506 = vsel %vm7250, %v7101, %v7378
    %v7507 = vsel %vm7251, %v6912, %v7379
    %v7508 = vsel %vm7252, %v6914, %v7380
    %v7509 = vsel %vm7253, %v7105, %v7381
    %v7510 = vsel %vm7254, %v7107, %v7382
    %v7511 = vsel %vm7255, %v6916, %v7383
    %v7512 = vsel %vm7256, %v6918, %v7384
    %v7513 = vsel %vm7257, %v7109, %v7385
    %v7514 = vsel %vm7258, %v7111, %v7386
    %v7515 = vsel %vm7259, %v6922, %v7387
    %v7516 = vsel %vm7260, %v6924, %v7388
    %v7517 = vsel %vm7261, %v7115, %v7389
    %v7518 = vsel %vm7262, %v7117, %v7390
    %v7519 = vsel %vm7263, %v6926, %v7391
    %v7520 = vsel %vm7264, %v6928, %v7392
    %v7521 = vsel %vm7265, %v7119, %v7393
    %v7522 = vsel %vm7266, %v7121, %v7394
    %v7523 = vsel %vm7267, %v6932, %v7395
    %v7524 = vsel %vm7268, %v6934, %v7396
    %v7525 = vsel %vm7269, %v7125, %v7397
    %v7526 = vsel %vm7270, %v7127, %v7398
    %v7527 = vsel %vm7271, %v6936, %v7399
    %v7528 = vsel %vm7272, %v6938, %v7400
    %v7529 = vsel %vm7273, %v7129, %v7401
    %v7530 = vsel %vm7274, %v7131, %v7402
    %v7531 = vsel %vm7275, %v6942, %v7403
    %v7532 = vsel %vm7276, %v6944, %v7404
    %v7533 = vsel %vm7277, %v7135, %v7405
    %v7534 = vsel %vm7278, %v7137, %v7406
    %v7535 = vsel %vm7279, %v6946, %v7407
    %v7536 = vsel %vm7280, %v6948, %v7408
    %v7537 = vsel %vm7281, %v7139, %v7409
    %v7538 = vsel %vm7282, %v7141, %v7410
    %v7539 = vsel %vm7283, %v6952, %v7411
    %v7540 = vsel %vm7284, %v6954, %v7412
    %v7541 = vsel %vm7285, %v7145, %v7413
    %v7542 = vsel %vm7286, %v7147, %v7414
    %v7543 = vsel %vm7287, %v6956, %v7415
    %v7544 = vsel %vm7288, %v6958, %v7416
    %v7545 = vsel %vm7289, %v7149, %v7417
    %v7546 = vsel %vm7290, %v7151, %v7418
    %v7547 = vsel %vm7291, %v6962, %v7419
    %v7548 = vsel %vm7292, %v6964, %v7420
    %v7549 = vsel %vm7293, %v7155, %v7421
    %v7550 = vsel %vm7294, %v7157, %v7422
    %v7551 = vsel %vm7295, %v6966, %v7423
    %v7552 = vsel %vm7296, %v6968, %v7424
    %v7553 = vsel %vm7297, %v7159, %v7425
    %v7554 = vsel %vm7298, %v7161, %v7426
    %v7555 = vsel %vm7299, %v6972, %v7427
    %v7556 = vsel %vm7300, %v6974, %v7428
    %v7557 = vsel %vm7301, %v7165, %v7429
    %v7558 = vsel %vm7302, %v7167, %v7430
    %v7559 = vsel %vm7303, %v6976, %v7431
    %v7560 = vsel %vm7304, %v6978, %v7432
    %v7561 = vsel %vm7305, %v7169, %v7433
    %v7562 = vsel %vm7306, %v7171, %v7434
    %v7563 = vsel %vm7307, %v6982, %v7435
    %v7564 = vsel %vm7308, %v6984, %v7436
    %v7565 = vsel %vm7309, %v7175, %v7437
    %v7566 = vsel %vm7310, %v7177, %v7438
    %v7567 = vsel %vm7311, %v6986, %v7439
    %v7568 = vsel %vm7312, %v6988, %v7440
    %v7569 = vsel %vm7313, %v7179, %v7441
    %v7570 = vsel %vm7314, %v7181, %v7442
    %v7571 = vsel %vm7315, %v6992, %v7443
    %v7572 = vsel %vm7316, %v6994, %v7444
    %v7573 = vsel %vm7317, %v7185, %v7445
    %v7574 = vsel %vm7318, %v7187, %v7446
    %v7575 = vsel %vm7319, %v6996, %v7447
    %v7576 = vsel %vm7320, %v6998, %v7448
    %v7577 = vsel %vm7321, %v7189, %v7449
    %v7578 = vsel %vm7322, %v7191, %v7450
    %v7579 = vsel %vm7323, %v7002, %v7451
    %v7580 = vsel %vm7324, %v7004, %v7452
    %v7581 = vsel %vm7325, %v7195, %v7453
    %v7582 = vsel %vm7326, %v7197, %v7454
    %v7583 = vsel %vm7327, %v7006, %v7455
    %v7584 = vsel %vm7328, %v7008, %v7456
    %v7585 = vsel %vm7329, %v7199, %v7457
    %v7586 = vsel %vm7330, %v7201, %v7458
    %v7587 = vpack.c.bf16 %v7463, %v7459
    %v7588 = vpack.c.bf16 %v7464, %v7460
    %v7589 = vpack.c.bf16 %v7465, %v7461
    %v7590 = vpack.c.bf16 %v7466, %v7462
    %v7591 = vpack.c.bf16 %v7471, %v7467
    %v7592 = vpack.c.bf16 %v7472, %v7468
    %v7593 = vpack.c.bf16 %v7473, %v7469
    %v7594 = vpack.c.bf16 %v7474, %v7470
    %v7595 = vpack.c.bf16 %v7479, %v7475
    %v7596 = vpack.c.bf16 %v7480, %v7476
    %v7597 = vpack.c.bf16 %v7481, %v7477
    %v7598 = vpack.c.bf16 %v7482, %v7478
    %v7599 = vpack.c.bf16 %v7487, %v7483
    %v7600 = vpack.c.bf16 %v7488, %v7484
    %v7601 = vpack.c.bf16 %v7489, %v7485
    %v7602 = vpack.c.bf16 %v7490, %v7486
    %v7603 = vpack.c.bf16 %v7495, %v7491
    %v7604 = vpack.c.bf16 %v7496, %v7492
    %v7605 = vpack.c.bf16 %v7497, %v7493
    %v7606 = vpack.c.bf16 %v7498, %v7494
    %v7607 = vpack.c.bf16 %v7503, %v7499
    %v7608 = vpack.c.bf16 %v7504, %v7500
    %v7609 = vpack.c.bf16 %v7505, %v7501
    %v7610 = vpack.c.bf16 %v7506, %v7502
    %v7611 = vpack.c.bf16 %v7511, %v7507
    %v7612 = vpack.c.bf16 %v7512, %v7508
    %v7613 = vpack.c.bf16 %v7513, %v7509
    %v7614 = vpack.c.bf16 %v7514, %v7510
    %v7615 = vpack.c.bf16 %v7519, %v7515
    %v7616 = vpack.c.bf16 %v7520, %v7516
    %v7617 = vpack.c.bf16 %v7521, %v7517
    %v7618 = vpack.c.bf16 %v7522, %v7518
    %v7619 = vpack.c.bf16 %v7527, %v7523
    %v7620 = vpack.c.bf16 %v7528, %v7524
    %v7621 = vpack.c.bf16 %v7529, %v7525
    %v7622 = vpack.c.bf16 %v7530, %v7526
    %v7623 = vpack.c.bf16 %v7535, %v7531
    %v7624 = vpack.c.bf16 %v7536, %v7532
    %v7625 = vpack.c.bf16 %v7537, %v7533
    %v7626 = vpack.c.bf16 %v7538, %v7534
    %v7627 = vpack.c.bf16 %v7543, %v7539
    %v7628 = vpack.c.bf16 %v7544, %v7540
    %v7629 = vpack.c.bf16 %v7545, %v7541
    %v7630 = vpack.c.bf16 %v7546, %v7542
    %v7631 = vpack.c.bf16 %v7551, %v7547
    %v7632 = vpack.c.bf16 %v7552, %v7548
    %v7633 = vpack.c.bf16 %v7553, %v7549
    %v7634 = vpack.c.bf16 %v7554, %v7550
    %v7635 = vpack.c.bf16 %v7559, %v7555
    %v7636 = vpack.c.bf16 %v7560, %v7556
    %v7637 = vpack.c.bf16 %v7561, %v7557
    %v7638 = vpack.c.bf16 %v7562, %v7558
    %v7639 = vpack.c.bf16 %v7567, %v7563
    %v7640 = vpack.c.bf16 %v7568, %v7564
    %v7641 = vpack.c.bf16 %v7569, %v7565
    %v7642 = vpack.c.bf16 %v7570, %v7566
    %v7643 = vpack.c.bf16 %v7575, %v7571
    %v7644 = vpack.c.bf16 %v7576, %v7572
    %v7645 = vpack.c.bf16 %v7577, %v7573
    %v7646 = vpack.c.bf16 %v7578, %v7574
    %v7647 = vpack.c.bf16 %v7583, %v7579
    %v7648 = vpack.c.bf16 %v7584, %v7580
    %v7649 = vpack.c.bf16 %v7585, %v7581
    %v7650 = vpack.c.bf16 %v7586, %v7582
    %7651 = vmatprep.subr.bf16.mxu0 %v7616
    %7652 = vmatpush1.bf16.msra.mxu0 %v7615
    %7653 = vmatprep.subr.bf16.mxu0 %v7612
    %7654 = vmatpush1.bf16.msra.mxu0 %v7611
    %7655 = vmatprep.subr.bf16.mxu0 %v7608
    %7656 = vmatpush1.bf16.msra.mxu0 %v7607
    %7657 = vmatprep.subr.bf16.mxu0 %v7604
    %7658 = vmatpush1.bf16.msra.mxu0 %v7603
    %7659 = vmatprep.subr.bf16.mxu0 %v7600
    %7660 = vmatpush1.bf16.msra.mxu0 %v7599
    %7661 = vmatprep.subr.bf16.mxu0 %v7596
    %7662 = vmatpush1.bf16.msra.mxu0 %v7595
    %7663 = vmatprep.subr.bf16.mxu0 %v7592
    %7664 = vmatpush1.bf16.msra.mxu0 %v7591
    %7665 = vmatprep.subr.bf16.mxu0 %v7588
    %7666 = vmatpush1.bf16.msra.mxu0 %v7587
    %7667 = vmatprep.subr.bf16.mxu0 %v7648
    %7668 = vmatpush2.bf16.msra.mxu0 %v7647
    %7669 = vmatprep.subr.bf16.mxu0 %v7644
    %7670 = vmatpush2.bf16.msra.mxu0 %v7643
    %7671 = vmatprep.subr.bf16.mxu0 %v7640
    %7672 = vmatpush2.bf16.msra.mxu0 %v7639
    %7673 = vmatprep.subr.bf16.mxu0 %v7636
    %7674 = vmatpush2.bf16.msra.mxu0 %v7635
    %7675 = vmatprep.subr.bf16.mxu0 %v7632
    %7676 = vmatpush2.bf16.msra.mxu0 %v7631
    %7677 = vmatprep.subr.bf16.mxu0 %v7628
    %7678 = vmatpush2.bf16.msra.mxu0 %v7627
    %7679 = vmatprep.subr.bf16.mxu0 %v7624
    %7680 = vmatpush2.bf16.msra.mxu0 %v7623
    %7681 = vmatprep.subr.bf16.mxu0 %v7620
    %7682 = vmatpush2.bf16.msra.mxu0 %v7619
    %7683 = vmatprep.mubr.bf16.mxu0 %v3941
    %7684 = vmatmul.mubr.bf16.gmra.mxu0 %v3940
    %v7685 = vpop.f32.mrf.mxu0
    %v7686 = vadd.f32 %v3687, %v7685
    %v7687 = vpop.f32.mrf.mxu0
    %v7688 = vadd.f32 %v3687, %v7687
    %v7689 = vpop.f32.mrf.mxu0
    %v7690 = vadd.f32 %v3692, %v7689
    %v7691 = vpop.f32.mrf.mxu0
    %v7692 = vadd.f32 %v3692, %v7691
    %7693 = vmatprep.mubr.bf16.mxu0 %v3943
    %7694 = vmatmul.mubr.bf16.gmra.mxu0 %v3942
    %v7695 = vpop.f32.mrf.mxu0
    %v7696 = vadd.f32 %v3697, %v7695
    %v7697 = vpop.f32.mrf.mxu0
    %v7698 = vadd.f32 %v3697, %v7697
    %v7699 = vpop.f32.mrf.mxu0
    %v7700 = vadd.f32 %v3702, %v7699
    %v7701 = vpop.f32.mrf.mxu0
    %v7702 = vadd.f32 %v3702, %v7701
    %7703 = vmatprep.mubr.bf16.mxu0 %v3945
    %7704 = vmatmul.mubr.bf16.gmra.mxu0 %v3944
    %v7705 = vpop.f32.mrf.mxu0
    %v7706 = vadd.f32 %v3707, %v7705
    %v7707 = vpop.f32.mrf.mxu0
    %v7708 = vadd.f32 %v3707, %v7707
    %v7709 = vpop.f32.mrf.mxu0
    %v7710 = vadd.f32 %v3712, %v7709
    %v7711 = vpop.f32.mrf.mxu0
    %v7712 = vadd.f32 %v3712, %v7711
    %7713 = vmatprep.mubr.bf16.mxu0 %v3947
    %7714 = vmatmul.mubr.bf16.gmra.mxu0 %v3946
    %v7715 = vpop.f32.mrf.mxu0
    %v7716 = vadd.f32 %v3717, %v7715
    %v7717 = vpop.f32.mrf.mxu0
    %v7718 = vadd.f32 %v3717, %v7717
    %v7719 = vpop.f32.mrf.mxu0
    %v7720 = vadd.f32 %v3722, %v7719
    %v7721 = vpop.f32.mrf.mxu0
    %v7722 = vadd.f32 %v3722, %v7721
    %7723 = vmatprep.mubr.bf16.mxu0 %v3949
    %7724 = vmatmul.mubr.bf16.gmra.mxu0 %v3948
    %v7725 = vpop.f32.mrf.mxu0
    %v7726 = vadd.f32 %v3727, %v7725
    %v7727 = vpop.f32.mrf.mxu0
    %v7728 = vadd.f32 %v3727, %v7727
    %v7729 = vpop.f32.mrf.mxu0
    %v7730 = vadd.f32 %v3732, %v7729
    %v7731 = vpop.f32.mrf.mxu0
    %v7732 = vadd.f32 %v3732, %v7731
    %7733 = vmatprep.mubr.bf16.mxu0 %v3951
    %7734 = vmatmul.mubr.bf16.gmra.mxu0 %v3950
    %v7735 = vpop.f32.mrf.mxu0
    %v7736 = vadd.f32 %v3737, %v7735
    %v7737 = vpop.f32.mrf.mxu0
    %v7738 = vadd.f32 %v3737, %v7737
    %v7739 = vpop.f32.mrf.mxu0
    %v7740 = vadd.f32 %v3742, %v7739
    %v7741 = vpop.f32.mrf.mxu0
    %v7742 = vadd.f32 %v3742, %v7741
    %7743 = vmatprep.mubr.bf16.mxu0 %v3953
    %7744 = vmatmul.mubr.bf16.gmra.mxu0 %v3952
    %v7745 = vpop.f32.mrf.mxu0
    %v7746 = vadd.f32 %v3747, %v7745
    %v7747 = vpop.f32.mrf.mxu0
    %v7748 = vadd.f32 %v3747, %v7747
    %v7749 = vpop.f32.mrf.mxu0
    %v7750 = vadd.f32 %v3752, %v7749
    %v7751 = vpop.f32.mrf.mxu0
    %v7752 = vadd.f32 %v3752, %v7751
    %7753 = vmatprep.mubr.bf16.mxu0 %v3955
    %7754 = vmatmul.mubr.bf16.gmra.mxu0 %v3954
    %v7755 = vpop.f32.mrf.mxu0
    %v7756 = vadd.f32 %v3757, %v7755
    %v7757 = vpop.f32.mrf.mxu0
    %v7758 = vadd.f32 %v3757, %v7757
    %v7759 = vpop.f32.mrf.mxu0
    %v7760 = vadd.f32 %v3762, %v7759
    %v7761 = vpop.f32.mrf.mxu0
    %v7762 = vadd.f32 %v3762, %v7761
    %7763 = vmatprep.mubr.bf16.mxu0 %v3957
    %7764 = vmatmul.mubr.bf16.gmra.mxu0 %v3956
    %v7765 = vpop.f32.mrf.mxu0
    %v7766 = vadd.f32 %v3767, %v7765
    %v7767 = vpop.f32.mrf.mxu0
    %v7768 = vadd.f32 %v3767, %v7767
    %v7769 = vpop.f32.mrf.mxu0
    %v7770 = vadd.f32 %v3772, %v7769
    %v7771 = vpop.f32.mrf.mxu0
    %v7772 = vadd.f32 %v3772, %v7771
    %7773 = vmatprep.mubr.bf16.mxu0 %v3959
    %7774 = vmatmul.mubr.bf16.gmra.mxu0 %v3958
    %v7775 = vpop.f32.mrf.mxu0
    %v7776 = vadd.f32 %v3777, %v7775
    %v7777 = vpop.f32.mrf.mxu0
    %v7778 = vadd.f32 %v3777, %v7777
    %v7779 = vpop.f32.mrf.mxu0
    %v7780 = vadd.f32 %v3782, %v7779
    %v7781 = vpop.f32.mrf.mxu0
    %v7782 = vadd.f32 %v3782, %v7781
    %7783 = vmatprep.mubr.bf16.mxu0 %v3961
    %7784 = vmatmul.mubr.bf16.gmra.mxu0 %v3960
    %v7785 = vpop.f32.mrf.mxu0
    %v7786 = vadd.f32 %v3787, %v7785
    %v7787 = vpop.f32.mrf.mxu0
    %v7788 = vadd.f32 %v3787, %v7787
    %v7789 = vpop.f32.mrf.mxu0
    %v7790 = vadd.f32 %v3792, %v7789
    %v7791 = vpop.f32.mrf.mxu0
    %v7792 = vadd.f32 %v3792, %v7791
    %7793 = vmatprep.mubr.bf16.mxu0 %v3963
    %7794 = vmatmul.mubr.bf16.gmra.mxu0 %v3962
    %v7795 = vpop.f32.mrf.mxu0
    %v7796 = vadd.f32 %v3797, %v7795
    %v7797 = vpop.f32.mrf.mxu0
    %v7798 = vadd.f32 %v3797, %v7797
    %v7799 = vpop.f32.mrf.mxu0
    %v7800 = vadd.f32 %v3802, %v7799
    %v7801 = vpop.f32.mrf.mxu0
    %v7802 = vadd.f32 %v3802, %v7801
    %7803 = vmatprep.mubr.bf16.mxu0 %v3965
    %7804 = vmatmul.mubr.bf16.gmra.mxu0 %v3964
    %v7805 = vpop.f32.mrf.mxu0
    %v7806 = vadd.f32 %v3807, %v7805
    %v7807 = vpop.f32.mrf.mxu0
    %v7808 = vadd.f32 %v3807, %v7807
    %v7809 = vpop.f32.mrf.mxu0
    %v7810 = vadd.f32 %v3812, %v7809
    %v7811 = vpop.f32.mrf.mxu0
    %v7812 = vadd.f32 %v3812, %v7811
    %7813 = vmatprep.mubr.bf16.mxu0 %v3967
    %7814 = vmatmul.mubr.bf16.gmra.mxu0 %v3966
    %v7815 = vpop.f32.mrf.mxu0
    %v7816 = vadd.f32 %v3817, %v7815
    %v7817 = vpop.f32.mrf.mxu0
    %v7818 = vadd.f32 %v3817, %v7817
    %v7819 = vpop.f32.mrf.mxu0
    %v7820 = vadd.f32 %v3822, %v7819
    %v7821 = vpop.f32.mrf.mxu0
    %v7822 = vadd.f32 %v3822, %v7821
    %7823 = vmatprep.mubr.bf16.mxu0 %v3969
    %7824 = vmatmul.mubr.bf16.gmra.mxu0 %v3968
    %v7825 = vpop.f32.mrf.mxu0
    %v7826 = vadd.f32 %v3827, %v7825
    %v7827 = vpop.f32.mrf.mxu0
    %v7828 = vadd.f32 %v3827, %v7827
    %v7829 = vpop.f32.mrf.mxu0
    %v7830 = vadd.f32 %v3832, %v7829
    %v7831 = vpop.f32.mrf.mxu0
    %v7832 = vadd.f32 %v3832, %v7831
    %7833 = vmatprep.mubr.bf16.mxu0 %v3971
    %7834 = vmatmul.mubr.bf16.gmra.mxu0 %v3970
    %v7835 = vpop.f32.mrf.mxu0
    %v7836 = vadd.f32 %v3837, %v7835
    %v7837 = vpop.f32.mrf.mxu0
    %v7838 = vadd.f32 %v3837, %v7837
    %v7839 = vpop.f32.mrf.mxu0
    %v7840 = vadd.f32 %v3842, %v7839
    %v7841 = vpop.f32.mrf.mxu0
    %v7842 = vadd.f32 %v3842, %v7841
    %7843 = vdwg.mxu0
    %7844 = vmatprep.subr.bf16.mxu0 %v7618
    %7845 = vmatpush1.bf16.msra.mxu0 %v7617
    %7846 = vmatprep.subr.bf16.mxu0 %v7614
    %7847 = vmatpush1.bf16.msra.mxu0 %v7613
    %7848 = vmatprep.subr.bf16.mxu0 %v7610
    %7849 = vmatpush1.bf16.msra.mxu0 %v7609
    %7850 = vmatprep.subr.bf16.mxu0 %v7606
    %7851 = vmatpush1.bf16.msra.mxu0 %v7605
    %7852 = vmatprep.subr.bf16.mxu0 %v7602
    %7853 = vmatpush1.bf16.msra.mxu0 %v7601
    %7854 = vmatprep.subr.bf16.mxu0 %v7598
    %7855 = vmatpush1.bf16.msra.mxu0 %v7597
    %7856 = vmatprep.subr.bf16.mxu0 %v7594
    %7857 = vmatpush1.bf16.msra.mxu0 %v7593
    %7858 = vmatprep.subr.bf16.mxu0 %v7590
    %7859 = vmatpush1.bf16.msra.mxu0 %v7589
    %7860 = vmatprep.subr.bf16.mxu0 %v7650
    %7861 = vmatpush2.bf16.msra.mxu0 %v7649
    %7862 = vmatprep.subr.bf16.mxu0 %v7646
    %7863 = vmatpush2.bf16.msra.mxu0 %v7645
    %7864 = vmatprep.subr.bf16.mxu0 %v7642
    %7865 = vmatpush2.bf16.msra.mxu0 %v7641
    %7866 = vmatprep.subr.bf16.mxu0 %v7638
    %7867 = vmatpush2.bf16.msra.mxu0 %v7637
    %7868 = vmatprep.subr.bf16.mxu0 %v7634
    %7869 = vmatpush2.bf16.msra.mxu0 %v7633
    %7870 = vmatprep.subr.bf16.mxu0 %v7630
    %7871 = vmatpush2.bf16.msra.mxu0 %v7629
    %7872 = vmatprep.subr.bf16.mxu0 %v7626
    %7873 = vmatpush2.bf16.msra.mxu0 %v7625
    %7874 = vmatprep.subr.bf16.mxu0 %v7622
    %7875 = vmatpush2.bf16.msra.mxu0 %v7621
    %7876 = vmatprep.mubr.bf16.mxu0 %v3941
    %7877 = vmatmul.mubr.bf16.gmra.mxu0 %v3940
    %v7878 = vpop.f32.mrf.mxu0
    %v7879 = vadd.f32 %v3687, %v7878
    %v7880 = vpop.f32.mrf.mxu0
    %v7881 = vadd.f32 %v3687, %v7880
    %v7882 = vpop.f32.mrf.mxu0
    %v7883 = vadd.f32 %v3692, %v7882
    %v7884 = vpop.f32.mrf.mxu0
    %v7885 = vadd.f32 %v3692, %v7884
    %7886 = vmatprep.mubr.bf16.mxu0 %v3943
    %7887 = vmatmul.mubr.bf16.gmra.mxu0 %v3942
    %v7888 = vpop.f32.mrf.mxu0
    %v7889 = vadd.f32 %v3697, %v7888
    %v7890 = vpop.f32.mrf.mxu0
    %v7891 = vadd.f32 %v3697, %v7890
    %v7892 = vpop.f32.mrf.mxu0
    %v7893 = vadd.f32 %v3702, %v7892
    %v7894 = vpop.f32.mrf.mxu0
    %v7895 = vadd.f32 %v3702, %v7894
    %7896 = vmatprep.mubr.bf16.mxu0 %v3945
    %7897 = vmatmul.mubr.bf16.gmra.mxu0 %v3944
    %v7898 = vpop.f32.mrf.mxu0
    %v7899 = vadd.f32 %v3707, %v7898
    %v7900 = vpop.f32.mrf.mxu0
    %v7901 = vadd.f32 %v3707, %v7900
    %v7902 = vpop.f32.mrf.mxu0
    %v7903 = vadd.f32 %v3712, %v7902
    %v7904 = vpop.f32.mrf.mxu0
    %v7905 = vadd.f32 %v3712, %v7904
    %7906 = vmatprep.mubr.bf16.mxu0 %v3947
    %7907 = vmatmul.mubr.bf16.gmra.mxu0 %v3946
    %v7908 = vpop.f32.mrf.mxu0
    %v7909 = vadd.f32 %v3717, %v7908
    %v7910 = vpop.f32.mrf.mxu0
    %v7911 = vadd.f32 %v3717, %v7910
    %v7912 = vpop.f32.mrf.mxu0
    %v7913 = vadd.f32 %v3722, %v7912
    %v7914 = vpop.f32.mrf.mxu0
    %v7915 = vadd.f32 %v3722, %v7914
    %7916 = vmatprep.mubr.bf16.mxu0 %v3949
    %7917 = vmatmul.mubr.bf16.gmra.mxu0 %v3948
    %v7918 = vpop.f32.mrf.mxu0
    %v7919 = vadd.f32 %v3727, %v7918
    %v7920 = vpop.f32.mrf.mxu0
    %v7921 = vadd.f32 %v3727, %v7920
    %v7922 = vpop.f32.mrf.mxu0
    %v7923 = vadd.f32 %v3732, %v7922
    %v7924 = vpop.f32.mrf.mxu0
    %v7925 = vadd.f32 %v3732, %v7924
    %7926 = vmatprep.mubr.bf16.mxu0 %v3951
    %7927 = vmatmul.mubr.bf16.gmra.mxu0 %v3950
    %v7928 = vpop.f32.mrf.mxu0
    %v7929 = vadd.f32 %v3737, %v7928
    %v7930 = vpop.f32.mrf.mxu0
    %v7931 = vadd.f32 %v3737, %v7930
    %v7932 = vpop.f32.mrf.mxu0
    %v7933 = vadd.f32 %v3742, %v7932
    %v7934 = vpop.f32.mrf.mxu0
    %v7935 = vadd.f32 %v3742, %v7934
    %7936 = vmatprep.mubr.bf16.mxu0 %v3953
    %7937 = vmatmul.mubr.bf16.gmra.mxu0 %v3952
    %v7938 = vpop.f32.mrf.mxu0
    %v7939 = vadd.f32 %v3747, %v7938
    %v7940 = vpop.f32.mrf.mxu0
    %v7941 = vadd.f32 %v3747, %v7940
    %v7942 = vpop.f32.mrf.mxu0
    %v7943 = vadd.f32 %v3752, %v7942
    %v7944 = vpop.f32.mrf.mxu0
    %v7945 = vadd.f32 %v3752, %v7944
    %7946 = vmatprep.mubr.bf16.mxu0 %v3955
    %7947 = vmatmul.mubr.bf16.gmra.mxu0 %v3954
    %v7948 = vpop.f32.mrf.mxu0
    %v7949 = vadd.f32 %v3757, %v7948
    %v7950 = vpop.f32.mrf.mxu0
    %v7951 = vadd.f32 %v3757, %v7950
    %v7952 = vpop.f32.mrf.mxu0
    %v7953 = vadd.f32 %v3762, %v7952
    %v7954 = vpop.f32.mrf.mxu0
    %v7955 = vadd.f32 %v3762, %v7954
    %7956 = vmatprep.mubr.bf16.mxu0 %v3957
    %7957 = vmatmul.mubr.bf16.gmra.mxu0 %v3956
    %v7958 = vpop.f32.mrf.mxu0
    %v7959 = vadd.f32 %v3767, %v7958
    %v7960 = vpop.f32.mrf.mxu0
    %v7961 = vadd.f32 %v3767, %v7960
    %v7962 = vpop.f32.mrf.mxu0
    %v7963 = vadd.f32 %v3772, %v7962
    %v7964 = vpop.f32.mrf.mxu0
    %v7965 = vadd.f32 %v3772, %v7964
    %7966 = vmatprep.mubr.bf16.mxu0 %v3959
    %7967 = vmatmul.mubr.bf16.gmra.mxu0 %v3958
    %v7968 = vpop.f32.mrf.mxu0
    %v7969 = vadd.f32 %v3777, %v7968
    %v7970 = vpop.f32.mrf.mxu0
    %v7971 = vadd.f32 %v3777, %v7970
    %v7972 = vpop.f32.mrf.mxu0
    %v7973 = vadd.f32 %v3782, %v7972
    %v7974 = vpop.f32.mrf.mxu0
    %v7975 = vadd.f32 %v3782, %v7974
    %7976 = vmatprep.mubr.bf16.mxu0 %v3961
    %7977 = vmatmul.mubr.bf16.gmra.mxu0 %v3960
    %v7978 = vpop.f32.mrf.mxu0
    %v7979 = vadd.f32 %v3787, %v7978
    %v7980 = vpop.f32.mrf.mxu0
    %v7981 = vadd.f32 %v3787, %v7980
    %v7982 = vpop.f32.mrf.mxu0
    %v7983 = vadd.f32 %v3792, %v7982
    %v7984 = vpop.f32.mrf.mxu0
    %v7985 = vadd.f32 %v3792, %v7984
    %7986 = vmatprep.mubr.bf16.mxu0 %v3963
    %7987 = vmatmul.mubr.bf16.gmra.mxu0 %v3962
    %v7988 = vpop.f32.mrf.mxu0
    %v7989 = vadd.f32 %v3797, %v7988
    %v7990 = vpop.f32.mrf.mxu0
    %v7991 = vadd.f32 %v3797, %v7990
    %v7992 = vpop.f32.mrf.mxu0
    %v7993 = vadd.f32 %v3802, %v7992
    %v7994 = vpop.f32.mrf.mxu0
    %v7995 = vadd.f32 %v3802, %v7994
    %7996 = vmatprep.mubr.bf16.mxu0 %v3965
    %7997 = vmatmul.mubr.bf16.gmra.mxu0 %v3964
    %v7998 = vpop.f32.mrf.mxu0
    %v7999 = vadd.f32 %v3807, %v7998
    %v8000 = vpop.f32.mrf.mxu0
    %v8001 = vadd.f32 %v3807, %v8000
    %v8002 = vpop.f32.mrf.mxu0
    %v8003 = vadd.f32 %v3812, %v8002
    %v8004 = vpop.f32.mrf.mxu0
    %v8005 = vadd.f32 %v3812, %v8004
    %8006 = vmatprep.mubr.bf16.mxu0 %v3967
    %8007 = vmatmul.mubr.bf16.gmra.mxu0 %v3966
    %v8008 = vpop.f32.mrf.mxu0
    %v8009 = vadd.f32 %v3817, %v8008
    %v8010 = vpop.f32.mrf.mxu0
    %v8011 = vadd.f32 %v3817, %v8010
    %v8012 = vpop.f32.mrf.mxu0
    %v8013 = vadd.f32 %v3822, %v8012
    %v8014 = vpop.f32.mrf.mxu0
    %v8015 = vadd.f32 %v3822, %v8014
    %8016 = vmatprep.mubr.bf16.mxu0 %v3969
    %8017 = vmatmul.mubr.bf16.gmra.mxu0 %v3968
    %v8018 = vpop.f32.mrf.mxu0
    %v8019 = vadd.f32 %v3827, %v8018
    %v8020 = vpop.f32.mrf.mxu0
    %v8021 = vadd.f32 %v3827, %v8020
    %v8022 = vpop.f32.mrf.mxu0
    %v8023 = vadd.f32 %v3832, %v8022
    %v8024 = vpop.f32.mrf.mxu0
    %v8025 = vadd.f32 %v3832, %v8024
    %8026 = vmatprep.mubr.bf16.mxu0 %v3971
    %8027 = vmatmul.mubr.bf16.gmra.mxu0 %v3970
    %v8028 = vpop.f32.mrf.mxu0
    %v8029 = vadd.f32 %v3837, %v8028
    %v8030 = vpop.f32.mrf.mxu0
    %v8031 = vadd.f32 %v3837, %v8030
    %v8032 = vpop.f32.mrf.mxu0
    %v8033 = vadd.f32 %v3842, %v8032
    %v8034 = vpop.f32.mrf.mxu0
    %v8035 = vadd.f32 %v3842, %v8034
    %8036 = vdwg.mxu0
    %vm8037 = vcmp.gt.f32.partialorder %v7686, 0.0
    %vm8038 = vcmp.gt.f32.partialorder %v7688, 0.0
    %vm8039 = vcmp.gt.f32.partialorder %v7879, 0.0
    %vm8040 = vcmp.gt.f32.partialorder %v7881, 0.0
    %vm8041 = vcmp.gt.f32.partialorder %v7690, 0.0
    %vm8042 = vcmp.gt.f32.partialorder %v7692, 0.0
    %vm8043 = vcmp.gt.f32.partialorder %v7883, 0.0
    %vm8044 = vcmp.gt.f32.partialorder %v7885, 0.0
    %vm8045 = vcmp.gt.f32.partialorder %v7696, 0.0
    %vm8046 = vcmp.gt.f32.partialorder %v7698, 0.0
    %vm8047 = vcmp.gt.f32.partialorder %v7889, 0.0
    %vm8048 = vcmp.gt.f32.partialorder %v7891, 0.0
    %vm8049 = vcmp.gt.f32.partialorder %v7700, 0.0
    %vm8050 = vcmp.gt.f32.partialorder %v7702, 0.0
    %vm8051 = vcmp.gt.f32.partialorder %v7893, 0.0
    %vm8052 = vcmp.gt.f32.partialorder %v7895, 0.0
    %vm8053 = vcmp.gt.f32.partialorder %v7706, 0.0
    %vm8054 = vcmp.gt.f32.partialorder %v7708, 0.0
    %vm8055 = vcmp.gt.f32.partialorder %v7899, 0.0
    %vm8056 = vcmp.gt.f32.partialorder %v7901, 0.0
    %vm8057 = vcmp.gt.f32.partialorder %v7710, 0.0
    %vm8058 = vcmp.gt.f32.partialorder %v7712, 0.0
    %vm8059 = vcmp.gt.f32.partialorder %v7903, 0.0
    %vm8060 = vcmp.gt.f32.partialorder %v7905, 0.0
    %vm8061 = vcmp.gt.f32.partialorder %v7716, 0.0
    %vm8062 = vcmp.gt.f32.partialorder %v7718, 0.0
    %vm8063 = vcmp.gt.f32.partialorder %v7909, 0.0
    %vm8064 = vcmp.gt.f32.partialorder %v7911, 0.0
    %vm8065 = vcmp.gt.f32.partialorder %v7720, 0.0
    %vm8066 = vcmp.gt.f32.partialorder %v7722, 0.0
    %vm8067 = vcmp.gt.f32.partialorder %v7913, 0.0
    %vm8068 = vcmp.gt.f32.partialorder %v7915, 0.0
    %vm8069 = vcmp.gt.f32.partialorder %v7726, 0.0
    %vm8070 = vcmp.gt.f32.partialorder %v7728, 0.0
    %vm8071 = vcmp.gt.f32.partialorder %v7919, 0.0
    %vm8072 = vcmp.gt.f32.partialorder %v7921, 0.0
    %vm8073 = vcmp.gt.f32.partialorder %v7730, 0.0
    %vm8074 = vcmp.gt.f32.partialorder %v7732, 0.0
    %vm8075 = vcmp.gt.f32.partialorder %v7923, 0.0
    %vm8076 = vcmp.gt.f32.partialorder %v7925, 0.0
    %vm8077 = vcmp.gt.f32.partialorder %v7736, 0.0
    %vm8078 = vcmp.gt.f32.partialorder %v7738, 0.0
    %vm8079 = vcmp.gt.f32.partialorder %v7929, 0.0
    %vm8080 = vcmp.gt.f32.partialorder %v7931, 0.0
    %vm8081 = vcmp.gt.f32.partialorder %v7740, 0.0
    %vm8082 = vcmp.gt.f32.partialorder %v7742, 0.0
    %vm8083 = vcmp.gt.f32.partialorder %v7933, 0.0
    %vm8084 = vcmp.gt.f32.partialorder %v7935, 0.0
    %vm8085 = vcmp.gt.f32.partialorder %v7746, 0.0
    %vm8086 = vcmp.gt.f32.partialorder %v7748, 0.0
    %vm8087 = vcmp.gt.f32.partialorder %v7939, 0.0
    %vm8088 = vcmp.gt.f32.partialorder %v7941, 0.0
    %vm8089 = vcmp.gt.f32.partialorder %v7750, 0.0
    %vm8090 = vcmp.gt.f32.partialorder %v7752, 0.0
    %vm8091 = vcmp.gt.f32.partialorder %v7943, 0.0
    %vm8092 = vcmp.gt.f32.partialorder %v7945, 0.0
    %vm8093 = vcmp.gt.f32.partialorder %v7756, 0.0
    %vm8094 = vcmp.gt.f32.partialorder %v7758, 0.0
    %vm8095 = vcmp.gt.f32.partialorder %v7949, 0.0
    %vm8096 = vcmp.gt.f32.partialorder %v7951, 0.0
    %vm8097 = vcmp.gt.f32.partialorder %v7760, 0.0
    %vm8098 = vcmp.gt.f32.partialorder %v7762, 0.0
    %vm8099 = vcmp.gt.f32.partialorder %v7953, 0.0
    %vm8100 = vcmp.gt.f32.partialorder %v7955, 0.0
    %vm8101 = vcmp.gt.f32.partialorder %v7766, 0.0
    %vm8102 = vcmp.gt.f32.partialorder %v7768, 0.0
    %vm8103 = vcmp.gt.f32.partialorder %v7959, 0.0
    %vm8104 = vcmp.gt.f32.partialorder %v7961, 0.0
    %vm8105 = vcmp.gt.f32.partialorder %v7770, 0.0
    %vm8106 = vcmp.gt.f32.partialorder %v7772, 0.0
    %vm8107 = vcmp.gt.f32.partialorder %v7963, 0.0
    %vm8108 = vcmp.gt.f32.partialorder %v7965, 0.0
    %vm8109 = vcmp.gt.f32.partialorder %v7776, 0.0
    %vm8110 = vcmp.gt.f32.partialorder %v7778, 0.0
    %vm8111 = vcmp.gt.f32.partialorder %v7969, 0.0
    %vm8112 = vcmp.gt.f32.partialorder %v7971, 0.0
    %vm8113 = vcmp.gt.f32.partialorder %v7780, 0.0
    %vm8114 = vcmp.gt.f32.partialorder %v7782, 0.0
    %vm8115 = vcmp.gt.f32.partialorder %v7973, 0.0
    %vm8116 = vcmp.gt.f32.partialorder %v7975, 0.0
    %vm8117 = vcmp.gt.f32.partialorder %v7786, 0.0
    %vm8118 = vcmp.gt.f32.partialorder %v7788, 0.0
    %vm8119 = vcmp.gt.f32.partialorder %v7979, 0.0
    %vm8120 = vcmp.gt.f32.partialorder %v7981, 0.0
    %vm8121 = vcmp.gt.f32.partialorder %v7790, 0.0
    %vm8122 = vcmp.gt.f32.partialorder %v7792, 0.0
    %vm8123 = vcmp.gt.f32.partialorder %v7983, 0.0
    %vm8124 = vcmp.gt.f32.partialorder %v7985, 0.0
    %vm8125 = vcmp.gt.f32.partialorder %v7796, 0.0
    %vm8126 = vcmp.gt.f32.partialorder %v7798, 0.0
    %vm8127 = vcmp.gt.f32.partialorder %v7989, 0.0
    %vm8128 = vcmp.gt.f32.partialorder %v7991, 0.0
    %vm8129 = vcmp.gt.f32.partialorder %v7800, 0.0
    %vm8130 = vcmp.gt.f32.partialorder %v7802, 0.0
    %vm8131 = vcmp.gt.f32.partialorder %v7993, 0.0
    %vm8132 = vcmp.gt.f32.partialorder %v7995, 0.0
    %vm8133 = vcmp.gt.f32.partialorder %v7806, 0.0
    %vm8134 = vcmp.gt.f32.partialorder %v7808, 0.0
    %vm8135 = vcmp.gt.f32.partialorder %v7999, 0.0
    %vm8136 = vcmp.gt.f32.partialorder %v8001, 0.0
    %vm8137 = vcmp.gt.f32.partialorder %v7810, 0.0
    %vm8138 = vcmp.gt.f32.partialorder %v7812, 0.0
    %vm8139 = vcmp.gt.f32.partialorder %v8003, 0.0
    %vm8140 = vcmp.gt.f32.partialorder %v8005, 0.0
    %vm8141 = vcmp.gt.f32.partialorder %v7816, 0.0
    %vm8142 = vcmp.gt.f32.partialorder %v7818, 0.0
    %vm8143 = vcmp.gt.f32.partialorder %v8009, 0.0
    %vm8144 = vcmp.gt.f32.partialorder %v8011, 0.0
    %vm8145 = vcmp.gt.f32.partialorder %v7820, 0.0
    %vm8146 = vcmp.gt.f32.partialorder %v7822, 0.0
    %vm8147 = vcmp.gt.f32.partialorder %v8013, 0.0
    %vm8148 = vcmp.gt.f32.partialorder %v8015, 0.0
    %vm8149 = vcmp.gt.f32.partialorder %v7826, 0.0
    %vm8150 = vcmp.gt.f32.partialorder %v7828, 0.0
    %vm8151 = vcmp.gt.f32.partialorder %v8019, 0.0
    %vm8152 = vcmp.gt.f32.partialorder %v8021, 0.0
    %vm8153 = vcmp.gt.f32.partialorder %v7830, 0.0
    %vm8154 = vcmp.gt.f32.partialorder %v7832, 0.0
    %vm8155 = vcmp.gt.f32.partialorder %v8023, 0.0
    %vm8156 = vcmp.gt.f32.partialorder %v8025, 0.0
    %vm8157 = vcmp.gt.f32.partialorder %v7836, 0.0
    %vm8158 = vcmp.gt.f32.partialorder %v7838, 0.0
    %vm8159 = vcmp.gt.f32.partialorder %v8029, 0.0
    %vm8160 = vcmp.gt.f32.partialorder %v8031, 0.0
    %vm8161 = vcmp.gt.f32.partialorder %v7840, 0.0
    %vm8162 = vcmp.gt.f32.partialorder %v7842, 0.0
    %vm8163 = vcmp.gt.f32.partialorder %v8033, 0.0
    %vm8164 = vcmp.gt.f32.partialorder %v8035, 0.0
    %v8165 = vmul.f32 %v7686, 0.01
    %v8166 = vmul.f32 %v7688, 0.01
    %v8167 = vmul.f32 %v7879, 0.01
    %v8168 = vmul.f32 %v7881, 0.01
    %v8169 = vmul.f32 %v7690, 0.01
    %v8170 = vmul.f32 %v7692, 0.01
    %v8171 = vmul.f32 %v7883, 0.01
    %v8172 = vmul.f32 %v7885, 0.01
    %v8173 = vmul.f32 %v7696, 0.01
    %v8174 = vmul.f32 %v7698, 0.01
    %v8175 = vmul.f32 %v7889, 0.01
    %v8176 = vmul.f32 %v7891, 0.01
    %v8177 = vmul.f32 %v7700, 0.01
    %v8178 = vmul.f32 %v7702, 0.01
    %v8179 = vmul.f32 %v7893, 0.01
    %v8180 = vmul.f32 %v7895, 0.01
    %v8181 = vmul.f32 %v7706, 0.01
    %v8182 = vmul.f32 %v7708, 0.01
    %v8183 = vmul.f32 %v7899, 0.01
    %v8184 = vmul.f32 %v7901, 0.01
    %v8185 = vmul.f32 %v7710, 0.01
    %v8186 = vmul.f32 %v7712, 0.01
    %v8187 = vmul.f32 %v7903, 0.01
    %v8188 = vmul.f32 %v7905, 0.01
    %v8189 = vmul.f32 %v7716, 0.01
    %v8190 = vmul.f32 %v7718, 0.01
    %v8191 = vmul.f32 %v7909, 0.01
    %v8192 = vmul.f32 %v7911, 0.01
    %v8193 = vmul.f32 %v7720, 0.01
    %v8194 = vmul.f32 %v7722, 0.01
    %v8195 = vmul.f32 %v7913, 0.01
    %v8196 = vmul.f32 %v7915, 0.01
    %v8197 = vmul.f32 %v7726, 0.01
    %v8198 = vmul.f32 %v7728, 0.01
    %v8199 = vmul.f32 %v7919, 0.01
    %v8200 = vmul.f32 %v7921, 0.01
    %v8201 = vmul.f32 %v7730, 0.01
    %v8202 = vmul.f32 %v7732, 0.01
    %v8203 = vmul.f32 %v7923, 0.01
    %v8204 = vmul.f32 %v7925, 0.01
    %v8205 = vmul.f32 %v7736, 0.01
    %v8206 = vmul.f32 %v7738, 0.01
    %v8207 = vmul.f32 %v7929, 0.01
    %v8208 = vmul.f32 %v7931, 0.01
    %v8209 = vmul.f32 %v7740, 0.01
    %v8210 = vmul.f32 %v7742, 0.01
    %v8211 = vmul.f32 %v7933, 0.01
    %v8212 = vmul.f32 %v7935, 0.01
    %v8213 = vmul.f32 %v7746, 0.01
    %v8214 = vmul.f32 %v7748, 0.01
    %v8215 = vmul.f32 %v7939, 0.01
    %v8216 = vmul.f32 %v7941, 0.01
    %v8217 = vmul.f32 %v7750, 0.01
    %v8218 = vmul.f32 %v7752, 0.01
    %v8219 = vmul.f32 %v7943, 0.01
    %v8220 = vmul.f32 %v7945, 0.01
    %v8221 = vmul.f32 %v7756, 0.01
    %v8222 = vmul.f32 %v7758, 0.01
    %v8223 = vmul.f32 %v7949, 0.01
    %v8224 = vmul.f32 %v7951, 0.01
    %v8225 = vmul.f32 %v7760, 0.01
    %v8226 = vmul.f32 %v7762, 0.01
    %v8227 = vmul.f32 %v7953, 0.01
    %v8228 = vmul.f32 %v7955, 0.01
    %v8229 = vmul.f32 %v7766, 0.01
    %v8230 = vmul.f32 %v7768, 0.01
    %v8231 = vmul.f32 %v7959, 0.01
    %v8232 = vmul.f32 %v7961, 0.01
    %v8233 = vmul.f32 %v7770, 0.01
    %v8234 = vmul.f32 %v7772, 0.01
    %v8235 = vmul.f32 %v7963, 0.01
    %v8236 = vmul.f32 %v7965, 0.01
    %v8237 = vmul.f32 %v7776, 0.01
    %v8238 = vmul.f32 %v7778, 0.01
    %v8239 = vmul.f32 %v7969, 0.01
    %v8240 = vmul.f32 %v7971, 0.01
    %v8241 = vmul.f32 %v7780, 0.01
    %v8242 = vmul.f32 %v7782, 0.01
    %v8243 = vmul.f32 %v7973, 0.01
    %v8244 = vmul.f32 %v7975, 0.01
    %v8245 = vmul.f32 %v7786, 0.01
    %v8246 = vmul.f32 %v7788, 0.01
    %v8247 = vmul.f32 %v7979, 0.01
    %v8248 = vmul.f32 %v7981, 0.01
    %v8249 = vmul.f32 %v7790, 0.01
    %v8250 = vmul.f32 %v7792, 0.01
    %v8251 = vmul.f32 %v7983, 0.01
    %v8252 = vmul.f32 %v7985, 0.01
    %v8253 = vmul.f32 %v7796, 0.01
    %v8254 = vmul.f32 %v7798, 0.01
    %v8255 = vmul.f32 %v7989, 0.01
    %v8256 = vmul.f32 %v7991, 0.01
    %v8257 = vmul.f32 %v7800, 0.01
    %v8258 = vmul.f32 %v7802, 0.01
    %v8259 = vmul.f32 %v7993, 0.01
    %v8260 = vmul.f32 %v7995, 0.01
    %v8261 = vmul.f32 %v7806, 0.01
    %v8262 = vmul.f32 %v7808, 0.01
    %v8263 = vmul.f32 %v7999, 0.01
    %v8264 = vmul.f32 %v8001, 0.01
    %v8265 = vmul.f32 %v7810, 0.01
    %v8266 = vmul.f32 %v7812, 0.01
    %v8267 = vmul.f32 %v8003, 0.01
    %v8268 = vmul.f32 %v8005, 0.01
    %v8269 = vmul.f32 %v7816, 0.01
    %v8270 = vmul.f32 %v7818, 0.01
    %v8271 = vmul.f32 %v8009, 0.01
    %v8272 = vmul.f32 %v8011, 0.01
    %v8273 = vmul.f32 %v7820, 0.01
    %v8274 = vmul.f32 %v7822, 0.01
    %v8275 = vmul.f32 %v8013, 0.01
    %v8276 = vmul.f32 %v8015, 0.01
    %v8277 = vmul.f32 %v7826, 0.01
    %v8278 = vmul.f32 %v7828, 0.01
    %v8279 = vmul.f32 %v8019, 0.01
    %v8280 = vmul.f32 %v8021, 0.01
    %v8281 = vmul.f32 %v7830, 0.01
    %v8282 = vmul.f32 %v7832, 0.01
    %v8283 = vmul.f32 %v8023, 0.01
    %v8284 = vmul.f32 %v8025, 0.01
    %v8285 = vmul.f32 %v7836, 0.01
    %v8286 = vmul.f32 %v7838, 0.01
    %v8287 = vmul.f32 %v8029, 0.01
    %v8288 = vmul.f32 %v8031, 0.01
    %v8289 = vmul.f32 %v7840, 0.01
    %v8290 = vmul.f32 %v7842, 0.01
    %v8291 = vmul.f32 %v8033, 0.01
    %v8292 = vmul.f32 %v8035, 0.01
    %v8293 = vsel %vm8037, %v7686, %v8165
    %v8294 = vsel %vm8038, %v7688, %v8166
    %v8295 = vsel %vm8039, %v7879, %v8167
    %v8296 = vsel %vm8040, %v7881, %v8168
    %v8297 = vsel %vm8041, %v7690, %v8169
    %v8298 = vsel %vm8042, %v7692, %v8170
    %v8299 = vsel %vm8043, %v7883, %v8171
    %v8300 = vsel %vm8044, %v7885, %v8172
    %v8301 = vsel %vm8045, %v7696, %v8173
    %v8302 = vsel %vm8046, %v7698, %v8174
    %v8303 = vsel %vm8047, %v7889, %v8175
    %v8304 = vsel %vm8048, %v7891, %v8176
    %v8305 = vsel %vm8049, %v7700, %v8177
    %v8306 = vsel %vm8050, %v7702, %v8178
    %v8307 = vsel %vm8051, %v7893, %v8179
    %v8308 = vsel %vm8052, %v7895, %v8180
    %v8309 = vsel %vm8053, %v7706, %v8181
    %v8310 = vsel %vm8054, %v7708, %v8182
    %v8311 = vsel %vm8055, %v7899, %v8183
    %v8312 = vsel %vm8056, %v7901, %v8184
    %v8313 = vsel %vm8057, %v7710, %v8185
    %v8314 = vsel %vm8058, %v7712, %v8186
    %v8315 = vsel %vm8059, %v7903, %v8187
    %v8316 = vsel %vm8060, %v7905, %v8188
    %v8317 = vsel %vm8061, %v7716, %v8189
    %v8318 = vsel %vm8062, %v7718, %v8190
    %v8319 = vsel %vm8063, %v7909, %v8191
    %v8320 = vsel %vm8064, %v7911, %v8192
    %v8321 = vsel %vm8065, %v7720, %v8193
    %v8322 = vsel %vm8066, %v7722, %v8194
    %v8323 = vsel %vm8067, %v7913, %v8195
    %v8324 = vsel %vm8068, %v7915, %v8196
    %v8325 = vsel %vm8069, %v7726, %v8197
    %v8326 = vsel %vm8070, %v7728, %v8198
    %v8327 = vsel %vm8071, %v7919, %v8199
    %v8328 = vsel %vm8072, %v7921, %v8200
    %v8329 = vsel %vm8073, %v7730, %v8201
    %v8330 = vsel %vm8074, %v7732, %v8202
    %v8331 = vsel %vm8075, %v7923, %v8203
    %v8332 = vsel %vm8076, %v7925, %v8204
    %v8333 = vsel %vm8077, %v7736, %v8205
    %v8334 = vsel %vm8078, %v7738, %v8206
    %v8335 = vsel %vm8079, %v7929, %v8207
    %v8336 = vsel %vm8080, %v7931, %v8208
    %v8337 = vsel %vm8081, %v7740, %v8209
    %v8338 = vsel %vm8082, %v7742, %v8210
    %v8339 = vsel %vm8083, %v7933, %v8211
    %v8340 = vsel %vm8084, %v7935, %v8212
    %v8341 = vsel %vm8085, %v7746, %v8213
    %v8342 = vsel %vm8086, %v7748, %v8214
    %v8343 = vsel %vm8087, %v7939, %v8215
    %v8344 = vsel %vm8088, %v7941, %v8216
    %v8345 = vsel %vm8089, %v7750, %v8217
    %v8346 = vsel %vm8090, %v7752, %v8218
    %v8347 = vsel %vm8091, %v7943, %v8219
    %v8348 = vsel %vm8092, %v7945, %v8220
    %v8349 = vsel %vm8093, %v7756, %v8221
    %v8350 = vsel %vm8094, %v7758, %v8222
    %v8351 = vsel %vm8095, %v7949, %v8223
    %v8352 = vsel %vm8096, %v7951, %v8224
    %v8353 = vsel %vm8097, %v7760, %v8225
    %v8354 = vsel %vm8098, %v7762, %v8226
    %v8355 = vsel %vm8099, %v7953, %v8227
    %v8356 = vsel %vm8100, %v7955, %v8228
    %v8357 = vsel %vm8101, %v7766, %v8229
    %v8358 = vsel %vm8102, %v7768, %v8230
    %v8359 = vsel %vm8103, %v7959, %v8231
    %v8360 = vsel %vm8104, %v7961, %v8232
    %v8361 = vsel %vm8105, %v7770, %v8233
    %v8362 = vsel %vm8106, %v7772, %v8234
    %v8363 = vsel %vm8107, %v7963, %v8235
    %v8364 = vsel %vm8108, %v7965, %v8236
    %v8365 = vsel %vm8109, %v7776, %v8237
    %v8366 = vsel %vm8110, %v7778, %v8238
    %v8367 = vsel %vm8111, %v7969, %v8239
    %v8368 = vsel %vm8112, %v7971, %v8240
    %v8369 = vsel %vm8113, %v7780, %v8241
    %v8370 = vsel %vm8114, %v7782, %v8242
    %v8371 = vsel %vm8115, %v7973, %v8243
    %v8372 = vsel %vm8116, %v7975, %v8244
    %v8373 = vsel %vm8117, %v7786, %v8245
    %v8374 = vsel %vm8118, %v7788, %v8246
    %v8375 = vsel %vm8119, %v7979, %v8247
    %v8376 = vsel %vm8120, %v7981, %v8248
    %v8377 = vsel %vm8121, %v7790, %v8249
    %v8378 = vsel %vm8122, %v7792, %v8250
    %v8379 = vsel %vm8123, %v7983, %v8251
    %v8380 = vsel %vm8124, %v7985, %v8252
    %v8381 = vsel %vm8125, %v7796, %v8253
    %v8382 = vsel %vm8126, %v7798, %v8254
    %v8383 = vsel %vm8127, %v7989, %v8255
    %v8384 = vsel %vm8128, %v7991, %v8256
    %v8385 = vsel %vm8129, %v7800, %v8257
    %v8386 = vsel %vm8130, %v7802, %v8258
    %v8387 = vsel %vm8131, %v7993, %v8259
    %v8388 = vsel %vm8132, %v7995, %v8260
    %v8389 = vsel %vm8133, %v7806, %v8261
    %v8390 = vsel %vm8134, %v7808, %v8262
    %v8391 = vsel %vm8135, %v7999, %v8263
    %v8392 = vsel %vm8136, %v8001, %v8264
    %v8393 = vsel %vm8137, %v7810, %v8265
    %v8394 = vsel %vm8138, %v7812, %v8266
    %v8395 = vsel %vm8139, %v8003, %v8267
    %v8396 = vsel %vm8140, %v8005, %v8268
    %v8397 = vsel %vm8141, %v7816, %v8269
    %v8398 = vsel %vm8142, %v7818, %v8270
    %v8399 = vsel %vm8143, %v8009, %v8271
    %v8400 = vsel %vm8144, %v8011, %v8272
    %v8401 = vsel %vm8145, %v7820, %v8273
    %v8402 = vsel %vm8146, %v7822, %v8274
    %v8403 = vsel %vm8147, %v8013, %v8275
    %v8404 = vsel %vm8148, %v8015, %v8276
    %v8405 = vsel %vm8149, %v7826, %v8277
    %v8406 = vsel %vm8150, %v7828, %v8278
    %v8407 = vsel %vm8151, %v8019, %v8279
    %v8408 = vsel %vm8152, %v8021, %v8280
    %v8409 = vsel %vm8153, %v7830, %v8281
    %v8410 = vsel %vm8154, %v7832, %v8282
    %v8411 = vsel %vm8155, %v8023, %v8283
    %v8412 = vsel %vm8156, %v8025, %v8284
    %v8413 = vsel %vm8157, %v7836, %v8285
    %v8414 = vsel %vm8158, %v7838, %v8286
    %v8415 = vsel %vm8159, %v8029, %v8287
    %v8416 = vsel %vm8160, %v8031, %v8288
    %v8417 = vsel %vm8161, %v7840, %v8289
    %v8418 = vsel %vm8162, %v7842, %v8290
    %v8419 = vsel %vm8163, %v8033, %v8291
    %v8420 = vsel %vm8164, %v8035, %v8292
    %v8421 = vmul.f32 %v4777, %v8293
    %v8422 = vmul.f32 %v4777, %v8294
    %v8423 = vmul.f32 %v4777, %v8295
    %v8424 = vmul.f32 %v4777, %v8296
    %v8425 = vmul.f32 %v4782, %v8297
    %v8426 = vmul.f32 %v4782, %v8298
    %v8427 = vmul.f32 %v4782, %v8299
    %v8428 = vmul.f32 %v4782, %v8300
    %v8429 = vmul.f32 %v4787, %v8301
    %v8430 = vmul.f32 %v4787, %v8302
    %v8431 = vmul.f32 %v4787, %v8303
    %v8432 = vmul.f32 %v4787, %v8304
    %v8433 = vmul.f32 %v4792, %v8305
    %v8434 = vmul.f32 %v4792, %v8306
    %v8435 = vmul.f32 %v4792, %v8307
    %v8436 = vmul.f32 %v4792, %v8308
    %v8437 = vmul.f32 %v4797, %v8309
    %v8438 = vmul.f32 %v4797, %v8310
    %v8439 = vmul.f32 %v4797, %v8311
    %v8440 = vmul.f32 %v4797, %v8312
    %v8441 = vmul.f32 %v4802, %v8313
    %v8442 = vmul.f32 %v4802, %v8314
    %v8443 = vmul.f32 %v4802, %v8315
    %v8444 = vmul.f32 %v4802, %v8316
    %v8445 = vmul.f32 %v4807, %v8317
    %v8446 = vmul.f32 %v4807, %v8318
    %v8447 = vmul.f32 %v4807, %v8319
    %v8448 = vmul.f32 %v4807, %v8320
    %v8449 = vmul.f32 %v4812, %v8321
    %v8450 = vmul.f32 %v4812, %v8322
    %v8451 = vmul.f32 %v4812, %v8323
    %v8452 = vmul.f32 %v4812, %v8324
    %v8453 = vmul.f32 %v4817, %v8325
    %v8454 = vmul.f32 %v4817, %v8326
    %v8455 = vmul.f32 %v4817, %v8327
    %v8456 = vmul.f32 %v4817, %v8328
    %v8457 = vmul.f32 %v4822, %v8329
    %v8458 = vmul.f32 %v4822, %v8330
    %v8459 = vmul.f32 %v4822, %v8331
    %v8460 = vmul.f32 %v4822, %v8332
    %v8461 = vmul.f32 %v4827, %v8333
    %v8462 = vmul.f32 %v4827, %v8334
    %v8463 = vmul.f32 %v4827, %v8335
    %v8464 = vmul.f32 %v4827, %v8336
    %v8465 = vmul.f32 %v4832, %v8337
    %v8466 = vmul.f32 %v4832, %v8338
    %v8467 = vmul.f32 %v4832, %v8339
    %v8468 = vmul.f32 %v4832, %v8340
    %v8469 = vmul.f32 %v4837, %v8341
    %v8470 = vmul.f32 %v4837, %v8342
    %v8471 = vmul.f32 %v4837, %v8343
    %v8472 = vmul.f32 %v4837, %v8344
    %v8473 = vmul.f32 %v4842, %v8345
    %v8474 = vmul.f32 %v4842, %v8346
    %v8475 = vmul.f32 %v4842, %v8347
    %v8476 = vmul.f32 %v4842, %v8348
    %v8477 = vmul.f32 %v4847, %v8349
    %v8478 = vmul.f32 %v4847, %v8350
    %v8479 = vmul.f32 %v4847, %v8351
    %v8480 = vmul.f32 %v4847, %v8352
    %v8481 = vmul.f32 %v4852, %v8353
    %v8482 = vmul.f32 %v4852, %v8354
    %v8483 = vmul.f32 %v4852, %v8355
    %v8484 = vmul.f32 %v4852, %v8356
    %v8485 = vmul.f32 %v4857, %v8357
    %v8486 = vmul.f32 %v4857, %v8358
    %v8487 = vmul.f32 %v4857, %v8359
    %v8488 = vmul.f32 %v4857, %v8360
    %v8489 = vmul.f32 %v4862, %v8361
    %v8490 = vmul.f32 %v4862, %v8362
    %v8491 = vmul.f32 %v4862, %v8363
    %v8492 = vmul.f32 %v4862, %v8364
    %v8493 = vmul.f32 %v4867, %v8365
    %v8494 = vmul.f32 %v4867, %v8366
    %v8495 = vmul.f32 %v4867, %v8367
    %v8496 = vmul.f32 %v4867, %v8368
    %v8497 = vmul.f32 %v4872, %v8369
    %v8498 = vmul.f32 %v4872, %v8370
    %v8499 = vmul.f32 %v4872, %v8371
    %v8500 = vmul.f32 %v4872, %v8372
    %v8501 = vmul.f32 %v4877, %v8373
    %v8502 = vmul.f32 %v4877, %v8374
    %v8503 = vmul.f32 %v4877, %v8375
    %v8504 = vmul.f32 %v4877, %v8376
    %v8505 = vmul.f32 %v4882, %v8377
    %v8506 = vmul.f32 %v4882, %v8378
    %v8507 = vmul.f32 %v4882, %v8379
    %v8508 = vmul.f32 %v4882, %v8380
    %v8509 = vmul.f32 %v4887, %v8381
    %v8510 = vmul.f32 %v4887, %v8382
    %v8511 = vmul.f32 %v4887, %v8383
    %v8512 = vmul.f32 %v4887, %v8384
    %v8513 = vmul.f32 %v4892, %v8385
    %v8514 = vmul.f32 %v4892, %v8386
    %v8515 = vmul.f32 %v4892, %v8387
    %v8516 = vmul.f32 %v4892, %v8388
    %v8517 = vmul.f32 %v4897, %v8389
    %v8518 = vmul.f32 %v4897, %v8390
    %v8519 = vmul.f32 %v4897, %v8391
    %v8520 = vmul.f32 %v4897, %v8392
    %v8521 = vmul.f32 %v4902, %v8393
    %v8522 = vmul.f32 %v4902, %v8394
    %v8523 = vmul.f32 %v4902, %v8395
    %v8524 = vmul.f32 %v4902, %v8396
    %v8525 = vmul.f32 %v4907, %v8397
    %v8526 = vmul.f32 %v4907, %v8398
    %v8527 = vmul.f32 %v4907, %v8399
    %v8528 = vmul.f32 %v4907, %v8400
    %v8529 = vmul.f32 %v4912, %v8401
    %v8530 = vmul.f32 %v4912, %v8402
    %v8531 = vmul.f32 %v4912, %v8403
    %v8532 = vmul.f32 %v4912, %v8404
    %v8533 = vmul.f32 %v4917, %v8405
    %v8534 = vmul.f32 %v4917, %v8406
    %v8535 = vmul.f32 %v4917, %v8407
    %v8536 = vmul.f32 %v4917, %v8408
    %v8537 = vmul.f32 %v4922, %v8409
    %v8538 = vmul.f32 %v4922, %v8410
    %v8539 = vmul.f32 %v4922, %v8411
    %v8540 = vmul.f32 %v4922, %v8412
    %v8541 = vmul.f32 %v4927, %v8413
    %v8542 = vmul.f32 %v4927, %v8414
    %v8543 = vmul.f32 %v4927, %v8415
    %v8544 = vmul.f32 %v4927, %v8416
    %v8545 = vmul.f32 %v4932, %v8417
    %v8546 = vmul.f32 %v4932, %v8418
    %v8547 = vmul.f32 %v4932, %v8419
    %v8548 = vmul.f32 %v4932, %v8420
    %v8549 = vadd.f32 %v8421, %v8425
    %v8550 = vadd.f32 %v8549, %v8429
    %v8551 = vadd.f32 %v8550, %v8433
    %v8552 = vadd.f32 %v8551, %v8437
    %v8553 = vadd.f32 %v8552, %v8441
    %v8554 = vadd.f32 %v8553, %v8445
    %v8555 = vadd.f32 %v8554, %v8449
    %v8556 = vadd.f32 %v8555, %v8453
    %v8557 = vadd.f32 %v8556, %v8457
    %v8558 = vadd.f32 %v8557, %v8461
    %v8559 = vadd.f32 %v8558, %v8465
    %v8560 = vadd.f32 %v8559, %v8469
    %v8561 = vadd.f32 %v8560, %v8473
    %v8562 = vadd.f32 %v8561, %v8477
    %v8563 = vadd.f32 %v8562, %v8481
    %v8564 = vadd.f32 %v8563, %v8485
    %v8565 = vadd.f32 %v8564, %v8489
    %v8566 = vadd.f32 %v8565, %v8493
    %v8567 = vadd.f32 %v8566, %v8497
    %v8568 = vadd.f32 %v8567, %v8501
    %v8569 = vadd.f32 %v8568, %v8505
    %v8570 = vadd.f32 %v8569, %v8509
    %v8571 = vadd.f32 %v8570, %v8513
    %v8572 = vadd.f32 %v8571, %v8517
    %v8573 = vadd.f32 %v8572, %v8521
    %v8574 = vadd.f32 %v8573, %v8525
    %v8575 = vadd.f32 %v8574, %v8529
    %v8576 = vadd.f32 %v8575, %v8533
    %v8577 = vadd.f32 %v8576, %v8537
    %v8578 = vadd.f32 %v8577, %v8541
    %v8579 = vadd.f32 %v8578, %v8545
    %v8580 = vrot.slane %v8579, 4
    %v8581 = vadd.f32 %v8579, %v8580
    %v8582 = vrot.slane %v8581, 2
    %v8583 = vadd.f32 %v8581, %v8582
    %v8584 = vrot.slane %v8583, 1
    %v8585 = vadd.f32 %v8583, %v8584
    %v8586 = vadd.f32 %v8422, %v8426
    %v8587 = vadd.f32 %v8586, %v8430
    %v8588 = vadd.f32 %v8587, %v8434
    %v8589 = vadd.f32 %v8588, %v8438
    %v8590 = vadd.f32 %v8589, %v8442
    %v8591 = vadd.f32 %v8590, %v8446
    %v8592 = vadd.f32 %v8591, %v8450
    %v8593 = vadd.f32 %v8592, %v8454
    %v8594 = vadd.f32 %v8593, %v8458
    %v8595 = vadd.f32 %v8594, %v8462
    %v8596 = vadd.f32 %v8595, %v8466
    %v8597 = vadd.f32 %v8596, %v8470
    %v8598 = vadd.f32 %v8597, %v8474
    %v8599 = vadd.f32 %v8598, %v8478
    %v8600 = vadd.f32 %v8599, %v8482
    %v8601 = vadd.f32 %v8600, %v8486
    %v8602 = vadd.f32 %v8601, %v8490
    %v8603 = vadd.f32 %v8602, %v8494
    %v8604 = vadd.f32 %v8603, %v8498
    %v8605 = vadd.f32 %v8604, %v8502
    %v8606 = vadd.f32 %v8605, %v8506
    %v8607 = vadd.f32 %v8606, %v8510
    %v8608 = vadd.f32 %v8607, %v8514
    %v8609 = vadd.f32 %v8608, %v8518
    %v8610 = vadd.f32 %v8609, %v8522
    %v8611 = vadd.f32 %v8610, %v8526
    %v8612 = vadd.f32 %v8611, %v8530
    %v8613 = vadd.f32 %v8612, %v8534
    %v8614 = vadd.f32 %v8613, %v8538
    %v8615 = vadd.f32 %v8614, %v8542
    %v8616 = vadd.f32 %v8615, %v8546
    %v8617 = vrot.slane %v8616, 4
    %v8618 = vadd.f32 %v8616, %v8617
    %v8619 = vrot.slane %v8618, 2
    %v8620 = vadd.f32 %v8618, %v8619
    %v8621 = vrot.slane %v8620, 1
    %v8622 = vadd.f32 %v8620, %v8621
    %v8623 = vadd.f32 %v8423, %v8427
    %v8624 = vadd.f32 %v8623, %v8431
    %v8625 = vadd.f32 %v8624, %v8435
    %v8626 = vadd.f32 %v8625, %v8439
    %v8627 = vadd.f32 %v8626, %v8443
    %v8628 = vadd.f32 %v8627, %v8447
    %v8629 = vadd.f32 %v8628, %v8451
    %v8630 = vadd.f32 %v8629, %v8455
    %v8631 = vadd.f32 %v8630, %v8459
    %v8632 = vadd.f32 %v8631, %v8463
    %v8633 = vadd.f32 %v8632, %v8467
    %v8634 = vadd.f32 %v8633, %v8471
    %v8635 = vadd.f32 %v8634, %v8475
    %v8636 = vadd.f32 %v8635, %v8479
    %v8637 = vadd.f32 %v8636, %v8483
    %v8638 = vadd.f32 %v8637, %v8487
    %v8639 = vadd.f32 %v8638, %v8491
    %v8640 = vadd.f32 %v8639, %v8495
    %v8641 = vadd.f32 %v8640, %v8499
    %v8642 = vadd.f32 %v8641, %v8503
    %v8643 = vadd.f32 %v8642, %v8507
    %v8644 = vadd.f32 %v8643, %v8511
    %v8645 = vadd.f32 %v8644, %v8515
    %v8646 = vadd.f32 %v8645, %v8519
    %v8647 = vadd.f32 %v8646, %v8523
    %v8648 = vadd.f32 %v8647, %v8527
    %v8649 = vadd.f32 %v8648, %v8531
    %v8650 = vadd.f32 %v8649, %v8535
    %v8651 = vadd.f32 %v8650, %v8539
    %v8652 = vadd.f32 %v8651, %v8543
    %v8653 = vadd.f32 %v8652, %v8547
    %v8654 = vrot.slane %v8653, 4
    %v8655 = vadd.f32 %v8653, %v8654
    %v8656 = vrot.slane %v8655, 2
    %v8657 = vadd.f32 %v8655, %v8656
    %v8658 = vrot.slane %v8657, 1
    %v8659 = vadd.f32 %v8657, %v8658
    %v8660 = vadd.f32 %v8424, %v8428
    %v8661 = vadd.f32 %v8660, %v8432
    %v8662 = vadd.f32 %v8661, %v8436
    %v8663 = vadd.f32 %v8662, %v8440
    %v8664 = vadd.f32 %v8663, %v8444
    %v8665 = vadd.f32 %v8664, %v8448
    %v8666 = vadd.f32 %v8665, %v8452
    %v8667 = vadd.f32 %v8666, %v8456
    %v8668 = vadd.f32 %v8667, %v8460
    %v8669 = vadd.f32 %v8668, %v8464
    %v8670 = vadd.f32 %v8669, %v8468
    %v8671 = vadd.f32 %v8670, %v8472
    %v8672 = vadd.f32 %v8671, %v8476
    %v8673 = vadd.f32 %v8672, %v8480
    %v8674 = vadd.f32 %v8673, %v8484
    %v8675 = vadd.f32 %v8674, %v8488
    %v8676 = vadd.f32 %v8675, %v8492
    %v8677 = vadd.f32 %v8676, %v8496
    %v8678 = vadd.f32 %v8677, %v8500
    %v8679 = vadd.f32 %v8678, %v8504
    %v8680 = vadd.f32 %v8679, %v8508
    %v8681 = vadd.f32 %v8680, %v8512
    %v8682 = vadd.f32 %v8681, %v8516
    %v8683 = vadd.f32 %v8682, %v8520
    %v8684 = vadd.f32 %v8683, %v8524
    %v8685 = vadd.f32 %v8684, %v8528
    %v8686 = vadd.f32 %v8685, %v8532
    %v8687 = vadd.f32 %v8686, %v8536
    %v8688 = vadd.f32 %v8687, %v8540
    %v8689 = vadd.f32 %v8688, %v8544
    %v8690 = vadd.f32 %v8689, %v8548
    %v8691 = vrot.slane %v8690, 4
    %v8692 = vadd.f32 %v8690, %v8691
    %v8693 = vrot.slane %v8692, 2
    %v8694 = vadd.f32 %v8692, %v8693
    %v8695 = vrot.slane %v8694, 1
    %v8696 = vadd.f32 %v8694, %v8695
    %v8697 = vadd.f32 %v8585, %v5218
    %v8698 = vadd.f32 %v8622, %v5218
    %v8699 = vadd.f32 %v8659, %v5218
    %v8700 = vadd.f32 %v8696, %v5218
    %v8705 = vcombine.low %v8697, %v8698
    %v8706 = vcombine.low %v8699, %v8700
    %v8708 = vunpack.c.l.s4 1966171168
    %v8709 = vunpack.c.0.s8 %v8708
    %v8710 = vlaneseq
    %v8711 = vshrl.u32 %v8710, 7
    %v8712 = vsub.s32 %v8709, %v8711
    %v8713 = vrot.slane %v8705, %v8712
    %v8715 = vunpack.c.l.s4 1966171168
    %v8716 = vunpack.c.0.s8 %v8715
    %v8717 = vlaneseq
    %v8718 = vshrl.u32 %v8717, 7
    %v8719 = vsub.s32 %v8716, %v8718
    %v8720 = vrot.slane %v8706, %v8719
    %v8721 = vcombine.low %v8713, %v8720
    %v8723 = vunpack.c.l.s4 1966171168
    %v8724 = vunpack.c.0.s8 %v8723
    %v8725 = vlaneseq
    %v8726 = vshrl.u32 %v8725, 7
    %v8727 = vsub.s32 %v8724, %v8726
    %v8728 = vrot.slane %v8721, %v8727
    %8730 = vst.msk [vmem:[#allocation3 + $0x4] sm:$0xf] %vm5255, %v8728
    // Predicated region
    $region46: #{tpu_custom_call.1} parent=1 // pred_check
      _
    $region47: #{tpu_custom_call.1} parent=1 // pred_check_branch
      %8732 = sbr.rel (0) target = $region49
    $region48: #{tpu_custom_call.1} parent=1 // pred_region
      %s8734 = ssub.s32 128, 128
      %8735 = vsyncadd [#allocation4], %s8734
      %s8737 = sshll.u32 [#allocation3], 4
      %s8738 = int_to_ptr.vmem [resolvable:$true] %s8737
      %8740 = dma.vmem_to_hbm [thread:$0]  %s8738, 128, %s11, [#allocation4]
    $region49: #{tpu_custom_call.1} parent=1 // pred_fallthru
      _
    // Predicated region
    $region50: #{tpu_custom_call.1} parent=1 // pred_check
      _
    $region51: #{tpu_custom_call.1} parent=1 // pred_check_branch
      %8742 = sbr.rel (0) target = $region53
    $region52: #{tpu_custom_call.1} parent=1 // pred_region
      %8743 = dma.done [#allocation4], 128
    $region53: #{tpu_custom_call.1} parent=1 // pred_fallthru
      _
    %8744 = vsyncpa [#allocation4], 1

</llo_original>
